<compile_context>
chip_gen: v7x
topology: tpu7x:2x2x1
jax: 0.10.0
libtpu: 0.0.40
codegen_flags: <defaults>
</compile_context>

<pallas_src>
import functools

import jax
import jax.numpy as jnp
from jax.experimental import pallas as pl
from jax.experimental.pallas import tpu as pltpu

_LANE = 128
_VMEM_LIMIT = 64 * 1024 * 1024


def _round_up(x, m):
    return (x + m - 1) // m * m


def _pick_tm(m, cap=1024):
    """Largest multiple-of-8 divisor of m that is <= cap (no megacore halving)."""
    t = min(m, cap)
    t -= t % 8
    while t >= 8:
        if m % t == 0:
            return t
        t -= 8
    return min(m, 8)


def _pick_tg(h, w, target_m=384):
    """Image rows per tapconv grid step: largest divisor of h with tg*w <= target_m."""
    tg = 1
    for d in range(1, h + 1):
        if h % d == 0 and d * w <= max(target_m, w):
            tg = d
    return tg


# ----------------------------------------------------------------------------
# Kernel 1: fused 1x1 convs — one matmul, bias+ReLU, split into per-branch outputs
# ----------------------------------------------------------------------------
def _make_mm_split_kernel(offsets):
    def kernel(a_ref, w_ref, b_ref, *o_refs):
        acc = jnp.dot(a_ref[...], w_ref[...], preferred_element_type=jnp.float32)
        y = jnp.maximum(acc + b_ref[...], 0.0)
        for (start, width), o_ref in zip(offsets, o_refs):
            o_ref[...] = y[:, start:start + width].astype(o_ref.dtype)   # lane-aligned
    return kernel


def matmul_split_bias_relu(a, w, bias, pads):
    """relu(a @ w + bias) split into len(pads) lane-dense bf16 outputs.

    a: (M, Cpad) bf16, w: (Cpad, sum(pads)) bf16, bias: (1, sum(pads)) f32.
    """
    m, c = a.shape
    ntot = w.shape[1]
    tm = _pick_tm(m)
    mp = pl.cdiv(m, tm) * tm
    a_in = jnp.pad(a, ((0, mp - m), (0, 0))) if mp != m else a
    offsets, off = [], 0
    for p in pads:
        offsets.append((off, p))
        off += p
    outs = pl.pallas_call(
        _make_mm_split_kernel(tuple(offsets)),
        out_shape=tuple(jax.ShapeDtypeStruct((mp, p), jnp.bfloat16) for p in pads),
        grid_spec=pltpu.PrefetchScalarGridSpec(
            num_scalar_prefetch=0,
            grid=(mp // tm,),
            in_specs=[
                pl.BlockSpec((tm, c), lambda i: (i, 0)),
                pl.BlockSpec((c, ntot), lambda i: (0, 0)),
                pl.BlockSpec((1, ntot), lambda i: (0, 0)),
            ],
            out_specs=tuple(pl.BlockSpec((tm, p), lambda i: (i, 0)) for p in pads),
        ),
        compiler_params=pltpu.CompilerParams(
            dimension_semantics=("parallel",), vmem_limit_bytes=_VMEM_LIMIT),
    )(a_in, w, bias)
    if mp != m:
        outs = tuple(o[:m] for o in outs)
    return outs


# ----------------------------------------------------------------------------
# Kernel 2: deep-K tap-fused conv + bias + ReLU (1x7, 7x1, and avgpool3x3+1x1)
# ----------------------------------------------------------------------------
def _make_tapconv_kernel(taps, tg, ph, w_out, c, n_pad):
    k = len(taps)

    def kernel(x_ref, w_ref, b_ref, o_ref):
        # x_ref: (1, Hp, Wp, Cpad) bf16  (one padded image, constant along the j axis)
        # w_ref: (K*Cpad, Npad) bf16     (per-tap weights stacked along Cin, BN folded)
        # b_ref: (1, Npad) f32
        # o_ref: (1, TG, W, Npad) bf16
        base = pl.multiple_of(pl.program_id(1) * tg, tg)
        blk = x_ref[0, pl.ds(base, tg + 2 * ph)]            # (TG+2ph, Wp, Cpad)
        views = [blk[di:di + tg, dj:dj + w_out, :] for (di, dj) in taps]
        a = views[0] if k == 1 else jnp.concatenate(views, axis=-1)   # (TG, W, K*Cpad)
        a = a.reshape(tg * w_out, k * c)                    # deep-K MXU operand
        acc = jnp.dot(a, w_ref[...], preferred_element_type=jnp.float32)
        y = jnp.maximum(acc + b_ref[...], 0.0)
        o_ref[0] = y.reshape(tg, w_out, n_pad).astype(o_ref.dtype)

    return kernel


def tapconv_bias_relu(x_nhwc, cp):
    """Fused multi-tap conv + (folded BN) bias + ReLU; bf16 in/out, 128-padded channels."""
    n, h, w, c = x_nhwc.shape
    ph, pw, taps = cp["ph"], cp["pw"], cp["taps"]
    k = len(taps)
    n_pad = cp["w"].shape[1]
    assert cp["w"].shape[0] == k * c, (cp["w"].shape, k, c)
    hp, wp = h + 2 * ph, w + 2 * pw
    # TODO(synk): fold the spatial halo padding into the kernel (boundary masking /
    #             padded out_spec of the previous stage) to remove this bf16 pad pass.
    xp = jnp.pad(x_nhwc, ((0, 0), (ph, ph), (pw, pw), (0, 0))) if (ph or pw) else x_nhwc
    tg = _pick_tg(h, w)
    out = pl.pallas_call(
        _make_tapconv_kernel(taps, tg, ph, w, c, n_pad),
        out_shape=jax.ShapeDtypeStruct((n, h, w, n_pad), jnp.bfloat16),
        grid_spec=pltpu.PrefetchScalarGridSpec(
            num_scalar_prefetch=0,
            grid=(n, h // tg),
            in_specs=[
                # Per-image padded slab; block index constant in j -> fetched once/image.
                # TODO(synk): pipeline_mode=pl.Buffered(1) to single-buffer this
                #             constant-index resident input on VMEM-tight chips (v7x).
                pl.BlockSpec((1, hp, wp, c), lambda i, j: (i, 0, 0, 0)),
                pl.BlockSpec((k * c, n_pad), lambda i, j: (0, 0)),
                pl.BlockSpec((1, n_pad), lambda i, j: (0, 0)),
            ],
            out_specs=pl.BlockSpec((1, tg, w, n_pad), lambda i, j: (i, j, 0, 0)),
        ),
        compiler_params=pltpu.CompilerParams(
            dimension_semantics=("parallel", "parallel"),
            vmem_limit_bytes=_VMEM_LIMIT),
    )(xp, cp["w"], cp["b"])
    return out


# ----------------------------------------------------------------------------
# Parameter construction (deterministic; folds BN into weights / bias)
# ----------------------------------------------------------------------------
def _conv_bn_folded(key, cin, cout, kh, kw, eps=1e-3):
    k0, k1, k2, k3, k4 = jax.random.split(key, 5)
    weight = jax.random.normal(k0, (cout, cin, kh, kw), jnp.float32) * 0.1
    gamma = jax.random.uniform(k1, (cout,), jnp.float32, 0.5, 1.5)
    beta = jax.random.normal(k2, (cout,), jnp.float32) * 0.1
    mean = jax.random.normal(k3, (cout,), jnp.float32) * 0.1
    var = jax.random.uniform(k4, (cout,), jnp.float32, 0.5, 1.5)
    scale = gamma / jnp.sqrt(var + eps)
    bias = beta - mean * scale
    return weight, scale, bias


def _pack_tapconv(weight, scale, bias, kh, kw, pool_div=1.0):
    cout, cin = weight.shape[0], weight.shape[1]
    cin_pad = _round_up(cin, _LANE)
    n_pad = _round_up(cout, _LANE)
    taps = tuple((i, j) for i in range(kh) for j in range(kw))
    blocks = []
    for (i, j) in taps:
        wm = jnp.transpose(weight[:, :, i, j], (1, 0)) * scale[None, :] * (1.0 / pool_div)
        blocks.append(jnp.pad(wm, ((0, cin_pad - cin), (0, n_pad - cout))))
    wpack = jnp.concatenate(blocks, axis=0).astype(jnp.bfloat16)       # (K*Cpad, Npad)
    bb = jnp.pad(bias, (0, n_pad - cout)).reshape(1, n_pad).astype(jnp.float32)
    return {"w": wpack, "b": bb, "taps": taps,
            "ph": (kh - 1) // 2, "pw": (kw - 1) // 2, "cout": cout}


def _pack_fused_1x1(convs, cin):
    cin_pad = _round_up(cin, _LANE)
    ws, bs, pads, couts = [], [], [], []
    for (w, s, b) in convs:
        cout = w.shape[0]
        p = _round_up(cout, _LANE)
        wm = jnp.transpose(w[:, :, 0, 0], (1, 0)) * s[None, :]
        ws.append(jnp.pad(wm, ((0, cin_pad - cin), (0, p - cout))))
        bs.append(jnp.pad(b, (0, p - cout)))
        pads.append(p)
        couts.append(cout)
    return {"w": jnp.concatenate(ws, axis=1).astype(jnp.bfloat16),
            "b": jnp.concatenate(bs).reshape(1, -1).astype(jnp.float32),
            "pads": tuple(pads), "couts": tuple(couts)}


def init_inceptionB_params(key, in_channels, ch1x1, ch7x7red, ch7x7,
                           ch7x7dbl_red, dch7x7dbl, pool_proj):
    """stride_num=1, ch1x1 != 0, pool_proj != 0 configuration (inference-mode BN)."""
    keys = jax.random.split(key, 10)

    c1 = _conv_bn_folded(keys[0], in_channels, ch1x1, 1, 1)
    c2r = _conv_bn_folded(keys[1], in_channels, ch7x7red, 1, 1)
    c3r = _conv_bn_folded(keys[4], in_channels, ch7x7dbl_red, 1, 1)
    fused = _pack_fused_1x1([c1, c2r, c3r], in_channels)

    def tap(k, cin, cout, kh, kw):
        w, s, b = _conv_bn_folded(k, cin, cout, kh, kw)
        return _pack_tapconv(w, s, b, kh, kw)

    branch2 = [tap(keys[2], ch7x7red, ch7x7, 1, 7),
               tap(keys[3], ch7x7, ch7x7, 7, 1)]
    branch3 = [tap(keys[5], ch7x7dbl_red, dch7x7dbl, 7, 1),
               tap(keys[6], dch7x7dbl, dch7x7dbl, 1, 7),
               tap(keys[7], dch7x7dbl, dch7x7dbl, 7, 1),
               tap(keys[8], dch7x7dbl, dch7x7dbl, 1, 7)]

    # branch4: AvgPool2d(3,1,1) + 1x1 conv == 3x3 conv with W1x1/9 at every tap
    # (count_include_pad=True, the PyTorch default).
    w4, s4, b4 = _conv_bn_folded(keys[9], in_channels, pool_proj, 1, 1)
    w4_3x3 = jnp.broadcast_to(w4[:, :, :1, :1], (pool_proj, in_channels, 3, 3))
    branch4 = _pack_tapconv(w4_3x3, s4, b4, 3, 3, pool_div=9.0)

    return {"cin_pad": _round_up(in_channels, _LANE), "fused1x1": fused,
            "branch2": branch2, "branch3": branch3, "branch4": branch4}


# ----------------------------------------------------------------------------
# Forward (matches torch inceptionB.forward; input / output NCHW)
# ----------------------------------------------------------------------------
def inceptionB_forward(params, x_nchw):
    n, cin, h, w = x_nchw.shape
    cin_pad = params["cin_pad"]
    # single boundary pass: NCHW -> NHWC, cast bf16, pad channels to a lane multiple
    x = jnp.transpose(x_nchw, (0, 2, 3, 1)).astype(jnp.bfloat16)
    if cin_pad != cin:
        x = jnp.pad(x, ((0, 0), (0, 0), (0, 0), (0, cin_pad - cin)))

    # fused branch1 / branch2-reduce / branch3-reduce 1x1 convs (one matmul over x)
    f = params["fused1x1"]
    y1, y2, y3 = matmul_split_bias_relu(x.reshape(n * h * w, cin_pad),
                                        f["w"], f["b"], f["pads"])
    b1 = y1.reshape(n, h, w, f["pads"][0])
    b2 = y2.reshape(n, h, w, f["pads"][1])
    b3 = y3.reshape(n, h, w, f["pads"][2])

    for cp in params["branch2"]:
        b2 = tapconv_bias_relu(b2, cp)          # channels stay 128-padded between stages
    for cp in params["branch3"]:
        b3 = tapconv_bias_relu(b3, cp)

    b4 = tapconv_bias_relu(x, params["branch4"])   # fused avg-pool + 1x1 + BN + ReLU

    # TODO(synk): write each branch straight into its channel slice of the final output
    #             (out_spec channel offsets + input_output_aliases) to drop this pass.
    out = jnp.concatenate(
        [b1[..., :f["couts"][0]],
         b2[..., :params["branch2"][-1]["cout"]],
         b3[..., :params["branch3"][-1]["cout"]],
         b4[..., :params["branch4"]["cout"]]], axis=-1)      # bf16 channel concat (NHWC)
    return jnp.transpose(out, (0, 3, 1, 2)).astype(jnp.float32)   # NHWC -> NCHW, f32


if __name__ == "__main__":
    key = jax.random.PRNGKey(0)
    k_x, k_p = jax.random.split(key)

    in_channels = 4
    params = init_inceptionB_params(
        k_p, in_channels=in_channels, ch1x1=8, ch7x7red=4, ch7x7=8,
        ch7x7dbl_red=4, dch7x7dbl=8, pool_proj=8)

    x = jax.random.normal(k_x, (2, in_channels, 16, 16), jnp.float32)  # NCHW

    fwd = jax.jit(functools.partial(inceptionB_forward, params))
    out = fwd(x)
    jax.block_until_ready(out)

    assert out.shape == (2, 8 + 8 + 8 + 8, 16, 16), out.shape
    assert out.dtype == jnp.float32
    print("KERNEL_OK")
</pallas_src>

<mosaic_0001>
module attributes {stable_mosaic.version = 11 : i64} {
  func.func @kernel(%arg0: i32, %arg1: i32, %arg2: memref<1x18x18x128xbf16, #tpu.memory_space<vmem>>, %arg3: memref<1152x128xbf16, #tpu.memory_space<vmem>>, %arg4: memref<1x128xf32, #tpu.memory_space<vmem>>, %arg5: memref<1x16x16x128xbf16, #tpu.memory_space<vmem>>) attributes {dimension_semantics = [#tpu.dimension_semantics<parallel>, #tpu.dimension_semantics<parallel>], iteration_bounds = array<i64: 2, 1>, scalar_prefetch = 0 : i64, scratch_operands = 0 : i64, tpu.core_type = #tpu.core_type<tc>, window_params = [{transform_indices = @transform_0, window_bounds = array<i64: 1, 18, 18, 128>}, {pipeline_mode = #tpu.pipeline_mode<synchronous>, transform_indices = @transform_1, window_bounds = array<i64: 1152, 128>}, {pipeline_mode = #tpu.pipeline_mode<synchronous>, transform_indices = @transform_2, window_bounds = array<i64: 1, 128>}, {transform_indices = @transform_3, window_bounds = array<i64: 1, 16, 16, 128>}]} {
    %c16_i32 = arith.constant 16 : i32
    %0 = arith.muli %arg1, %c16_i32 : i32
    %1 = tpu.assume_multiple %0, 16 : i32
    %c0 = arith.constant 0 : index
    %2 = arith.index_cast %1 : i32 to index
    %c0_0 = arith.constant 0 : index
    %c0_1 = arith.constant 0 : index
    %3 = vector.load %arg2[%c0, %2, %c0_0, %c0_1] : memref<1x18x18x128xbf16, #tpu.memory_space<vmem>>, vector<1x18x18x128xbf16>
    %4 = vector.shape_cast %3 : vector<1x18x18x128xbf16> to vector<18x18x128xbf16>
    %5 = vector.extract_strided_slice %4 {offsets = [0, 0, 0], sizes = [16, 16, 128], strides = [1, 1, 1]} : vector<18x18x128xbf16> to vector<16x16x128xbf16>
    %6 = vector.extract_strided_slice %4 {offsets = [0, 1, 0], sizes = [16, 16, 128], strides = [1, 1, 1]} : vector<18x18x128xbf16> to vector<16x16x128xbf16>
    %7 = vector.extract_strided_slice %4 {offsets = [0, 2, 0], sizes = [16, 16, 128], strides = [1, 1, 1]} : vector<18x18x128xbf16> to vector<16x16x128xbf16>
    %8 = vector.extract_strided_slice %4 {offsets = [1, 0, 0], sizes = [16, 16, 128], strides = [1, 1, 1]} : vector<18x18x128xbf16> to vector<16x16x128xbf16>
    %9 = vector.extract_strided_slice %4 {offsets = [1, 1, 0], sizes = [16, 16, 128], strides = [1, 1, 1]} : vector<18x18x128xbf16> to vector<16x16x128xbf16>
    %10 = vector.extract_strided_slice %4 {offsets = [1, 2, 0], sizes = [16, 16, 128], strides = [1, 1, 1]} : vector<18x18x128xbf16> to vector<16x16x128xbf16>
    %11 = vector.extract_strided_slice %4 {offsets = [2, 0, 0], sizes = [16, 16, 128], strides = [1, 1, 1]} : vector<18x18x128xbf16> to vector<16x16x128xbf16>
    %12 = vector.extract_strided_slice %4 {offsets = [2, 1, 0], sizes = [16, 16, 128], strides = [1, 1, 1]} : vector<18x18x128xbf16> to vector<16x16x128xbf16>
    %13 = vector.extract_strided_slice %4 {offsets = [2, 2, 0], sizes = [16, 16, 128], strides = [1, 1, 1]} : vector<18x18x128xbf16> to vector<16x16x128xbf16>
    %14 = tpu.concatenate %5, %6, %7, %8, %9, %10, %11, %12, %13 in 2 : vector<16x16x128xbf16>, vector<16x16x128xbf16>, vector<16x16x128xbf16>, vector<16x16x128xbf16>, vector<16x16x128xbf16>, vector<16x16x128xbf16>, vector<16x16x128xbf16>, vector<16x16x128xbf16>, vector<16x16x128xbf16> -> vector<16x16x1152xbf16>
    %15 = vector.shape_cast %14 : vector<16x16x1152xbf16> to vector<256x1152xbf16>
    %c0_2 = arith.constant 0 : index
    %c0_3 = arith.constant 0 : index
    %16 = vector.load %arg3[%c0_2, %c0_3] : memref<1152x128xbf16, #tpu.memory_space<vmem>>, vector<1152x128xbf16>
    %cst = arith.constant dense<0.000000e+00> : vector<256x128xf32>
    %17 = tpu.matmul %15, %16, %cst {dimension_numbers = #tpu.dot_dimension_numbers<[1], [0], [0], [1], [0, 0, 1, 1], [], []>} : vector<256x1152xbf16>, vector<1152x128xbf16>, vector<256x128xf32> -> vector<256x128xf32>
    %c0_4 = arith.constant 0 : index
    %c0_5 = arith.constant 0 : index
    %18 = vector.load %arg4[%c0_4, %c0_5] : memref<1x128xf32, #tpu.memory_space<vmem>>, vector<1x128xf32>
    %19 = vector.broadcast %18 : vector<1x128xf32> to vector<256x128xf32>
    %20 = arith.addf %17, %19 : vector<256x128xf32>
    %cst_6 = arith.constant 0.000000e+00 : f32
    %21 = vector.broadcast %cst_6 : f32 to vector<256x128xf32>
    %22 = arith.maximumf %20, %21 : vector<256x128xf32>
    %23 = vector.shape_cast %22 : vector<256x128xf32> to vector<16x16x128xf32>
    %24 = arith.truncf %23 : vector<16x16x128xf32> to vector<16x16x128xbf16>
    %c0_7 = arith.constant 0 : index
    %c0_8 = arith.constant 0 : index
    %c0_9 = arith.constant 0 : index
    %c0_10 = arith.constant 0 : index
    %25 = vector.load %arg5[%c0_7, %c0_8, %c0_9, %c0_10] : memref<1x16x16x128xbf16, #tpu.memory_space<vmem>>, vector<1x16x16x128xbf16>
    %26 = vector.shape_cast %25 : vector<1x16x16x128xbf16> to vector<16x16x128xbf16>
    %27 = vector.shape_cast %24 : vector<16x16x128xbf16> to vector<1x16x16x128xbf16>
    tpu.vector_store %arg5[%c0_7, %c0_8, %c0_9, %c0_10], %27 {strides = array<i32>} : memref<1x16x16x128xbf16, #tpu.memory_space<vmem>>, vector<1x16x16x128xbf16>,
    return
  }
  func.func @transform_0(%arg0: i32, %arg1: i32) -> (i32, i32, i32, i32) {
    %c0_i32 = arith.constant 0 : i32
    %c0_i32_0 = arith.constant 0 : i32
    %c0_i32_1 = arith.constant 0 : i32
    %c0_i32_2 = arith.constant 0 : i32
    return %arg0, %c0_i32, %c0_i32_0, %c0_i32_1 : i32, i32, i32, i32
  }
  func.func @transform_1(%arg0: i32, %arg1: i32) -> (i32, i32) {
    %c0_i32 = arith.constant 0 : i32
    %c0_i32_0 = arith.constant 0 : i32
    %c0_i32_1 = arith.constant 0 : i32
    return %c0_i32, %c0_i32_0 : i32, i32
  }
  func.func @transform_2(%arg0: i32, %arg1: i32) -> (i32, i32) {
    %c0_i32 = arith.constant 0 : i32
    %c0_i32_0 = arith.constant 0 : i32
    %c0_i32_1 = arith.constant 0 : i32
    return %c0_i32, %c0_i32_0 : i32, i32
  }
  func.func @transform_3(%arg0: i32, %arg1: i32) -> (i32, i32, i32, i32) {
    %c0_i32 = arith.constant 0 : i32
    %c0_i32_0 = arith.constant 0 : i32
    %c0_i32_1 = arith.constant 0 : i32
    return %arg0, %arg1, %c0_i32, %c0_i32_0 : i32, i32, i32, i32
  }
}

module attributes {stable_mosaic.version = 11 : i64} {
  func.func @kernel(%arg0: i32, %arg1: memref<512x128xbf16, #tpu.memory_space<vmem>>, %arg2: memref<128x384xbf16, #tpu.memory_space<vmem>>, %arg3: memref<1x384xf32, #tpu.memory_space<vmem>>, %arg4: memref<512x128xbf16, #tpu.memory_space<vmem>>, %arg5: memref<512x128xbf16, #tpu.memory_space<vmem>>, %arg6: memref<512x128xbf16, #tpu.memory_space<vmem>>) attributes {dimension_semantics = [#tpu.dimension_semantics<parallel>], iteration_bounds = array<i64: 1>, scalar_prefetch = 0 : i64, scratch_operands = 0 : i64, tpu.core_type = #tpu.core_type<tc>, window_params = [{transform_indices = @transform_0, window_bounds = array<i64: 512, 128>}, {pipeline_mode = #tpu.pipeline_mode<synchronous>, transform_indices = @transform_1, window_bounds = array<i64: 128, 384>}, {pipeline_mode = #tpu.pipeline_mode<synchronous>, transform_indices = @transform_2, window_bounds = array<i64: 1, 384>}, {transform_indices = @transform_3, window_bounds = array<i64: 512, 128>}, {transform_indices = @transform_4, window_bounds = array<i64: 512, 128>}, {transform_indices = @transform_5, window_bounds = array<i64: 512, 128>}]} {
    %c0 = arith.constant 0 : index
    %c0_0 = arith.constant 0 : index
    %0 = vector.load %arg1[%c0, %c0_0] : memref<512x128xbf16, #tpu.memory_space<vmem>>, vector<512x128xbf16>
    %c0_1 = arith.constant 0 : index
    %c0_2 = arith.constant 0 : index
    %1 = vector.load %arg2[%c0_1, %c0_2] : memref<128x384xbf16, #tpu.memory_space<vmem>>, vector<128x384xbf16>
    %cst = arith.constant dense<0.000000e+00> : vector<512x384xf32>
    %2 = tpu.matmul %0, %1, %cst {dimension_numbers = #tpu.dot_dimension_numbers<[1], [0], [0], [1], [0, 0, 1, 1], [], []>} : vector<512x128xbf16>, vector<128x384xbf16>, vector<512x384xf32> -> vector<512x384xf32>
    %c0_3 = arith.constant 0 : index
    %c0_4 = arith.constant 0 : index
    %3 = vector.load %arg3[%c0_3, %c0_4] : memref<1x384xf32, #tpu.memory_space<vmem>>, vector<1x384xf32>
    %4 = vector.broadcast %3 : vector<1x384xf32> to vector<512x384xf32>
    %5 = arith.addf %2, %4 : vector<512x384xf32>
    %cst_5 = arith.constant 0.000000e+00 : f32
    %6 = vector.broadcast %cst_5 : f32 to vector<512x384xf32>
    %7 = arith.maximumf %5, %6 : vector<512x384xf32>
    %8 = vector.extract_strided_slice %7 {offsets = [0, 0], sizes = [512, 128], strides = [1, 1]} : vector<512x384xf32> to vector<512x128xf32>
    %9 = arith.truncf %8 : vector<512x128xf32> to vector<512x128xbf16>
    %c0_6 = arith.constant 0 : index
    %c0_7 = arith.constant 0 : index
    %10 = vector.load %arg4[%c0_6, %c0_7] : memref<512x128xbf16, #tpu.memory_space<vmem>>, vector<512x128xbf16>
    tpu.vector_store %arg4[%c0_6, %c0_7], %9 {strides = array<i32>} : memref<512x128xbf16, #tpu.memory_space<vmem>>, vector<512x128xbf16>,
    %11 = vector.extract_strided_slice %7 {offsets = [0, 128], sizes = [512, 128], strides = [1, 1]} : vector<512x384xf32> to vector<512x128xf32>
    %12 = arith.truncf %11 : vector<512x128xf32> to vector<512x128xbf16>
    %c0_8 = arith.constant 0 : index
    %c0_9 = arith.constant 0 : index
    %13 = vector.load %arg5[%c0_8, %c0_9] : memref<512x128xbf16, #tpu.memory_space<vmem>>, vector<512x128xbf16>
    tpu.vector_store %arg5[%c0_8, %c0_9], %12 {strides = array<i32>} : memref<512x128xbf16, #tpu.memory_space<vmem>>, vector<512x128xbf16>,
    %14 = vector.extract_strided_slice %7 {offsets = [0, 256], sizes = [512, 128], strides = [1, 1]} : vector<512x384xf32> to vector<512x128xf32>
    %15 = arith.truncf %14 : vector<512x128xf32> to vector<512x128xbf16>
    %c0_10 = arith.constant 0 : index
    %c0_11 = arith.constant 0 : index
    %16 = vector.load %arg6[%c0_10, %c0_11] : memref<512x128xbf16, #tpu.memory_space<vmem>>, vector<512x128xbf16>
    tpu.vector_store %arg6[%c0_10, %c0_11], %15 {strides = array<i32>} : memref<512x128xbf16, #tpu.memory_space<vmem>>, vector<512x128xbf16>,
    return
  }
  func.func @transform_0(%arg0: i32) -> (i32, i32) {
    %c0_i32 = arith.constant 0 : i32
    %c0_i32_0 = arith.constant 0 : i32
    return %arg0, %c0_i32 : i32, i32
  }
  func.func @transform_1(%arg0: i32) -> (i32, i32) {
    %c0_i32 = arith.constant 0 : i32
    %c0_i32_0 = arith.constant 0 : i32
    %c0_i32_1 = arith.constant 0 : i32
    return %c0_i32, %c0_i32_0 : i32, i32
  }
  func.func @transform_2(%arg0: i32) -> (i32, i32) {
    %c0_i32 = arith.constant 0 : i32
    %c0_i32_0 = arith.constant 0 : i32
    %c0_i32_1 = arith.constant 0 : i32
    return %c0_i32, %c0_i32_0 : i32, i32
  }
  func.func @transform_3(%arg0: i32) -> (i32, i32) {
    %c0_i32 = arith.constant 0 : i32
    %c0_i32_0 = arith.constant 0 : i32
    return %arg0, %c0_i32 : i32, i32
  }
  func.func @transform_4(%arg0: i32) -> (i32, i32) {
    %c0_i32 = arith.constant 0 : i32
    %c0_i32_0 = arith.constant 0 : i32
    return %arg0, %c0_i32 : i32, i32
  }
  func.func @transform_5(%arg0: i32) -> (i32, i32) {
    %c0_i32 = arith.constant 0 : i32
    %c0_i32_0 = arith.constant 0 : i32
    return %arg0, %c0_i32 : i32, i32
  }
}

module attributes {stable_mosaic.version = 11 : i64} {
  func.func @kernel(%arg0: i32, %arg1: i32, %arg2: memref<1x16x22x128xbf16, #tpu.memory_space<vmem>>, %arg3: memref<896x128xbf16, #tpu.memory_space<vmem>>, %arg4: memref<1x128xf32, #tpu.memory_space<vmem>>, %arg5: memref<1x16x16x128xbf16, #tpu.memory_space<vmem>>) attributes {dimension_semantics = [#tpu.dimension_semantics<parallel>, #tpu.dimension_semantics<parallel>], iteration_bounds = array<i64: 2, 1>, scalar_prefetch = 0 : i64, scratch_operands = 0 : i64, tpu.core_type = #tpu.core_type<tc>, window_params = [{transform_indices = @transform_0, window_bounds = array<i64: 1, 16, 22, 128>}, {pipeline_mode = #tpu.pipeline_mode<synchronous>, transform_indices = @transform_1, window_bounds = array<i64: 896, 128>}, {pipeline_mode = #tpu.pipeline_mode<synchronous>, transform_indices = @transform_2, window_bounds = array<i64: 1, 128>}, {transform_indices = @transform_3, window_bounds = array<i64: 1, 16, 16, 128>}]} {
    %c16_i32 = arith.constant 16 : i32
    %0 = arith.muli %arg1, %c16_i32 : i32
    %1 = tpu.assume_multiple %0, 16 : i32
    %c0 = arith.constant 0 : index
    %2 = arith.index_cast %1 : i32 to index
    %c0_0 = arith.constant 0 : index
    %c0_1 = arith.constant 0 : index
    %3 = vector.load %arg2[%c0, %2, %c0_0, %c0_1] : memref<1x16x22x128xbf16, #tpu.memory_space<vmem>>, vector<1x16x22x128xbf16>
    %4 = vector.shape_cast %3 : vector<1x16x22x128xbf16> to vector<16x22x128xbf16>
    %5 = vector.extract_strided_slice %4 {offsets = [0, 0, 0], sizes = [16, 16, 128], strides = [1, 1, 1]} : vector<16x22x128xbf16> to vector<16x16x128xbf16>
    %6 = vector.extract_strided_slice %4 {offsets = [0, 1, 0], sizes = [16, 16, 128], strides = [1, 1, 1]} : vector<16x22x128xbf16> to vector<16x16x128xbf16>
    %7 = vector.extract_strided_slice %4 {offsets = [0, 2, 0], sizes = [16, 16, 128], strides = [1, 1, 1]} : vector<16x22x128xbf16> to vector<16x16x128xbf16>
    %8 = vector.extract_strided_slice %4 {offsets = [0, 3, 0], sizes = [16, 16, 128], strides = [1, 1, 1]} : vector<16x22x128xbf16> to vector<16x16x128xbf16>
    %9 = vector.extract_strided_slice %4 {offsets = [0, 4, 0], sizes = [16, 16, 128], strides = [1, 1, 1]} : vector<16x22x128xbf16> to vector<16x16x128xbf16>
    %10 = vector.extract_strided_slice %4 {offsets = [0, 5, 0], sizes = [16, 16, 128], strides = [1, 1, 1]} : vector<16x22x128xbf16> to vector<16x16x128xbf16>
    %11 = vector.extract_strided_slice %4 {offsets = [0, 6, 0], sizes = [16, 16, 128], strides = [1, 1, 1]} : vector<16x22x128xbf16> to vector<16x16x128xbf16>
    %12 = tpu.concatenate %5, %6, %7, %8, %9, %10, %11 in 2 : vector<16x16x128xbf16>, vector<16x16x128xbf16>, vector<16x16x128xbf16>, vector<16x16x128xbf16>, vector<16x16x128xbf16>, vector<16x16x128xbf16>, vector<16x16x128xbf16> -> vector<16x16x896xbf16>
    %13 = vector.shape_cast %12 : vector<16x16x896xbf16> to vector<256x896xbf16>
    %c0_2 = arith.constant 0 : index
    %c0_3 = arith.constant 0 : index
    %14 = vector.load %arg3[%c0_2, %c0_3] : memref<896x128xbf16, #tpu.memory_space<vmem>>, vector<896x128xbf16>
    %cst = arith.constant dense<0.000000e+00> : vector<256x128xf32>
    %15 = tpu.matmul %13, %14, %cst {dimension_numbers = #tpu.dot_dimension_numbers<[1], [0], [0], [1], [0, 0, 1, 1], [], []>} : vector<256x896xbf16>, vector<896x128xbf16>, vector<256x128xf32> -> vector<256x128xf32>
    %c0_4 = arith.constant 0 : index
    %c0_5 = arith.constant 0 : index
    %16 = vector.load %arg4[%c0_4, %c0_5] : memref<1x128xf32, #tpu.memory_space<vmem>>, vector<1x128xf32>
    %17 = vector.broadcast %16 : vector<1x128xf32> to vector<256x128xf32>
    %18 = arith.addf %15, %17 : vector<256x128xf32>
    %cst_6 = arith.constant 0.000000e+00 : f32
    %19 = vector.broadcast %cst_6 : f32 to vector<256x128xf32>
    %20 = arith.maximumf %18, %19 : vector<256x128xf32>
    %21 = vector.shape_cast %20 : vector<256x128xf32> to vector<16x16x128xf32>
    %22 = arith.truncf %21 : vector<16x16x128xf32> to vector<16x16x128xbf16>
    %c0_7 = arith.constant 0 : index
    %c0_8 = arith.constant 0 : index
    %c0_9 = arith.constant 0 : index
    %c0_10 = arith.constant 0 : index
    %23 = vector.load %arg5[%c0_7, %c0_8, %c0_9, %c0_10] : memref<1x16x16x128xbf16, #tpu.memory_space<vmem>>, vector<1x16x16x128xbf16>
    %24 = vector.shape_cast %23 : vector<1x16x16x128xbf16> to vector<16x16x128xbf16>
    %25 = vector.shape_cast %22 : vector<16x16x128xbf16> to vector<1x16x16x128xbf16>
    tpu.vector_store %arg5[%c0_7, %c0_8, %c0_9, %c0_10], %25 {strides = array<i32>} : memref<1x16x16x128xbf16, #tpu.memory_space<vmem>>, vector<1x16x16x128xbf16>,
    return
  }
  func.func @transform_0(%arg0: i32, %arg1: i32) -> (i32, i32, i32, i32) {
    %c0_i32 = arith.constant 0 : i32
    %c0_i32_0 = arith.constant 0 : i32
    %c0_i32_1 = arith.constant 0 : i32
    %c0_i32_2 = arith.constant 0 : i32
    return %arg0, %c0_i32, %c0_i32_0, %c0_i32_1 : i32, i32, i32, i32
  }
  func.func @transform_1(%arg0: i32, %arg1: i32) -> (i32, i32) {
    %c0_i32 = arith.constant 0 : i32
    %c0_i32_0 = arith.constant 0 : i32
    %c0_i32_1 = arith.constant 0 : i32
    return %c0_i32, %c0_i32_0 : i32, i32
  }
  func.func @transform_2(%arg0: i32, %arg1: i32) -> (i32, i32) {
    %c0_i32 = arith.constant 0 : i32
    %c0_i32_0 = arith.constant 0 : i32
    %c0_i32_1 = arith.constant 0 : i32
    return %c0_i32, %c0_i32_0 : i32, i32
  }
  func.func @transform_3(%arg0: i32, %arg1: i32) -> (i32, i32, i32, i32) {
    %c0_i32 = arith.constant 0 : i32
    %c0_i32_0 = arith.constant 0 : i32
    %c0_i32_1 = arith.constant 0 : i32
    return %arg0, %arg1, %c0_i32, %c0_i32_0 : i32, i32, i32, i32
  }
}

module attributes {stable_mosaic.version = 11 : i64} {
  func.func @kernel(%arg0: i32, %arg1: i32, %arg2: memref<1x22x16x128xbf16, #tpu.memory_space<vmem>>, %arg3: memref<896x128xbf16, #tpu.memory_space<vmem>>, %arg4: memref<1x128xf32, #tpu.memory_space<vmem>>, %arg5: memref<1x16x16x128xbf16, #tpu.memory_space<vmem>>) attributes {dimension_semantics = [#tpu.dimension_semantics<parallel>, #tpu.dimension_semantics<parallel>], iteration_bounds = array<i64: 2, 1>, scalar_prefetch = 0 : i64, scratch_operands = 0 : i64, tpu.core_type = #tpu.core_type<tc>, window_params = [{transform_indices = @transform_0, window_bounds = array<i64: 1, 22, 16, 128>}, {pipeline_mode = #tpu.pipeline_mode<synchronous>, transform_indices = @transform_1, window_bounds = array<i64: 896, 128>}, {pipeline_mode = #tpu.pipeline_mode<synchronous>, transform_indices = @transform_2, window_bounds = array<i64: 1, 128>}, {transform_indices = @transform_3, window_bounds = array<i64: 1, 16, 16, 128>}]} {
    %c16_i32 = arith.constant 16 : i32
    %0 = arith.muli %arg1, %c16_i32 : i32
    %1 = tpu.assume_multiple %0, 16 : i32
    %c0 = arith.constant 0 : index
    %2 = arith.index_cast %1 : i32 to index
    %c0_0 = arith.constant 0 : index
    %c0_1 = arith.constant 0 : index
    %3 = vector.load %arg2[%c0, %2, %c0_0, %c0_1] : memref<1x22x16x128xbf16, #tpu.memory_space<vmem>>, vector<1x22x16x128xbf16>
    %4 = vector.shape_cast %3 : vector<1x22x16x128xbf16> to vector<22x16x128xbf16>
    %5 = vector.extract_strided_slice %4 {offsets = [0, 0, 0], sizes = [16, 16, 128], strides = [1, 1, 1]} : vector<22x16x128xbf16> to vector<16x16x128xbf16>
    %6 = vector.extract_strided_slice %4 {offsets = [1, 0, 0], sizes = [16, 16, 128], strides = [1, 1, 1]} : vector<22x16x128xbf16> to vector<16x16x128xbf16>
    %7 = vector.extract_strided_slice %4 {offsets = [2, 0, 0], sizes = [16, 16, 128], strides = [1, 1, 1]} : vector<22x16x128xbf16> to vector<16x16x128xbf16>
    %8 = vector.extract_strided_slice %4 {offsets = [3, 0, 0], sizes = [16, 16, 128], strides = [1, 1, 1]} : vector<22x16x128xbf16> to vector<16x16x128xbf16>
    %9 = vector.extract_strided_slice %4 {offsets = [4, 0, 0], sizes = [16, 16, 128], strides = [1, 1, 1]} : vector<22x16x128xbf16> to vector<16x16x128xbf16>
    %10 = vector.extract_strided_slice %4 {offsets = [5, 0, 0], sizes = [16, 16, 128], strides = [1, 1, 1]} : vector<22x16x128xbf16> to vector<16x16x128xbf16>
    %11 = vector.extract_strided_slice %4 {offsets = [6, 0, 0], sizes = [16, 16, 128], strides = [1, 1, 1]} : vector<22x16x128xbf16> to vector<16x16x128xbf16>
    %12 = tpu.concatenate %5, %6, %7, %8, %9, %10, %11 in 2 : vector<16x16x128xbf16>, vector<16x16x128xbf16>, vector<16x16x128xbf16>, vector<16x16x128xbf16>, vector<16x16x128xbf16>, vector<16x16x128xbf16>, vector<16x16x128xbf16> -> vector<16x16x896xbf16>
    %13 = vector.shape_cast %12 : vector<16x16x896xbf16> to vector<256x896xbf16>
    %c0_2 = arith.constant 0 : index
    %c0_3 = arith.constant 0 : index
    %14 = vector.load %arg3[%c0_2, %c0_3] : memref<896x128xbf16, #tpu.memory_space<vmem>>, vector<896x128xbf16>
    %cst = arith.constant dense<0.000000e+00> : vector<256x128xf32>
    %15 = tpu.matmul %13, %14, %cst {dimension_numbers = #tpu.dot_dimension_numbers<[1], [0], [0], [1], [0, 0, 1, 1], [], []>} : vector<256x896xbf16>, vector<896x128xbf16>, vector<256x128xf32> -> vector<256x128xf32>
    %c0_4 = arith.constant 0 : index
    %c0_5 = arith.constant 0 : index
    %16 = vector.load %arg4[%c0_4, %c0_5] : memref<1x128xf32, #tpu.memory_space<vmem>>, vector<1x128xf32>
    %17 = vector.broadcast %16 : vector<1x128xf32> to vector<256x128xf32>
    %18 = arith.addf %15, %17 : vector<256x128xf32>
    %cst_6 = arith.constant 0.000000e+00 : f32
    %19 = vector.broadcast %cst_6 : f32 to vector<256x128xf32>
    %20 = arith.maximumf %18, %19 : vector<256x128xf32>
    %21 = vector.shape_cast %20 : vector<256x128xf32> to vector<16x16x128xf32>
    %22 = arith.truncf %21 : vector<16x16x128xf32> to vector<16x16x128xbf16>
    %c0_7 = arith.constant 0 : index
    %c0_8 = arith.constant 0 : index
    %c0_9 = arith.constant 0 : index
    %c0_10 = arith.constant 0 : index
    %23 = vector.load %arg5[%c0_7, %c0_8, %c0_9, %c0_10] : memref<1x16x16x128xbf16, #tpu.memory_space<vmem>>, vector<1x16x16x128xbf16>
    %24 = vector.shape_cast %23 : vector<1x16x16x128xbf16> to vector<16x16x128xbf16>
    %25 = vector.shape_cast %22 : vector<16x16x128xbf16> to vector<1x16x16x128xbf16>
    tpu.vector_store %arg5[%c0_7, %c0_8, %c0_9, %c0_10], %25 {strides = array<i32>} : memref<1x16x16x128xbf16, #tpu.memory_space<vmem>>, vector<1x16x16x128xbf16>,
    return
  }
  func.func @transform_0(%arg0: i32, %arg1: i32) -> (i32, i32, i32, i32) {
    %c0_i32 = arith.constant 0 : i32
    %c0_i32_0 = arith.constant 0 : i32
    %c0_i32_1 = arith.constant 0 : i32
    %c0_i32_2 = arith.constant 0 : i32
    return %arg0, %c0_i32, %c0_i32_0, %c0_i32_1 : i32, i32, i32, i32
  }
  func.func @transform_1(%arg0: i32, %arg1: i32) -> (i32, i32) {
    %c0_i32 = arith.constant 0 : i32
    %c0_i32_0 = arith.constant 0 : i32
    %c0_i32_1 = arith.constant 0 : i32
    return %c0_i32, %c0_i32_0 : i32, i32
  }
  func.func @transform_2(%arg0: i32, %arg1: i32) -> (i32, i32) {
    %c0_i32 = arith.constant 0 : i32
    %c0_i32_0 = arith.constant 0 : i32
    %c0_i32_1 = arith.constant 0 : i32
    return %c0_i32, %c0_i32_0 : i32, i32
  }
  func.func @transform_3(%arg0: i32, %arg1: i32) -> (i32, i32, i32, i32) {
    %c0_i32 = arith.constant 0 : i32
    %c0_i32_0 = arith.constant 0 : i32
    %c0_i32_1 = arith.constant 0 : i32
    return %arg0, %arg1, %c0_i32, %c0_i32_0 : i32, i32, i32, i32
  }
}

</mosaic_0001>

<llo_original>
// kernel: inceptionB_forward.10
$region0: #{inceptionB_forward.10}
  #allocation0 [shape = 'u32[]', space=smem, size = 0x4, offset = 0x4, fixed_abs, tag = 'smem constant byte address 0x4 - core index']
  #allocation1 [shape = 'u32[144,128]{1,0:T(1,128)}', space=vmem, size = 0x12000, scoped, tag = 'internal scratch']
  %s0 = inlined_call_operand.hbm [shape: bf16[2,22,16,128], index: 0, kind: input, shape index: {}]
  %s1 = inlined_call_operand.hbm [shape: bf16[896,128], index: 1, kind: input, shape index: {}]
  %s2 = inlined_call_operand.hbm [shape: f32[1,128], index: 2, kind: input, shape index: {}]
  %s3 = inlined_call_operand.hbm [shape: bf16[2,16,16,128], index: 3, kind: output, shape index: {}]
  %s4 = sld [smem:[#allocation0]]
  $region57: #{inceptionB_forward.10} parent=0
    _
  %s6 = ssub.s32 1, %s4
  %s7 = scalar_select 0, %s6, %s4
  $region1: #{inceptionB_forward.10} parent=0
    #allocation2 [shape = 'u8[180224]{0}', space=vmem, size = 0x2c000, scoped, tag = 'input window, operand 0']
    #allocation3 [shape = 's32[2]{0}', space=sflag, size = 0x8, scoped, tag = 'scoped memory for inceptionB_forward.10']
    #allocation4 [shape = 's32[2]{0}', space=sflag, size = 0x8, scoped, tag = 'scoped memory for inceptionB_forward.10']
    #allocation5 [shape = 'u8[229376]{0}', space=vmem, size = 0x38000, scoped, tag = 'input window, operand 1, single buffered']
    #allocation6 [shape = 's32[1]{0}', space=sflag, size = 0x4, scoped, tag = 'scoped memory for inceptionB_forward.10']
    #allocation7 [shape = 'u8[512]{0}', space=vmem, size = 0x400, scoped, tag = 'input window, operand 2, single buffered']
    #allocation8 [shape = 'u8[131072]{0}', space=vmem, size = 0x20000, scoped, tag = 'output window, operand 0']
    %8 = vsyncpa [#allocation3], 0
    %s9 = scalar_lea.sflag [#allocation3], 1
    %10 = vsyncpa %s9, 0
    %11 = vsyncpa [#allocation6], 0
    %12 = vsyncpa [#allocation4], 0
    %s13 = scalar_lea.sflag [#allocation4], 1
    %14 = vsyncpa %s13, 0
    loop: start=0, step=1, limit=4
    $region2: #{inceptionB_forward.10} parent=1 // loop_pre_header
      _
    $region3: #{inceptionB_forward.10} parent=1 // loop_header
      %s16 = sphi 0, %s20
      %p17 = scmp.ge.s32.totalorder %s16, 4
      %s23 = sphi 0, %s35
      %s24 = sphi 0, %s31
      %s25 = sphi 0, %s23
      %s26 = sphi 0, %s24
      %s27 = sphi 0, %s25
      %s28 = sphi 0, %s26
      %s38 = sphi 0, %s40
      %s41 = sphi 0, %s38
      %s42 = sphi 0, %s41
      %s58 = sphi 0, %s42
      %s62 = sphi 0, %s62
      %s64 = sphi 0, %s62
      %s65 = sphi 0, %s64
      %s79 = sphi 0, %s65
      %s83 = sphi 0, %s83
      %s85 = sphi 0, %s83
      %s86 = sphi 0, %s85
      %s100 = sphi 0, %s86
      %s108 = sphi 0, %s110
      %s111 = sphi 0, %s108
      %s112 = sphi 0, %s111
      %s128 = sphi 0, %s112
    $region4: #{inceptionB_forward.10} parent=1 // loop_header_branch
      %19 = sbr.rel (%p17) target = $region8
    $region5: #{inceptionB_forward.10} parent=1 // loop_body
      %s21 = ssub.s32 %s16, 1
      %s22 = ssub.s32 %s16, 2
      %s29 = sadd.s32 1, %s24
      %p30 = scmp.ge.s32.totalorder %s29, 1
      %s31 = scalar_select %p30, 0, %s29
      %s32 = sadd.s32 1, %s23
      %s33 = scalar_select %p30, %s32, %s23
      %p34 = scmp.ge.s32.totalorder %s33, 2
      %s35 = scalar_select %p34, 0, %s33
      %s36 = ssub.s32 %s23, %s35
      %p37 = scmp.eq.s32.totalorder %s36, 0
      %s39 = sadd.s32 %s38, 1
      %s40 = scalar_select %p37, %s38, %s39
      %p43 = pneg %p37
      %p44 = scmp.eq.s32.totalorder %s16, 1
      %p45 = por %p43, %p44
      %p46 = scmp.ne.s32.totalorder %s38, %s41
      %p47 = scmp.eq.s32.totalorder %s16, 0
      %p48 = por %p46, %p47
      %p49 = scmp.ne.s32.totalorder %s38, %s41
      %p50 = scmp.eq.s32.totalorder %s21, 1
      %p51 = por %p49, %p50
      %p52 = scmp.ne.s32.totalorder %s41, %s42
      %p53 = scmp.eq.s32.totalorder %s21, 0
      %p54 = por %p52, %p53
      %p55 = scmp.ne.s32.totalorder %s41, %s42
      %p56 = scmp.eq.s32.totalorder %s22, 1
      %p57 = por %p55, %p56
      %p59 = scmp.ne.s32.totalorder %s42, %s58
      %p60 = scmp.eq.s32.totalorder %s22, 0
      %p61 = por %p59, %p60
      %s63 = sadd.s32 %s62, 1
      %p66 = scmp.eq.s32.totalorder %s16, 1
      %p67 = scmp.ne.s32.totalorder %s62, %s64
      %p68 = scmp.eq.s32.totalorder %s16, 0
      %p69 = por %p67, %p68
      %p70 = scmp.ne.s32.totalorder %s62, %s64
      %p71 = scmp.eq.s32.totalorder %s21, 1
      %p72 = por %p70, %p71
      %p73 = scmp.ne.s32.totalorder %s64, %s65
      %p74 = scmp.eq.s32.totalorder %s21, 0
      %p75 = por %p73, %p74
      %p76 = scmp.ne.s32.totalorder %s64, %s65
      %p77 = scmp.eq.s32.totalorder %s22, 1
      %p78 = por %p76, %p77
      %p80 = scmp.ne.s32.totalorder %s65, %s79
      %p81 = scmp.eq.s32.totalorder %s22, 0
      %p82 = por %p80, %p81
      %s84 = sadd.s32 %s83, 1
      %p87 = scmp.eq.s32.totalorder %s16, 1
      %p88 = scmp.ne.s32.totalorder %s83, %s85
      %p89 = scmp.eq.s32.totalorder %s16, 0
      %p90 = por %p88, %p89
      %p91 = scmp.ne.s32.totalorder %s83, %s85
      %p92 = scmp.eq.s32.totalorder %s21, 1
      %p93 = por %p91, %p92
      %p94 = scmp.ne.s32.totalorder %s85, %s86
      %p95 = scmp.eq.s32.totalorder %s21, 0
      %p96 = por %p94, %p95
      %p97 = scmp.ne.s32.totalorder %s85, %s86
      %p98 = scmp.eq.s32.totalorder %s22, 1
      %p99 = por %p97, %p98
      %p101 = scmp.ne.s32.totalorder %s86, %s100
      %p102 = scmp.eq.s32.totalorder %s22, 0
      %p103 = por %p101, %p102
      %s104 = ssub.s32 %s23, %s35
      %s105 = ssub.s32 %s24, %s31
      %s106 = sor.u32 %s104, %s105
      %p107 = scmp.eq.s32.totalorder %s106, 0
      %s109 = sadd.s32 %s108, 1
      %s110 = scalar_select %p107, %s108, %s109
      %p113 = pneg %p107
      %p114 = scmp.eq.s32.totalorder %s16, 1
      %p115 = por %p113, %p114
      %p116 = scmp.ne.s32.totalorder %s108, %s111
      %p117 = scmp.eq.s32.totalorder %s16, 0
      %p118 = por %p116, %p117
      %p119 = scmp.ne.s32.totalorder %s108, %s111
      %p120 = scmp.eq.s32.totalorder %s21, 1
      %p121 = por %p119, %p120
      %p122 = scmp.ne.s32.totalorder %s111, %s112
      %p123 = scmp.eq.s32.totalorder %s21, 0
      %p124 = por %p122, %p123
      %p125 = scmp.ne.s32.totalorder %s111, %s112
      %p126 = scmp.eq.s32.totalorder %s22, 1
      %p127 = por %p125, %p126
      %p129 = scmp.ne.s32.totalorder %s112, %s128
      %p130 = scmp.eq.s32.totalorder %s22, 0
      %p131 = por %p129, %p130
      %p132 = scmp.le.s32.totalorder 1, %s16
      %p133 = scmp.lt.s32.totalorder %s16, 3
      %p134 = pnand %p132, %p133
      %p135 = pneg %p134
      // Predicated region
      $region9: #{inceptionB_forward.10} parent=5 // pred_check
        _
      $region10: #{inceptionB_forward.10} parent=5 // pred_check_branch
        %137 = sbr.rel (%p134) target = $region12
      $region11: #{inceptionB_forward.10} parent=5 // pred_region
        %s138 = ssub.s32 %s16, 1
        // Predicated region
        $region13: #{inceptionB_forward.10} parent=11 // pred_check
          %p139 = pneg %p75
        $region14: #{inceptionB_forward.10} parent=11 // pred_check_branch
          %141 = sbr.rel (%p139) target = $region16
        $region15: #{inceptionB_forward.10} parent=11 // pred_region
          %s143 = ssub.s32 7168, 7168
          %144 = vsyncadd [#allocation6], %s143
          %s145 = sshll.u32 [#allocation5], 4
          %s146 = int_to_ptr.vmem [resolvable:$true] %s145
          %151 = dma.hbm_to_vmem [thread:$0]  %s1, 7168, %s146, [#allocation6], 64, 64, 4
        $region16: #{inceptionB_forward.10} parent=11 // pred_fallthru
          _
        // Predicated region
        $region17: #{inceptionB_forward.10} parent=11 // pred_check
          %p152 = pneg %p96
        $region18: #{inceptionB_forward.10} parent=11 // pred_check_branch
          %154 = sbr.rel (%p152) target = $region20
        $region19: #{inceptionB_forward.10} parent=11 // pred_region
          %s156 = ssub.s32 16, 16
          %157 = vsyncadd [#allocation6], %s156
          %s159 = sshll.u32 [#allocation7], 4
          %s160 = int_to_ptr.vmem [resolvable:$true] %s159
          %162 = dma.hbm_to_vmem [thread:$0]  %s2, 16, %s160, [#allocation6]
        $region20: #{inceptionB_forward.10} parent=11 // pred_fallthru
          _
      $region12: #{inceptionB_forward.10} parent=5 // pred_fallthru
        _
      %p163 = scmp.lt.s32.totalorder %s16, 2
      // Predicated region
      $region21: #{inceptionB_forward.10} parent=5 // pred_check
        %p164 = pneg %p163
      $region22: #{inceptionB_forward.10} parent=5 // pred_check_branch
        %166 = sbr.rel (%p164) target = $region24
      $region23: #{inceptionB_forward.10} parent=5 // pred_region
        // Predicated region
        $region25: #{inceptionB_forward.10} parent=23 // pred_check
          %p167 = pneg %p48
        $region26: #{inceptionB_forward.10} parent=23 // pred_check_branch
          %169 = sbr.rel (%p167) target = $region28
        $region27: #{inceptionB_forward.10} parent=23 // pred_region
          %s170 = sand.u32 %s38, 1
          %s171 = scalar_lea.sflag [#allocation3], %s170
          %s172 = sand.u32 %s38, 1
          %s173 = smul.addr %s172, 176
          %s174 = scalar_lea.vmem [#allocation2], %s173
          %s176 = ssub.s32 2816, 2816
          %177 = vsyncadd %s171, %s176
          %s178 = smul.addr %s23, 44
          %s179 = smul.addr %s178, 64
          %s180 = scalar_lea.hbm %s0, %s179
          %s181 = sshll.u32 %s174, 4
          %s182 = int_to_ptr.vmem [resolvable:$true] %s181
          %187 = dma.hbm_to_vmem [thread:$0]  %s180, 2816, %s182, %s171, 64, 64, 4
        $region28: #{inceptionB_forward.10} parent=23 // pred_fallthru
          _
      $region24: #{inceptionB_forward.10} parent=5 // pred_fallthru
        _
      %p188 = scmp.le.s32.totalorder 1, %s16
      %p189 = scmp.lt.s32.totalorder %s16, 3
      %p190 = pnand %p188, %p189
      %p191 = pneg %p190
      // Predicated region
      $region29: #{inceptionB_forward.10} parent=5 // pred_check
        _
      $region30: #{inceptionB_forward.10} parent=5 // pred_check_branch
        %193 = sbr.rel (%p190) target = $region32
      $region31: #{inceptionB_forward.10} parent=5 // pred_region
        %s194 = ssub.s32 %s16, 1
        %s195 = sand.u32 %s41, 1
        %s196 = scalar_lea.sflag [#allocation3], %s195
        %s197 = sand.u32 %s41, 1
        %s198 = smul.addr %s197, 176
        %s199 = scalar_lea.vmem [#allocation2], %s198
        // Predicated region
        $region33: #{inceptionB_forward.10} parent=31 // pred_check
          %p200 = pneg %p54
        $region34: #{inceptionB_forward.10} parent=31 // pred_check_branch
          %202 = sbr.rel (%p200) target = $region36
        $region35: #{inceptionB_forward.10} parent=31 // pred_region
          %203 = dma.done %s196, 2816
        $region36: #{inceptionB_forward.10} parent=31 // pred_fallthru
          _
        // Predicated region
        $region37: #{inceptionB_forward.10} parent=31 // pred_check
          %p204 = pneg %p75
        $region38: #{inceptionB_forward.10} parent=31 // pred_check_branch
          %206 = sbr.rel (%p204) target = $region40
        $region39: #{inceptionB_forward.10} parent=31 // pred_region
          %207 = dma.done [#allocation6], 7168
        $region40: #{inceptionB_forward.10} parent=31 // pred_fallthru
          _
        // Predicated region
        $region41: #{inceptionB_forward.10} parent=31 // pred_check
          %p208 = pneg %p96
        $region42: #{inceptionB_forward.10} parent=31 // pred_check_branch
          %210 = sbr.rel (%p208) target = $region44
        $region43: #{inceptionB_forward.10} parent=31 // pred_region
          %211 = dma.done [#allocation6], 16
        $region44: #{inceptionB_forward.10} parent=31 // pred_fallthru
          _
        %s212 = sand.u32 %s41, 1
        %s213 = scalar_lea.sflag [#allocation3], %s212
        %s214 = sand.u32 %s41, 1
        %s215 = smul.addr %s214, 176
        %s216 = scalar_lea.vmem [#allocation2], %s215
        %p217 = pneg %p54
        %p218 = pneg %p51
        %p219 = pneg %p75
        %p220 = pneg %p72
        %p221 = pneg %p96
        %p222 = pneg %p93
        %p223 = pneg %p124
        %p224 = pneg %p121
        %s225 = sand.u32 %s111, 1
        %s226 = scalar_lea.sflag [#allocation4], %s225
        %s227 = sand.u32 %s111, 1
        %s228 = smul.addr %s227, 128
        %s229 = scalar_lea.vmem [#allocation8], %s228
        %s230 = smul.u32 16, %s26
        %s232 = smul.u32 %s26, 16
        %s233 = smul.u32 %s232, 2
        %s234 = smul.addr %s233, 4
        %s235 = scalar_lea.vmem %s199, %s234 [#allocation2]
        %v236 = vld [vmem:[%s235] sm:$0xf]
        %v237 = vld [vmem:[%s235 + $0x4] sm:$0xf]
        %v238 = vld [vmem:[%s235 + $0x8] sm:$0xf]
        %v239 = vld [vmem:[%s235 + $0xc] sm:$0xf]
        %v240 = vld [vmem:[%s235 + $0x10] sm:$0xf]
        %v241 = vld [vmem:[%s235 + $0x14] sm:$0xf]
        %v242 = vld [vmem:[%s235 + $0x18] sm:$0xf]
        %v243 = vld [vmem:[%s235 + $0x1c] sm:$0xf]
        %v244 = vld [vmem:[%s235 + $0x20] sm:$0xf]
        %v245 = vld [vmem:[%s235 + $0x24] sm:$0xf]
        %v246 = vld [vmem:[%s235 + $0x28] sm:$0xf]
        %v247 = vld [vmem:[%s235 + $0x2c] sm:$0xf]
        %v248 = vld [vmem:[%s235 + $0x30] sm:$0xf]
        %v249 = vld [vmem:[%s235 + $0x34] sm:$0xf]
        %v250 = vld [vmem:[%s235 + $0x38] sm:$0xf]
        %v251 = vld [vmem:[%s235 + $0x3c] sm:$0xf]
        %v252 = vld [vmem:[%s235 + $0x40] sm:$0xf]
        %v253 = vld [vmem:[%s235 + $0x44] sm:$0xf]
        %v254 = vld [vmem:[%s235 + $0x48] sm:$0xf]
        %v255 = vld [vmem:[%s235 + $0x4c] sm:$0xf]
        %v256 = vld [vmem:[%s235 + $0x50] sm:$0xf]
        %v257 = vld [vmem:[%s235 + $0x54] sm:$0xf]
        %v258 = vld [vmem:[%s235 + $0x58] sm:$0xf]
        %v259 = vld [vmem:[%s235 + $0x5c] sm:$0xf]
        %v260 = vld [vmem:[%s235 + $0x60] sm:$0xf]
        %v261 = vld [vmem:[%s235 + $0x64] sm:$0xf]
        %v262 = vld [vmem:[%s235 + $0x68] sm:$0xf]
        %v263 = vld [vmem:[%s235 + $0x6c] sm:$0xf]
        %v264 = vld [vmem:[%s235 + $0x70] sm:$0xf]
        %v265 = vld [vmem:[%s235 + $0x74] sm:$0xf]
        %v266 = vld [vmem:[%s235 + $0x78] sm:$0xf]
        %v267 = vld [vmem:[%s235 + $0x7c] sm:$0xf]
        %v268 = vld [vmem:[%s235 + $0x80] sm:$0xf]
        %v269 = vld [vmem:[%s235 + $0x84] sm:$0xf]
        %v270 = vld [vmem:[%s235 + $0x88] sm:$0xf]
        %v271 = vld [vmem:[%s235 + $0x8c] sm:$0xf]
        %v272 = vld [vmem:[%s235 + $0x90] sm:$0xf]
        %v273 = vld [vmem:[%s235 + $0x94] sm:$0xf]
        %v274 = vld [vmem:[%s235 + $0x98] sm:$0xf]
        %v275 = vld [vmem:[%s235 + $0x9c] sm:$0xf]
        %v276 = vld [vmem:[%s235 + $0xa0] sm:$0xf]
        %v277 = vld [vmem:[%s235 + $0xa4] sm:$0xf]
        %v278 = vld [vmem:[%s235 + $0xa8] sm:$0xf]
        %v279 = vld [vmem:[%s235 + $0xac] sm:$0xf]
        %v312 = vunpack.c.l.b16 %v236
        %v313 = vunpack.c.l.b16 %v237
        %v314 = vunpack.c.l.b16 %v238
        %v315 = vunpack.c.l.b16 %v239
        %v316 = vunpack.c.l.b16 %v240
        %v317 = vunpack.c.l.b16 %v241
        %v318 = vunpack.c.l.b16 %v242
        %v319 = vunpack.c.l.b16 %v243
        %v320 = vunpack.c.l.b16 %v244
        %v321 = vunpack.c.l.b16 %v245
        %v322 = vunpack.c.l.b16 %v246
        %v323 = vunpack.c.l.b16 %v247
        %v324 = vunpack.c.l.b16 %v248
        %v325 = vunpack.c.l.b16 %v249
        %v326 = vunpack.c.l.b16 %v250
        %v327 = vunpack.c.l.b16 %v251
        %v328 = vunpack.c.l.b16 %v252
        %v329 = vunpack.c.l.b16 %v253
        %v330 = vunpack.c.l.b16 %v254
        %v331 = vunpack.c.l.b16 %v255
        %v332 = vunpack.c.l.b16 %v256
        %v333 = vunpack.c.l.b16 %v257
        %v334 = vunpack.c.l.b16 %v258
        %v335 = vunpack.c.l.b16 %v259
        %v336 = vunpack.c.l.b16 %v260
        %v337 = vunpack.c.l.b16 %v261
        %v338 = vunpack.c.l.b16 %v262
        %v339 = vunpack.c.l.b16 %v263
        %v340 = vunpack.c.l.b16 %v264
        %v341 = vunpack.c.l.b16 %v265
        %v342 = vunpack.c.l.b16 %v266
        %v343 = vunpack.c.l.b16 %v267
        %v344 = vpack.c.b16 %v313, %v312
        %v345 = vpack.c.b16 %v315, %v314
        %v346 = vpack.c.b16 %v317, %v316
        %v347 = vpack.c.b16 %v319, %v318
        %v348 = vpack.c.b16 %v321, %v320
        %v349 = vpack.c.b16 %v323, %v322
        %v350 = vpack.c.b16 %v325, %v324
        %v351 = vpack.c.b16 %v327, %v326
        %v352 = vpack.c.b16 %v329, %v328
        %v353 = vpack.c.b16 %v331, %v330
        %v354 = vpack.c.b16 %v333, %v332
        %v355 = vpack.c.b16 %v335, %v334
        %v356 = vpack.c.b16 %v337, %v336
        %v357 = vpack.c.b16 %v339, %v338
        %v358 = vpack.c.b16 %v341, %v340
        %v359 = vpack.c.b16 %v343, %v342
        %v378 = vunpack.c.l.b16 %v268
        %v379 = vunpack.c.l.b16 %v269
        %v380 = vpack.c.b16 %v379, %v378
        %v384 = vunpack.c.l.b16 %v270
        %v385 = vunpack.c.l.b16 %v271
        %v386 = vpack.c.b16 %v385, %v384
        %v390 = vunpack.c.l.b16 %v272
        %v391 = vunpack.c.l.b16 %v273
        %v392 = vpack.c.b16 %v391, %v390
        %v396 = vunpack.c.l.b16 %v274
        %v397 = vunpack.c.l.b16 %v275
        %v398 = vpack.c.b16 %v397, %v396
        %v402 = vunpack.c.l.b16 %v276
        %v403 = vunpack.c.l.b16 %v277
        %v404 = vpack.c.b16 %v403, %v402
        %v408 = vunpack.c.l.b16 %v278
        %v409 = vunpack.c.l.b16 %v279
        %v410 = vpack.c.b16 %v409, %v408
        %v412 = vld [vmem:[#allocation5] sm:$0xf]
        %v413 = vld [vmem:[#allocation5 + $0x4] sm:$0xf]
        %v414 = vld [vmem:[#allocation5 + $0x8] sm:$0xf]
        %v415 = vld [vmem:[#allocation5 + $0xc] sm:$0xf]
        %v416 = vld [vmem:[#allocation5 + $0x10] sm:$0xf]
        %v417 = vld [vmem:[#allocation5 + $0x14] sm:$0xf]
        %v418 = vld [vmem:[#allocation5 + $0x18] sm:$0xf]
        %v419 = vld [vmem:[#allocation5 + $0x1c] sm:$0xf]
        %v420 = vld [vmem:[#allocation5 + $0x20] sm:$0xf]
        %v421 = vld [vmem:[#allocation5 + $0x24] sm:$0xf]
        %v422 = vld [vmem:[#allocation5 + $0x28] sm:$0xf]
        %v423 = vld [vmem:[#allocation5 + $0x2c] sm:$0xf]
        %v424 = vld [vmem:[#allocation5 + $0x30] sm:$0xf]
        %v425 = vld [vmem:[#allocation5 + $0x34] sm:$0xf]
        %v426 = vld [vmem:[#allocation5 + $0x38] sm:$0xf]
        %v427 = vld [vmem:[#allocation5 + $0x3c] sm:$0xf]
        %v428 = vld [vmem:[#allocation5 + $0x40] sm:$0xf]
        %v429 = vld [vmem:[#allocation5 + $0x44] sm:$0xf]
        %v430 = vld [vmem:[#allocation5 + $0x48] sm:$0xf]
        %v431 = vld [vmem:[#allocation5 + $0x4c] sm:$0xf]
        %v432 = vld [vmem:[#allocation5 + $0x50] sm:$0xf]
        %v433 = vld [vmem:[#allocation5 + $0x54] sm:$0xf]
        %v434 = vld [vmem:[#allocation5 + $0x58] sm:$0xf]
        %v435 = vld [vmem:[#allocation5 + $0x5c] sm:$0xf]
        %v436 = vld [vmem:[#allocation5 + $0x60] sm:$0xf]
        %v437 = vld [vmem:[#allocation5 + $0x64] sm:$0xf]
        %v438 = vld [vmem:[#allocation5 + $0x68] sm:$0xf]
        %v439 = vld [vmem:[#allocation5 + $0x6c] sm:$0xf]
        %v440 = vld [vmem:[#allocation5 + $0x70] sm:$0xf]
        %v441 = vld [vmem:[#allocation5 + $0x74] sm:$0xf]
        %v442 = vld [vmem:[#allocation5 + $0x78] sm:$0xf]
        %v443 = vld [vmem:[#allocation5 + $0x7c] sm:$0xf]
        %v444 = vld [vmem:[#allocation5 + $0x80] sm:$0xf]
        %v445 = vld [vmem:[#allocation5 + $0x84] sm:$0xf]
        %v446 = vld [vmem:[#allocation5 + $0x88] sm:$0xf]
        %v447 = vld [vmem:[#allocation5 + $0x8c] sm:$0xf]
        %v448 = vld [vmem:[#allocation5 + $0x90] sm:$0xf]
        %v449 = vld [vmem:[#allocation5 + $0x94] sm:$0xf]
        %v450 = vld [vmem:[#allocation5 + $0x98] sm:$0xf]
        %v451 = vld [vmem:[#allocation5 + $0x9c] sm:$0xf]
        %v452 = vld [vmem:[#allocation5 + $0xa0] sm:$0xf]
        %v453 = vld [vmem:[#allocation5 + $0xa4] sm:$0xf]
        %v454 = vld [vmem:[#allocation5 + $0xa8] sm:$0xf]
        %v455 = vld [vmem:[#allocation5 + $0xac] sm:$0xf]
        %v456 = vld [vmem:[#allocation5 + $0xb0] sm:$0xf]
        %v457 = vld [vmem:[#allocation5 + $0xb4] sm:$0xf]
        %v458 = vld [vmem:[#allocation5 + $0xb8] sm:$0xf]
        %v459 = vld [vmem:[#allocation5 + $0xbc] sm:$0xf]
        %v460 = vld [vmem:[#allocation5 + $0xc0] sm:$0xf]
        %v461 = vld [vmem:[#allocation5 + $0xc4] sm:$0xf]
        %v462 = vld [vmem:[#allocation5 + $0xc8] sm:$0xf]
        %v463 = vld [vmem:[#allocation5 + $0xcc] sm:$0xf]
        %v464 = vld [vmem:[#allocation5 + $0xd0] sm:$0xf]
        %v465 = vld [vmem:[#allocation5 + $0xd4] sm:$0xf]
        %v466 = vld [vmem:[#allocation5 + $0xd8] sm:$0xf]
        %v467 = vld [vmem:[#allocation5 + $0xdc] sm:$0xf]
        %v468 = vld [vmem:[#allocation5 + $0xe0] sm:$0xf]
        %v469 = vld [vmem:[#allocation5 + $0xe4] sm:$0xf]
        %v470 = vld [vmem:[#allocation5 + $0xe8] sm:$0xf]
        %v471 = vld [vmem:[#allocation5 + $0xec] sm:$0xf]
        %v472 = vld [vmem:[#allocation5 + $0xf0] sm:$0xf]
        %v473 = vld [vmem:[#allocation5 + $0xf4] sm:$0xf]
        %v474 = vld [vmem:[#allocation5 + $0xf8] sm:$0xf]
        %v475 = vld [vmem:[#allocation5 + $0xfc] sm:$0xf]
        %v476 = vld [vmem:[#allocation5 + $0x100] sm:$0xf]
        %v477 = vld [vmem:[#allocation5 + $0x104] sm:$0xf]
        %v478 = vld [vmem:[#allocation5 + $0x108] sm:$0xf]
        %v479 = vld [vmem:[#allocation5 + $0x10c] sm:$0xf]
        %v480 = vld [vmem:[#allocation5 + $0x110] sm:$0xf]
        %v481 = vld [vmem:[#allocation5 + $0x114] sm:$0xf]
        %v482 = vld [vmem:[#allocation5 + $0x118] sm:$0xf]
        %v483 = vld [vmem:[#allocation5 + $0x11c] sm:$0xf]
        %v484 = vld [vmem:[#allocation5 + $0x120] sm:$0xf]
        %v485 = vld [vmem:[#allocation5 + $0x124] sm:$0xf]
        %v486 = vld [vmem:[#allocation5 + $0x128] sm:$0xf]
        %v487 = vld [vmem:[#allocation5 + $0x12c] sm:$0xf]
        %v488 = vld [vmem:[#allocation5 + $0x130] sm:$0xf]
        %v489 = vld [vmem:[#allocation5 + $0x134] sm:$0xf]
        %v490 = vld [vmem:[#allocation5 + $0x138] sm:$0xf]
        %v491 = vld [vmem:[#allocation5 + $0x13c] sm:$0xf]
        %v492 = vld [vmem:[#allocation5 + $0x140] sm:$0xf]
        %v493 = vld [vmem:[#allocation5 + $0x144] sm:$0xf]
        %v494 = vld [vmem:[#allocation5 + $0x148] sm:$0xf]
        %v495 = vld [vmem:[#allocation5 + $0x14c] sm:$0xf]
        %v496 = vld [vmem:[#allocation5 + $0x150] sm:$0xf]
        %v497 = vld [vmem:[#allocation5 + $0x154] sm:$0xf]
        %v498 = vld [vmem:[#allocation5 + $0x158] sm:$0xf]
        %v499 = vld [vmem:[#allocation5 + $0x15c] sm:$0xf]
        %v500 = vld [vmem:[#allocation5 + $0x160] sm:$0xf]
        %v501 = vld [vmem:[#allocation5 + $0x164] sm:$0xf]
        %v502 = vld [vmem:[#allocation5 + $0x168] sm:$0xf]
        %v503 = vld [vmem:[#allocation5 + $0x16c] sm:$0xf]
        %v504 = vld [vmem:[#allocation5 + $0x170] sm:$0xf]
        %v505 = vld [vmem:[#allocation5 + $0x174] sm:$0xf]
        %v506 = vld [vmem:[#allocation5 + $0x178] sm:$0xf]
        %v507 = vld [vmem:[#allocation5 + $0x17c] sm:$0xf]
        %v508 = vld [vmem:[#allocation5 + $0x180] sm:$0xf]
        %v509 = vld [vmem:[#allocation5 + $0x184] sm:$0xf]
        %v510 = vld [vmem:[#allocation5 + $0x188] sm:$0xf]
        %v511 = vld [vmem:[#allocation5 + $0x18c] sm:$0xf]
        %v512 = vld [vmem:[#allocation5 + $0x190] sm:$0xf]
        %v513 = vld [vmem:[#allocation5 + $0x194] sm:$0xf]
        %v514 = vld [vmem:[#allocation5 + $0x198] sm:$0xf]
        %v515 = vld [vmem:[#allocation5 + $0x19c] sm:$0xf]
        %v516 = vld [vmem:[#allocation5 + $0x1a0] sm:$0xf]
        %v517 = vld [vmem:[#allocation5 + $0x1a4] sm:$0xf]
        %v518 = vld [vmem:[#allocation5 + $0x1a8] sm:$0xf]
        %v519 = vld [vmem:[#allocation5 + $0x1ac] sm:$0xf]
        %v520 = vld [vmem:[#allocation5 + $0x1b0] sm:$0xf]
        %v521 = vld [vmem:[#allocation5 + $0x1b4] sm:$0xf]
        %v522 = vld [vmem:[#allocation5 + $0x1b8] sm:$0xf]
        %v523 = vld [vmem:[#allocation5 + $0x1bc] sm:$0xf]
        %v524 = vld [vmem:[#allocation7] sm:$0x1]
        %v526 = vlaneseq
        %v527 = vshrl.u32 %v526, 7
        %v528 = vsub.s32 0, %v527
        %v529 = vrot.slane %v524, %v528
        %v643 = vunpack.c.l.b16 %v412
        %v644 = vunpack.c.l.b16 %v413
        %v645 = vunpack.c.l.b16 %v414
        %v646 = vunpack.c.l.b16 %v415
        %v647 = vunpack.c.l.b16 %v416
        %v648 = vunpack.c.l.b16 %v417
        %v649 = vunpack.c.l.b16 %v418
        %v650 = vunpack.c.l.b16 %v419
        %v651 = vunpack.c.l.b16 %v420
        %v652 = vunpack.c.l.b16 %v421
        %v653 = vunpack.c.l.b16 %v422
        %v654 = vunpack.c.l.b16 %v423
        %v655 = vunpack.c.l.b16 %v424
        %v656 = vunpack.c.l.b16 %v425
        %v657 = vunpack.c.l.b16 %v426
        %v658 = vunpack.c.l.b16 %v427
        %v659 = vunpack.c.l.b16 %v428
        %v660 = vunpack.c.l.b16 %v429
        %v661 = vunpack.c.l.b16 %v430
        %v662 = vunpack.c.l.b16 %v431
        %v663 = vunpack.c.l.b16 %v432
        %v664 = vunpack.c.l.b16 %v433
        %v665 = vunpack.c.l.b16 %v434
        %v666 = vunpack.c.l.b16 %v435
        %v667 = vunpack.c.l.b16 %v436
        %v668 = vunpack.c.l.b16 %v437
        %v669 = vunpack.c.l.b16 %v438
        %v670 = vunpack.c.l.b16 %v439
        %v671 = vunpack.c.l.b16 %v440
        %v672 = vunpack.c.l.b16 %v441
        %v673 = vunpack.c.l.b16 %v442
        %v674 = vunpack.c.l.b16 %v443
        %v675 = vunpack.c.l.b16 %v444
        %v676 = vunpack.c.l.b16 %v445
        %v677 = vunpack.c.l.b16 %v446
        %v678 = vunpack.c.l.b16 %v447
        %v679 = vunpack.c.l.b16 %v448
        %v680 = vunpack.c.l.b16 %v449
        %v681 = vunpack.c.l.b16 %v450
        %v682 = vunpack.c.l.b16 %v451
        %v683 = vunpack.c.l.b16 %v452
        %v684 = vunpack.c.l.b16 %v453
        %v685 = vunpack.c.l.b16 %v454
        %v686 = vunpack.c.l.b16 %v455
        %v687 = vunpack.c.l.b16 %v456
        %v688 = vunpack.c.l.b16 %v457
        %v689 = vunpack.c.l.b16 %v458
        %v690 = vunpack.c.l.b16 %v459
        %v691 = vunpack.c.l.b16 %v460
        %v692 = vunpack.c.l.b16 %v461
        %v693 = vunpack.c.l.b16 %v462
        %v694 = vunpack.c.l.b16 %v463
        %v695 = vunpack.c.l.b16 %v464
        %v696 = vunpack.c.l.b16 %v465
        %v697 = vunpack.c.l.b16 %v466
        %v698 = vunpack.c.l.b16 %v467
        %v699 = vunpack.c.l.b16 %v468
        %v700 = vunpack.c.l.b16 %v469
        %v701 = vunpack.c.l.b16 %v470
        %v702 = vunpack.c.l.b16 %v471
        %v703 = vunpack.c.l.b16 %v472
        %v704 = vunpack.c.l.b16 %v473
        %v705 = vunpack.c.l.b16 %v474
        %v706 = vunpack.c.l.b16 %v475
        %v707 = vunpack.c.l.b16 %v476
        %v708 = vunpack.c.l.b16 %v477
        %v709 = vunpack.c.l.b16 %v478
        %v710 = vunpack.c.l.b16 %v479
        %v711 = vunpack.c.l.b16 %v480
        %v712 = vunpack.c.l.b16 %v481
        %v713 = vunpack.c.l.b16 %v482
        %v714 = vunpack.c.l.b16 %v483
        %v715 = vunpack.c.l.b16 %v484
        %v716 = vunpack.c.l.b16 %v485
        %v717 = vunpack.c.l.b16 %v486
        %v718 = vunpack.c.l.b16 %v487
        %v719 = vunpack.c.l.b16 %v488
        %v720 = vunpack.c.l.b16 %v489
        %v721 = vunpack.c.l.b16 %v490
        %v722 = vunpack.c.l.b16 %v491
        %v723 = vunpack.c.l.b16 %v492
        %v724 = vunpack.c.l.b16 %v493
        %v725 = vunpack.c.l.b16 %v494
        %v726 = vunpack.c.l.b16 %v495
        %v727 = vunpack.c.l.b16 %v496
        %v728 = vunpack.c.l.b16 %v497
        %v729 = vunpack.c.l.b16 %v498
        %v730 = vunpack.c.l.b16 %v499
        %v731 = vunpack.c.l.b16 %v500
        %v732 = vunpack.c.l.b16 %v501
        %v733 = vunpack.c.l.b16 %v502
        %v734 = vunpack.c.l.b16 %v503
        %v735 = vunpack.c.l.b16 %v504
        %v736 = vunpack.c.l.b16 %v505
        %v737 = vunpack.c.l.b16 %v506
        %v738 = vunpack.c.l.b16 %v507
        %v739 = vunpack.c.l.b16 %v508
        %v740 = vunpack.c.l.b16 %v509
        %v741 = vunpack.c.l.b16 %v510
        %v742 = vunpack.c.l.b16 %v511
        %v743 = vunpack.c.l.b16 %v512
        %v744 = vunpack.c.l.b16 %v513
        %v745 = vunpack.c.l.b16 %v514
        %v746 = vunpack.c.l.b16 %v515
        %v747 = vunpack.c.l.b16 %v516
        %v748 = vunpack.c.l.b16 %v517
        %v749 = vunpack.c.l.b16 %v518
        %v750 = vunpack.c.l.b16 %v519
        %v751 = vunpack.c.l.b16 %v520
        %v752 = vunpack.c.l.b16 %v521
        %v753 = vunpack.c.l.b16 %v522
        %v754 = vunpack.c.l.b16 %v523
        %v755 = vpack.c.b16 %v644, %v643
        %v756 = vpack.c.b16 %v646, %v645
        %v757 = vpack.c.b16 %v648, %v647
        %v758 = vpack.c.b16 %v650, %v649
        %v759 = vpack.c.b16 %v652, %v651
        %v760 = vpack.c.b16 %v654, %v653
        %v761 = vpack.c.b16 %v656, %v655
        %v762 = vpack.c.b16 %v658, %v657
        %v763 = vpack.c.b16 %v660, %v659
        %v764 = vpack.c.b16 %v662, %v661
        %v765 = vpack.c.b16 %v664, %v663
        %v766 = vpack.c.b16 %v666, %v665
        %v767 = vpack.c.b16 %v668, %v667
        %v768 = vpack.c.b16 %v670, %v669
        %v769 = vpack.c.b16 %v672, %v671
        %v770 = vpack.c.b16 %v674, %v673
        %v771 = vpack.c.b16 %v676, %v675
        %v772 = vpack.c.b16 %v678, %v677
        %v773 = vpack.c.b16 %v680, %v679
        %v774 = vpack.c.b16 %v682, %v681
        %v775 = vpack.c.b16 %v684, %v683
        %v776 = vpack.c.b16 %v686, %v685
        %v777 = vpack.c.b16 %v688, %v687
        %v778 = vpack.c.b16 %v690, %v689
        %v779 = vpack.c.b16 %v692, %v691
        %v780 = vpack.c.b16 %v694, %v693
        %v781 = vpack.c.b16 %v696, %v695
        %v782 = vpack.c.b16 %v698, %v697
        %v783 = vpack.c.b16 %v700, %v699
        %v784 = vpack.c.b16 %v702, %v701
        %v785 = vpack.c.b16 %v704, %v703
        %v786 = vpack.c.b16 %v706, %v705
        %v787 = vpack.c.b16 %v708, %v707
        %v788 = vpack.c.b16 %v710, %v709
        %v789 = vpack.c.b16 %v712, %v711
        %v790 = vpack.c.b16 %v714, %v713
        %v791 = vpack.c.b16 %v716, %v715
        %v792 = vpack.c.b16 %v718, %v717
        %v793 = vpack.c.b16 %v720, %v719
        %v794 = vpack.c.b16 %v722, %v721
        %v795 = vpack.c.b16 %v724, %v723
        %v796 = vpack.c.b16 %v726, %v725
        %v797 = vpack.c.b16 %v728, %v727
        %v798 = vpack.c.b16 %v730, %v729
        %v799 = vpack.c.b16 %v732, %v731
        %v800 = vpack.c.b16 %v734, %v733
        %v801 = vpack.c.b16 %v736, %v735
        %v802 = vpack.c.b16 %v738, %v737
        %v803 = vpack.c.b16 %v740, %v739
        %v804 = vpack.c.b16 %v742, %v741
        %v805 = vpack.c.b16 %v744, %v743
        %v806 = vpack.c.b16 %v746, %v745
        %v807 = vpack.c.b16 %v748, %v747
        %v808 = vpack.c.b16 %v750, %v749
        %v809 = vpack.c.b16 %v752, %v751
        %v810 = vpack.c.b16 %v754, %v753
        %867 = vmatprep.subr.bf16.mxu0 0
        %868 = vmatpush1.bf16.msra.mxu0 %v755
        %869 = vmatprep.subr.bf16.mxu0 0
        %870 = vmatpush1.bf16.msra.mxu0 %v756
        %871 = vmatprep.subr.bf16.mxu0 0
        %872 = vmatpush1.bf16.msra.mxu0 %v757
        %873 = vmatprep.subr.bf16.mxu0 0
        %874 = vmatpush1.bf16.msra.mxu0 %v758
        %875 = vmatprep.subr.bf16.mxu0 0
        %876 = vmatpush1.bf16.msra.mxu0 %v759
        %877 = vmatprep.subr.bf16.mxu0 0
        %878 = vmatpush1.bf16.msra.mxu0 %v760
        %879 = vmatprep.subr.bf16.mxu0 0
        %880 = vmatpush1.bf16.msra.mxu0 %v761
        %881 = vmatprep.subr.bf16.mxu0 0
        %882 = vmatpush1.bf16.msra.mxu0 %v762
        %883 = vmatprep.subr.bf16.mxu0 0
        %884 = vmatpush1.bf16.msra.mxu0 %v763
        %885 = vmatprep.subr.bf16.mxu0 0
        %886 = vmatpush1.bf16.msra.mxu0 %v764
        %887 = vmatprep.subr.bf16.mxu0 0
        %888 = vmatpush1.bf16.msra.mxu0 %v765
        %889 = vmatprep.subr.bf16.mxu0 0
        %890 = vmatpush1.bf16.msra.mxu0 %v766
        %891 = vmatprep.subr.bf16.mxu0 0
        %892 = vmatpush1.bf16.msra.mxu0 %v767
        %893 = vmatprep.subr.bf16.mxu0 0
        %894 = vmatpush1.bf16.msra.mxu0 %v768
        %895 = vmatprep.subr.bf16.mxu0 0
        %896 = vmatpush1.bf16.msra.mxu0 %v769
        %897 = vmatprep.subr.bf16.mxu0 0
        %898 = vmatpush1.bf16.msra.mxu0 %v770
        %899 = vmatprep.mubr.bf16.mxu0 %v345
        %900 = vmatmul.mubr.bf16.gmra.mrb[0].mxu0 %v344
        %v901 = vpop.f32.mrb[0].mxu0
        %v902 = vadd.f32 %v529, %v901
        %v903 = vpop.f32.mrb[0].mxu0
        %v904 = vpop.f32.mrb[0].mxu0
        %v905 = vadd.f32 %v529, %v904
        %v906 = vpop.f32.mrb[0].mxu0
        %907 = vmatprep.mubr.bf16.mxu0 %v346
        %908 = vmatmul.mubr.bf16.gmra.mrb[0].mxu0 %v345
        %v909 = vpop.f32.mrb[0].mxu0
        %v910 = vadd.f32 %v529, %v909
        %v911 = vpop.f32.mrb[0].mxu0
        %v912 = vpop.f32.mrb[0].mxu0
        %v913 = vadd.f32 %v529, %v912
        %v914 = vpop.f32.mrb[0].mxu0
        %915 = vmatprep.mubr.bf16.mxu0 %v347
        %916 = vmatmul.mubr.bf16.gmra.mrb[0].mxu0 %v346
        %v917 = vpop.f32.mrb[0].mxu0
        %v918 = vadd.f32 %v529, %v917
        %v919 = vpop.f32.mrb[0].mxu0
        %v920 = vpop.f32.mrb[0].mxu0
        %v921 = vadd.f32 %v529, %v920
        %v922 = vpop.f32.mrb[0].mxu0
        %923 = vmatprep.mubr.bf16.mxu0 %v348
        %924 = vmatmul.mubr.bf16.gmra.mrb[0].mxu0 %v347
        %v925 = vpop.f32.mrb[0].mxu0
        %v926 = vadd.f32 %v529, %v925
        %v927 = vpop.f32.mrb[0].mxu0
        %v928 = vpop.f32.mrb[0].mxu0
        %v929 = vadd.f32 %v529, %v928
        %v930 = vpop.f32.mrb[0].mxu0
        %931 = vmatprep.mubr.bf16.mxu0 %v349
        %932 = vmatmul.mubr.bf16.gmra.mrb[0].mxu0 %v348
        %v933 = vpop.f32.mrb[0].mxu0
        %v934 = vadd.f32 %v529, %v933
        %v935 = vpop.f32.mrb[0].mxu0
        %v936 = vpop.f32.mrb[0].mxu0
        %v937 = vadd.f32 %v529, %v936
        %v938 = vpop.f32.mrb[0].mxu0
        %939 = vmatprep.mubr.bf16.mxu0 %v350
        %940 = vmatmul.mubr.bf16.gmra.mrb[0].mxu0 %v349
        %v941 = vpop.f32.mrb[0].mxu0
        %v942 = vadd.f32 %v529, %v941
        %v943 = vpop.f32.mrb[0].mxu0
        %v944 = vpop.f32.mrb[0].mxu0
        %v945 = vadd.f32 %v529, %v944
        %v946 = vpop.f32.mrb[0].mxu0
        %947 = vmatprep.mubr.bf16.mxu0 %v351
        %948 = vmatmul.mubr.bf16.gmra.mrb[0].mxu0 %v350
        %v949 = vpop.f32.mrb[0].mxu0
        %v950 = vadd.f32 %v529, %v949
        %v951 = vpop.f32.mrb[0].mxu0
        %v952 = vpop.f32.mrb[0].mxu0
        %v953 = vadd.f32 %v529, %v952
        %v954 = vpop.f32.mrb[0].mxu0
        %955 = vmatprep.mubr.bf16.mxu0 %v352
        %956 = vmatmul.mubr.bf16.gmra.mrb[0].mxu0 %v351
        %v957 = vpop.f32.mrb[0].mxu0
        %v958 = vadd.f32 %v529, %v957
        %v959 = vpop.f32.mrb[0].mxu0
        %v960 = vpop.f32.mrb[0].mxu0
        %v961 = vadd.f32 %v529, %v960
        %v962 = vpop.f32.mrb[0].mxu0
        %963 = vmatprep.mubr.bf16.mxu0 %v353
        %964 = vmatmul.mubr.bf16.gmra.mrb[0].mxu0 %v352
        %v965 = vpop.f32.mrb[0].mxu0
        %v966 = vadd.f32 %v529, %v965
        %v967 = vpop.f32.mrb[0].mxu0
        %v968 = vpop.f32.mrb[0].mxu0
        %v969 = vadd.f32 %v529, %v968
        %v970 = vpop.f32.mrb[0].mxu0
        %971 = vmatprep.mubr.bf16.mxu0 %v354
        %972 = vmatmul.mubr.bf16.gmra.mrb[0].mxu0 %v353
        %v973 = vpop.f32.mrb[0].mxu0
        %v974 = vadd.f32 %v529, %v973
        %v975 = vpop.f32.mrb[0].mxu0
        %v976 = vpop.f32.mrb[0].mxu0
        %v977 = vadd.f32 %v529, %v976
        %v978 = vpop.f32.mrb[0].mxu0
        %979 = vmatprep.mubr.bf16.mxu0 %v355
        %980 = vmatmul.mubr.bf16.gmra.mrb[0].mxu0 %v354
        %v981 = vpop.f32.mrb[0].mxu0
        %v982 = vadd.f32 %v529, %v981
        %v983 = vpop.f32.mrb[0].mxu0
        %v984 = vpop.f32.mrb[0].mxu0
        %v985 = vadd.f32 %v529, %v984
        %v986 = vpop.f32.mrb[0].mxu0
        %987 = vmatprep.mubr.bf16.mxu0 %v356
        %988 = vmatmul.mubr.bf16.gmra.mrb[0].mxu0 %v355
        %v989 = vpop.f32.mrb[0].mxu0
        %v990 = vadd.f32 %v529, %v989
        %v991 = vpop.f32.mrb[0].mxu0
        %v992 = vpop.f32.mrb[0].mxu0
        %v993 = vadd.f32 %v529, %v992
        %v994 = vpop.f32.mrb[0].mxu0
        %995 = vmatprep.mubr.bf16.mxu0 %v357
        %996 = vmatmul.mubr.bf16.gmra.mrb[0].mxu0 %v356
        %v997 = vpop.f32.mrb[0].mxu0
        %v998 = vadd.f32 %v529, %v997
        %v999 = vpop.f32.mrb[0].mxu0
        %v1000 = vpop.f32.mrb[0].mxu0
        %v1001 = vadd.f32 %v529, %v1000
        %v1002 = vpop.f32.mrb[0].mxu0
        %1003 = vmatprep.mubr.bf16.mxu0 %v358
        %1004 = vmatmul.mubr.bf16.gmra.mrb[0].mxu0 %v357
        %v1005 = vpop.f32.mrb[0].mxu0
        %v1006 = vadd.f32 %v529, %v1005
        %v1007 = vpop.f32.mrb[0].mxu0
        %v1008 = vpop.f32.mrb[0].mxu0
        %v1009 = vadd.f32 %v529, %v1008
        %v1010 = vpop.f32.mrb[0].mxu0
        %1011 = vmatprep.mubr.bf16.mxu0 %v359
        %1012 = vmatmul.mubr.bf16.gmra.mrb[0].mxu0 %v358
        %v1013 = vpop.f32.mrb[0].mxu0
        %v1014 = vadd.f32 %v529, %v1013
        %v1015 = vpop.f32.mrb[0].mxu0
        %v1016 = vpop.f32.mrb[0].mxu0
        %v1017 = vadd.f32 %v529, %v1016
        %v1018 = vpop.f32.mrb[0].mxu0
        %1019 = vmatprep.mubr.bf16.mxu0 %v380
        %1020 = vmatmul.mubr.bf16.gmra.mrb[0].mxu0 %v359
        %v1021 = vpop.f32.mrb[0].mxu0
        %v1022 = vadd.f32 %v529, %v1021
        %v1023 = vpop.f32.mrb[0].mxu0
        %v1024 = vpop.f32.mrb[0].mxu0
        %v1025 = vadd.f32 %v529, %v1024
        %v1026 = vpop.f32.mrb[0].mxu0
        %1027 = vdwg.mxu0
        %1028 = vmatprep.subr.bf16.mxu0 0
        %1029 = vmatpush1.bf16.msra.mxu0 %v771
        %1030 = vmatprep.subr.bf16.mxu0 0
        %1031 = vmatpush1.bf16.msra.mxu0 %v772
        %1032 = vmatprep.subr.bf16.mxu0 0
        %1033 = vmatpush1.bf16.msra.mxu0 %v773
        %1034 = vmatprep.subr.bf16.mxu0 0
        %1035 = vmatpush1.bf16.msra.mxu0 %v774
        %1036 = vmatprep.subr.bf16.mxu0 0
        %1037 = vmatpush1.bf16.msra.mxu0 %v775
        %1038 = vmatprep.subr.bf16.mxu0 0
        %1039 = vmatpush1.bf16.msra.mxu0 %v776
        %1040 = vmatprep.subr.bf16.mxu0 0
        %1041 = vmatpush1.bf16.msra.mxu0 %v777
        %1042 = vmatprep.subr.bf16.mxu0 0
        %1043 = vmatpush1.bf16.msra.mxu0 %v778
        %1044 = vmatprep.subr.bf16.mxu0 0
        %1045 = vmatpush1.bf16.msra.mxu0 %v779
        %1046 = vmatprep.subr.bf16.mxu0 0
        %1047 = vmatpush1.bf16.msra.mxu0 %v780
        %1048 = vmatprep.subr.bf16.mxu0 0
        %1049 = vmatpush1.bf16.msra.mxu0 %v781
        %1050 = vmatprep.subr.bf16.mxu0 0
        %1051 = vmatpush1.bf16.msra.mxu0 %v782
        %1052 = vmatprep.subr.bf16.mxu0 0
        %1053 = vmatpush1.bf16.msra.mxu0 %v783
        %1054 = vmatprep.subr.bf16.mxu0 0
        %1055 = vmatpush1.bf16.msra.mxu0 %v784
        %1056 = vmatprep.subr.bf16.mxu0 0
        %1057 = vmatpush1.bf16.msra.mxu0 %v785
        %1058 = vmatprep.subr.bf16.mxu0 0
        %1059 = vmatpush1.bf16.msra.mxu0 %v786
        %1060 = vmatprep.mubr.bf16.mxu0 %v347
        %1061 = vmatmul.mubr.bf16.gmra.mrb[0].mxu0 %v346
        %v1062 = vpop.f32.mrb[0].mxu0
        %v1063 = vadd.f32 %v902, %v1062
        %v1064 = vpop.f32.mrb[0].mxu0
        %v1065 = vpop.f32.mrb[0].mxu0
        %v1066 = vadd.f32 %v905, %v1065
        %v1067 = vpop.f32.mrb[0].mxu0
        %1068 = vmatprep.mubr.bf16.mxu0 %v348
        %1069 = vmatmul.mubr.bf16.gmra.mrb[0].mxu0 %v347
        %v1070 = vpop.f32.mrb[0].mxu0
        %v1071 = vadd.f32 %v910, %v1070
        %v1072 = vpop.f32.mrb[0].mxu0
        %v1073 = vpop.f32.mrb[0].mxu0
        %v1074 = vadd.f32 %v913, %v1073
        %v1075 = vpop.f32.mrb[0].mxu0
        %1076 = vmatprep.mubr.bf16.mxu0 %v349
        %1077 = vmatmul.mubr.bf16.gmra.mrb[0].mxu0 %v348
        %v1078 = vpop.f32.mrb[0].mxu0
        %v1079 = vadd.f32 %v918, %v1078
        %v1080 = vpop.f32.mrb[0].mxu0
        %v1081 = vpop.f32.mrb[0].mxu0
        %v1082 = vadd.f32 %v921, %v1081
        %v1083 = vpop.f32.mrb[0].mxu0
        %1084 = vmatprep.mubr.bf16.mxu0 %v350
        %1085 = vmatmul.mubr.bf16.gmra.mrb[0].mxu0 %v349
        %v1086 = vpop.f32.mrb[0].mxu0
        %v1087 = vadd.f32 %v926, %v1086
        %v1088 = vpop.f32.mrb[0].mxu0
        %v1089 = vpop.f32.mrb[0].mxu0
        %v1090 = vadd.f32 %v929, %v1089
        %v1091 = vpop.f32.mrb[0].mxu0
        %1092 = vmatprep.mubr.bf16.mxu0 %v351
        %1093 = vmatmul.mubr.bf16.gmra.mrb[0].mxu0 %v350
        %v1094 = vpop.f32.mrb[0].mxu0
        %v1095 = vadd.f32 %v934, %v1094
        %v1096 = vpop.f32.mrb[0].mxu0
        %v1097 = vpop.f32.mrb[0].mxu0
        %v1098 = vadd.f32 %v937, %v1097
        %v1099 = vpop.f32.mrb[0].mxu0
        %1100 = vmatprep.mubr.bf16.mxu0 %v352
        %1101 = vmatmul.mubr.bf16.gmra.mrb[0].mxu0 %v351
        %v1102 = vpop.f32.mrb[0].mxu0
        %v1103 = vadd.f32 %v942, %v1102
        %v1104 = vpop.f32.mrb[0].mxu0
        %v1105 = vpop.f32.mrb[0].mxu0
        %v1106 = vadd.f32 %v945, %v1105
        %v1107 = vpop.f32.mrb[0].mxu0
        %1108 = vmatprep.mubr.bf16.mxu0 %v353
        %1109 = vmatmul.mubr.bf16.gmra.mrb[0].mxu0 %v352
        %v1110 = vpop.f32.mrb[0].mxu0
        %v1111 = vadd.f32 %v950, %v1110
        %v1112 = vpop.f32.mrb[0].mxu0
        %v1113 = vpop.f32.mrb[0].mxu0
        %v1114 = vadd.f32 %v953, %v1113
        %v1115 = vpop.f32.mrb[0].mxu0
        %1116 = vmatprep.mubr.bf16.mxu0 %v354
        %1117 = vmatmul.mubr.bf16.gmra.mrb[0].mxu0 %v353
        %v1118 = vpop.f32.mrb[0].mxu0
        %v1119 = vadd.f32 %v958, %v1118
        %v1120 = vpop.f32.mrb[0].mxu0
        %v1121 = vpop.f32.mrb[0].mxu0
        %v1122 = vadd.f32 %v961, %v1121
        %v1123 = vpop.f32.mrb[0].mxu0
        %1124 = vmatprep.mubr.bf16.mxu0 %v355
        %1125 = vmatmul.mubr.bf16.gmra.mrb[0].mxu0 %v354
        %v1126 = vpop.f32.mrb[0].mxu0
        %v1127 = vadd.f32 %v966, %v1126
        %v1128 = vpop.f32.mrb[0].mxu0
        %v1129 = vpop.f32.mrb[0].mxu0
        %v1130 = vadd.f32 %v969, %v1129
        %v1131 = vpop.f32.mrb[0].mxu0
        %1132 = vmatprep.mubr.bf16.mxu0 %v356
        %1133 = vmatmul.mubr.bf16.gmra.mrb[0].mxu0 %v355
        %v1134 = vpop.f32.mrb[0].mxu0
        %v1135 = vadd.f32 %v974, %v1134
        %v1136 = vpop.f32.mrb[0].mxu0
        %v1137 = vpop.f32.mrb[0].mxu0
        %v1138 = vadd.f32 %v977, %v1137
        %v1139 = vpop.f32.mrb[0].mxu0
        %1140 = vmatprep.mubr.bf16.mxu0 %v357
        %1141 = vmatmul.mubr.bf16.gmra.mrb[0].mxu0 %v356
        %v1142 = vpop.f32.mrb[0].mxu0
        %v1143 = vadd.f32 %v982, %v1142
        %v1144 = vpop.f32.mrb[0].mxu0
        %v1145 = vpop.f32.mrb[0].mxu0
        %v1146 = vadd.f32 %v985, %v1145
        %v1147 = vpop.f32.mrb[0].mxu0
        %1148 = vmatprep.mubr.bf16.mxu0 %v358
        %1149 = vmatmul.mubr.bf16.gmra.mrb[0].mxu0 %v357
        %v1150 = vpop.f32.mrb[0].mxu0
        %v1151 = vadd.f32 %v990, %v1150
        %v1152 = vpop.f32.mrb[0].mxu0
        %v1153 = vpop.f32.mrb[0].mxu0
        %v1154 = vadd.f32 %v993, %v1153
        %v1155 = vpop.f32.mrb[0].mxu0
        %1156 = vmatprep.mubr.bf16.mxu0 %v359
        %1157 = vmatmul.mubr.bf16.gmra.mrb[0].mxu0 %v358
        %v1158 = vpop.f32.mrb[0].mxu0
        %v1159 = vadd.f32 %v998, %v1158
        %v1160 = vpop.f32.mrb[0].mxu0
        %v1161 = vpop.f32.mrb[0].mxu0
        %v1162 = vadd.f32 %v1001, %v1161
        %v1163 = vpop.f32.mrb[0].mxu0
        %1164 = vmatprep.mubr.bf16.mxu0 %v380
        %1165 = vmatmul.mubr.bf16.gmra.mrb[0].mxu0 %v359
        %v1166 = vpop.f32.mrb[0].mxu0
        %v1167 = vadd.f32 %v1006, %v1166
        %v1168 = vpop.f32.mrb[0].mxu0
        %v1169 = vpop.f32.mrb[0].mxu0
        %v1170 = vadd.f32 %v1009, %v1169
        %v1171 = vpop.f32.mrb[0].mxu0
        %1172 = vmatprep.mubr.bf16.mxu0 %v386
        %1173 = vmatmul.mubr.bf16.gmra.mrb[0].mxu0 %v380
        %v1174 = vpop.f32.mrb[0].mxu0
        %v1175 = vadd.f32 %v1014, %v1174
        %v1176 = vpop.f32.mrb[0].mxu0
        %v1177 = vpop.f32.mrb[0].mxu0
        %v1178 = vadd.f32 %v1017, %v1177
        %v1179 = vpop.f32.mrb[0].mxu0
        %1180 = vmatprep.mubr.bf16.mxu0 %v392
        %1181 = vmatmul.mubr.bf16.gmra.mrb[0].mxu0 %v386
        %v1182 = vpop.f32.mrb[0].mxu0
        %v1183 = vadd.f32 %v1022, %v1182
        %v1184 = vpop.f32.mrb[0].mxu0
        %v1185 = vpop.f32.mrb[0].mxu0
        %v1186 = vadd.f32 %v1025, %v1185
        %v1187 = vpop.f32.mrb[0].mxu0
        %1188 = vdwg.mxu0
        %1189 = vmatprep.subr.bf16.mxu0 0
        %1190 = vmatpush1.bf16.msra.mxu0 %v787
        %1191 = vmatprep.subr.bf16.mxu0 0
        %1192 = vmatpush1.bf16.msra.mxu0 %v788
        %1193 = vmatprep.subr.bf16.mxu0 0
        %1194 = vmatpush1.bf16.msra.mxu0 %v789
        %1195 = vmatprep.subr.bf16.mxu0 0
        %1196 = vmatpush1.bf16.msra.mxu0 %v790
        %1197 = vmatprep.subr.bf16.mxu0 0
        %1198 = vmatpush1.bf16.msra.mxu0 %v791
        %1199 = vmatprep.subr.bf16.mxu0 0
        %1200 = vmatpush1.bf16.msra.mxu0 %v792
        %1201 = vmatprep.subr.bf16.mxu0 0
        %1202 = vmatpush1.bf16.msra.mxu0 %v793
        %1203 = vmatprep.subr.bf16.mxu0 0
        %1204 = vmatpush1.bf16.msra.mxu0 %v794
        %1205 = vmatprep.subr.bf16.mxu0 0
        %1206 = vmatpush1.bf16.msra.mxu0 %v795
        %1207 = vmatprep.subr.bf16.mxu0 0
        %1208 = vmatpush1.bf16.msra.mxu0 %v796
        %1209 = vmatprep.subr.bf16.mxu0 0
        %1210 = vmatpush1.bf16.msra.mxu0 %v797
        %1211 = vmatprep.subr.bf16.mxu0 0
        %1212 = vmatpush1.bf16.msra.mxu0 %v798
        %1213 = vmatprep.subr.bf16.mxu0 0
        %1214 = vmatpush1.bf16.msra.mxu0 %v799
        %1215 = vmatprep.subr.bf16.mxu0 0
        %1216 = vmatpush1.bf16.msra.mxu0 %v800
        %1217 = vmatprep.subr.bf16.mxu0 0
        %1218 = vmatpush1.bf16.msra.mxu0 %v801
        %1219 = vmatprep.subr.bf16.mxu0 0
        %1220 = vmatpush1.bf16.msra.mxu0 %v802
        %1221 = vmatprep.mubr.bf16.mxu0 %v349
        %1222 = vmatmul.mubr.bf16.gmra.mrb[0].mxu0 %v348
        %v1223 = vpop.f32.mrb[0].mxu0
        %v1224 = vadd.f32 %v1063, %v1223
        %v1225 = vpop.f32.mrb[0].mxu0
        %v1226 = vpop.f32.mrb[0].mxu0
        %v1227 = vadd.f32 %v1066, %v1226
        %v1228 = vpop.f32.mrb[0].mxu0
        %1229 = vmatprep.mubr.bf16.mxu0 %v350
        %1230 = vmatmul.mubr.bf16.gmra.mrb[0].mxu0 %v349
        %v1231 = vpop.f32.mrb[0].mxu0
        %v1232 = vadd.f32 %v1071, %v1231
        %v1233 = vpop.f32.mrb[0].mxu0
        %v1234 = vpop.f32.mrb[0].mxu0
        %v1235 = vadd.f32 %v1074, %v1234
        %v1236 = vpop.f32.mrb[0].mxu0
        %1237 = vmatprep.mubr.bf16.mxu0 %v351
        %1238 = vmatmul.mubr.bf16.gmra.mrb[0].mxu0 %v350
        %v1239 = vpop.f32.mrb[0].mxu0
        %v1240 = vadd.f32 %v1079, %v1239
        %v1241 = vpop.f32.mrb[0].mxu0
        %v1242 = vpop.f32.mrb[0].mxu0
        %v1243 = vadd.f32 %v1082, %v1242
        %v1244 = vpop.f32.mrb[0].mxu0
        %1245 = vmatprep.mubr.bf16.mxu0 %v352
        %1246 = vmatmul.mubr.bf16.gmra.mrb[0].mxu0 %v351
        %v1247 = vpop.f32.mrb[0].mxu0
        %v1248 = vadd.f32 %v1087, %v1247
        %v1249 = vpop.f32.mrb[0].mxu0
        %v1250 = vpop.f32.mrb[0].mxu0
        %v1251 = vadd.f32 %v1090, %v1250
        %v1252 = vpop.f32.mrb[0].mxu0
        %1253 = vmatprep.mubr.bf16.mxu0 %v353
        %1254 = vmatmul.mubr.bf16.gmra.mrb[0].mxu0 %v352
        %v1255 = vpop.f32.mrb[0].mxu0
        %v1256 = vadd.f32 %v1095, %v1255
        %v1257 = vpop.f32.mrb[0].mxu0
        %v1258 = vpop.f32.mrb[0].mxu0
        %v1259 = vadd.f32 %v1098, %v1258
        %v1260 = vpop.f32.mrb[0].mxu0
        %1261 = vmatprep.mubr.bf16.mxu0 %v354
        %1262 = vmatmul.mubr.bf16.gmra.mrb[0].mxu0 %v353
        %v1263 = vpop.f32.mrb[0].mxu0
        %v1264 = vadd.f32 %v1103, %v1263
        %v1265 = vpop.f32.mrb[0].mxu0
        %v1266 = vpop.f32.mrb[0].mxu0
        %v1267 = vadd.f32 %v1106, %v1266
        %v1268 = vpop.f32.mrb[0].mxu0
        %1269 = vmatprep.mubr.bf16.mxu0 %v355
        %1270 = vmatmul.mubr.bf16.gmra.mrb[0].mxu0 %v354
        %v1271 = vpop.f32.mrb[0].mxu0
        %v1272 = vadd.f32 %v1111, %v1271
        %v1273 = vpop.f32.mrb[0].mxu0
        %v1274 = vpop.f32.mrb[0].mxu0
        %v1275 = vadd.f32 %v1114, %v1274
        %v1276 = vpop.f32.mrb[0].mxu0
        %1277 = vmatprep.mubr.bf16.mxu0 %v356
        %1278 = vmatmul.mubr.bf16.gmra.mrb[0].mxu0 %v355
        %v1279 = vpop.f32.mrb[0].mxu0
        %v1280 = vadd.f32 %v1119, %v1279
        %v1281 = vpop.f32.mrb[0].mxu0
        %v1282 = vpop.f32.mrb[0].mxu0
        %v1283 = vadd.f32 %v1122, %v1282
        %v1284 = vpop.f32.mrb[0].mxu0
        %1285 = vmatprep.mubr.bf16.mxu0 %v357
        %1286 = vmatmul.mubr.bf16.gmra.mrb[0].mxu0 %v356
        %v1287 = vpop.f32.mrb[0].mxu0
        %v1288 = vadd.f32 %v1127, %v1287
        %v1289 = vpop.f32.mrb[0].mxu0
        %v1290 = vpop.f32.mrb[0].mxu0
        %v1291 = vadd.f32 %v1130, %v1290
        %v1292 = vpop.f32.mrb[0].mxu0
        %1293 = vmatprep.mubr.bf16.mxu0 %v358
        %1294 = vmatmul.mubr.bf16.gmra.mrb[0].mxu0 %v357
        %v1295 = vpop.f32.mrb[0].mxu0
        %v1296 = vadd.f32 %v1135, %v1295
        %v1297 = vpop.f32.mrb[0].mxu0
        %v1298 = vpop.f32.mrb[0].mxu0
        %v1299 = vadd.f32 %v1138, %v1298
        %v1300 = vpop.f32.mrb[0].mxu0
        %1301 = vmatprep.mubr.bf16.mxu0 %v359
        %1302 = vmatmul.mubr.bf16.gmra.mrb[0].mxu0 %v358
        %v1303 = vpop.f32.mrb[0].mxu0
        %v1304 = vadd.f32 %v1143, %v1303
        %v1305 = vpop.f32.mrb[0].mxu0
        %v1306 = vpop.f32.mrb[0].mxu0
        %v1307 = vadd.f32 %v1146, %v1306
        %v1308 = vpop.f32.mrb[0].mxu0
        %1309 = vmatprep.mubr.bf16.mxu0 %v380
        %1310 = vmatmul.mubr.bf16.gmra.mrb[0].mxu0 %v359
        %v1311 = vpop.f32.mrb[0].mxu0
        %v1312 = vadd.f32 %v1151, %v1311
        %v1313 = vpop.f32.mrb[0].mxu0
        %v1314 = vpop.f32.mrb[0].mxu0
        %v1315 = vadd.f32 %v1154, %v1314
        %v1316 = vpop.f32.mrb[0].mxu0
        %1317 = vmatprep.mubr.bf16.mxu0 %v386
        %1318 = vmatmul.mubr.bf16.gmra.mrb[0].mxu0 %v380
        %v1319 = vpop.f32.mrb[0].mxu0
        %v1320 = vadd.f32 %v1159, %v1319
        %v1321 = vpop.f32.mrb[0].mxu0
        %v1322 = vpop.f32.mrb[0].mxu0
        %v1323 = vadd.f32 %v1162, %v1322
        %v1324 = vpop.f32.mrb[0].mxu0
        %1325 = vmatprep.mubr.bf16.mxu0 %v392
        %1326 = vmatmul.mubr.bf16.gmra.mrb[0].mxu0 %v386
        %v1327 = vpop.f32.mrb[0].mxu0
        %v1328 = vadd.f32 %v1167, %v1327
        %v1329 = vpop.f32.mrb[0].mxu0
        %v1330 = vpop.f32.mrb[0].mxu0
        %v1331 = vadd.f32 %v1170, %v1330
        %v1332 = vpop.f32.mrb[0].mxu0
        %1333 = vmatprep.mubr.bf16.mxu0 %v398
        %1334 = vmatmul.mubr.bf16.gmra.mrb[0].mxu0 %v392
        %v1335 = vpop.f32.mrb[0].mxu0
        %v1336 = vadd.f32 %v1175, %v1335
        %v1337 = vpop.f32.mrb[0].mxu0
        %v1338 = vpop.f32.mrb[0].mxu0
        %v1339 = vadd.f32 %v1178, %v1338
        %v1340 = vpop.f32.mrb[0].mxu0
        %1341 = vmatprep.mubr.bf16.mxu0 %v404
        %1342 = vmatmul.mubr.bf16.gmra.mrb[0].mxu0 %v398
        %v1343 = vpop.f32.mrb[0].mxu0
        %v1344 = vadd.f32 %v1183, %v1343
        %v1345 = vpop.f32.mrb[0].mxu0
        %v1346 = vpop.f32.mrb[0].mxu0
        %v1347 = vadd.f32 %v1186, %v1346
        %v1348 = vpop.f32.mrb[0].mxu0
        %1349 = vdwg.mxu0
        %1350 = vmatprep.subr.bf16.mxu0 0
        %1351 = vmatpush1.bf16.msra.mxu0 %v803
        %1352 = vmatprep.subr.bf16.mxu0 0
        %1353 = vmatpush1.bf16.msra.mxu0 %v804
        %1354 = vmatprep.subr.bf16.mxu0 0
        %1355 = vmatpush1.bf16.msra.mxu0 %v805
        %1356 = vmatprep.subr.bf16.mxu0 0
        %1357 = vmatpush1.bf16.msra.mxu0 %v806
        %1358 = vmatprep.subr.bf16.mxu0 0
        %1359 = vmatpush1.bf16.msra.mxu0 %v807
        %1360 = vmatprep.subr.bf16.mxu0 0
        %1361 = vmatpush1.bf16.msra.mxu0 %v808
        %1362 = vmatprep.subr.bf16.mxu0 0
        %1363 = vmatpush1.bf16.msra.mxu0 %v809
        %1364 = vmatprep.subr.bf16.mxu0 0
        %1365 = vmatpush1.bf16.msra.mxu0 %v810
        %1366 = vmatprep.subr.bf16.mxu0 0
        %1367 = vmatpush1.bf16.msra.mxu0 0
        %1368 = vmatprep.subr.bf16.mxu0 0
        %1369 = vmatpush1.bf16.msra.mxu0 0
        %1370 = vmatprep.subr.bf16.mxu0 0
        %1371 = vmatpush1.bf16.msra.mxu0 0
        %1372 = vmatprep.subr.bf16.mxu0 0
        %1373 = vmatpush1.bf16.msra.mxu0 0
        %1374 = vmatprep.subr.bf16.mxu0 0
        %1375 = vmatpush1.bf16.msra.mxu0 0
        %1376 = vmatprep.subr.bf16.mxu0 0
        %1377 = vmatpush1.bf16.msra.mxu0 0
        %1378 = vmatprep.subr.bf16.mxu0 0
        %1379 = vmatpush1.bf16.msra.mxu0 0
        %1380 = vmatprep.subr.bf16.mxu0 0
        %1381 = vmatpush1.bf16.msra.mxu0 0
        %1382 = vmatprep.mubr.bf16.mxu0 0
        %1383 = vmatmul.mubr.bf16.gmra.mrb[0].mxu0 %v350
        %v1384 = vpop.f32.mrb[0].mxu0
        %v1385 = vadd.f32 %v1224, %v1384
        %v1386 = vpop.f32.mrb[0].mxu0
        %v1387 = vpop.f32.mrb[0].mxu0
        %v1388 = vadd.f32 %v1227, %v1387
        %v1389 = vpop.f32.mrb[0].mxu0
        %1390 = vmatprep.mubr.bf16.mxu0 0
        %1391 = vmatmul.mubr.bf16.gmra.mrb[0].mxu0 %v351
        %v1392 = vpop.f32.mrb[0].mxu0
        %v1393 = vadd.f32 %v1232, %v1392
        %v1394 = vpop.f32.mrb[0].mxu0
        %v1395 = vpop.f32.mrb[0].mxu0
        %v1396 = vadd.f32 %v1235, %v1395
        %v1397 = vpop.f32.mrb[0].mxu0
        %1398 = vmatprep.mubr.bf16.mxu0 0
        %1399 = vmatmul.mubr.bf16.gmra.mrb[0].mxu0 %v352
        %v1400 = vpop.f32.mrb[0].mxu0
        %v1401 = vadd.f32 %v1240, %v1400
        %v1402 = vpop.f32.mrb[0].mxu0
        %v1403 = vpop.f32.mrb[0].mxu0
        %v1404 = vadd.f32 %v1243, %v1403
        %v1405 = vpop.f32.mrb[0].mxu0
        %1406 = vmatprep.mubr.bf16.mxu0 0
        %1407 = vmatmul.mubr.bf16.gmra.mrb[0].mxu0 %v353
        %v1408 = vpop.f32.mrb[0].mxu0
        %v1409 = vadd.f32 %v1248, %v1408
        %v1410 = vpop.f32.mrb[0].mxu0
        %v1411 = vpop.f32.mrb[0].mxu0
        %v1412 = vadd.f32 %v1251, %v1411
        %v1413 = vpop.f32.mrb[0].mxu0
        %1414 = vmatprep.mubr.bf16.mxu0 0
        %1415 = vmatmul.mubr.bf16.gmra.mrb[0].mxu0 %v354
        %v1416 = vpop.f32.mrb[0].mxu0
        %v1417 = vadd.f32 %v1256, %v1416
        %v1418 = vpop.f32.mrb[0].mxu0
        %v1419 = vpop.f32.mrb[0].mxu0
        %v1420 = vadd.f32 %v1259, %v1419
        %v1421 = vpop.f32.mrb[0].mxu0
        %1422 = vmatprep.mubr.bf16.mxu0 0
        %1423 = vmatmul.mubr.bf16.gmra.mrb[0].mxu0 %v355
        %v1424 = vpop.f32.mrb[0].mxu0
        %v1425 = vadd.f32 %v1264, %v1424
        %v1426 = vpop.f32.mrb[0].mxu0
        %v1427 = vpop.f32.mrb[0].mxu0
        %v1428 = vadd.f32 %v1267, %v1427
        %v1429 = vpop.f32.mrb[0].mxu0
        %1430 = vmatprep.mubr.bf16.mxu0 0
        %1431 = vmatmul.mubr.bf16.gmra.mrb[0].mxu0 %v356
        %v1432 = vpop.f32.mrb[0].mxu0
        %v1433 = vadd.f32 %v1272, %v1432
        %v1434 = vpop.f32.mrb[0].mxu0
        %v1435 = vpop.f32.mrb[0].mxu0
        %v1436 = vadd.f32 %v1275, %v1435
        %v1437 = vpop.f32.mrb[0].mxu0
        %1438 = vmatprep.mubr.bf16.mxu0 0
        %1439 = vmatmul.mubr.bf16.gmra.mrb[0].mxu0 %v357
        %v1440 = vpop.f32.mrb[0].mxu0
        %v1441 = vadd.f32 %v1280, %v1440
        %v1442 = vpop.f32.mrb[0].mxu0
        %v1443 = vpop.f32.mrb[0].mxu0
        %v1444 = vadd.f32 %v1283, %v1443
        %v1445 = vpop.f32.mrb[0].mxu0
        %1446 = vmatprep.mubr.bf16.mxu0 0
        %1447 = vmatmul.mubr.bf16.gmra.mrb[0].mxu0 %v358
        %v1448 = vpop.f32.mrb[0].mxu0
        %v1449 = vadd.f32 %v1288, %v1448
        %v1450 = vpop.f32.mrb[0].mxu0
        %v1451 = vpop.f32.mrb[0].mxu0
        %v1452 = vadd.f32 %v1291, %v1451
        %v1453 = vpop.f32.mrb[0].mxu0
        %1454 = vmatprep.mubr.bf16.mxu0 0
        %1455 = vmatmul.mubr.bf16.gmra.mrb[0].mxu0 %v359
        %v1456 = vpop.f32.mrb[0].mxu0
        %v1457 = vadd.f32 %v1296, %v1456
        %v1458 = vpop.f32.mrb[0].mxu0
        %v1459 = vpop.f32.mrb[0].mxu0
        %v1460 = vadd.f32 %v1299, %v1459
        %v1461 = vpop.f32.mrb[0].mxu0
        %1462 = vmatprep.mubr.bf16.mxu0 0
        %1463 = vmatmul.mubr.bf16.gmra.mrb[0].mxu0 %v380
        %v1464 = vpop.f32.mrb[0].mxu0
        %v1465 = vadd.f32 %v1304, %v1464
        %v1466 = vpop.f32.mrb[0].mxu0
        %v1467 = vpop.f32.mrb[0].mxu0
        %v1468 = vadd.f32 %v1307, %v1467
        %v1469 = vpop.f32.mrb[0].mxu0
        %1470 = vmatprep.mubr.bf16.mxu0 0
        %1471 = vmatmul.mubr.bf16.gmra.mrb[0].mxu0 %v386
        %v1472 = vpop.f32.mrb[0].mxu0
        %v1473 = vadd.f32 %v1312, %v1472
        %v1474 = vpop.f32.mrb[0].mxu0
        %v1475 = vpop.f32.mrb[0].mxu0
        %v1476 = vadd.f32 %v1315, %v1475
        %v1477 = vpop.f32.mrb[0].mxu0
        %1478 = vmatprep.mubr.bf16.mxu0 0
        %1479 = vmatmul.mubr.bf16.gmra.mrb[0].mxu0 %v392
        %v1480 = vpop.f32.mrb[0].mxu0
        %v1481 = vadd.f32 %v1320, %v1480
        %v1482 = vpop.f32.mrb[0].mxu0
        %v1483 = vpop.f32.mrb[0].mxu0
        %v1484 = vadd.f32 %v1323, %v1483
        %v1485 = vpop.f32.mrb[0].mxu0
        %1486 = vmatprep.mubr.bf16.mxu0 0
        %1487 = vmatmul.mubr.bf16.gmra.mrb[0].mxu0 %v398
        %v1488 = vpop.f32.mrb[0].mxu0
        %v1489 = vadd.f32 %v1328, %v1488
        %v1490 = vpop.f32.mrb[0].mxu0
        %v1491 = vpop.f32.mrb[0].mxu0
        %v1492 = vadd.f32 %v1331, %v1491
        %v1493 = vpop.f32.mrb[0].mxu0
        %1494 = vmatprep.mubr.bf16.mxu0 0
        %1495 = vmatmul.mubr.bf16.gmra.mrb[0].mxu0 %v404
        %v1496 = vpop.f32.mrb[0].mxu0
        %v1497 = vadd.f32 %v1336, %v1496
        %v1498 = vpop.f32.mrb[0].mxu0
        %v1499 = vpop.f32.mrb[0].mxu0
        %v1500 = vadd.f32 %v1339, %v1499
        %v1501 = vpop.f32.mrb[0].mxu0
        %1502 = vmatprep.mubr.bf16.mxu0 0
        %1503 = vmatmul.mubr.bf16.gmra.mrb[0].mxu0 %v410
        %v1504 = vpop.f32.mrb[0].mxu0
        %v1505 = vadd.f32 %v1344, %v1504
        %v1506 = vpop.f32.mrb[0].mxu0
        %v1507 = vpop.f32.mrb[0].mxu0
        %v1508 = vadd.f32 %v1347, %v1507
        %v1509 = vpop.f32.mrb[0].mxu0
        %1510 = vdwg.mxu0
        %v1511 = vmax.f32 %v1385, 0.0
        %v1512 = vmax.f32 %v1388, 0.0
        %v1513 = vmax.f32 %v1393, 0.0
        %v1514 = vmax.f32 %v1396, 0.0
        %v1515 = vmax.f32 %v1401, 0.0
        %v1516 = vmax.f32 %v1404, 0.0
        %v1517 = vmax.f32 %v1409, 0.0
        %v1518 = vmax.f32 %v1412, 0.0
        %v1519 = vmax.f32 %v1417, 0.0
        %v1520 = vmax.f32 %v1420, 0.0
        %v1521 = vmax.f32 %v1425, 0.0
        %v1522 = vmax.f32 %v1428, 0.0
        %v1523 = vmax.f32 %v1433, 0.0
        %v1524 = vmax.f32 %v1436, 0.0
        %v1525 = vmax.f32 %v1441, 0.0
        %v1526 = vmax.f32 %v1444, 0.0
        %v1527 = vmax.f32 %v1449, 0.0
        %v1528 = vmax.f32 %v1452, 0.0
        %v1529 = vmax.f32 %v1457, 0.0
        %v1530 = vmax.f32 %v1460, 0.0
        %v1531 = vmax.f32 %v1465, 0.0
        %v1532 = vmax.f32 %v1468, 0.0
        %v1533 = vmax.f32 %v1473, 0.0
        %v1534 = vmax.f32 %v1476, 0.0
        %v1535 = vmax.f32 %v1481, 0.0
        %v1536 = vmax.f32 %v1484, 0.0
        %v1537 = vmax.f32 %v1489, 0.0
        %v1538 = vmax.f32 %v1492, 0.0
        %v1539 = vmax.f32 %v1497, 0.0
        %v1540 = vmax.f32 %v1500, 0.0
        %v1541 = vmax.f32 %v1505, 0.0
        %v1542 = vmax.f32 %v1508, 0.0
        %v1543 = vpack.c.bf16 %v1512, %v1511
        %v1544 = vpack.c.bf16 %v1514, %v1513
        %v1545 = vpack.c.bf16 %v1516, %v1515
        %v1546 = vpack.c.bf16 %v1518, %v1517
        %v1547 = vpack.c.bf16 %v1520, %v1519
        %v1548 = vpack.c.bf16 %v1522, %v1521
        %v1549 = vpack.c.bf16 %v1524, %v1523
        %v1550 = vpack.c.bf16 %v1526, %v1525
        %v1551 = vpack.c.bf16 %v1528, %v1527
        %v1552 = vpack.c.bf16 %v1530, %v1529
        %v1553 = vpack.c.bf16 %v1532, %v1531
        %v1554 = vpack.c.bf16 %v1534, %v1533
        %v1555 = vpack.c.bf16 %v1536, %v1535
        %v1556 = vpack.c.bf16 %v1538, %v1537
        %v1557 = vpack.c.bf16 %v1540, %v1539
        %v1558 = vpack.c.bf16 %v1542, %v1541
        %v1575 = vunpack.c.l.b16 %v1543
        %v1576 = vunpack.c.h.b16 %v1543
        %v1577 = vunpack.c.l.b16 %v1544
        %v1578 = vunpack.c.h.b16 %v1544
        %v1579 = vunpack.c.l.b16 %v1545
        %v1580 = vunpack.c.h.b16 %v1545
        %v1581 = vunpack.c.l.b16 %v1546
        %v1582 = vunpack.c.h.b16 %v1546
        %v1583 = vunpack.c.l.b16 %v1547
        %v1584 = vunpack.c.h.b16 %v1547
        %v1585 = vunpack.c.l.b16 %v1548
        %v1586 = vunpack.c.h.b16 %v1548
        %v1587 = vunpack.c.l.b16 %v1549
        %v1588 = vunpack.c.h.b16 %v1549
        %v1589 = vunpack.c.l.b16 %v1550
        %v1590 = vunpack.c.h.b16 %v1550
        %v1591 = vunpack.c.l.b16 %v1551
        %v1592 = vunpack.c.h.b16 %v1551
        %v1593 = vunpack.c.l.b16 %v1552
        %v1594 = vunpack.c.h.b16 %v1552
        %v1595 = vunpack.c.l.b16 %v1553
        %v1596 = vunpack.c.h.b16 %v1553
        %v1597 = vunpack.c.l.b16 %v1554
        %v1598 = vunpack.c.h.b16 %v1554
        %v1599 = vunpack.c.l.b16 %v1555
        %v1600 = vunpack.c.h.b16 %v1555
        %v1601 = vunpack.c.l.b16 %v1556
        %v1602 = vunpack.c.h.b16 %v1556
        %v1603 = vunpack.c.l.b16 %v1557
        %v1604 = vunpack.c.h.b16 %v1557
        %v1605 = vunpack.c.l.b16 %v1558
        %v1606 = vunpack.c.h.b16 %v1558
        %v1607 = vpack.c.b16 %v1575, %v1575
        %v1608 = vpack.c.b16 %v1576, %v1576
        %v1609 = vpack.c.b16 %v1577, %v1577
        %v1610 = vpack.c.b16 %v1578, %v1578
        %v1611 = vpack.c.b16 %v1579, %v1579
        %v1612 = vpack.c.b16 %v1580, %v1580
        %v1613 = vpack.c.b16 %v1581, %v1581
        %v1614 = vpack.c.b16 %v1582, %v1582
        %v1615 = vpack.c.b16 %v1583, %v1583
        %v1616 = vpack.c.b16 %v1584, %v1584
        %v1617 = vpack.c.b16 %v1585, %v1585
        %v1618 = vpack.c.b16 %v1586, %v1586
        %v1619 = vpack.c.b16 %v1587, %v1587
        %v1620 = vpack.c.b16 %v1588, %v1588
        %v1621 = vpack.c.b16 %v1589, %v1589
        %v1622 = vpack.c.b16 %v1590, %v1590
        %v1623 = vpack.c.b16 %v1591, %v1591
        %v1624 = vpack.c.b16 %v1592, %v1592
        %v1625 = vpack.c.b16 %v1593, %v1593
        %v1626 = vpack.c.b16 %v1594, %v1594
        %v1627 = vpack.c.b16 %v1595, %v1595
        %v1628 = vpack.c.b16 %v1596, %v1596
        %v1629 = vpack.c.b16 %v1597, %v1597
        %v1630 = vpack.c.b16 %v1598, %v1598
        %v1631 = vpack.c.b16 %v1599, %v1599
        %v1632 = vpack.c.b16 %v1600, %v1600
        %v1633 = vpack.c.b16 %v1601, %v1601
        %v1634 = vpack.c.b16 %v1602, %v1602
        %v1635 = vpack.c.b16 %v1603, %v1603
        %v1636 = vpack.c.b16 %v1604, %v1604
        %v1637 = vpack.c.b16 %v1605, %v1605
        %v1638 = vpack.c.b16 %v1606, %v1606
        %1671 = vst [vmem:[%s229] sm:$0xf] %v1607
        %1672 = vst [vmem:[%s229 + $0x4] sm:$0xf] %v1608
        %1673 = vst [vmem:[%s229 + $0x8] sm:$0xf] %v1609
        %1674 = vst [vmem:[%s229 + $0xc] sm:$0xf] %v1610
        %1675 = vst [vmem:[%s229 + $0x10] sm:$0xf] %v1611
        %1676 = vst [vmem:[%s229 + $0x14] sm:$0xf] %v1612
        %1677 = vst [vmem:[%s229 + $0x18] sm:$0xf] %v1613
        %1678 = vst [vmem:[%s229 + $0x1c] sm:$0xf] %v1614
        %1679 = vst [vmem:[%s229 + $0x20] sm:$0xf] %v1615
        %1680 = vst [vmem:[%s229 + $0x24] sm:$0xf] %v1616
        %1681 = vst [vmem:[%s229 + $0x28] sm:$0xf] %v1617
        %1682 = vst [vmem:[%s229 + $0x2c] sm:$0xf] %v1618
        %1683 = vst [vmem:[%s229 + $0x30] sm:$0xf] %v1619
        %1684 = vst [vmem:[%s229 + $0x34] sm:$0xf] %v1620
        %1685 = vst [vmem:[%s229 + $0x38] sm:$0xf] %v1621
        %1686 = vst [vmem:[%s229 + $0x3c] sm:$0xf] %v1622
        %1687 = vst [vmem:[%s229 + $0x40] sm:$0xf] %v1623
        %1688 = vst [vmem:[%s229 + $0x44] sm:$0xf] %v1624
        %1689 = vst [vmem:[%s229 + $0x48] sm:$0xf] %v1625
        %1690 = vst [vmem:[%s229 + $0x4c] sm:$0xf] %v1626
        %1691 = vst [vmem:[%s229 + $0x50] sm:$0xf] %v1627
        %1692 = vst [vmem:[%s229 + $0x54] sm:$0xf] %v1628
        %1693 = vst [vmem:[%s229 + $0x58] sm:$0xf] %v1629
        %1694 = vst [vmem:[%s229 + $0x5c] sm:$0xf] %v1630
        %1695 = vst [vmem:[%s229 + $0x60] sm:$0xf] %v1631
        %1696 = vst [vmem:[%s229 + $0x64] sm:$0xf] %v1632
        %1697 = vst [vmem:[%s229 + $0x68] sm:$0xf] %v1633
        %1698 = vst [vmem:[%s229 + $0x6c] sm:$0xf] %v1634
        %1699 = vst [vmem:[%s229 + $0x70] sm:$0xf] %v1635
        %1700 = vst [vmem:[%s229 + $0x74] sm:$0xf] %v1636
        %1701 = vst [vmem:[%s229 + $0x78] sm:$0xf] %v1637
        %1702 = vst [vmem:[%s229 + $0x7c] sm:$0xf] %v1638
        %s1703 = sand.u32 %s111, 1
        %s1704 = scalar_lea.sflag [#allocation4], %s1703
        %s1705 = sand.u32 %s111, 1
        %s1706 = smul.addr %s1705, 128
        %s1707 = scalar_lea.vmem [#allocation8], %s1706
        // Predicated region
        $region45: #{inceptionB_forward.10} parent=31 // pred_check
          %p1708 = pneg %p121
        $region46: #{inceptionB_forward.10} parent=31 // pred_check_branch
          %1710 = sbr.rel (%p1708) target = $region48
        $region47: #{inceptionB_forward.10} parent=31 // pred_region
          %s1711 = smul.u32 16, %s26
          %s1713 = ssub.s32 2048, 2048
          %1714 = vsyncadd %s1704, %s1713
          %s1715 = smul.addr %s1711, 2
          %s1716 = smul.addr %s25, 32
          %s1717 = sadd.s32 %s1715, %s1716
          %s1718 = smul.addr %s1717, 64
          %s1719 = scalar_lea.hbm %s3, %s1718
          %s1720 = sshll.u32 %s1707, 4
          %s1721 = int_to_ptr.vmem [resolvable:$true] %s1720
          %1726 = dma.vmem_to_hbm [thread:$0]  %s1721, 2048, %s1719, %s1704, 64, 64, 4
        $region48: #{inceptionB_forward.10} parent=31 // pred_fallthru
          _
      $region32: #{inceptionB_forward.10} parent=5 // pred_fallthru
        _
      %p1727 = scmp.le.s32.totalorder 2, %s16
      // Predicated region
      $region49: #{inceptionB_forward.10} parent=5 // pred_check
        %p1728 = pneg %p1727
      $region50: #{inceptionB_forward.10} parent=5 // pred_check_branch
        %1730 = sbr.rel (%p1728) target = $region52
      $region51: #{inceptionB_forward.10} parent=5 // pred_region
        %s1731 = ssub.s32 %s16, 2
        // Predicated region
        $region53: #{inceptionB_forward.10} parent=51 // pred_check
          %p1732 = pneg %p127
        $region54: #{inceptionB_forward.10} parent=51 // pred_check_branch
          %1734 = sbr.rel (%p1732) target = $region56
        $region55: #{inceptionB_forward.10} parent=51 // pred_region
          %s1735 = sand.u32 %s112, 1
          %s1736 = scalar_lea.sflag [#allocation4], %s1735
          %s1737 = sand.u32 %s112, 1
          %s1738 = smul.addr %s1737, 128
          %s1739 = scalar_lea.vmem [#allocation8], %s1738
          %1740 = dma.done %s1736, 2048
        $region56: #{inceptionB_forward.10} parent=51 // pred_fallthru
          _
      $region52: #{inceptionB_forward.10} parent=5 // pred_fallthru
        _
    $region6: #{inceptionB_forward.10} parent=1 // loop_footer
      %s20 = sadd.s32 1, %s16
    $region7: #{inceptionB_forward.10} parent=1 // loop_footer_branch
      %15 = sbr.rel target = $region3
    $region8: #{inceptionB_forward.10} parent=1 // loop_exit
      _
    %1741 = vsyncpa [#allocation3], 1
    %s1742 = scalar_lea.sflag [#allocation3], 1
    %1743 = vsyncpa %s1742, 1
    %1744 = vsyncpa [#allocation6], 1
    %1745 = vsyncpa [#allocation4], 1
    %s1746 = scalar_lea.sflag [#allocation4], 1
    %1747 = vsyncpa %s1746, 1

// kernel: inceptionB_forward.8
$region0: #{inceptionB_forward.8}
  #allocation0 [shape = 'u32[]', space=smem, size = 0x4, offset = 0x4, fixed_abs, tag = 'smem constant byte address 0x4 - core index']
  #allocation1 [shape = 'u32[144,128]{1,0:T(1,128)}', space=vmem, size = 0x12000, scoped, tag = 'internal scratch']
  %s0 = inlined_call_operand.hbm [shape: bf16[512,128], index: 0, kind: input, shape index: {}]
  %s1 = inlined_call_operand.hbm [shape: bf16[128,384], index: 1, kind: input, shape index: {}]
  %s2 = inlined_call_operand.hbm [shape: f32[1,384], index: 2, kind: input, shape index: {}]
  %s3 = inlined_call_operand.hbm [shape: bf16[512,128], index: 3, kind: output, shape index: {0}]
  %s4 = inlined_call_operand.hbm [shape: bf16[512,128], index: 4, kind: output, shape index: {1}]
  %s5 = inlined_call_operand.hbm [shape: bf16[512,128], index: 5, kind: output, shape index: {2}]
  %6 = xla_tuple %s3, %s4, %s5
  %s7 = sld [smem:[#allocation0]]
  $region50: #{inceptionB_forward.8} parent=0
    _
  %s9 = ssub.s32 1, %s7
  %s10 = scalar_select 0, %s9, %s7
  $region1: #{inceptionB_forward.8} parent=0
    #allocation2 [shape = 'u8[131072]{0}', space=vmem, size = 0x20000, scoped, tag = 'input window, operand 0, single buffered']
    #allocation3 [shape = 's32[1]{0}', space=sflag, size = 0x4, scoped, tag = 'scoped memory for inceptionB_forward.8']
    #allocation4 [shape = 's32[1]{0}', space=sflag, size = 0x4, scoped, tag = 'scoped memory for inceptionB_forward.8']
    #allocation5 [shape = 'u8[98304]{0}', space=vmem, size = 0x18000, scoped, tag = 'input window, operand 1, single buffered']
    #allocation6 [shape = 's32[1]{0}', space=sflag, size = 0x4, scoped, tag = 'scoped memory for inceptionB_forward.8']
    #allocation7 [shape = 'u8[1536]{0}', space=vmem, size = 0x800, scoped, tag = 'input window, operand 2, single buffered']
    #allocation8 [shape = 'u8[131072]{0}', space=vmem, size = 0x20000, scoped, tag = 'output window, operand 0, single buffered']
    #allocation9 [shape = 'u8[131072]{0}', space=vmem, size = 0x20000, scoped, tag = 'output window, operand 1, single buffered']
    #allocation10 [shape = 's32[1]{0}', space=sflag, size = 0x4, scoped, tag = 'scoped memory for inceptionB_forward.8']
    #allocation11 [shape = 'u8[131072]{0}', space=vmem, size = 0x20000, scoped, tag = 'output window, operand 2, single buffered']
    %11 = vsyncpa [#allocation3], 0
    %12 = vsyncpa [#allocation6], 0
    %13 = vsyncpa [#allocation4], 0
    %14 = vsyncpa [#allocation10], 0
    // Predicated region
    $region2: #{inceptionB_forward.8} parent=1 // pred_check
      _
    $region3: #{inceptionB_forward.8} parent=1 // pred_check_branch
      %16 = sbr.rel (0) target = $region5
    $region4: #{inceptionB_forward.8} parent=1 // pred_region
      %s18 = ssub.s32 4096, 4096
      %19 = vsyncadd [#allocation3], %s18
      %s20 = sshll.u32 [#allocation2], 4
      %s21 = int_to_ptr.vmem [resolvable:$true] %s20
      %26 = dma.hbm_to_vmem [thread:$0]  %s0, 4096, %s21, [#allocation3], 64, 64, 4
    $region5: #{inceptionB_forward.8} parent=1 // pred_fallthru
      _
    // Predicated region
    $region6: #{inceptionB_forward.8} parent=1 // pred_check
      _
    $region7: #{inceptionB_forward.8} parent=1 // pred_check_branch
      %28 = sbr.rel (0) target = $region9
    $region8: #{inceptionB_forward.8} parent=1 // pred_region
      %s30 = ssub.s32 3072, 3072
      %31 = vsyncadd [#allocation6], %s30
      %s32 = sshll.u32 [#allocation5], 4
      %s33 = int_to_ptr.vmem [resolvable:$true] %s32
      %38 = dma.hbm_to_vmem [thread:$0]  %s1, 3072, %s33, [#allocation6], 192, 192, 12
    $region9: #{inceptionB_forward.8} parent=1 // pred_fallthru
      _
    // Predicated region
    $region10: #{inceptionB_forward.8} parent=1 // pred_check
      _
    $region11: #{inceptionB_forward.8} parent=1 // pred_check_branch
      %40 = sbr.rel (0) target = $region13
    $region12: #{inceptionB_forward.8} parent=1 // pred_region
      %s42 = ssub.s32 48, 48
      %43 = vsyncadd [#allocation6], %s42
      %s45 = sshll.u32 [#allocation7], 4
      %s46 = int_to_ptr.vmem [resolvable:$true] %s45
      %48 = dma.hbm_to_vmem [thread:$0]  %s2, 48, %s46, [#allocation6]
    $region13: #{inceptionB_forward.8} parent=1 // pred_fallthru
      _
    // Predicated region
    $region14: #{inceptionB_forward.8} parent=1 // pred_check
      _
    $region15: #{inceptionB_forward.8} parent=1 // pred_check_branch
      %50 = sbr.rel (0) target = $region17
    $region16: #{inceptionB_forward.8} parent=1 // pred_region
      %51 = dma.done [#allocation3], 4096
    $region17: #{inceptionB_forward.8} parent=1 // pred_fallthru
      _
    // Predicated region
    $region18: #{inceptionB_forward.8} parent=1 // pred_check
      _
    $region19: #{inceptionB_forward.8} parent=1 // pred_check_branch
      %53 = sbr.rel (0) target = $region21
    $region20: #{inceptionB_forward.8} parent=1 // pred_region
      %54 = dma.done [#allocation6], 3072
    $region21: #{inceptionB_forward.8} parent=1 // pred_fallthru
      _
    // Predicated region
    $region22: #{inceptionB_forward.8} parent=1 // pred_check
      _
    $region23: #{inceptionB_forward.8} parent=1 // pred_check_branch
      %56 = sbr.rel (0) target = $region25
    $region24: #{inceptionB_forward.8} parent=1 // pred_region
      %57 = dma.done [#allocation6], 48
    $region25: #{inceptionB_forward.8} parent=1 // pred_fallthru
      _
    %v59 = vld [vmem:[#allocation2] sm:$0xf]
    %v60 = vld [vmem:[#allocation2 + $0x4] sm:$0xf]
    %v61 = vld [vmem:[#allocation2 + $0x8] sm:$0xf]
    %v62 = vld [vmem:[#allocation2 + $0xc] sm:$0xf]
    %v63 = vld [vmem:[#allocation2 + $0x10] sm:$0xf]
    %v64 = vld [vmem:[#allocation2 + $0x14] sm:$0xf]
    %v65 = vld [vmem:[#allocation2 + $0x18] sm:$0xf]
    %v66 = vld [vmem:[#allocation2 + $0x1c] sm:$0xf]
    %v67 = vld [vmem:[#allocation2 + $0x20] sm:$0xf]
    %v68 = vld [vmem:[#allocation2 + $0x24] sm:$0xf]
    %v69 = vld [vmem:[#allocation2 + $0x28] sm:$0xf]
    %v70 = vld [vmem:[#allocation2 + $0x2c] sm:$0xf]
    %v71 = vld [vmem:[#allocation2 + $0x30] sm:$0xf]
    %v72 = vld [vmem:[#allocation2 + $0x34] sm:$0xf]
    %v73 = vld [vmem:[#allocation2 + $0x38] sm:$0xf]
    %v74 = vld [vmem:[#allocation2 + $0x3c] sm:$0xf]
    %v75 = vld [vmem:[#allocation2 + $0x40] sm:$0xf]
    %v76 = vld [vmem:[#allocation2 + $0x44] sm:$0xf]
    %v77 = vld [vmem:[#allocation2 + $0x48] sm:$0xf]
    %v78 = vld [vmem:[#allocation2 + $0x4c] sm:$0xf]
    %v79 = vld [vmem:[#allocation2 + $0x50] sm:$0xf]
    %v80 = vld [vmem:[#allocation2 + $0x54] sm:$0xf]
    %v81 = vld [vmem:[#allocation2 + $0x58] sm:$0xf]
    %v82 = vld [vmem:[#allocation2 + $0x5c] sm:$0xf]
    %v83 = vld [vmem:[#allocation2 + $0x60] sm:$0xf]
    %v84 = vld [vmem:[#allocation2 + $0x64] sm:$0xf]
    %v85 = vld [vmem:[#allocation2 + $0x68] sm:$0xf]
    %v86 = vld [vmem:[#allocation2 + $0x6c] sm:$0xf]
    %v87 = vld [vmem:[#allocation2 + $0x70] sm:$0xf]
    %v88 = vld [vmem:[#allocation2 + $0x74] sm:$0xf]
    %v89 = vld [vmem:[#allocation2 + $0x78] sm:$0xf]
    %v90 = vld [vmem:[#allocation2 + $0x7c] sm:$0xf]
    %v91 = vld [vmem:[#allocation2 + $0x80] sm:$0xf]
    %v92 = vld [vmem:[#allocation2 + $0x84] sm:$0xf]
    %v93 = vld [vmem:[#allocation2 + $0x88] sm:$0xf]
    %v94 = vld [vmem:[#allocation2 + $0x8c] sm:$0xf]
    %v95 = vld [vmem:[#allocation2 + $0x90] sm:$0xf]
    %v96 = vld [vmem:[#allocation2 + $0x94] sm:$0xf]
    %v97 = vld [vmem:[#allocation2 + $0x98] sm:$0xf]
    %v98 = vld [vmem:[#allocation2 + $0x9c] sm:$0xf]
    %v99 = vld [vmem:[#allocation2 + $0xa0] sm:$0xf]
    %v100 = vld [vmem:[#allocation2 + $0xa4] sm:$0xf]
    %v101 = vld [vmem:[#allocation2 + $0xa8] sm:$0xf]
    %v102 = vld [vmem:[#allocation2 + $0xac] sm:$0xf]
    %v103 = vld [vmem:[#allocation2 + $0xb0] sm:$0xf]
    %v104 = vld [vmem:[#allocation2 + $0xb4] sm:$0xf]
    %v105 = vld [vmem:[#allocation2 + $0xb8] sm:$0xf]
    %v106 = vld [vmem:[#allocation2 + $0xbc] sm:$0xf]
    %v107 = vld [vmem:[#allocation2 + $0xc0] sm:$0xf]
    %v108 = vld [vmem:[#allocation2 + $0xc4] sm:$0xf]
    %v109 = vld [vmem:[#allocation2 + $0xc8] sm:$0xf]
    %v110 = vld [vmem:[#allocation2 + $0xcc] sm:$0xf]
    %v111 = vld [vmem:[#allocation2 + $0xd0] sm:$0xf]
    %v112 = vld [vmem:[#allocation2 + $0xd4] sm:$0xf]
    %v113 = vld [vmem:[#allocation2 + $0xd8] sm:$0xf]
    %v114 = vld [vmem:[#allocation2 + $0xdc] sm:$0xf]
    %v115 = vld [vmem:[#allocation2 + $0xe0] sm:$0xf]
    %v116 = vld [vmem:[#allocation2 + $0xe4] sm:$0xf]
    %v117 = vld [vmem:[#allocation2 + $0xe8] sm:$0xf]
    %v118 = vld [vmem:[#allocation2 + $0xec] sm:$0xf]
    %v119 = vld [vmem:[#allocation2 + $0xf0] sm:$0xf]
    %v120 = vld [vmem:[#allocation2 + $0xf4] sm:$0xf]
    %v121 = vld [vmem:[#allocation2 + $0xf8] sm:$0xf]
    %v122 = vld [vmem:[#allocation2 + $0xfc] sm:$0xf]
    %v123 = vld [vmem:[#allocation5] sm:$0xff]
    %v124 = vld [vmem:[#allocation5 + $0x8] sm:$0xf]
    %v125 = vld [vmem:[#allocation5 + $0xc] sm:$0xff]
    %v126 = vld [vmem:[#allocation5 + $0x14] sm:$0xf]
    %v127 = vld [vmem:[#allocation5 + $0x18] sm:$0xff]
    %v128 = vld [vmem:[#allocation5 + $0x20] sm:$0xf]
    %v129 = vld [vmem:[#allocation5 + $0x24] sm:$0xff]
    %v130 = vld [vmem:[#allocation5 + $0x2c] sm:$0xf]
    %v131 = vld [vmem:[#allocation5 + $0x30] sm:$0xff]
    %v132 = vld [vmem:[#allocation5 + $0x38] sm:$0xf]
    %v133 = vld [vmem:[#allocation5 + $0x3c] sm:$0xff]
    %v134 = vld [vmem:[#allocation5 + $0x44] sm:$0xf]
    %v135 = vld [vmem:[#allocation5 + $0x48] sm:$0xff]
    %v136 = vld [vmem:[#allocation5 + $0x50] sm:$0xf]
    %v137 = vld [vmem:[#allocation5 + $0x54] sm:$0xff]
    %v138 = vld [vmem:[#allocation5 + $0x5c] sm:$0xf]
    %v139 = vld [vmem:[#allocation5 + $0x60] sm:$0xff]
    %v140 = vld [vmem:[#allocation5 + $0x68] sm:$0xf]
    %v141 = vld [vmem:[#allocation5 + $0x6c] sm:$0xff]
    %v142 = vld [vmem:[#allocation5 + $0x74] sm:$0xf]
    %v143 = vld [vmem:[#allocation5 + $0x78] sm:$0xff]
    %v144 = vld [vmem:[#allocation5 + $0x80] sm:$0xf]
    %v145 = vld [vmem:[#allocation5 + $0x84] sm:$0xff]
    %v146 = vld [vmem:[#allocation5 + $0x8c] sm:$0xf]
    %v147 = vld [vmem:[#allocation5 + $0x90] sm:$0xff]
    %v148 = vld [vmem:[#allocation5 + $0x98] sm:$0xf]
    %v149 = vld [vmem:[#allocation5 + $0x9c] sm:$0xff]
    %v150 = vld [vmem:[#allocation5 + $0xa4] sm:$0xf]
    %v151 = vld [vmem:[#allocation5 + $0xa8] sm:$0xff]
    %v152 = vld [vmem:[#allocation5 + $0xb0] sm:$0xf]
    %v153 = vld [vmem:[#allocation5 + $0xb4] sm:$0xff]
    %v154 = vld [vmem:[#allocation5 + $0xbc] sm:$0xf]
    %v155 = vld [vmem:[#allocation7] sm:$0x7]
    %v157 = vlaneseq
    %v158 = vshrl.u32 %v157, 7
    %v159 = vsub.s32 0, %v158
    %v160 = vrot.slane %v155, %v159
    %v161 = vlaneseq
    %v162 = vshrl.u32 %v161, 7
    %v163 = vsub.s32 1, %v162
    %v164 = vrot.slane %v155, %v163
    %v165 = vlaneseq
    %v166 = vshrl.u32 %v165, 7
    %v167 = vsub.s32 2, %v166
    %v168 = vrot.slane %v155, %v167
    %v236 = vunpack.c.l.b16 %v59
    %v237 = vunpack.c.l.b16 %v60
    %v238 = vunpack.c.l.b16 %v61
    %v239 = vunpack.c.l.b16 %v62
    %v240 = vunpack.c.l.b16 %v63
    %v241 = vunpack.c.l.b16 %v64
    %v242 = vunpack.c.l.b16 %v65
    %v243 = vunpack.c.l.b16 %v66
    %v244 = vunpack.c.l.b16 %v67
    %v245 = vunpack.c.l.b16 %v68
    %v246 = vunpack.c.l.b16 %v69
    %v247 = vunpack.c.l.b16 %v70
    %v248 = vunpack.c.l.b16 %v71
    %v249 = vunpack.c.l.b16 %v72
    %v250 = vunpack.c.l.b16 %v73
    %v251 = vunpack.c.l.b16 %v74
    %v252 = vunpack.c.l.b16 %v75
    %v253 = vunpack.c.l.b16 %v76
    %v254 = vunpack.c.l.b16 %v77
    %v255 = vunpack.c.l.b16 %v78
    %v256 = vunpack.c.l.b16 %v79
    %v257 = vunpack.c.l.b16 %v80
    %v258 = vunpack.c.l.b16 %v81
    %v259 = vunpack.c.l.b16 %v82
    %v260 = vunpack.c.l.b16 %v83
    %v261 = vunpack.c.l.b16 %v84
    %v262 = vunpack.c.l.b16 %v85
    %v263 = vunpack.c.l.b16 %v86
    %v264 = vunpack.c.l.b16 %v87
    %v265 = vunpack.c.l.b16 %v88
    %v266 = vunpack.c.l.b16 %v89
    %v267 = vunpack.c.l.b16 %v90
    %v268 = vunpack.c.l.b16 %v91
    %v269 = vunpack.c.l.b16 %v92
    %v270 = vunpack.c.l.b16 %v93
    %v271 = vunpack.c.l.b16 %v94
    %v272 = vunpack.c.l.b16 %v95
    %v273 = vunpack.c.l.b16 %v96
    %v274 = vunpack.c.l.b16 %v97
    %v275 = vunpack.c.l.b16 %v98
    %v276 = vunpack.c.l.b16 %v99
    %v277 = vunpack.c.l.b16 %v100
    %v278 = vunpack.c.l.b16 %v101
    %v279 = vunpack.c.l.b16 %v102
    %v280 = vunpack.c.l.b16 %v103
    %v281 = vunpack.c.l.b16 %v104
    %v282 = vunpack.c.l.b16 %v105
    %v283 = vunpack.c.l.b16 %v106
    %v284 = vunpack.c.l.b16 %v107
    %v285 = vunpack.c.l.b16 %v108
    %v286 = vunpack.c.l.b16 %v109
    %v287 = vunpack.c.l.b16 %v110
    %v288 = vunpack.c.l.b16 %v111
    %v289 = vunpack.c.l.b16 %v112
    %v290 = vunpack.c.l.b16 %v113
    %v291 = vunpack.c.l.b16 %v114
    %v292 = vunpack.c.l.b16 %v115
    %v293 = vunpack.c.l.b16 %v116
    %v294 = vunpack.c.l.b16 %v117
    %v295 = vunpack.c.l.b16 %v118
    %v296 = vunpack.c.l.b16 %v119
    %v297 = vunpack.c.l.b16 %v120
    %v298 = vunpack.c.l.b16 %v121
    %v299 = vunpack.c.l.b16 %v122
    %v300 = vpack.c.b16 %v237, %v236
    %v301 = vpack.c.b16 %v239, %v238
    %v302 = vpack.c.b16 %v241, %v240
    %v303 = vpack.c.b16 %v243, %v242
    %v304 = vpack.c.b16 %v245, %v244
    %v305 = vpack.c.b16 %v247, %v246
    %v306 = vpack.c.b16 %v249, %v248
    %v307 = vpack.c.b16 %v251, %v250
    %v308 = vpack.c.b16 %v253, %v252
    %v309 = vpack.c.b16 %v255, %v254
    %v310 = vpack.c.b16 %v257, %v256
    %v311 = vpack.c.b16 %v259, %v258
    %v312 = vpack.c.b16 %v261, %v260
    %v313 = vpack.c.b16 %v263, %v262
    %v314 = vpack.c.b16 %v265, %v264
    %v315 = vpack.c.b16 %v267, %v266
    %v316 = vpack.c.b16 %v269, %v268
    %v317 = vpack.c.b16 %v271, %v270
    %v318 = vpack.c.b16 %v273, %v272
    %v319 = vpack.c.b16 %v275, %v274
    %v320 = vpack.c.b16 %v277, %v276
    %v321 = vpack.c.b16 %v279, %v278
    %v322 = vpack.c.b16 %v281, %v280
    %v323 = vpack.c.b16 %v283, %v282
    %v324 = vpack.c.b16 %v285, %v284
    %v325 = vpack.c.b16 %v287, %v286
    %v326 = vpack.c.b16 %v289, %v288
    %v327 = vpack.c.b16 %v291, %v290
    %v328 = vpack.c.b16 %v293, %v292
    %v329 = vpack.c.b16 %v295, %v294
    %v330 = vpack.c.b16 %v297, %v296
    %v331 = vpack.c.b16 %v299, %v298
    %v396 = vunpack.c.l.b16 %v123
    %v397 = vunpack.c.h.b16 %v123
    %v398 = vunpack.c.l.b16 %v124
    %v399 = vunpack.c.l.b16 %v125
    %v400 = vunpack.c.h.b16 %v125
    %v401 = vunpack.c.l.b16 %v126
    %v402 = vunpack.c.l.b16 %v127
    %v403 = vunpack.c.h.b16 %v127
    %v404 = vunpack.c.l.b16 %v128
    %v405 = vunpack.c.l.b16 %v129
    %v406 = vunpack.c.h.b16 %v129
    %v407 = vunpack.c.l.b16 %v130
    %v408 = vunpack.c.l.b16 %v131
    %v409 = vunpack.c.h.b16 %v131
    %v410 = vunpack.c.l.b16 %v132
    %v411 = vunpack.c.l.b16 %v133
    %v412 = vunpack.c.h.b16 %v133
    %v413 = vunpack.c.l.b16 %v134
    %v414 = vunpack.c.l.b16 %v135
    %v415 = vunpack.c.h.b16 %v135
    %v416 = vunpack.c.l.b16 %v136
    %v417 = vunpack.c.l.b16 %v137
    %v418 = vunpack.c.h.b16 %v137
    %v419 = vunpack.c.l.b16 %v138
    %v420 = vunpack.c.l.b16 %v139
    %v421 = vunpack.c.h.b16 %v139
    %v422 = vunpack.c.l.b16 %v140
    %v423 = vunpack.c.l.b16 %v141
    %v424 = vunpack.c.h.b16 %v141
    %v425 = vunpack.c.l.b16 %v142
    %v426 = vunpack.c.l.b16 %v143
    %v427 = vunpack.c.h.b16 %v143
    %v428 = vunpack.c.l.b16 %v144
    %v429 = vunpack.c.l.b16 %v145
    %v430 = vunpack.c.h.b16 %v145
    %v431 = vunpack.c.l.b16 %v146
    %v432 = vunpack.c.l.b16 %v147
    %v433 = vunpack.c.h.b16 %v147
    %v434 = vunpack.c.l.b16 %v148
    %v435 = vunpack.c.l.b16 %v149
    %v436 = vunpack.c.h.b16 %v149
    %v437 = vunpack.c.l.b16 %v150
    %v438 = vunpack.c.l.b16 %v151
    %v439 = vunpack.c.h.b16 %v151
    %v440 = vunpack.c.l.b16 %v152
    %v441 = vunpack.c.l.b16 %v153
    %v442 = vunpack.c.h.b16 %v153
    %v443 = vunpack.c.l.b16 %v154
    %v444 = vpack.c.b16 %v399, %v396
    %v445 = vpack.c.b16 %v400, %v397
    %v446 = vpack.c.b16 %v401, %v398
    %v447 = vpack.c.b16 %v405, %v402
    %v448 = vpack.c.b16 %v406, %v403
    %v449 = vpack.c.b16 %v407, %v404
    %v450 = vpack.c.b16 %v411, %v408
    %v451 = vpack.c.b16 %v412, %v409
    %v452 = vpack.c.b16 %v413, %v410
    %v453 = vpack.c.b16 %v417, %v414
    %v454 = vpack.c.b16 %v418, %v415
    %v455 = vpack.c.b16 %v419, %v416
    %v456 = vpack.c.b16 %v423, %v420
    %v457 = vpack.c.b16 %v424, %v421
    %v458 = vpack.c.b16 %v425, %v422
    %v459 = vpack.c.b16 %v429, %v426
    %v460 = vpack.c.b16 %v430, %v427
    %v461 = vpack.c.b16 %v431, %v428
    %v462 = vpack.c.b16 %v435, %v432
    %v463 = vpack.c.b16 %v436, %v433
    %v464 = vpack.c.b16 %v437, %v434
    %v465 = vpack.c.b16 %v441, %v438
    %v466 = vpack.c.b16 %v442, %v439
    %v467 = vpack.c.b16 %v443, %v440
    %492 = vmatprep.subr.bf16.mxu0 %v445
    %493 = vmatpush1.bf16.msra.mxu0 %v444
    %494 = vmatprep.subr.bf16.mxu0 %v448
    %495 = vmatpush1.bf16.msra.mxu0 %v447
    %496 = vmatprep.subr.bf16.mxu0 %v451
    %497 = vmatpush1.bf16.msra.mxu0 %v450
    %498 = vmatprep.subr.bf16.mxu0 %v454
    %499 = vmatpush1.bf16.msra.mxu0 %v453
    %500 = vmatprep.subr.bf16.mxu0 %v457
    %501 = vmatpush1.bf16.msra.mxu0 %v456
    %502 = vmatprep.subr.bf16.mxu0 %v460
    %503 = vmatpush1.bf16.msra.mxu0 %v459
    %504 = vmatprep.subr.bf16.mxu0 %v463
    %505 = vmatpush1.bf16.msra.mxu0 %v462
    %506 = vmatprep.subr.bf16.mxu0 %v466
    %507 = vmatpush1.bf16.msra.mxu0 %v465
    %508 = vmatprep.subr.bf16.mxu0 0
    %509 = vmatpush1.bf16.msra.mxu0 0
    %510 = vmatprep.subr.bf16.mxu0 0
    %511 = vmatpush1.bf16.msra.mxu0 0
    %512 = vmatprep.subr.bf16.mxu0 0
    %513 = vmatpush1.bf16.msra.mxu0 0
    %514 = vmatprep.subr.bf16.mxu0 0
    %515 = vmatpush1.bf16.msra.mxu0 0
    %516 = vmatprep.subr.bf16.mxu0 0
    %517 = vmatpush1.bf16.msra.mxu0 0
    %518 = vmatprep.subr.bf16.mxu0 0
    %519 = vmatpush1.bf16.msra.mxu0 0
    %520 = vmatprep.subr.bf16.mxu0 0
    %521 = vmatpush1.bf16.msra.mxu0 0
    %522 = vmatprep.subr.bf16.mxu0 0
    %523 = vmatpush1.bf16.msra.mxu0 0
    %524 = vmatprep.mubr.bf16.mxu0 0
    %525 = vmatmul.mubr.bf16.gmra.mrb[0].mxu0 %v300
    %v526 = vpop.f32.mrb[0].mxu0
    %v527 = vadd.f32 %v160, %v526
    %v528 = vpop.f32.mrb[0].mxu0
    %v529 = vadd.f32 %v164, %v528
    %v530 = vpop.f32.mrb[0].mxu0
    %v531 = vadd.f32 %v160, %v530
    %v532 = vpop.f32.mrb[0].mxu0
    %v533 = vadd.f32 %v164, %v532
    %534 = vmatprep.mubr.bf16.mxu0 0
    %535 = vmatmul.mubr.bf16.gmra.mrb[0].mxu0 %v301
    %v536 = vpop.f32.mrb[0].mxu0
    %v537 = vadd.f32 %v160, %v536
    %v538 = vpop.f32.mrb[0].mxu0
    %v539 = vadd.f32 %v164, %v538
    %v540 = vpop.f32.mrb[0].mxu0
    %v541 = vadd.f32 %v160, %v540
    %v542 = vpop.f32.mrb[0].mxu0
    %v543 = vadd.f32 %v164, %v542
    %544 = vmatprep.mubr.bf16.mxu0 0
    %545 = vmatmul.mubr.bf16.gmra.mrb[0].mxu0 %v302
    %v546 = vpop.f32.mrb[0].mxu0
    %v547 = vadd.f32 %v160, %v546
    %v548 = vpop.f32.mrb[0].mxu0
    %v549 = vadd.f32 %v164, %v548
    %v550 = vpop.f32.mrb[0].mxu0
    %v551 = vadd.f32 %v160, %v550
    %v552 = vpop.f32.mrb[0].mxu0
    %v553 = vadd.f32 %v164, %v552
    %554 = vmatprep.mubr.bf16.mxu0 0
    %555 = vmatmul.mubr.bf16.gmra.mrb[0].mxu0 %v303
    %v556 = vpop.f32.mrb[0].mxu0
    %v557 = vadd.f32 %v160, %v556
    %v558 = vpop.f32.mrb[0].mxu0
    %v559 = vadd.f32 %v164, %v558
    %v560 = vpop.f32.mrb[0].mxu0
    %v561 = vadd.f32 %v160, %v560
    %v562 = vpop.f32.mrb[0].mxu0
    %v563 = vadd.f32 %v164, %v562
    %564 = vmatprep.mubr.bf16.mxu0 0
    %565 = vmatmul.mubr.bf16.gmra.mrb[0].mxu0 %v304
    %v566 = vpop.f32.mrb[0].mxu0
    %v567 = vadd.f32 %v160, %v566
    %v568 = vpop.f32.mrb[0].mxu0
    %v569 = vadd.f32 %v164, %v568
    %v570 = vpop.f32.mrb[0].mxu0
    %v571 = vadd.f32 %v160, %v570
    %v572 = vpop.f32.mrb[0].mxu0
    %v573 = vadd.f32 %v164, %v572
    %574 = vmatprep.mubr.bf16.mxu0 0
    %575 = vmatmul.mubr.bf16.gmra.mrb[0].mxu0 %v305
    %v576 = vpop.f32.mrb[0].mxu0
    %v577 = vadd.f32 %v160, %v576
    %v578 = vpop.f32.mrb[0].mxu0
    %v579 = vadd.f32 %v164, %v578
    %v580 = vpop.f32.mrb[0].mxu0
    %v581 = vadd.f32 %v160, %v580
    %v582 = vpop.f32.mrb[0].mxu0
    %v583 = vadd.f32 %v164, %v582
    %584 = vmatprep.mubr.bf16.mxu0 0
    %585 = vmatmul.mubr.bf16.gmra.mrb[0].mxu0 %v306
    %v586 = vpop.f32.mrb[0].mxu0
    %v587 = vadd.f32 %v160, %v586
    %v588 = vpop.f32.mrb[0].mxu0
    %v589 = vadd.f32 %v164, %v588
    %v590 = vpop.f32.mrb[0].mxu0
    %v591 = vadd.f32 %v160, %v590
    %v592 = vpop.f32.mrb[0].mxu0
    %v593 = vadd.f32 %v164, %v592
    %594 = vmatprep.mubr.bf16.mxu0 0
    %595 = vmatmul.mubr.bf16.gmra.mrb[0].mxu0 %v307
    %v596 = vpop.f32.mrb[0].mxu0
    %v597 = vadd.f32 %v160, %v596
    %v598 = vpop.f32.mrb[0].mxu0
    %v599 = vadd.f32 %v164, %v598
    %v600 = vpop.f32.mrb[0].mxu0
    %v601 = vadd.f32 %v160, %v600
    %v602 = vpop.f32.mrb[0].mxu0
    %v603 = vadd.f32 %v164, %v602
    %604 = vmatprep.mubr.bf16.mxu0 0
    %605 = vmatmul.mubr.bf16.gmra.mrb[0].mxu0 %v308
    %v606 = vpop.f32.mrb[0].mxu0
    %v607 = vadd.f32 %v160, %v606
    %v608 = vpop.f32.mrb[0].mxu0
    %v609 = vadd.f32 %v164, %v608
    %v610 = vpop.f32.mrb[0].mxu0
    %v611 = vadd.f32 %v160, %v610
    %v612 = vpop.f32.mrb[0].mxu0
    %v613 = vadd.f32 %v164, %v612
    %614 = vmatprep.mubr.bf16.mxu0 0
    %615 = vmatmul.mubr.bf16.gmra.mrb[0].mxu0 %v309
    %v616 = vpop.f32.mrb[0].mxu0
    %v617 = vadd.f32 %v160, %v616
    %v618 = vpop.f32.mrb[0].mxu0
    %v619 = vadd.f32 %v164, %v618
    %v620 = vpop.f32.mrb[0].mxu0
    %v621 = vadd.f32 %v160, %v620
    %v622 = vpop.f32.mrb[0].mxu0
    %v623 = vadd.f32 %v164, %v622
    %624 = vmatprep.mubr.bf16.mxu0 0
    %625 = vmatmul.mubr.bf16.gmra.mrb[0].mxu0 %v310
    %v626 = vpop.f32.mrb[0].mxu0
    %v627 = vadd.f32 %v160, %v626
    %v628 = vpop.f32.mrb[0].mxu0
    %v629 = vadd.f32 %v164, %v628
    %v630 = vpop.f32.mrb[0].mxu0
    %v631 = vadd.f32 %v160, %v630
    %v632 = vpop.f32.mrb[0].mxu0
    %v633 = vadd.f32 %v164, %v632
    %634 = vmatprep.mubr.bf16.mxu0 0
    %635 = vmatmul.mubr.bf16.gmra.mrb[0].mxu0 %v311
    %v636 = vpop.f32.mrb[0].mxu0
    %v637 = vadd.f32 %v160, %v636
    %v638 = vpop.f32.mrb[0].mxu0
    %v639 = vadd.f32 %v164, %v638
    %v640 = vpop.f32.mrb[0].mxu0
    %v641 = vadd.f32 %v160, %v640
    %v642 = vpop.f32.mrb[0].mxu0
    %v643 = vadd.f32 %v164, %v642
    %644 = vmatprep.mubr.bf16.mxu0 0
    %645 = vmatmul.mubr.bf16.gmra.mrb[0].mxu0 %v312
    %v646 = vpop.f32.mrb[0].mxu0
    %v647 = vadd.f32 %v160, %v646
    %v648 = vpop.f32.mrb[0].mxu0
    %v649 = vadd.f32 %v164, %v648
    %v650 = vpop.f32.mrb[0].mxu0
    %v651 = vadd.f32 %v160, %v650
    %v652 = vpop.f32.mrb[0].mxu0
    %v653 = vadd.f32 %v164, %v652
    %654 = vmatprep.mubr.bf16.mxu0 0
    %655 = vmatmul.mubr.bf16.gmra.mrb[0].mxu0 %v313
    %v656 = vpop.f32.mrb[0].mxu0
    %v657 = vadd.f32 %v160, %v656
    %v658 = vpop.f32.mrb[0].mxu0
    %v659 = vadd.f32 %v164, %v658
    %v660 = vpop.f32.mrb[0].mxu0
    %v661 = vadd.f32 %v160, %v660
    %v662 = vpop.f32.mrb[0].mxu0
    %v663 = vadd.f32 %v164, %v662
    %664 = vmatprep.mubr.bf16.mxu0 0
    %665 = vmatmul.mubr.bf16.gmra.mrb[0].mxu0 %v314
    %v666 = vpop.f32.mrb[0].mxu0
    %v667 = vadd.f32 %v160, %v666
    %v668 = vpop.f32.mrb[0].mxu0
    %v669 = vadd.f32 %v164, %v668
    %v670 = vpop.f32.mrb[0].mxu0
    %v671 = vadd.f32 %v160, %v670
    %v672 = vpop.f32.mrb[0].mxu0
    %v673 = vadd.f32 %v164, %v672
    %674 = vmatprep.mubr.bf16.mxu0 0
    %675 = vmatmul.mubr.bf16.gmra.mrb[0].mxu0 %v315
    %v676 = vpop.f32.mrb[0].mxu0
    %v677 = vadd.f32 %v160, %v676
    %v678 = vpop.f32.mrb[0].mxu0
    %v679 = vadd.f32 %v164, %v678
    %v680 = vpop.f32.mrb[0].mxu0
    %v681 = vadd.f32 %v160, %v680
    %v682 = vpop.f32.mrb[0].mxu0
    %v683 = vadd.f32 %v164, %v682
    %684 = vmatprep.mubr.bf16.mxu0 0
    %685 = vmatmul.mubr.bf16.gmra.mrb[0].mxu0 %v316
    %v686 = vpop.f32.mrb[0].mxu0
    %v687 = vadd.f32 %v160, %v686
    %v688 = vpop.f32.mrb[0].mxu0
    %v689 = vadd.f32 %v164, %v688
    %v690 = vpop.f32.mrb[0].mxu0
    %v691 = vadd.f32 %v160, %v690
    %v692 = vpop.f32.mrb[0].mxu0
    %v693 = vadd.f32 %v164, %v692
    %694 = vmatprep.mubr.bf16.mxu0 0
    %695 = vmatmul.mubr.bf16.gmra.mrb[0].mxu0 %v317
    %v696 = vpop.f32.mrb[0].mxu0
    %v697 = vadd.f32 %v160, %v696
    %v698 = vpop.f32.mrb[0].mxu0
    %v699 = vadd.f32 %v164, %v698
    %v700 = vpop.f32.mrb[0].mxu0
    %v701 = vadd.f32 %v160, %v700
    %v702 = vpop.f32.mrb[0].mxu0
    %v703 = vadd.f32 %v164, %v702
    %704 = vmatprep.mubr.bf16.mxu0 0
    %705 = vmatmul.mubr.bf16.gmra.mrb[0].mxu0 %v318
    %v706 = vpop.f32.mrb[0].mxu0
    %v707 = vadd.f32 %v160, %v706
    %v708 = vpop.f32.mrb[0].mxu0
    %v709 = vadd.f32 %v164, %v708
    %v710 = vpop.f32.mrb[0].mxu0
    %v711 = vadd.f32 %v160, %v710
    %v712 = vpop.f32.mrb[0].mxu0
    %v713 = vadd.f32 %v164, %v712
    %714 = vmatprep.mubr.bf16.mxu0 0
    %715 = vmatmul.mubr.bf16.gmra.mrb[0].mxu0 %v319
    %v716 = vpop.f32.mrb[0].mxu0
    %v717 = vadd.f32 %v160, %v716
    %v718 = vpop.f32.mrb[0].mxu0
    %v719 = vadd.f32 %v164, %v718
    %v720 = vpop.f32.mrb[0].mxu0
    %v721 = vadd.f32 %v160, %v720
    %v722 = vpop.f32.mrb[0].mxu0
    %v723 = vadd.f32 %v164, %v722
    %724 = vmatprep.mubr.bf16.mxu0 0
    %725 = vmatmul.mubr.bf16.gmra.mrb[0].mxu0 %v320
    %v726 = vpop.f32.mrb[0].mxu0
    %v727 = vadd.f32 %v160, %v726
    %v728 = vpop.f32.mrb[0].mxu0
    %v729 = vadd.f32 %v164, %v728
    %v730 = vpop.f32.mrb[0].mxu0
    %v731 = vadd.f32 %v160, %v730
    %v732 = vpop.f32.mrb[0].mxu0
    %v733 = vadd.f32 %v164, %v732
    %734 = vmatprep.mubr.bf16.mxu0 0
    %735 = vmatmul.mubr.bf16.gmra.mrb[0].mxu0 %v321
    %v736 = vpop.f32.mrb[0].mxu0
    %v737 = vadd.f32 %v160, %v736
    %v738 = vpop.f32.mrb[0].mxu0
    %v739 = vadd.f32 %v164, %v738
    %v740 = vpop.f32.mrb[0].mxu0
    %v741 = vadd.f32 %v160, %v740
    %v742 = vpop.f32.mrb[0].mxu0
    %v743 = vadd.f32 %v164, %v742
    %744 = vmatprep.mubr.bf16.mxu0 0
    %745 = vmatmul.mubr.bf16.gmra.mrb[0].mxu0 %v322
    %v746 = vpop.f32.mrb[0].mxu0
    %v747 = vadd.f32 %v160, %v746
    %v748 = vpop.f32.mrb[0].mxu0
    %v749 = vadd.f32 %v164, %v748
    %v750 = vpop.f32.mrb[0].mxu0
    %v751 = vadd.f32 %v160, %v750
    %v752 = vpop.f32.mrb[0].mxu0
    %v753 = vadd.f32 %v164, %v752
    %754 = vmatprep.mubr.bf16.mxu0 0
    %755 = vmatmul.mubr.bf16.gmra.mrb[0].mxu0 %v323
    %v756 = vpop.f32.mrb[0].mxu0
    %v757 = vadd.f32 %v160, %v756
    %v758 = vpop.f32.mrb[0].mxu0
    %v759 = vadd.f32 %v164, %v758
    %v760 = vpop.f32.mrb[0].mxu0
    %v761 = vadd.f32 %v160, %v760
    %v762 = vpop.f32.mrb[0].mxu0
    %v763 = vadd.f32 %v164, %v762
    %764 = vmatprep.mubr.bf16.mxu0 0
    %765 = vmatmul.mubr.bf16.gmra.mrb[0].mxu0 %v324
    %v766 = vpop.f32.mrb[0].mxu0
    %v767 = vadd.f32 %v160, %v766
    %v768 = vpop.f32.mrb[0].mxu0
    %v769 = vadd.f32 %v164, %v768
    %v770 = vpop.f32.mrb[0].mxu0
    %v771 = vadd.f32 %v160, %v770
    %v772 = vpop.f32.mrb[0].mxu0
    %v773 = vadd.f32 %v164, %v772
    %774 = vmatprep.mubr.bf16.mxu0 0
    %775 = vmatmul.mubr.bf16.gmra.mrb[0].mxu0 %v325
    %v776 = vpop.f32.mrb[0].mxu0
    %v777 = vadd.f32 %v160, %v776
    %v778 = vpop.f32.mrb[0].mxu0
    %v779 = vadd.f32 %v164, %v778
    %v780 = vpop.f32.mrb[0].mxu0
    %v781 = vadd.f32 %v160, %v780
    %v782 = vpop.f32.mrb[0].mxu0
    %v783 = vadd.f32 %v164, %v782
    %784 = vmatprep.mubr.bf16.mxu0 0
    %785 = vmatmul.mubr.bf16.gmra.mrb[0].mxu0 %v326
    %v786 = vpop.f32.mrb[0].mxu0
    %v787 = vadd.f32 %v160, %v786
    %v788 = vpop.f32.mrb[0].mxu0
    %v789 = vadd.f32 %v164, %v788
    %v790 = vpop.f32.mrb[0].mxu0
    %v791 = vadd.f32 %v160, %v790
    %v792 = vpop.f32.mrb[0].mxu0
    %v793 = vadd.f32 %v164, %v792
    %794 = vmatprep.mubr.bf16.mxu0 0
    %795 = vmatmul.mubr.bf16.gmra.mrb[0].mxu0 %v327
    %v796 = vpop.f32.mrb[0].mxu0
    %v797 = vadd.f32 %v160, %v796
    %v798 = vpop.f32.mrb[0].mxu0
    %v799 = vadd.f32 %v164, %v798
    %v800 = vpop.f32.mrb[0].mxu0
    %v801 = vadd.f32 %v160, %v800
    %v802 = vpop.f32.mrb[0].mxu0
    %v803 = vadd.f32 %v164, %v802
    %804 = vmatprep.mubr.bf16.mxu0 0
    %805 = vmatmul.mubr.bf16.gmra.mrb[0].mxu0 %v328
    %v806 = vpop.f32.mrb[0].mxu0
    %v807 = vadd.f32 %v160, %v806
    %v808 = vpop.f32.mrb[0].mxu0
    %v809 = vadd.f32 %v164, %v808
    %v810 = vpop.f32.mrb[0].mxu0
    %v811 = vadd.f32 %v160, %v810
    %v812 = vpop.f32.mrb[0].mxu0
    %v813 = vadd.f32 %v164, %v812
    %814 = vmatprep.mubr.bf16.mxu0 0
    %815 = vmatmul.mubr.bf16.gmra.mrb[0].mxu0 %v329
    %v816 = vpop.f32.mrb[0].mxu0
    %v817 = vadd.f32 %v160, %v816
    %v818 = vpop.f32.mrb[0].mxu0
    %v819 = vadd.f32 %v164, %v818
    %v820 = vpop.f32.mrb[0].mxu0
    %v821 = vadd.f32 %v160, %v820
    %v822 = vpop.f32.mrb[0].mxu0
    %v823 = vadd.f32 %v164, %v822
    %824 = vmatprep.mubr.bf16.mxu0 0
    %825 = vmatmul.mubr.bf16.gmra.mrb[0].mxu0 %v330
    %v826 = vpop.f32.mrb[0].mxu0
    %v827 = vadd.f32 %v160, %v826
    %v828 = vpop.f32.mrb[0].mxu0
    %v829 = vadd.f32 %v164, %v828
    %v830 = vpop.f32.mrb[0].mxu0
    %v831 = vadd.f32 %v160, %v830
    %v832 = vpop.f32.mrb[0].mxu0
    %v833 = vadd.f32 %v164, %v832
    %834 = vmatprep.mubr.bf16.mxu0 0
    %835 = vmatmul.mubr.bf16.gmra.mrb[0].mxu0 %v331
    %v836 = vpop.f32.mrb[0].mxu0
    %v837 = vadd.f32 %v160, %v836
    %v838 = vpop.f32.mrb[0].mxu0
    %v839 = vadd.f32 %v164, %v838
    %v840 = vpop.f32.mrb[0].mxu0
    %v841 = vadd.f32 %v160, %v840
    %v842 = vpop.f32.mrb[0].mxu0
    %v843 = vadd.f32 %v164, %v842
    %844 = vdwg.mxu0
    %845 = vmatprep.subr.bf16.mxu0 0
    %846 = vmatpush1.bf16.msra.mxu0 %v446
    %847 = vmatprep.subr.bf16.mxu0 0
    %848 = vmatpush1.bf16.msra.mxu0 %v449
    %849 = vmatprep.subr.bf16.mxu0 0
    %850 = vmatpush1.bf16.msra.mxu0 %v452
    %851 = vmatprep.subr.bf16.mxu0 0
    %852 = vmatpush1.bf16.msra.mxu0 %v455
    %853 = vmatprep.subr.bf16.mxu0 0
    %854 = vmatpush1.bf16.msra.mxu0 %v458
    %855 = vmatprep.subr.bf16.mxu0 0
    %856 = vmatpush1.bf16.msra.mxu0 %v461
    %857 = vmatprep.subr.bf16.mxu0 0
    %858 = vmatpush1.bf16.msra.mxu0 %v464
    %859 = vmatprep.subr.bf16.mxu0 0
    %860 = vmatpush1.bf16.msra.mxu0 %v467
    %861 = vmatprep.subr.bf16.mxu0 0
    %862 = vmatpush1.bf16.msra.mxu0 0
    %863 = vmatprep.subr.bf16.mxu0 0
    %864 = vmatpush1.bf16.msra.mxu0 0
    %865 = vmatprep.subr.bf16.mxu0 0
    %866 = vmatpush1.bf16.msra.mxu0 0
    %867 = vmatprep.subr.bf16.mxu0 0
    %868 = vmatpush1.bf16.msra.mxu0 0
    %869 = vmatprep.subr.bf16.mxu0 0
    %870 = vmatpush1.bf16.msra.mxu0 0
    %871 = vmatprep.subr.bf16.mxu0 0
    %872 = vmatpush1.bf16.msra.mxu0 0
    %873 = vmatprep.subr.bf16.mxu0 0
    %874 = vmatpush1.bf16.msra.mxu0 0
    %875 = vmatprep.subr.bf16.mxu0 0
    %876 = vmatpush1.bf16.msra.mxu0 0
    %877 = vmatprep.mubr.bf16.mxu0 0
    %878 = vmatmul.mubr.bf16.gmra.mrb[0].mxu0 %v300
    %v879 = vpop.f32.mrb[0].mxu0
    %v880 = vadd.f32 %v168, %v879
    %v881 = vpop.f32.mrb[0].mxu0
    %v882 = vpop.f32.mrb[0].mxu0
    %v883 = vadd.f32 %v168, %v882
    %v884 = vpop.f32.mrb[0].mxu0
    %885 = vmatprep.mubr.bf16.mxu0 0
    %886 = vmatmul.mubr.bf16.gmra.mrb[0].mxu0 %v301
    %v887 = vpop.f32.mrb[0].mxu0
    %v888 = vadd.f32 %v168, %v887
    %v889 = vpop.f32.mrb[0].mxu0
    %v890 = vpop.f32.mrb[0].mxu0
    %v891 = vadd.f32 %v168, %v890
    %v892 = vpop.f32.mrb[0].mxu0
    %893 = vmatprep.mubr.bf16.mxu0 0
    %894 = vmatmul.mubr.bf16.gmra.mrb[0].mxu0 %v302
    %v895 = vpop.f32.mrb[0].mxu0
    %v896 = vadd.f32 %v168, %v895
    %v897 = vpop.f32.mrb[0].mxu0
    %v898 = vpop.f32.mrb[0].mxu0
    %v899 = vadd.f32 %v168, %v898
    %v900 = vpop.f32.mrb[0].mxu0
    %901 = vmatprep.mubr.bf16.mxu0 0
    %902 = vmatmul.mubr.bf16.gmra.mrb[0].mxu0 %v303
    %v903 = vpop.f32.mrb[0].mxu0
    %v904 = vadd.f32 %v168, %v903
    %v905 = vpop.f32.mrb[0].mxu0
    %v906 = vpop.f32.mrb[0].mxu0
    %v907 = vadd.f32 %v168, %v906
    %v908 = vpop.f32.mrb[0].mxu0
    %909 = vmatprep.mubr.bf16.mxu0 0
    %910 = vmatmul.mubr.bf16.gmra.mrb[0].mxu0 %v304
    %v911 = vpop.f32.mrb[0].mxu0
    %v912 = vadd.f32 %v168, %v911
    %v913 = vpop.f32.mrb[0].mxu0
    %v914 = vpop.f32.mrb[0].mxu0
    %v915 = vadd.f32 %v168, %v914
    %v916 = vpop.f32.mrb[0].mxu0
    %917 = vmatprep.mubr.bf16.mxu0 0
    %918 = vmatmul.mubr.bf16.gmra.mrb[0].mxu0 %v305
    %v919 = vpop.f32.mrb[0].mxu0
    %v920 = vadd.f32 %v168, %v919
    %v921 = vpop.f32.mrb[0].mxu0
    %v922 = vpop.f32.mrb[0].mxu0
    %v923 = vadd.f32 %v168, %v922
    %v924 = vpop.f32.mrb[0].mxu0
    %925 = vmatprep.mubr.bf16.mxu0 0
    %926 = vmatmul.mubr.bf16.gmra.mrb[0].mxu0 %v306
    %v927 = vpop.f32.mrb[0].mxu0
    %v928 = vadd.f32 %v168, %v927
    %v929 = vpop.f32.mrb[0].mxu0
    %v930 = vpop.f32.mrb[0].mxu0
    %v931 = vadd.f32 %v168, %v930
    %v932 = vpop.f32.mrb[0].mxu0
    %933 = vmatprep.mubr.bf16.mxu0 0
    %934 = vmatmul.mubr.bf16.gmra.mrb[0].mxu0 %v307
    %v935 = vpop.f32.mrb[0].mxu0
    %v936 = vadd.f32 %v168, %v935
    %v937 = vpop.f32.mrb[0].mxu0
    %v938 = vpop.f32.mrb[0].mxu0
    %v939 = vadd.f32 %v168, %v938
    %v940 = vpop.f32.mrb[0].mxu0
    %941 = vmatprep.mubr.bf16.mxu0 0
    %942 = vmatmul.mubr.bf16.gmra.mrb[0].mxu0 %v308
    %v943 = vpop.f32.mrb[0].mxu0
    %v944 = vadd.f32 %v168, %v943
    %v945 = vpop.f32.mrb[0].mxu0
    %v946 = vpop.f32.mrb[0].mxu0
    %v947 = vadd.f32 %v168, %v946
    %v948 = vpop.f32.mrb[0].mxu0
    %949 = vmatprep.mubr.bf16.mxu0 0
    %950 = vmatmul.mubr.bf16.gmra.mrb[0].mxu0 %v309
    %v951 = vpop.f32.mrb[0].mxu0
    %v952 = vadd.f32 %v168, %v951
    %v953 = vpop.f32.mrb[0].mxu0
    %v954 = vpop.f32.mrb[0].mxu0
    %v955 = vadd.f32 %v168, %v954
    %v956 = vpop.f32.mrb[0].mxu0
    %957 = vmatprep.mubr.bf16.mxu0 0
    %958 = vmatmul.mubr.bf16.gmra.mrb[0].mxu0 %v310
    %v959 = vpop.f32.mrb[0].mxu0
    %v960 = vadd.f32 %v168, %v959
    %v961 = vpop.f32.mrb[0].mxu0
    %v962 = vpop.f32.mrb[0].mxu0
    %v963 = vadd.f32 %v168, %v962
    %v964 = vpop.f32.mrb[0].mxu0
    %965 = vmatprep.mubr.bf16.mxu0 0
    %966 = vmatmul.mubr.bf16.gmra.mrb[0].mxu0 %v311
    %v967 = vpop.f32.mrb[0].mxu0
    %v968 = vadd.f32 %v168, %v967
    %v969 = vpop.f32.mrb[0].mxu0
    %v970 = vpop.f32.mrb[0].mxu0
    %v971 = vadd.f32 %v168, %v970
    %v972 = vpop.f32.mrb[0].mxu0
    %973 = vmatprep.mubr.bf16.mxu0 0
    %974 = vmatmul.mubr.bf16.gmra.mrb[0].mxu0 %v312
    %v975 = vpop.f32.mrb[0].mxu0
    %v976 = vadd.f32 %v168, %v975
    %v977 = vpop.f32.mrb[0].mxu0
    %v978 = vpop.f32.mrb[0].mxu0
    %v979 = vadd.f32 %v168, %v978
    %v980 = vpop.f32.mrb[0].mxu0
    %981 = vmatprep.mubr.bf16.mxu0 0
    %982 = vmatmul.mubr.bf16.gmra.mrb[0].mxu0 %v313
    %v983 = vpop.f32.mrb[0].mxu0
    %v984 = vadd.f32 %v168, %v983
    %v985 = vpop.f32.mrb[0].mxu0
    %v986 = vpop.f32.mrb[0].mxu0
    %v987 = vadd.f32 %v168, %v986
    %v988 = vpop.f32.mrb[0].mxu0
    %989 = vmatprep.mubr.bf16.mxu0 0
    %990 = vmatmul.mubr.bf16.gmra.mrb[0].mxu0 %v314
    %v991 = vpop.f32.mrb[0].mxu0
    %v992 = vadd.f32 %v168, %v991
    %v993 = vpop.f32.mrb[0].mxu0
    %v994 = vpop.f32.mrb[0].mxu0
    %v995 = vadd.f32 %v168, %v994
    %v996 = vpop.f32.mrb[0].mxu0
    %997 = vmatprep.mubr.bf16.mxu0 0
    %998 = vmatmul.mubr.bf16.gmra.mrb[0].mxu0 %v315
    %v999 = vpop.f32.mrb[0].mxu0
    %v1000 = vadd.f32 %v168, %v999
    %v1001 = vpop.f32.mrb[0].mxu0
    %v1002 = vpop.f32.mrb[0].mxu0
    %v1003 = vadd.f32 %v168, %v1002
    %v1004 = vpop.f32.mrb[0].mxu0
    %1005 = vmatprep.mubr.bf16.mxu0 0
    %1006 = vmatmul.mubr.bf16.gmra.mrb[0].mxu0 %v316
    %v1007 = vpop.f32.mrb[0].mxu0
    %v1008 = vadd.f32 %v168, %v1007
    %v1009 = vpop.f32.mrb[0].mxu0
    %v1010 = vpop.f32.mrb[0].mxu0
    %v1011 = vadd.f32 %v168, %v1010
    %v1012 = vpop.f32.mrb[0].mxu0
    %1013 = vmatprep.mubr.bf16.mxu0 0
    %1014 = vmatmul.mubr.bf16.gmra.mrb[0].mxu0 %v317
    %v1015 = vpop.f32.mrb[0].mxu0
    %v1016 = vadd.f32 %v168, %v1015
    %v1017 = vpop.f32.mrb[0].mxu0
    %v1018 = vpop.f32.mrb[0].mxu0
    %v1019 = vadd.f32 %v168, %v1018
    %v1020 = vpop.f32.mrb[0].mxu0
    %1021 = vmatprep.mubr.bf16.mxu0 0
    %1022 = vmatmul.mubr.bf16.gmra.mrb[0].mxu0 %v318
    %v1023 = vpop.f32.mrb[0].mxu0
    %v1024 = vadd.f32 %v168, %v1023
    %v1025 = vpop.f32.mrb[0].mxu0
    %v1026 = vpop.f32.mrb[0].mxu0
    %v1027 = vadd.f32 %v168, %v1026
    %v1028 = vpop.f32.mrb[0].mxu0
    %1029 = vmatprep.mubr.bf16.mxu0 0
    %1030 = vmatmul.mubr.bf16.gmra.mrb[0].mxu0 %v319
    %v1031 = vpop.f32.mrb[0].mxu0
    %v1032 = vadd.f32 %v168, %v1031
    %v1033 = vpop.f32.mrb[0].mxu0
    %v1034 = vpop.f32.mrb[0].mxu0
    %v1035 = vadd.f32 %v168, %v1034
    %v1036 = vpop.f32.mrb[0].mxu0
    %1037 = vmatprep.mubr.bf16.mxu0 0
    %1038 = vmatmul.mubr.bf16.gmra.mrb[0].mxu0 %v320
    %v1039 = vpop.f32.mrb[0].mxu0
    %v1040 = vadd.f32 %v168, %v1039
    %v1041 = vpop.f32.mrb[0].mxu0
    %v1042 = vpop.f32.mrb[0].mxu0
    %v1043 = vadd.f32 %v168, %v1042
    %v1044 = vpop.f32.mrb[0].mxu0
    %1045 = vmatprep.mubr.bf16.mxu0 0
    %1046 = vmatmul.mubr.bf16.gmra.mrb[0].mxu0 %v321
    %v1047 = vpop.f32.mrb[0].mxu0
    %v1048 = vadd.f32 %v168, %v1047
    %v1049 = vpop.f32.mrb[0].mxu0
    %v1050 = vpop.f32.mrb[0].mxu0
    %v1051 = vadd.f32 %v168, %v1050
    %v1052 = vpop.f32.mrb[0].mxu0
    %1053 = vmatprep.mubr.bf16.mxu0 0
    %1054 = vmatmul.mubr.bf16.gmra.mrb[0].mxu0 %v322
    %v1055 = vpop.f32.mrb[0].mxu0
    %v1056 = vadd.f32 %v168, %v1055
    %v1057 = vpop.f32.mrb[0].mxu0
    %v1058 = vpop.f32.mrb[0].mxu0
    %v1059 = vadd.f32 %v168, %v1058
    %v1060 = vpop.f32.mrb[0].mxu0
    %1061 = vmatprep.mubr.bf16.mxu0 0
    %1062 = vmatmul.mubr.bf16.gmra.mrb[0].mxu0 %v323
    %v1063 = vpop.f32.mrb[0].mxu0
    %v1064 = vadd.f32 %v168, %v1063
    %v1065 = vpop.f32.mrb[0].mxu0
    %v1066 = vpop.f32.mrb[0].mxu0
    %v1067 = vadd.f32 %v168, %v1066
    %v1068 = vpop.f32.mrb[0].mxu0
    %1069 = vmatprep.mubr.bf16.mxu0 0
    %1070 = vmatmul.mubr.bf16.gmra.mrb[0].mxu0 %v324
    %v1071 = vpop.f32.mrb[0].mxu0
    %v1072 = vadd.f32 %v168, %v1071
    %v1073 = vpop.f32.mrb[0].mxu0
    %v1074 = vpop.f32.mrb[0].mxu0
    %v1075 = vadd.f32 %v168, %v1074
    %v1076 = vpop.f32.mrb[0].mxu0
    %1077 = vmatprep.mubr.bf16.mxu0 0
    %1078 = vmatmul.mubr.bf16.gmra.mrb[0].mxu0 %v325
    %v1079 = vpop.f32.mrb[0].mxu0
    %v1080 = vadd.f32 %v168, %v1079
    %v1081 = vpop.f32.mrb[0].mxu0
    %v1082 = vpop.f32.mrb[0].mxu0
    %v1083 = vadd.f32 %v168, %v1082
    %v1084 = vpop.f32.mrb[0].mxu0
    %1085 = vmatprep.mubr.bf16.mxu0 0
    %1086 = vmatmul.mubr.bf16.gmra.mrb[0].mxu0 %v326
    %v1087 = vpop.f32.mrb[0].mxu0
    %v1088 = vadd.f32 %v168, %v1087
    %v1089 = vpop.f32.mrb[0].mxu0
    %v1090 = vpop.f32.mrb[0].mxu0
    %v1091 = vadd.f32 %v168, %v1090
    %v1092 = vpop.f32.mrb[0].mxu0
    %1093 = vmatprep.mubr.bf16.mxu0 0
    %1094 = vmatmul.mubr.bf16.gmra.mrb[0].mxu0 %v327
    %v1095 = vpop.f32.mrb[0].mxu0
    %v1096 = vadd.f32 %v168, %v1095
    %v1097 = vpop.f32.mrb[0].mxu0
    %v1098 = vpop.f32.mrb[0].mxu0
    %v1099 = vadd.f32 %v168, %v1098
    %v1100 = vpop.f32.mrb[0].mxu0
    %1101 = vmatprep.mubr.bf16.mxu0 0
    %1102 = vmatmul.mubr.bf16.gmra.mrb[0].mxu0 %v328
    %v1103 = vpop.f32.mrb[0].mxu0
    %v1104 = vadd.f32 %v168, %v1103
    %v1105 = vpop.f32.mrb[0].mxu0
    %v1106 = vpop.f32.mrb[0].mxu0
    %v1107 = vadd.f32 %v168, %v1106
    %v1108 = vpop.f32.mrb[0].mxu0
    %1109 = vmatprep.mubr.bf16.mxu0 0
    %1110 = vmatmul.mubr.bf16.gmra.mrb[0].mxu0 %v329
    %v1111 = vpop.f32.mrb[0].mxu0
    %v1112 = vadd.f32 %v168, %v1111
    %v1113 = vpop.f32.mrb[0].mxu0
    %v1114 = vpop.f32.mrb[0].mxu0
    %v1115 = vadd.f32 %v168, %v1114
    %v1116 = vpop.f32.mrb[0].mxu0
    %1117 = vmatprep.mubr.bf16.mxu0 0
    %1118 = vmatmul.mubr.bf16.gmra.mrb[0].mxu0 %v330
    %v1119 = vpop.f32.mrb[0].mxu0
    %v1120 = vadd.f32 %v168, %v1119
    %v1121 = vpop.f32.mrb[0].mxu0
    %v1122 = vpop.f32.mrb[0].mxu0
    %v1123 = vadd.f32 %v168, %v1122
    %v1124 = vpop.f32.mrb[0].mxu0
    %1125 = vmatprep.mubr.bf16.mxu0 0
    %1126 = vmatmul.mubr.bf16.gmra.mrb[0].mxu0 %v331
    %v1127 = vpop.f32.mrb[0].mxu0
    %v1128 = vadd.f32 %v168, %v1127
    %v1129 = vpop.f32.mrb[0].mxu0
    %v1130 = vpop.f32.mrb[0].mxu0
    %v1131 = vadd.f32 %v168, %v1130
    %v1132 = vpop.f32.mrb[0].mxu0
    %1133 = vdwg.mxu0
    %v1134 = vmax.f32 %v527, 0.0
    %v1135 = vmax.f32 %v529, 0.0
    %v1136 = vmax.f32 %v880, 0.0
    %v1137 = vmax.f32 %v531, 0.0
    %v1138 = vmax.f32 %v533, 0.0
    %v1139 = vmax.f32 %v883, 0.0
    %v1140 = vmax.f32 %v537, 0.0
    %v1141 = vmax.f32 %v539, 0.0
    %v1142 = vmax.f32 %v888, 0.0
    %v1143 = vmax.f32 %v541, 0.0
    %v1144 = vmax.f32 %v543, 0.0
    %v1145 = vmax.f32 %v891, 0.0
    %v1146 = vmax.f32 %v547, 0.0
    %v1147 = vmax.f32 %v549, 0.0
    %v1148 = vmax.f32 %v896, 0.0
    %v1149 = vmax.f32 %v551, 0.0
    %v1150 = vmax.f32 %v553, 0.0
    %v1151 = vmax.f32 %v899, 0.0
    %v1152 = vmax.f32 %v557, 0.0
    %v1153 = vmax.f32 %v559, 0.0
    %v1154 = vmax.f32 %v904, 0.0
    %v1155 = vmax.f32 %v561, 0.0
    %v1156 = vmax.f32 %v563, 0.0
    %v1157 = vmax.f32 %v907, 0.0
    %v1158 = vmax.f32 %v567, 0.0
    %v1159 = vmax.f32 %v569, 0.0
    %v1160 = vmax.f32 %v912, 0.0
    %v1161 = vmax.f32 %v571, 0.0
    %v1162 = vmax.f32 %v573, 0.0
    %v1163 = vmax.f32 %v915, 0.0
    %v1164 = vmax.f32 %v577, 0.0
    %v1165 = vmax.f32 %v579, 0.0
    %v1166 = vmax.f32 %v920, 0.0
    %v1167 = vmax.f32 %v581, 0.0
    %v1168 = vmax.f32 %v583, 0.0
    %v1169 = vmax.f32 %v923, 0.0
    %v1170 = vmax.f32 %v587, 0.0
    %v1171 = vmax.f32 %v589, 0.0
    %v1172 = vmax.f32 %v928, 0.0
    %v1173 = vmax.f32 %v591, 0.0
    %v1174 = vmax.f32 %v593, 0.0
    %v1175 = vmax.f32 %v931, 0.0
    %v1176 = vmax.f32 %v597, 0.0
    %v1177 = vmax.f32 %v599, 0.0
    %v1178 = vmax.f32 %v936, 0.0
    %v1179 = vmax.f32 %v601, 0.0
    %v1180 = vmax.f32 %v603, 0.0
    %v1181 = vmax.f32 %v939, 0.0
    %v1182 = vmax.f32 %v607, 0.0
    %v1183 = vmax.f32 %v609, 0.0
    %v1184 = vmax.f32 %v944, 0.0
    %v1185 = vmax.f32 %v611, 0.0
    %v1186 = vmax.f32 %v613, 0.0
    %v1187 = vmax.f32 %v947, 0.0
    %v1188 = vmax.f32 %v617, 0.0
    %v1189 = vmax.f32 %v619, 0.0
    %v1190 = vmax.f32 %v952, 0.0
    %v1191 = vmax.f32 %v621, 0.0
    %v1192 = vmax.f32 %v623, 0.0
    %v1193 = vmax.f32 %v955, 0.0
    %v1194 = vmax.f32 %v627, 0.0
    %v1195 = vmax.f32 %v629, 0.0
    %v1196 = vmax.f32 %v960, 0.0
    %v1197 = vmax.f32 %v631, 0.0
    %v1198 = vmax.f32 %v633, 0.0
    %v1199 = vmax.f32 %v963, 0.0
    %v1200 = vmax.f32 %v637, 0.0
    %v1201 = vmax.f32 %v639, 0.0
    %v1202 = vmax.f32 %v968, 0.0
    %v1203 = vmax.f32 %v641, 0.0
    %v1204 = vmax.f32 %v643, 0.0
    %v1205 = vmax.f32 %v971, 0.0
    %v1206 = vmax.f32 %v647, 0.0
    %v1207 = vmax.f32 %v649, 0.0
    %v1208 = vmax.f32 %v976, 0.0
    %v1209 = vmax.f32 %v651, 0.0
    %v1210 = vmax.f32 %v653, 0.0
    %v1211 = vmax.f32 %v979, 0.0
    %v1212 = vmax.f32 %v657, 0.0
    %v1213 = vmax.f32 %v659, 0.0
    %v1214 = vmax.f32 %v984, 0.0
    %v1215 = vmax.f32 %v661, 0.0
    %v1216 = vmax.f32 %v663, 0.0
    %v1217 = vmax.f32 %v987, 0.0
    %v1218 = vmax.f32 %v667, 0.0
    %v1219 = vmax.f32 %v669, 0.0
    %v1220 = vmax.f32 %v992, 0.0
    %v1221 = vmax.f32 %v671, 0.0
    %v1222 = vmax.f32 %v673, 0.0
    %v1223 = vmax.f32 %v995, 0.0
    %v1224 = vmax.f32 %v677, 0.0
    %v1225 = vmax.f32 %v679, 0.0
    %v1226 = vmax.f32 %v1000, 0.0
    %v1227 = vmax.f32 %v681, 0.0
    %v1228 = vmax.f32 %v683, 0.0
    %v1229 = vmax.f32 %v1003, 0.0
    %v1230 = vmax.f32 %v687, 0.0
    %v1231 = vmax.f32 %v689, 0.0
    %v1232 = vmax.f32 %v1008, 0.0
    %v1233 = vmax.f32 %v691, 0.0
    %v1234 = vmax.f32 %v693, 0.0
    %v1235 = vmax.f32 %v1011, 0.0
    %v1236 = vmax.f32 %v697, 0.0
    %v1237 = vmax.f32 %v699, 0.0
    %v1238 = vmax.f32 %v1016, 0.0
    %v1239 = vmax.f32 %v701, 0.0
    %v1240 = vmax.f32 %v703, 0.0
    %v1241 = vmax.f32 %v1019, 0.0
    %v1242 = vmax.f32 %v707, 0.0
    %v1243 = vmax.f32 %v709, 0.0
    %v1244 = vmax.f32 %v1024, 0.0
    %v1245 = vmax.f32 %v711, 0.0
    %v1246 = vmax.f32 %v713, 0.0
    %v1247 = vmax.f32 %v1027, 0.0
    %v1248 = vmax.f32 %v717, 0.0
    %v1249 = vmax.f32 %v719, 0.0
    %v1250 = vmax.f32 %v1032, 0.0
    %v1251 = vmax.f32 %v721, 0.0
    %v1252 = vmax.f32 %v723, 0.0
    %v1253 = vmax.f32 %v1035, 0.0
    %v1254 = vmax.f32 %v727, 0.0
    %v1255 = vmax.f32 %v729, 0.0
    %v1256 = vmax.f32 %v1040, 0.0
    %v1257 = vmax.f32 %v731, 0.0
    %v1258 = vmax.f32 %v733, 0.0
    %v1259 = vmax.f32 %v1043, 0.0
    %v1260 = vmax.f32 %v737, 0.0
    %v1261 = vmax.f32 %v739, 0.0
    %v1262 = vmax.f32 %v1048, 0.0
    %v1263 = vmax.f32 %v741, 0.0
    %v1264 = vmax.f32 %v743, 0.0
    %v1265 = vmax.f32 %v1051, 0.0
    %v1266 = vmax.f32 %v747, 0.0
    %v1267 = vmax.f32 %v749, 0.0
    %v1268 = vmax.f32 %v1056, 0.0
    %v1269 = vmax.f32 %v751, 0.0
    %v1270 = vmax.f32 %v753, 0.0
    %v1271 = vmax.f32 %v1059, 0.0
    %v1272 = vmax.f32 %v757, 0.0
    %v1273 = vmax.f32 %v759, 0.0
    %v1274 = vmax.f32 %v1064, 0.0
    %v1275 = vmax.f32 %v761, 0.0
    %v1276 = vmax.f32 %v763, 0.0
    %v1277 = vmax.f32 %v1067, 0.0
    %v1278 = vmax.f32 %v767, 0.0
    %v1279 = vmax.f32 %v769, 0.0
    %v1280 = vmax.f32 %v1072, 0.0
    %v1281 = vmax.f32 %v771, 0.0
    %v1282 = vmax.f32 %v773, 0.0
    %v1283 = vmax.f32 %v1075, 0.0
    %v1284 = vmax.f32 %v777, 0.0
    %v1285 = vmax.f32 %v779, 0.0
    %v1286 = vmax.f32 %v1080, 0.0
    %v1287 = vmax.f32 %v781, 0.0
    %v1288 = vmax.f32 %v783, 0.0
    %v1289 = vmax.f32 %v1083, 0.0
    %v1290 = vmax.f32 %v787, 0.0
    %v1291 = vmax.f32 %v789, 0.0
    %v1292 = vmax.f32 %v1088, 0.0
    %v1293 = vmax.f32 %v791, 0.0
    %v1294 = vmax.f32 %v793, 0.0
    %v1295 = vmax.f32 %v1091, 0.0
    %v1296 = vmax.f32 %v797, 0.0
    %v1297 = vmax.f32 %v799, 0.0
    %v1298 = vmax.f32 %v1096, 0.0
    %v1299 = vmax.f32 %v801, 0.0
    %v1300 = vmax.f32 %v803, 0.0
    %v1301 = vmax.f32 %v1099, 0.0
    %v1302 = vmax.f32 %v807, 0.0
    %v1303 = vmax.f32 %v809, 0.0
    %v1304 = vmax.f32 %v1104, 0.0
    %v1305 = vmax.f32 %v811, 0.0
    %v1306 = vmax.f32 %v813, 0.0
    %v1307 = vmax.f32 %v1107, 0.0
    %v1308 = vmax.f32 %v817, 0.0
    %v1309 = vmax.f32 %v819, 0.0
    %v1310 = vmax.f32 %v1112, 0.0
    %v1311 = vmax.f32 %v821, 0.0
    %v1312 = vmax.f32 %v823, 0.0
    %v1313 = vmax.f32 %v1115, 0.0
    %v1314 = vmax.f32 %v827, 0.0
    %v1315 = vmax.f32 %v829, 0.0
    %v1316 = vmax.f32 %v1120, 0.0
    %v1317 = vmax.f32 %v831, 0.0
    %v1318 = vmax.f32 %v833, 0.0
    %v1319 = vmax.f32 %v1123, 0.0
    %v1320 = vmax.f32 %v837, 0.0
    %v1321 = vmax.f32 %v839, 0.0
    %v1322 = vmax.f32 %v1128, 0.0
    %v1323 = vmax.f32 %v841, 0.0
    %v1324 = vmax.f32 %v843, 0.0
    %v1325 = vmax.f32 %v1131, 0.0
    %v1326 = vpack.c.bf16 %v1137, %v1134
    %v1327 = vpack.c.bf16 %v1143, %v1140
    %v1328 = vpack.c.bf16 %v1149, %v1146
    %v1329 = vpack.c.bf16 %v1155, %v1152
    %v1330 = vpack.c.bf16 %v1161, %v1158
    %v1331 = vpack.c.bf16 %v1167, %v1164
    %v1332 = vpack.c.bf16 %v1173, %v1170
    %v1333 = vpack.c.bf16 %v1179, %v1176
    %v1334 = vpack.c.bf16 %v1185, %v1182
    %v1335 = vpack.c.bf16 %v1191, %v1188
    %v1336 = vpack.c.bf16 %v1197, %v1194
    %v1337 = vpack.c.bf16 %v1203, %v1200
    %v1338 = vpack.c.bf16 %v1209, %v1206
    %v1339 = vpack.c.bf16 %v1215, %v1212
    %v1340 = vpack.c.bf16 %v1221, %v1218
    %v1341 = vpack.c.bf16 %v1227, %v1224
    %v1342 = vpack.c.bf16 %v1233, %v1230
    %v1343 = vpack.c.bf16 %v1239, %v1236
    %v1344 = vpack.c.bf16 %v1245, %v1242
    %v1345 = vpack.c.bf16 %v1251, %v1248
    %v1346 = vpack.c.bf16 %v1257, %v1254
    %v1347 = vpack.c.bf16 %v1263, %v1260
    %v1348 = vpack.c.bf16 %v1269, %v1266
    %v1349 = vpack.c.bf16 %v1275, %v1272
    %v1350 = vpack.c.bf16 %v1281, %v1278
    %v1351 = vpack.c.bf16 %v1287, %v1284
    %v1352 = vpack.c.bf16 %v1293, %v1290
    %v1353 = vpack.c.bf16 %v1299, %v1296
    %v1354 = vpack.c.bf16 %v1305, %v1302
    %v1355 = vpack.c.bf16 %v1311, %v1308
    %v1356 = vpack.c.bf16 %v1317, %v1314
    %v1357 = vpack.c.bf16 %v1323, %v1320
    %v1390 = vunpack.c.l.b16 %v1326
    %v1391 = vunpack.c.h.b16 %v1326
    %v1392 = vunpack.c.l.b16 %v1327
    %v1393 = vunpack.c.h.b16 %v1327
    %v1394 = vunpack.c.l.b16 %v1328
    %v1395 = vunpack.c.h.b16 %v1328
    %v1396 = vunpack.c.l.b16 %v1329
    %v1397 = vunpack.c.h.b16 %v1329
    %v1398 = vunpack.c.l.b16 %v1330
    %v1399 = vunpack.c.h.b16 %v1330
    %v1400 = vunpack.c.l.b16 %v1331
    %v1401 = vunpack.c.h.b16 %v1331
    %v1402 = vunpack.c.l.b16 %v1332
    %v1403 = vunpack.c.h.b16 %v1332
    %v1404 = vunpack.c.l.b16 %v1333
    %v1405 = vunpack.c.h.b16 %v1333
    %v1406 = vunpack.c.l.b16 %v1334
    %v1407 = vunpack.c.h.b16 %v1334
    %v1408 = vunpack.c.l.b16 %v1335
    %v1409 = vunpack.c.h.b16 %v1335
    %v1410 = vunpack.c.l.b16 %v1336
    %v1411 = vunpack.c.h.b16 %v1336
    %v1412 = vunpack.c.l.b16 %v1337
    %v1413 = vunpack.c.h.b16 %v1337
    %v1414 = vunpack.c.l.b16 %v1338
    %v1415 = vunpack.c.h.b16 %v1338
    %v1416 = vunpack.c.l.b16 %v1339
    %v1417 = vunpack.c.h.b16 %v1339
    %v1418 = vunpack.c.l.b16 %v1340
    %v1419 = vunpack.c.h.b16 %v1340
    %v1420 = vunpack.c.l.b16 %v1341
    %v1421 = vunpack.c.h.b16 %v1341
    %v1422 = vunpack.c.l.b16 %v1342
    %v1423 = vunpack.c.h.b16 %v1342
    %v1424 = vunpack.c.l.b16 %v1343
    %v1425 = vunpack.c.h.b16 %v1343
    %v1426 = vunpack.c.l.b16 %v1344
    %v1427 = vunpack.c.h.b16 %v1344
    %v1428 = vunpack.c.l.b16 %v1345
    %v1429 = vunpack.c.h.b16 %v1345
    %v1430 = vunpack.c.l.b16 %v1346
    %v1431 = vunpack.c.h.b16 %v1346
    %v1432 = vunpack.c.l.b16 %v1347
    %v1433 = vunpack.c.h.b16 %v1347
    %v1434 = vunpack.c.l.b16 %v1348
    %v1435 = vunpack.c.h.b16 %v1348
    %v1436 = vunpack.c.l.b16 %v1349
    %v1437 = vunpack.c.h.b16 %v1349
    %v1438 = vunpack.c.l.b16 %v1350
    %v1439 = vunpack.c.h.b16 %v1350
    %v1440 = vunpack.c.l.b16 %v1351
    %v1441 = vunpack.c.h.b16 %v1351
    %v1442 = vunpack.c.l.b16 %v1352
    %v1443 = vunpack.c.h.b16 %v1352
    %v1444 = vunpack.c.l.b16 %v1353
    %v1445 = vunpack.c.h.b16 %v1353
    %v1446 = vunpack.c.l.b16 %v1354
    %v1447 = vunpack.c.h.b16 %v1354
    %v1448 = vunpack.c.l.b16 %v1355
    %v1449 = vunpack.c.h.b16 %v1355
    %v1450 = vunpack.c.l.b16 %v1356
    %v1451 = vunpack.c.h.b16 %v1356
    %v1452 = vunpack.c.l.b16 %v1357
    %v1453 = vunpack.c.h.b16 %v1357
    %v1454 = vpack.c.b16 %v1390, %v1390
    %v1455 = vpack.c.b16 %v1391, %v1391
    %v1456 = vpack.c.b16 %v1392, %v1392
    %v1457 = vpack.c.b16 %v1393, %v1393
    %v1458 = vpack.c.b16 %v1394, %v1394
    %v1459 = vpack.c.b16 %v1395, %v1395
    %v1460 = vpack.c.b16 %v1396, %v1396
    %v1461 = vpack.c.b16 %v1397, %v1397
    %v1462 = vpack.c.b16 %v1398, %v1398
    %v1463 = vpack.c.b16 %v1399, %v1399
    %v1464 = vpack.c.b16 %v1400, %v1400
    %v1465 = vpack.c.b16 %v1401, %v1401
    %v1466 = vpack.c.b16 %v1402, %v1402
    %v1467 = vpack.c.b16 %v1403, %v1403
    %v1468 = vpack.c.b16 %v1404, %v1404
    %v1469 = vpack.c.b16 %v1405, %v1405
    %v1470 = vpack.c.b16 %v1406, %v1406
    %v1471 = vpack.c.b16 %v1407, %v1407
    %v1472 = vpack.c.b16 %v1408, %v1408
    %v1473 = vpack.c.b16 %v1409, %v1409
    %v1474 = vpack.c.b16 %v1410, %v1410
    %v1475 = vpack.c.b16 %v1411, %v1411
    %v1476 = vpack.c.b16 %v1412, %v1412
    %v1477 = vpack.c.b16 %v1413, %v1413
    %v1478 = vpack.c.b16 %v1414, %v1414
    %v1479 = vpack.c.b16 %v1415, %v1415
    %v1480 = vpack.c.b16 %v1416, %v1416
    %v1481 = vpack.c.b16 %v1417, %v1417
    %v1482 = vpack.c.b16 %v1418, %v1418
    %v1483 = vpack.c.b16 %v1419, %v1419
    %v1484 = vpack.c.b16 %v1420, %v1420
    %v1485 = vpack.c.b16 %v1421, %v1421
    %v1486 = vpack.c.b16 %v1422, %v1422
    %v1487 = vpack.c.b16 %v1423, %v1423
    %v1488 = vpack.c.b16 %v1424, %v1424
    %v1489 = vpack.c.b16 %v1425, %v1425
    %v1490 = vpack.c.b16 %v1426, %v1426
    %v1491 = vpack.c.b16 %v1427, %v1427
    %v1492 = vpack.c.b16 %v1428, %v1428
    %v1493 = vpack.c.b16 %v1429, %v1429
    %v1494 = vpack.c.b16 %v1430, %v1430
    %v1495 = vpack.c.b16 %v1431, %v1431
    %v1496 = vpack.c.b16 %v1432, %v1432
    %v1497 = vpack.c.b16 %v1433, %v1433
    %v1498 = vpack.c.b16 %v1434, %v1434
    %v1499 = vpack.c.b16 %v1435, %v1435
    %v1500 = vpack.c.b16 %v1436, %v1436
    %v1501 = vpack.c.b16 %v1437, %v1437
    %v1502 = vpack.c.b16 %v1438, %v1438
    %v1503 = vpack.c.b16 %v1439, %v1439
    %v1504 = vpack.c.b16 %v1440, %v1440
    %v1505 = vpack.c.b16 %v1441, %v1441
    %v1506 = vpack.c.b16 %v1442, %v1442
    %v1507 = vpack.c.b16 %v1443, %v1443
    %v1508 = vpack.c.b16 %v1444, %v1444
    %v1509 = vpack.c.b16 %v1445, %v1445
    %v1510 = vpack.c.b16 %v1446, %v1446
    %v1511 = vpack.c.b16 %v1447, %v1447
    %v1512 = vpack.c.b16 %v1448, %v1448
    %v1513 = vpack.c.b16 %v1449, %v1449
    %v1514 = vpack.c.b16 %v1450, %v1450
    %v1515 = vpack.c.b16 %v1451, %v1451
    %v1516 = vpack.c.b16 %v1452, %v1452
    %v1517 = vpack.c.b16 %v1453, %v1453
    %1582 = vst [vmem:[#allocation8] sm:$0xf] %v1454
    %1583 = vst [vmem:[#allocation8 + $0x4] sm:$0xf] %v1455
    %1584 = vst [vmem:[#allocation8 + $0x8] sm:$0xf] %v1456
    %1585 = vst [vmem:[#allocation8 + $0xc] sm:$0xf] %v1457
    %1586 = vst [vmem:[#allocation8 + $0x10] sm:$0xf] %v1458
    %1587 = vst [vmem:[#allocation8 + $0x14] sm:$0xf] %v1459
    %1588 = vst [vmem:[#allocation8 + $0x18] sm:$0xf] %v1460
    %1589 = vst [vmem:[#allocation8 + $0x1c] sm:$0xf] %v1461
    %1590 = vst [vmem:[#allocation8 + $0x20] sm:$0xf] %v1462
    %1591 = vst [vmem:[#allocation8 + $0x24] sm:$0xf] %v1463
    %1592 = vst [vmem:[#allocation8 + $0x28] sm:$0xf] %v1464
    %1593 = vst [vmem:[#allocation8 + $0x2c] sm:$0xf] %v1465
    %1594 = vst [vmem:[#allocation8 + $0x30] sm:$0xf] %v1466
    %1595 = vst [vmem:[#allocation8 + $0x34] sm:$0xf] %v1467
    %1596 = vst [vmem:[#allocation8 + $0x38] sm:$0xf] %v1468
    %1597 = vst [vmem:[#allocation8 + $0x3c] sm:$0xf] %v1469
    %1598 = vst [vmem:[#allocation8 + $0x40] sm:$0xf] %v1470
    %1599 = vst [vmem:[#allocation8 + $0x44] sm:$0xf] %v1471
    %1600 = vst [vmem:[#allocation8 + $0x48] sm:$0xf] %v1472
    %1601 = vst [vmem:[#allocation8 + $0x4c] sm:$0xf] %v1473
    %1602 = vst [vmem:[#allocation8 + $0x50] sm:$0xf] %v1474
    %1603 = vst [vmem:[#allocation8 + $0x54] sm:$0xf] %v1475
    %1604 = vst [vmem:[#allocation8 + $0x58] sm:$0xf] %v1476
    %1605 = vst [vmem:[#allocation8 + $0x5c] sm:$0xf] %v1477
    %1606 = vst [vmem:[#allocation8 + $0x60] sm:$0xf] %v1478
    %1607 = vst [vmem:[#allocation8 + $0x64] sm:$0xf] %v1479
    %1608 = vst [vmem:[#allocation8 + $0x68] sm:$0xf] %v1480
    %1609 = vst [vmem:[#allocation8 + $0x6c] sm:$0xf] %v1481
    %1610 = vst [vmem:[#allocation8 + $0x70] sm:$0xf] %v1482
    %1611 = vst [vmem:[#allocation8 + $0x74] sm:$0xf] %v1483
    %1612 = vst [vmem:[#allocation8 + $0x78] sm:$0xf] %v1484
    %1613 = vst [vmem:[#allocation8 + $0x7c] sm:$0xf] %v1485
    %1614 = vst [vmem:[#allocation8 + $0x80] sm:$0xf] %v1486
    %1615 = vst [vmem:[#allocation8 + $0x84] sm:$0xf] %v1487
    %1616 = vst [vmem:[#allocation8 + $0x88] sm:$0xf] %v1488
    %1617 = vst [vmem:[#allocation8 + $0x8c] sm:$0xf] %v1489
    %1618 = vst [vmem:[#allocation8 + $0x90] sm:$0xf] %v1490
    %1619 = vst [vmem:[#allocation8 + $0x94] sm:$0xf] %v1491
    %1620 = vst [vmem:[#allocation8 + $0x98] sm:$0xf] %v1492
    %1621 = vst [vmem:[#allocation8 + $0x9c] sm:$0xf] %v1493
    %1622 = vst [vmem:[#allocation8 + $0xa0] sm:$0xf] %v1494
    %1623 = vst [vmem:[#allocation8 + $0xa4] sm:$0xf] %v1495
    %1624 = vst [vmem:[#allocation8 + $0xa8] sm:$0xf] %v1496
    %1625 = vst [vmem:[#allocation8 + $0xac] sm:$0xf] %v1497
    %1626 = vst [vmem:[#allocation8 + $0xb0] sm:$0xf] %v1498
    %1627 = vst [vmem:[#allocation8 + $0xb4] sm:$0xf] %v1499
    %1628 = vst [vmem:[#allocation8 + $0xb8] sm:$0xf] %v1500
    %1629 = vst [vmem:[#allocation8 + $0xbc] sm:$0xf] %v1501
    %1630 = vst [vmem:[#allocation8 + $0xc0] sm:$0xf] %v1502
    %1631 = vst [vmem:[#allocation8 + $0xc4] sm:$0xf] %v1503
    %1632 = vst [vmem:[#allocation8 + $0xc8] sm:$0xf] %v1504
    %1633 = vst [vmem:[#allocation8 + $0xcc] sm:$0xf] %v1505
    %1634 = vst [vmem:[#allocation8 + $0xd0] sm:$0xf] %v1506
    %1635 = vst [vmem:[#allocation8 + $0xd4] sm:$0xf] %v1507
    %1636 = vst [vmem:[#allocation8 + $0xd8] sm:$0xf] %v1508
    %1637 = vst [vmem:[#allocation8 + $0xdc] sm:$0xf] %v1509
    %1638 = vst [vmem:[#allocation8 + $0xe0] sm:$0xf] %v1510
    %1639 = vst [vmem:[#allocation8 + $0xe4] sm:$0xf] %v1511
    %1640 = vst [vmem:[#allocation8 + $0xe8] sm:$0xf] %v1512
    %1641 = vst [vmem:[#allocation8 + $0xec] sm:$0xf] %v1513
    %1642 = vst [vmem:[#allocation8 + $0xf0] sm:$0xf] %v1514
    %1643 = vst [vmem:[#allocation8 + $0xf4] sm:$0xf] %v1515
    %1644 = vst [vmem:[#allocation8 + $0xf8] sm:$0xf] %v1516
    %1645 = vst [vmem:[#allocation8 + $0xfc] sm:$0xf] %v1517
    %v1646 = vpack.c.bf16 %v1138, %v1135
    %v1647 = vpack.c.bf16 %v1144, %v1141
    %v1648 = vpack.c.bf16 %v1150, %v1147
    %v1649 = vpack.c.bf16 %v1156, %v1153
    %v1650 = vpack.c.bf16 %v1162, %v1159
    %v1651 = vpack.c.bf16 %v1168, %v1165
    %v1652 = vpack.c.bf16 %v1174, %v1171
    %v1653 = vpack.c.bf16 %v1180, %v1177
    %v1654 = vpack.c.bf16 %v1186, %v1183
    %v1655 = vpack.c.bf16 %v1192, %v1189
    %v1656 = vpack.c.bf16 %v1198, %v1195
    %v1657 = vpack.c.bf16 %v1204, %v1201
    %v1658 = vpack.c.bf16 %v1210, %v1207
    %v1659 = vpack.c.bf16 %v1216, %v1213
    %v1660 = vpack.c.bf16 %v1222, %v1219
    %v1661 = vpack.c.bf16 %v1228, %v1225
    %v1662 = vpack.c.bf16 %v1234, %v1231
    %v1663 = vpack.c.bf16 %v1240, %v1237
    %v1664 = vpack.c.bf16 %v1246, %v1243
    %v1665 = vpack.c.bf16 %v1252, %v1249
    %v1666 = vpack.c.bf16 %v1258, %v1255
    %v1667 = vpack.c.bf16 %v1264, %v1261
    %v1668 = vpack.c.bf16 %v1270, %v1267
    %v1669 = vpack.c.bf16 %v1276, %v1273
    %v1670 = vpack.c.bf16 %v1282, %v1279
    %v1671 = vpack.c.bf16 %v1288, %v1285
    %v1672 = vpack.c.bf16 %v1294, %v1291
    %v1673 = vpack.c.bf16 %v1300, %v1297
    %v1674 = vpack.c.bf16 %v1306, %v1303
    %v1675 = vpack.c.bf16 %v1312, %v1309
    %v1676 = vpack.c.bf16 %v1318, %v1315
    %v1677 = vpack.c.bf16 %v1324, %v1321
    %v1710 = vunpack.c.l.b16 %v1646
    %v1711 = vunpack.c.h.b16 %v1646
    %v1712 = vunpack.c.l.b16 %v1647
    %v1713 = vunpack.c.h.b16 %v1647
    %v1714 = vunpack.c.l.b16 %v1648
    %v1715 = vunpack.c.h.b16 %v1648
    %v1716 = vunpack.c.l.b16 %v1649
    %v1717 = vunpack.c.h.b16 %v1649
    %v1718 = vunpack.c.l.b16 %v1650
    %v1719 = vunpack.c.h.b16 %v1650
    %v1720 = vunpack.c.l.b16 %v1651
    %v1721 = vunpack.c.h.b16 %v1651
    %v1722 = vunpack.c.l.b16 %v1652
    %v1723 = vunpack.c.h.b16 %v1652
    %v1724 = vunpack.c.l.b16 %v1653
    %v1725 = vunpack.c.h.b16 %v1653
    %v1726 = vunpack.c.l.b16 %v1654
    %v1727 = vunpack.c.h.b16 %v1654
    %v1728 = vunpack.c.l.b16 %v1655
    %v1729 = vunpack.c.h.b16 %v1655
    %v1730 = vunpack.c.l.b16 %v1656
    %v1731 = vunpack.c.h.b16 %v1656
    %v1732 = vunpack.c.l.b16 %v1657
    %v1733 = vunpack.c.h.b16 %v1657
    %v1734 = vunpack.c.l.b16 %v1658
    %v1735 = vunpack.c.h.b16 %v1658
    %v1736 = vunpack.c.l.b16 %v1659
    %v1737 = vunpack.c.h.b16 %v1659
    %v1738 = vunpack.c.l.b16 %v1660
    %v1739 = vunpack.c.h.b16 %v1660
    %v1740 = vunpack.c.l.b16 %v1661
    %v1741 = vunpack.c.h.b16 %v1661
    %v1742 = vunpack.c.l.b16 %v1662
    %v1743 = vunpack.c.h.b16 %v1662
    %v1744 = vunpack.c.l.b16 %v1663
    %v1745 = vunpack.c.h.b16 %v1663
    %v1746 = vunpack.c.l.b16 %v1664
    %v1747 = vunpack.c.h.b16 %v1664
    %v1748 = vunpack.c.l.b16 %v1665
    %v1749 = vunpack.c.h.b16 %v1665
    %v1750 = vunpack.c.l.b16 %v1666
    %v1751 = vunpack.c.h.b16 %v1666
    %v1752 = vunpack.c.l.b16 %v1667
    %v1753 = vunpack.c.h.b16 %v1667
    %v1754 = vunpack.c.l.b16 %v1668
    %v1755 = vunpack.c.h.b16 %v1668
    %v1756 = vunpack.c.l.b16 %v1669
    %v1757 = vunpack.c.h.b16 %v1669
    %v1758 = vunpack.c.l.b16 %v1670
    %v1759 = vunpack.c.h.b16 %v1670
    %v1760 = vunpack.c.l.b16 %v1671
    %v1761 = vunpack.c.h.b16 %v1671
    %v1762 = vunpack.c.l.b16 %v1672
    %v1763 = vunpack.c.h.b16 %v1672
    %v1764 = vunpack.c.l.b16 %v1673
    %v1765 = vunpack.c.h.b16 %v1673
    %v1766 = vunpack.c.l.b16 %v1674
    %v1767 = vunpack.c.h.b16 %v1674
    %v1768 = vunpack.c.l.b16 %v1675
    %v1769 = vunpack.c.h.b16 %v1675
    %v1770 = vunpack.c.l.b16 %v1676
    %v1771 = vunpack.c.h.b16 %v1676
    %v1772 = vunpack.c.l.b16 %v1677
    %v1773 = vunpack.c.h.b16 %v1677
    %v1774 = vpack.c.b16 %v1710, %v1710
    %v1775 = vpack.c.b16 %v1711, %v1711
    %v1776 = vpack.c.b16 %v1712, %v1712
    %v1777 = vpack.c.b16 %v1713, %v1713
    %v1778 = vpack.c.b16 %v1714, %v1714
    %v1779 = vpack.c.b16 %v1715, %v1715
    %v1780 = vpack.c.b16 %v1716, %v1716
    %v1781 = vpack.c.b16 %v1717, %v1717
    %v1782 = vpack.c.b16 %v1718, %v1718
    %v1783 = vpack.c.b16 %v1719, %v1719
    %v1784 = vpack.c.b16 %v1720, %v1720
    %v1785 = vpack.c.b16 %v1721, %v1721
    %v1786 = vpack.c.b16 %v1722, %v1722
    %v1787 = vpack.c.b16 %v1723, %v1723
    %v1788 = vpack.c.b16 %v1724, %v1724
    %v1789 = vpack.c.b16 %v1725, %v1725
    %v1790 = vpack.c.b16 %v1726, %v1726
    %v1791 = vpack.c.b16 %v1727, %v1727
    %v1792 = vpack.c.b16 %v1728, %v1728
    %v1793 = vpack.c.b16 %v1729, %v1729
    %v1794 = vpack.c.b16 %v1730, %v1730
    %v1795 = vpack.c.b16 %v1731, %v1731
    %v1796 = vpack.c.b16 %v1732, %v1732
    %v1797 = vpack.c.b16 %v1733, %v1733
    %v1798 = vpack.c.b16 %v1734, %v1734
    %v1799 = vpack.c.b16 %v1735, %v1735
    %v1800 = vpack.c.b16 %v1736, %v1736
    %v1801 = vpack.c.b16 %v1737, %v1737
    %v1802 = vpack.c.b16 %v1738, %v1738
    %v1803 = vpack.c.b16 %v1739, %v1739
    %v1804 = vpack.c.b16 %v1740, %v1740
    %v1805 = vpack.c.b16 %v1741, %v1741
    %v1806 = vpack.c.b16 %v1742, %v1742
    %v1807 = vpack.c.b16 %v1743, %v1743
    %v1808 = vpack.c.b16 %v1744, %v1744
    %v1809 = vpack.c.b16 %v1745, %v1745
    %v1810 = vpack.c.b16 %v1746, %v1746
    %v1811 = vpack.c.b16 %v1747, %v1747
    %v1812 = vpack.c.b16 %v1748, %v1748
    %v1813 = vpack.c.b16 %v1749, %v1749
    %v1814 = vpack.c.b16 %v1750, %v1750
    %v1815 = vpack.c.b16 %v1751, %v1751
    %v1816 = vpack.c.b16 %v1752, %v1752
    %v1817 = vpack.c.b16 %v1753, %v1753
    %v1818 = vpack.c.b16 %v1754, %v1754
    %v1819 = vpack.c.b16 %v1755, %v1755
    %v1820 = vpack.c.b16 %v1756, %v1756
    %v1821 = vpack.c.b16 %v1757, %v1757
    %v1822 = vpack.c.b16 %v1758, %v1758
    %v1823 = vpack.c.b16 %v1759, %v1759
    %v1824 = vpack.c.b16 %v1760, %v1760
    %v1825 = vpack.c.b16 %v1761, %v1761
    %v1826 = vpack.c.b16 %v1762, %v1762
    %v1827 = vpack.c.b16 %v1763, %v1763
    %v1828 = vpack.c.b16 %v1764, %v1764
    %v1829 = vpack.c.b16 %v1765, %v1765
    %v1830 = vpack.c.b16 %v1766, %v1766
    %v1831 = vpack.c.b16 %v1767, %v1767
    %v1832 = vpack.c.b16 %v1768, %v1768
    %v1833 = vpack.c.b16 %v1769, %v1769
    %v1834 = vpack.c.b16 %v1770, %v1770
    %v1835 = vpack.c.b16 %v1771, %v1771
    %v1836 = vpack.c.b16 %v1772, %v1772
    %v1837 = vpack.c.b16 %v1773, %v1773
    %1902 = vst [vmem:[#allocation9] sm:$0xf] %v1774
    %1903 = vst [vmem:[#allocation9 + $0x4] sm:$0xf] %v1775
    %1904 = vst [vmem:[#allocation9 + $0x8] sm:$0xf] %v1776
    %1905 = vst [vmem:[#allocation9 + $0xc] sm:$0xf] %v1777
    %1906 = vst [vmem:[#allocation9 + $0x10] sm:$0xf] %v1778
    %1907 = vst [vmem:[#allocation9 + $0x14] sm:$0xf] %v1779
    %1908 = vst [vmem:[#allocation9 + $0x18] sm:$0xf] %v1780
    %1909 = vst [vmem:[#allocation9 + $0x1c] sm:$0xf] %v1781
    %1910 = vst [vmem:[#allocation9 + $0x20] sm:$0xf] %v1782
    %1911 = vst [vmem:[#allocation9 + $0x24] sm:$0xf] %v1783
    %1912 = vst [vmem:[#allocation9 + $0x28] sm:$0xf] %v1784
    %1913 = vst [vmem:[#allocation9 + $0x2c] sm:$0xf] %v1785
    %1914 = vst [vmem:[#allocation9 + $0x30] sm:$0xf] %v1786
    %1915 = vst [vmem:[#allocation9 + $0x34] sm:$0xf] %v1787
    %1916 = vst [vmem:[#allocation9 + $0x38] sm:$0xf] %v1788
    %1917 = vst [vmem:[#allocation9 + $0x3c] sm:$0xf] %v1789
    %1918 = vst [vmem:[#allocation9 + $0x40] sm:$0xf] %v1790
    %1919 = vst [vmem:[#allocation9 + $0x44] sm:$0xf] %v1791
    %1920 = vst [vmem:[#allocation9 + $0x48] sm:$0xf] %v1792
    %1921 = vst [vmem:[#allocation9 + $0x4c] sm:$0xf] %v1793
    %1922 = vst [vmem:[#allocation9 + $0x50] sm:$0xf] %v1794
    %1923 = vst [vmem:[#allocation9 + $0x54] sm:$0xf] %v1795
    %1924 = vst [vmem:[#allocation9 + $0x58] sm:$0xf] %v1796
    %1925 = vst [vmem:[#allocation9 + $0x5c] sm:$0xf] %v1797
    %1926 = vst [vmem:[#allocation9 + $0x60] sm:$0xf] %v1798
    %1927 = vst [vmem:[#allocation9 + $0x64] sm:$0xf] %v1799
    %1928 = vst [vmem:[#allocation9 + $0x68] sm:$0xf] %v1800
    %1929 = vst [vmem:[#allocation9 + $0x6c] sm:$0xf] %v1801
    %1930 = vst [vmem:[#allocation9 + $0x70] sm:$0xf] %v1802
    %1931 = vst [vmem:[#allocation9 + $0x74] sm:$0xf] %v1803
    %1932 = vst [vmem:[#allocation9 + $0x78] sm:$0xf] %v1804
    %1933 = vst [vmem:[#allocation9 + $0x7c] sm:$0xf] %v1805
    %1934 = vst [vmem:[#allocation9 + $0x80] sm:$0xf] %v1806
    %1935 = vst [vmem:[#allocation9 + $0x84] sm:$0xf] %v1807
    %1936 = vst [vmem:[#allocation9 + $0x88] sm:$0xf] %v1808
    %1937 = vst [vmem:[#allocation9 + $0x8c] sm:$0xf] %v1809
    %1938 = vst [vmem:[#allocation9 + $0x90] sm:$0xf] %v1810
    %1939 = vst [vmem:[#allocation9 + $0x94] sm:$0xf] %v1811
    %1940 = vst [vmem:[#allocation9 + $0x98] sm:$0xf] %v1812
    %1941 = vst [vmem:[#allocation9 + $0x9c] sm:$0xf] %v1813
    %1942 = vst [vmem:[#allocation9 + $0xa0] sm:$0xf] %v1814
    %1943 = vst [vmem:[#allocation9 + $0xa4] sm:$0xf] %v1815
    %1944 = vst [vmem:[#allocation9 + $0xa8] sm:$0xf] %v1816
    %1945 = vst [vmem:[#allocation9 + $0xac] sm:$0xf] %v1817
    %1946 = vst [vmem:[#allocation9 + $0xb0] sm:$0xf] %v1818
    %1947 = vst [vmem:[#allocation9 + $0xb4] sm:$0xf] %v1819
    %1948 = vst [vmem:[#allocation9 + $0xb8] sm:$0xf] %v1820
    %1949 = vst [vmem:[#allocation9 + $0xbc] sm:$0xf] %v1821
    %1950 = vst [vmem:[#allocation9 + $0xc0] sm:$0xf] %v1822
    %1951 = vst [vmem:[#allocation9 + $0xc4] sm:$0xf] %v1823
    %1952 = vst [vmem:[#allocation9 + $0xc8] sm:$0xf] %v1824
    %1953 = vst [vmem:[#allocation9 + $0xcc] sm:$0xf] %v1825
    %1954 = vst [vmem:[#allocation9 + $0xd0] sm:$0xf] %v1826
    %1955 = vst [vmem:[#allocation9 + $0xd4] sm:$0xf] %v1827
    %1956 = vst [vmem:[#allocation9 + $0xd8] sm:$0xf] %v1828
    %1957 = vst [vmem:[#allocation9 + $0xdc] sm:$0xf] %v1829
    %1958 = vst [vmem:[#allocation9 + $0xe0] sm:$0xf] %v1830
    %1959 = vst [vmem:[#allocation9 + $0xe4] sm:$0xf] %v1831
    %1960 = vst [vmem:[#allocation9 + $0xe8] sm:$0xf] %v1832
    %1961 = vst [vmem:[#allocation9 + $0xec] sm:$0xf] %v1833
    %1962 = vst [vmem:[#allocation9 + $0xf0] sm:$0xf] %v1834
    %1963 = vst [vmem:[#allocation9 + $0xf4] sm:$0xf] %v1835
    %1964 = vst [vmem:[#allocation9 + $0xf8] sm:$0xf] %v1836
    %1965 = vst [vmem:[#allocation9 + $0xfc] sm:$0xf] %v1837
    %v1966 = vpack.c.bf16 %v1139, %v1136
    %v1967 = vpack.c.bf16 %v1145, %v1142
    %v1968 = vpack.c.bf16 %v1151, %v1148
    %v1969 = vpack.c.bf16 %v1157, %v1154
    %v1970 = vpack.c.bf16 %v1163, %v1160
    %v1971 = vpack.c.bf16 %v1169, %v1166
    %v1972 = vpack.c.bf16 %v1175, %v1172
    %v1973 = vpack.c.bf16 %v1181, %v1178
    %v1974 = vpack.c.bf16 %v1187, %v1184
    %v1975 = vpack.c.bf16 %v1193, %v1190
    %v1976 = vpack.c.bf16 %v1199, %v1196
    %v1977 = vpack.c.bf16 %v1205, %v1202
    %v1978 = vpack.c.bf16 %v1211, %v1208
    %v1979 = vpack.c.bf16 %v1217, %v1214
    %v1980 = vpack.c.bf16 %v1223, %v1220
    %v1981 = vpack.c.bf16 %v1229, %v1226
    %v1982 = vpack.c.bf16 %v1235, %v1232
    %v1983 = vpack.c.bf16 %v1241, %v1238
    %v1984 = vpack.c.bf16 %v1247, %v1244
    %v1985 = vpack.c.bf16 %v1253, %v1250
    %v1986 = vpack.c.bf16 %v1259, %v1256
    %v1987 = vpack.c.bf16 %v1265, %v1262
    %v1988 = vpack.c.bf16 %v1271, %v1268
    %v1989 = vpack.c.bf16 %v1277, %v1274
    %v1990 = vpack.c.bf16 %v1283, %v1280
    %v1991 = vpack.c.bf16 %v1289, %v1286
    %v1992 = vpack.c.bf16 %v1295, %v1292
    %v1993 = vpack.c.bf16 %v1301, %v1298
    %v1994 = vpack.c.bf16 %v1307, %v1304
    %v1995 = vpack.c.bf16 %v1313, %v1310
    %v1996 = vpack.c.bf16 %v1319, %v1316
    %v1997 = vpack.c.bf16 %v1325, %v1322
    %v2030 = vunpack.c.l.b16 %v1966
    %v2031 = vunpack.c.h.b16 %v1966
    %v2032 = vunpack.c.l.b16 %v1967
    %v2033 = vunpack.c.h.b16 %v1967
    %v2034 = vunpack.c.l.b16 %v1968
    %v2035 = vunpack.c.h.b16 %v1968
    %v2036 = vunpack.c.l.b16 %v1969
    %v2037 = vunpack.c.h.b16 %v1969
    %v2038 = vunpack.c.l.b16 %v1970
    %v2039 = vunpack.c.h.b16 %v1970
    %v2040 = vunpack.c.l.b16 %v1971
    %v2041 = vunpack.c.h.b16 %v1971
    %v2042 = vunpack.c.l.b16 %v1972
    %v2043 = vunpack.c.h.b16 %v1972
    %v2044 = vunpack.c.l.b16 %v1973
    %v2045 = vunpack.c.h.b16 %v1973
    %v2046 = vunpack.c.l.b16 %v1974
    %v2047 = vunpack.c.h.b16 %v1974
    %v2048 = vunpack.c.l.b16 %v1975
    %v2049 = vunpack.c.h.b16 %v1975
    %v2050 = vunpack.c.l.b16 %v1976
    %v2051 = vunpack.c.h.b16 %v1976
    %v2052 = vunpack.c.l.b16 %v1977
    %v2053 = vunpack.c.h.b16 %v1977
    %v2054 = vunpack.c.l.b16 %v1978
    %v2055 = vunpack.c.h.b16 %v1978
    %v2056 = vunpack.c.l.b16 %v1979
    %v2057 = vunpack.c.h.b16 %v1979
    %v2058 = vunpack.c.l.b16 %v1980
    %v2059 = vunpack.c.h.b16 %v1980
    %v2060 = vunpack.c.l.b16 %v1981
    %v2061 = vunpack.c.h.b16 %v1981
    %v2062 = vunpack.c.l.b16 %v1982
    %v2063 = vunpack.c.h.b16 %v1982
    %v2064 = vunpack.c.l.b16 %v1983
    %v2065 = vunpack.c.h.b16 %v1983
    %v2066 = vunpack.c.l.b16 %v1984
    %v2067 = vunpack.c.h.b16 %v1984
    %v2068 = vunpack.c.l.b16 %v1985
    %v2069 = vunpack.c.h.b16 %v1985
    %v2070 = vunpack.c.l.b16 %v1986
    %v2071 = vunpack.c.h.b16 %v1986
    %v2072 = vunpack.c.l.b16 %v1987
    %v2073 = vunpack.c.h.b16 %v1987
    %v2074 = vunpack.c.l.b16 %v1988
    %v2075 = vunpack.c.h.b16 %v1988
    %v2076 = vunpack.c.l.b16 %v1989
    %v2077 = vunpack.c.h.b16 %v1989
    %v2078 = vunpack.c.l.b16 %v1990
    %v2079 = vunpack.c.h.b16 %v1990
    %v2080 = vunpack.c.l.b16 %v1991
    %v2081 = vunpack.c.h.b16 %v1991
    %v2082 = vunpack.c.l.b16 %v1992
    %v2083 = vunpack.c.h.b16 %v1992
    %v2084 = vunpack.c.l.b16 %v1993
    %v2085 = vunpack.c.h.b16 %v1993
    %v2086 = vunpack.c.l.b16 %v1994
    %v2087 = vunpack.c.h.b16 %v1994
    %v2088 = vunpack.c.l.b16 %v1995
    %v2089 = vunpack.c.h.b16 %v1995
    %v2090 = vunpack.c.l.b16 %v1996
    %v2091 = vunpack.c.h.b16 %v1996
    %v2092 = vunpack.c.l.b16 %v1997
    %v2093 = vunpack.c.h.b16 %v1997
    %v2094 = vpack.c.b16 %v2030, %v2030
    %v2095 = vpack.c.b16 %v2031, %v2031
    %v2096 = vpack.c.b16 %v2032, %v2032
    %v2097 = vpack.c.b16 %v2033, %v2033
    %v2098 = vpack.c.b16 %v2034, %v2034
    %v2099 = vpack.c.b16 %v2035, %v2035
    %v2100 = vpack.c.b16 %v2036, %v2036
    %v2101 = vpack.c.b16 %v2037, %v2037
    %v2102 = vpack.c.b16 %v2038, %v2038
    %v2103 = vpack.c.b16 %v2039, %v2039
    %v2104 = vpack.c.b16 %v2040, %v2040
    %v2105 = vpack.c.b16 %v2041, %v2041
    %v2106 = vpack.c.b16 %v2042, %v2042
    %v2107 = vpack.c.b16 %v2043, %v2043
    %v2108 = vpack.c.b16 %v2044, %v2044
    %v2109 = vpack.c.b16 %v2045, %v2045
    %v2110 = vpack.c.b16 %v2046, %v2046
    %v2111 = vpack.c.b16 %v2047, %v2047
    %v2112 = vpack.c.b16 %v2048, %v2048
    %v2113 = vpack.c.b16 %v2049, %v2049
    %v2114 = vpack.c.b16 %v2050, %v2050
    %v2115 = vpack.c.b16 %v2051, %v2051
    %v2116 = vpack.c.b16 %v2052, %v2052
    %v2117 = vpack.c.b16 %v2053, %v2053
    %v2118 = vpack.c.b16 %v2054, %v2054
    %v2119 = vpack.c.b16 %v2055, %v2055
    %v2120 = vpack.c.b16 %v2056, %v2056
    %v2121 = vpack.c.b16 %v2057, %v2057
    %v2122 = vpack.c.b16 %v2058, %v2058
    %v2123 = vpack.c.b16 %v2059, %v2059
    %v2124 = vpack.c.b16 %v2060, %v2060
    %v2125 = vpack.c.b16 %v2061, %v2061
    %v2126 = vpack.c.b16 %v2062, %v2062
    %v2127 = vpack.c.b16 %v2063, %v2063
    %v2128 = vpack.c.b16 %v2064, %v2064
    %v2129 = vpack.c.b16 %v2065, %v2065
    %v2130 = vpack.c.b16 %v2066, %v2066
    %v2131 = vpack.c.b16 %v2067, %v2067
    %v2132 = vpack.c.b16 %v2068, %v2068
    %v2133 = vpack.c.b16 %v2069, %v2069
    %v2134 = vpack.c.b16 %v2070, %v2070
    %v2135 = vpack.c.b16 %v2071, %v2071
    %v2136 = vpack.c.b16 %v2072, %v2072
    %v2137 = vpack.c.b16 %v2073, %v2073
    %v2138 = vpack.c.b16 %v2074, %v2074
    %v2139 = vpack.c.b16 %v2075, %v2075
    %v2140 = vpack.c.b16 %v2076, %v2076
    %v2141 = vpack.c.b16 %v2077, %v2077
    %v2142 = vpack.c.b16 %v2078, %v2078
    %v2143 = vpack.c.b16 %v2079, %v2079
    %v2144 = vpack.c.b16 %v2080, %v2080
    %v2145 = vpack.c.b16 %v2081, %v2081
    %v2146 = vpack.c.b16 %v2082, %v2082
    %v2147 = vpack.c.b16 %v2083, %v2083
    %v2148 = vpack.c.b16 %v2084, %v2084
    %v2149 = vpack.c.b16 %v2085, %v2085
    %v2150 = vpack.c.b16 %v2086, %v2086
    %v2151 = vpack.c.b16 %v2087, %v2087
    %v2152 = vpack.c.b16 %v2088, %v2088
    %v2153 = vpack.c.b16 %v2089, %v2089
    %v2154 = vpack.c.b16 %v2090, %v2090
    %v2155 = vpack.c.b16 %v2091, %v2091
    %v2156 = vpack.c.b16 %v2092, %v2092
    %v2157 = vpack.c.b16 %v2093, %v2093
    %2222 = vst [vmem:[#allocation11] sm:$0xf] %v2094
    %2223 = vst [vmem:[#allocation11 + $0x4] sm:$0xf] %v2095
    %2224 = vst [vmem:[#allocation11 + $0x8] sm:$0xf] %v2096
    %2225 = vst [vmem:[#allocation11 + $0xc] sm:$0xf] %v2097
    %2226 = vst [vmem:[#allocation11 + $0x10] sm:$0xf] %v2098
    %2227 = vst [vmem:[#allocation11 + $0x14] sm:$0xf] %v2099
    %2228 = vst [vmem:[#allocation11 + $0x18] sm:$0xf] %v2100
    %2229 = vst [vmem:[#allocation11 + $0x1c] sm:$0xf] %v2101
    %2230 = vst [vmem:[#allocation11 + $0x20] sm:$0xf] %v2102
    %2231 = vst [vmem:[#allocation11 + $0x24] sm:$0xf] %v2103
    %2232 = vst [vmem:[#allocation11 + $0x28] sm:$0xf] %v2104
    %2233 = vst [vmem:[#allocation11 + $0x2c] sm:$0xf] %v2105
    %2234 = vst [vmem:[#allocation11 + $0x30] sm:$0xf] %v2106
    %2235 = vst [vmem:[#allocation11 + $0x34] sm:$0xf] %v2107
    %2236 = vst [vmem:[#allocation11 + $0x38] sm:$0xf] %v2108
    %2237 = vst [vmem:[#allocation11 + $0x3c] sm:$0xf] %v2109
    %2238 = vst [vmem:[#allocation11 + $0x40] sm:$0xf] %v2110
    %2239 = vst [vmem:[#allocation11 + $0x44] sm:$0xf] %v2111
    %2240 = vst [vmem:[#allocation11 + $0x48] sm:$0xf] %v2112
    %2241 = vst [vmem:[#allocation11 + $0x4c] sm:$0xf] %v2113
    %2242 = vst [vmem:[#allocation11 + $0x50] sm:$0xf] %v2114
    %2243 = vst [vmem:[#allocation11 + $0x54] sm:$0xf] %v2115
    %2244 = vst [vmem:[#allocation11 + $0x58] sm:$0xf] %v2116
    %2245 = vst [vmem:[#allocation11 + $0x5c] sm:$0xf] %v2117
    %2246 = vst [vmem:[#allocation11 + $0x60] sm:$0xf] %v2118
    %2247 = vst [vmem:[#allocation11 + $0x64] sm:$0xf] %v2119
    %2248 = vst [vmem:[#allocation11 + $0x68] sm:$0xf] %v2120
    %2249 = vst [vmem:[#allocation11 + $0x6c] sm:$0xf] %v2121
    %2250 = vst [vmem:[#allocation11 + $0x70] sm:$0xf] %v2122
    %2251 = vst [vmem:[#allocation11 + $0x74] sm:$0xf] %v2123
    %2252 = vst [vmem:[#allocation11 + $0x78] sm:$0xf] %v2124
    %2253 = vst [vmem:[#allocation11 + $0x7c] sm:$0xf] %v2125
    %2254 = vst [vmem:[#allocation11 + $0x80] sm:$0xf] %v2126
    %2255 = vst [vmem:[#allocation11 + $0x84] sm:$0xf] %v2127
    %2256 = vst [vmem:[#allocation11 + $0x88] sm:$0xf] %v2128
    %2257 = vst [vmem:[#allocation11 + $0x8c] sm:$0xf] %v2129
    %2258 = vst [vmem:[#allocation11 + $0x90] sm:$0xf] %v2130
    %2259 = vst [vmem:[#allocation11 + $0x94] sm:$0xf] %v2131
    %2260 = vst [vmem:[#allocation11 + $0x98] sm:$0xf] %v2132
    %2261 = vst [vmem:[#allocation11 + $0x9c] sm:$0xf] %v2133
    %2262 = vst [vmem:[#allocation11 + $0xa0] sm:$0xf] %v2134
    %2263 = vst [vmem:[#allocation11 + $0xa4] sm:$0xf] %v2135
    %2264 = vst [vmem:[#allocation11 + $0xa8] sm:$0xf] %v2136
    %2265 = vst [vmem:[#allocation11 + $0xac] sm:$0xf] %v2137
    %2266 = vst [vmem:[#allocation11 + $0xb0] sm:$0xf] %v2138
    %2267 = vst [vmem:[#allocation11 + $0xb4] sm:$0xf] %v2139
    %2268 = vst [vmem:[#allocation11 + $0xb8] sm:$0xf] %v2140
    %2269 = vst [vmem:[#allocation11 + $0xbc] sm:$0xf] %v2141
    %2270 = vst [vmem:[#allocation11 + $0xc0] sm:$0xf] %v2142
    %2271 = vst [vmem:[#allocation11 + $0xc4] sm:$0xf] %v2143
    %2272 = vst [vmem:[#allocation11 + $0xc8] sm:$0xf] %v2144
    %2273 = vst [vmem:[#allocation11 + $0xcc] sm:$0xf] %v2145
    %2274 = vst [vmem:[#allocation11 + $0xd0] sm:$0xf] %v2146
    %2275 = vst [vmem:[#allocation11 + $0xd4] sm:$0xf] %v2147
    %2276 = vst [vmem:[#allocation11 + $0xd8] sm:$0xf] %v2148
    %2277 = vst [vmem:[#allocation11 + $0xdc] sm:$0xf] %v2149
    %2278 = vst [vmem:[#allocation11 + $0xe0] sm:$0xf] %v2150
    %2279 = vst [vmem:[#allocation11 + $0xe4] sm:$0xf] %v2151
    %2280 = vst [vmem:[#allocation11 + $0xe8] sm:$0xf] %v2152
    %2281 = vst [vmem:[#allocation11 + $0xec] sm:$0xf] %v2153
    %2282 = vst [vmem:[#allocation11 + $0xf0] sm:$0xf] %v2154
    %2283 = vst [vmem:[#allocation11 + $0xf4] sm:$0xf] %v2155
    %2284 = vst [vmem:[#allocation11 + $0xf8] sm:$0xf] %v2156
    %2285 = vst [vmem:[#allocation11 + $0xfc] sm:$0xf] %v2157
    // Predicated region
    $region26: #{inceptionB_forward.8} parent=1 // pred_check
      _
    $region27: #{inceptionB_forward.8} parent=1 // pred_check_branch
      %2287 = sbr.rel (0) target = $region29
    $region28: #{inceptionB_forward.8} parent=1 // pred_region
      %s2289 = ssub.s32 4096, 4096
      %2290 = vsyncadd [#allocation4], %s2289
      %s2291 = sshll.u32 [#allocation8], 4
      %s2292 = int_to_ptr.vmem [resolvable:$true] %s2291
      %2297 = dma.vmem_to_hbm [thread:$0]  %s2292, 4096, %s3, [#allocation4], 64, 64, 4
    $region29: #{inceptionB_forward.8} parent=1 // pred_fallthru
      _
    // Predicated region
    $region30: #{inceptionB_forward.8} parent=1 // pred_check
      _
    $region31: #{inceptionB_forward.8} parent=1 // pred_check_branch
      %2299 = sbr.rel (0) target = $region33
    $region32: #{inceptionB_forward.8} parent=1 // pred_region
      %s2301 = ssub.s32 4096, 4096
      %2302 = vsyncadd [#allocation10], %s2301
      %s2303 = sshll.u32 [#allocation9], 4
      %s2304 = int_to_ptr.vmem [resolvable:$true] %s2303
      %2309 = dma.vmem_to_hbm [thread:$0]  %s2304, 4096, %s4, [#allocation10], 64, 64, 4
    $region33: #{inceptionB_forward.8} parent=1 // pred_fallthru
      _
    // Predicated region
    $region34: #{inceptionB_forward.8} parent=1 // pred_check
      _
    $region35: #{inceptionB_forward.8} parent=1 // pred_check_branch
      %2311 = sbr.rel (0) target = $region37
    $region36: #{inceptionB_forward.8} parent=1 // pred_region
      %s2313 = ssub.s32 4096, 4096
      %2314 = vsyncadd [#allocation10], %s2313
      %s2315 = sshll.u32 [#allocation11], 4
      %s2316 = int_to_ptr.vmem [resolvable:$true] %s2315
      %2321 = dma.vmem_to_hbm [thread:$0]  %s2316, 4096, %s5, [#allocation10], 64, 64, 4
    $region37: #{inceptionB_forward.8} parent=1 // pred_fallthru
      _
    // Predicated region
    $region38: #{inceptionB_forward.8} parent=1 // pred_check
      _
    $region39: #{inceptionB_forward.8} parent=1 // pred_check_branch
      %2323 = sbr.rel (0) target = $region41
    $region40: #{inceptionB_forward.8} parent=1 // pred_region
      %2324 = dma.done [#allocation4], 4096
    $region41: #{inceptionB_forward.8} parent=1 // pred_fallthru
      _
    // Predicated region
    $region42: #{inceptionB_forward.8} parent=1 // pred_check
      _
    $region43: #{inceptionB_forward.8} parent=1 // pred_check_branch
      %2326 = sbr.rel (0) target = $region45
    $region44: #{inceptionB_forward.8} parent=1 // pred_region
      %2327 = dma.done [#allocation10], 4096
    $region45: #{inceptionB_forward.8} parent=1 // pred_fallthru
      _
    // Predicated region
    $region46: #{inceptionB_forward.8} parent=1 // pred_check
      _
    $region47: #{inceptionB_forward.8} parent=1 // pred_check_branch
      %2329 = sbr.rel (0) target = $region49
    $region48: #{inceptionB_forward.8} parent=1 // pred_region
      %2330 = dma.done [#allocation10], 4096
    $region49: #{inceptionB_forward.8} parent=1 // pred_fallthru
      _
    %2331 = vsyncpa [#allocation3], 1
    %2332 = vsyncpa [#allocation6], 1
    %2333 = vsyncpa [#allocation4], 1
    %2334 = vsyncpa [#allocation10], 1

// kernel: inceptionB_forward.15
$region0: #{inceptionB_forward.15}
  #allocation0 [shape = 'u32[]', space=smem, size = 0x4, offset = 0x4, fixed_abs, tag = 'smem constant byte address 0x4 - core index']
  #allocation1 [shape = 'u32[144,128]{1,0:T(1,128)}', space=vmem, size = 0x12000, scoped, tag = 'internal scratch']
  %s0 = inlined_call_operand.hbm [shape: bf16[2,18,18,128], index: 0, kind: input, shape index: {}]
  %s1 = inlined_call_operand.hbm [shape: bf16[1152,128], index: 1, kind: input, shape index: {}]
  %s2 = inlined_call_operand.hbm [shape: f32[1,128], index: 2, kind: input, shape index: {}]
  %s3 = inlined_call_operand.hbm [shape: bf16[2,16,16,128], index: 3, kind: output, shape index: {}]
  %s4 = sld [smem:[#allocation0]]
  $region57: #{inceptionB_forward.15} parent=0
    _
  %s6 = ssub.s32 1, %s4
  %s7 = scalar_select 0, %s6, %s4
  $region1: #{inceptionB_forward.15} parent=0
    #allocation2 [shape = 'u8[221184]{0}', space=vmem, size = 0x36000, scoped, tag = 'input window, operand 0']
    #allocation3 [shape = 's32[2]{0}', space=sflag, size = 0x8, scoped, tag = 'scoped memory for inceptionB_forward.15']
    #allocation4 [shape = 's32[2]{0}', space=sflag, size = 0x8, scoped, tag = 'scoped memory for inceptionB_forward.15']
    #allocation5 [shape = 'u8[294912]{0}', space=vmem, size = 0x48000, scoped, tag = 'input window, operand 1, single buffered']
    #allocation6 [shape = 's32[1]{0}', space=sflag, size = 0x4, scoped, tag = 'scoped memory for inceptionB_forward.15']
    #allocation7 [shape = 'u8[512]{0}', space=vmem, size = 0x400, scoped, tag = 'input window, operand 2, single buffered']
    #allocation8 [shape = 'u8[131072]{0}', space=vmem, size = 0x20000, scoped, tag = 'output window, operand 0']
    %8 = vsyncpa [#allocation3], 0
    %s9 = scalar_lea.sflag [#allocation3], 1
    %10 = vsyncpa %s9, 0
    %11 = vsyncpa [#allocation6], 0
    %12 = vsyncpa [#allocation4], 0
    %s13 = scalar_lea.sflag [#allocation4], 1
    %14 = vsyncpa %s13, 0
    loop: start=0, step=1, limit=4
    $region2: #{inceptionB_forward.15} parent=1 // loop_pre_header
      _
    $region3: #{inceptionB_forward.15} parent=1 // loop_header
      %s16 = sphi 0, %s20
      %p17 = scmp.ge.s32.totalorder %s16, 4
      %s23 = sphi 0, %s35
      %s24 = sphi 0, %s31
      %s25 = sphi 0, %s23
      %s26 = sphi 0, %s24
      %s27 = sphi 0, %s25
      %s28 = sphi 0, %s26
      %s38 = sphi 0, %s40
      %s41 = sphi 0, %s38
      %s42 = sphi 0, %s41
      %s58 = sphi 0, %s42
      %s62 = sphi 0, %s62
      %s64 = sphi 0, %s62
      %s65 = sphi 0, %s64
      %s79 = sphi 0, %s65
      %s83 = sphi 0, %s83
      %s85 = sphi 0, %s83
      %s86 = sphi 0, %s85
      %s100 = sphi 0, %s86
      %s108 = sphi 0, %s110
      %s111 = sphi 0, %s108
      %s112 = sphi 0, %s111
      %s128 = sphi 0, %s112
    $region4: #{inceptionB_forward.15} parent=1 // loop_header_branch
      %19 = sbr.rel (%p17) target = $region8
    $region5: #{inceptionB_forward.15} parent=1 // loop_body
      %s21 = ssub.s32 %s16, 1
      %s22 = ssub.s32 %s16, 2
      %s29 = sadd.s32 1, %s24
      %p30 = scmp.ge.s32.totalorder %s29, 1
      %s31 = scalar_select %p30, 0, %s29
      %s32 = sadd.s32 1, %s23
      %s33 = scalar_select %p30, %s32, %s23
      %p34 = scmp.ge.s32.totalorder %s33, 2
      %s35 = scalar_select %p34, 0, %s33
      %s36 = ssub.s32 %s23, %s35
      %p37 = scmp.eq.s32.totalorder %s36, 0
      %s39 = sadd.s32 %s38, 1
      %s40 = scalar_select %p37, %s38, %s39
      %p43 = pneg %p37
      %p44 = scmp.eq.s32.totalorder %s16, 1
      %p45 = por %p43, %p44
      %p46 = scmp.ne.s32.totalorder %s38, %s41
      %p47 = scmp.eq.s32.totalorder %s16, 0
      %p48 = por %p46, %p47
      %p49 = scmp.ne.s32.totalorder %s38, %s41
      %p50 = scmp.eq.s32.totalorder %s21, 1
      %p51 = por %p49, %p50
      %p52 = scmp.ne.s32.totalorder %s41, %s42
      %p53 = scmp.eq.s32.totalorder %s21, 0
      %p54 = por %p52, %p53
      %p55 = scmp.ne.s32.totalorder %s41, %s42
      %p56 = scmp.eq.s32.totalorder %s22, 1
      %p57 = por %p55, %p56
      %p59 = scmp.ne.s32.totalorder %s42, %s58
      %p60 = scmp.eq.s32.totalorder %s22, 0
      %p61 = por %p59, %p60
      %s63 = sadd.s32 %s62, 1
      %p66 = scmp.eq.s32.totalorder %s16, 1
      %p67 = scmp.ne.s32.totalorder %s62, %s64
      %p68 = scmp.eq.s32.totalorder %s16, 0
      %p69 = por %p67, %p68
      %p70 = scmp.ne.s32.totalorder %s62, %s64
      %p71 = scmp.eq.s32.totalorder %s21, 1
      %p72 = por %p70, %p71
      %p73 = scmp.ne.s32.totalorder %s64, %s65
      %p74 = scmp.eq.s32.totalorder %s21, 0
      %p75 = por %p73, %p74
      %p76 = scmp.ne.s32.totalorder %s64, %s65
      %p77 = scmp.eq.s32.totalorder %s22, 1
      %p78 = por %p76, %p77
      %p80 = scmp.ne.s32.totalorder %s65, %s79
      %p81 = scmp.eq.s32.totalorder %s22, 0
      %p82 = por %p80, %p81
      %s84 = sadd.s32 %s83, 1
      %p87 = scmp.eq.s32.totalorder %s16, 1
      %p88 = scmp.ne.s32.totalorder %s83, %s85
      %p89 = scmp.eq.s32.totalorder %s16, 0
      %p90 = por %p88, %p89
      %p91 = scmp.ne.s32.totalorder %s83, %s85
      %p92 = scmp.eq.s32.totalorder %s21, 1
      %p93 = por %p91, %p92
      %p94 = scmp.ne.s32.totalorder %s85, %s86
      %p95 = scmp.eq.s32.totalorder %s21, 0
      %p96 = por %p94, %p95
      %p97 = scmp.ne.s32.totalorder %s85, %s86
      %p98 = scmp.eq.s32.totalorder %s22, 1
      %p99 = por %p97, %p98
      %p101 = scmp.ne.s32.totalorder %s86, %s100
      %p102 = scmp.eq.s32.totalorder %s22, 0
      %p103 = por %p101, %p102
      %s104 = ssub.s32 %s23, %s35
      %s105 = ssub.s32 %s24, %s31
      %s106 = sor.u32 %s104, %s105
      %p107 = scmp.eq.s32.totalorder %s106, 0
      %s109 = sadd.s32 %s108, 1
      %s110 = scalar_select %p107, %s108, %s109
      %p113 = pneg %p107
      %p114 = scmp.eq.s32.totalorder %s16, 1
      %p115 = por %p113, %p114
      %p116 = scmp.ne.s32.totalorder %s108, %s111
      %p117 = scmp.eq.s32.totalorder %s16, 0
      %p118 = por %p116, %p117
      %p119 = scmp.ne.s32.totalorder %s108, %s111
      %p120 = scmp.eq.s32.totalorder %s21, 1
      %p121 = por %p119, %p120
      %p122 = scmp.ne.s32.totalorder %s111, %s112
      %p123 = scmp.eq.s32.totalorder %s21, 0
      %p124 = por %p122, %p123
      %p125 = scmp.ne.s32.totalorder %s111, %s112
      %p126 = scmp.eq.s32.totalorder %s22, 1
      %p127 = por %p125, %p126
      %p129 = scmp.ne.s32.totalorder %s112, %s128
      %p130 = scmp.eq.s32.totalorder %s22, 0
      %p131 = por %p129, %p130
      %p132 = scmp.le.s32.totalorder 1, %s16
      %p133 = scmp.lt.s32.totalorder %s16, 3
      %p134 = pnand %p132, %p133
      %p135 = pneg %p134
      // Predicated region
      $region9: #{inceptionB_forward.15} parent=5 // pred_check
        _
      $region10: #{inceptionB_forward.15} parent=5 // pred_check_branch
        %137 = sbr.rel (%p134) target = $region12
      $region11: #{inceptionB_forward.15} parent=5 // pred_region
        %s138 = ssub.s32 %s16, 1
        // Predicated region
        $region13: #{inceptionB_forward.15} parent=11 // pred_check
          %p139 = pneg %p75
        $region14: #{inceptionB_forward.15} parent=11 // pred_check_branch
          %141 = sbr.rel (%p139) target = $region16
        $region15: #{inceptionB_forward.15} parent=11 // pred_region
          %s143 = ssub.s32 9216, 9216
          %144 = vsyncadd [#allocation6], %s143
          %s145 = sshll.u32 [#allocation5], 4
          %s146 = int_to_ptr.vmem [resolvable:$true] %s145
          %151 = dma.hbm_to_vmem [thread:$0]  %s1, 9216, %s146, [#allocation6], 64, 64, 4
        $region16: #{inceptionB_forward.15} parent=11 // pred_fallthru
          _
        // Predicated region
        $region17: #{inceptionB_forward.15} parent=11 // pred_check
          %p152 = pneg %p96
        $region18: #{inceptionB_forward.15} parent=11 // pred_check_branch
          %154 = sbr.rel (%p152) target = $region20
        $region19: #{inceptionB_forward.15} parent=11 // pred_region
          %s156 = ssub.s32 16, 16
          %157 = vsyncadd [#allocation6], %s156
          %s159 = sshll.u32 [#allocation7], 4
          %s160 = int_to_ptr.vmem [resolvable:$true] %s159
          %162 = dma.hbm_to_vmem [thread:$0]  %s2, 16, %s160, [#allocation6]
        $region20: #{inceptionB_forward.15} parent=11 // pred_fallthru
          _
      $region12: #{inceptionB_forward.15} parent=5 // pred_fallthru
        _
      %p163 = scmp.lt.s32.totalorder %s16, 2
      // Predicated region
      $region21: #{inceptionB_forward.15} parent=5 // pred_check
        %p164 = pneg %p163
      $region22: #{inceptionB_forward.15} parent=5 // pred_check_branch
        %166 = sbr.rel (%p164) target = $region24
      $region23: #{inceptionB_forward.15} parent=5 // pred_region
        // Predicated region
        $region25: #{inceptionB_forward.15} parent=23 // pred_check
          %p167 = pneg %p48
        $region26: #{inceptionB_forward.15} parent=23 // pred_check_branch
          %169 = sbr.rel (%p167) target = $region28
        $region27: #{inceptionB_forward.15} parent=23 // pred_region
          %s170 = sand.u32 %s38, 1
          %s171 = scalar_lea.sflag [#allocation3], %s170
          %s172 = sand.u32 %s38, 1
          %s173 = smul.addr %s172, 216
          %s174 = scalar_lea.vmem [#allocation2], %s173
          %s176 = ssub.s32 3456, 3456
          %177 = vsyncadd %s171, %s176
          %s178 = smul.addr %s23, 54
          %s179 = smul.addr %s178, 64
          %s180 = scalar_lea.hbm %s0, %s179
          %s181 = sshll.u32 %s174, 4
          %s182 = int_to_ptr.vmem [resolvable:$true] %s181
          %187 = dma.hbm_to_vmem [thread:$0]  %s180, 3456, %s182, %s171, 64, 64, 4
        $region28: #{inceptionB_forward.15} parent=23 // pred_fallthru
          _
      $region24: #{inceptionB_forward.15} parent=5 // pred_fallthru
        _
      %p188 = scmp.le.s32.totalorder 1, %s16
      %p189 = scmp.lt.s32.totalorder %s16, 3
      %p190 = pnand %p188, %p189
      %p191 = pneg %p190
      // Predicated region
      $region29: #{inceptionB_forward.15} parent=5 // pred_check
        _
      $region30: #{inceptionB_forward.15} parent=5 // pred_check_branch
        %193 = sbr.rel (%p190) target = $region32
      $region31: #{inceptionB_forward.15} parent=5 // pred_region
        %s194 = ssub.s32 %s16, 1
        %s195 = sand.u32 %s41, 1
        %s196 = scalar_lea.sflag [#allocation3], %s195
        %s197 = sand.u32 %s41, 1
        %s198 = smul.addr %s197, 216
        %s199 = scalar_lea.vmem [#allocation2], %s198
        // Predicated region
        $region33: #{inceptionB_forward.15} parent=31 // pred_check
          %p200 = pneg %p54
        $region34: #{inceptionB_forward.15} parent=31 // pred_check_branch
          %202 = sbr.rel (%p200) target = $region36
        $region35: #{inceptionB_forward.15} parent=31 // pred_region
          %203 = dma.done %s196, 3456
        $region36: #{inceptionB_forward.15} parent=31 // pred_fallthru
          _
        // Predicated region
        $region37: #{inceptionB_forward.15} parent=31 // pred_check
          %p204 = pneg %p75
        $region38: #{inceptionB_forward.15} parent=31 // pred_check_branch
          %206 = sbr.rel (%p204) target = $region40
        $region39: #{inceptionB_forward.15} parent=31 // pred_region
          %207 = dma.done [#allocation6], 9216
        $region40: #{inceptionB_forward.15} parent=31 // pred_fallthru
          _
        // Predicated region
        $region41: #{inceptionB_forward.15} parent=31 // pred_check
          %p208 = pneg %p96
        $region42: #{inceptionB_forward.15} parent=31 // pred_check_branch
          %210 = sbr.rel (%p208) target = $region44
        $region43: #{inceptionB_forward.15} parent=31 // pred_region
          %211 = dma.done [#allocation6], 16
        $region44: #{inceptionB_forward.15} parent=31 // pred_fallthru
          _
        %s212 = sand.u32 %s41, 1
        %s213 = scalar_lea.sflag [#allocation3], %s212
        %s214 = sand.u32 %s41, 1
        %s215 = smul.addr %s214, 216
        %s216 = scalar_lea.vmem [#allocation2], %s215
        %p217 = pneg %p54
        %p218 = pneg %p51
        %p219 = pneg %p75
        %p220 = pneg %p72
        %p221 = pneg %p96
        %p222 = pneg %p93
        %p223 = pneg %p124
        %p224 = pneg %p121
        %s225 = sand.u32 %s111, 1
        %s226 = scalar_lea.sflag [#allocation4], %s225
        %s227 = sand.u32 %s111, 1
        %s228 = smul.addr %s227, 128
        %s229 = scalar_lea.vmem [#allocation8], %s228
        %s230 = smul.u32 16, %s26
        %s232 = smul.u32 %s26, 16
        %s233 = smul.u32 %s232, 3
        %s234 = smul.addr %s233, 4
        %s235 = scalar_lea.vmem %s199, %s234 [#allocation2]
        %v236 = vld [vmem:[%s235] sm:$0xf]
        %v237 = vld [vmem:[%s235 + $0x4] sm:$0xf]
        %v238 = vld [vmem:[%s235 + $0x8] sm:$0x1]
        %v239 = vld [vmem:[%s235 + $0xc] sm:$0xf]
        %v240 = vld [vmem:[%s235 + $0x10] sm:$0xf]
        %v241 = vld [vmem:[%s235 + $0x14] sm:$0x1]
        %v242 = vld [vmem:[%s235 + $0x18] sm:$0xf]
        %v243 = vld [vmem:[%s235 + $0x1c] sm:$0xf]
        %v244 = vld [vmem:[%s235 + $0x20] sm:$0x1]
        %v245 = vld [vmem:[%s235 + $0x24] sm:$0xf]
        %v246 = vld [vmem:[%s235 + $0x28] sm:$0xf]
        %v247 = vld [vmem:[%s235 + $0x2c] sm:$0x1]
        %v248 = vld [vmem:[%s235 + $0x30] sm:$0xf]
        %v249 = vld [vmem:[%s235 + $0x34] sm:$0xf]
        %v250 = vld [vmem:[%s235 + $0x38] sm:$0x1]
        %v251 = vld [vmem:[%s235 + $0x3c] sm:$0xf]
        %v252 = vld [vmem:[%s235 + $0x40] sm:$0xf]
        %v253 = vld [vmem:[%s235 + $0x44] sm:$0x1]
        %v254 = vld [vmem:[%s235 + $0x48] sm:$0xf]
        %v255 = vld [vmem:[%s235 + $0x4c] sm:$0xf]
        %v256 = vld [vmem:[%s235 + $0x50] sm:$0x1]
        %v257 = vld [vmem:[%s235 + $0x54] sm:$0xf]
        %v258 = vld [vmem:[%s235 + $0x58] sm:$0xf]
        %v259 = vld [vmem:[%s235 + $0x5c] sm:$0x1]
        %v260 = vld [vmem:[%s235 + $0x60] sm:$0xf]
        %v261 = vld [vmem:[%s235 + $0x64] sm:$0xf]
        %v262 = vld [vmem:[%s235 + $0x68] sm:$0x1]
        %v263 = vld [vmem:[%s235 + $0x6c] sm:$0xf]
        %v264 = vld [vmem:[%s235 + $0x70] sm:$0xf]
        %v265 = vld [vmem:[%s235 + $0x74] sm:$0x1]
        %v266 = vld [vmem:[%s235 + $0x78] sm:$0xf]
        %v267 = vld [vmem:[%s235 + $0x7c] sm:$0xf]
        %v268 = vld [vmem:[%s235 + $0x80] sm:$0x1]
        %v269 = vld [vmem:[%s235 + $0x84] sm:$0xf]
        %v270 = vld [vmem:[%s235 + $0x88] sm:$0xf]
        %v271 = vld [vmem:[%s235 + $0x8c] sm:$0x1]
        %v272 = vld [vmem:[%s235 + $0x90] sm:$0xf]
        %v273 = vld [vmem:[%s235 + $0x94] sm:$0xf]
        %v274 = vld [vmem:[%s235 + $0x98] sm:$0x1]
        %v275 = vld [vmem:[%s235 + $0x9c] sm:$0xf]
        %v276 = vld [vmem:[%s235 + $0xa0] sm:$0xf]
        %v277 = vld [vmem:[%s235 + $0xa4] sm:$0x1]
        %v278 = vld [vmem:[%s235 + $0xa8] sm:$0xf]
        %v279 = vld [vmem:[%s235 + $0xac] sm:$0xf]
        %v280 = vld [vmem:[%s235 + $0xb0] sm:$0x1]
        %v281 = vld [vmem:[%s235 + $0xb4] sm:$0xf]
        %v282 = vld [vmem:[%s235 + $0xb8] sm:$0xf]
        %v283 = vld [vmem:[%s235 + $0xbc] sm:$0x1]
        %v284 = vld [vmem:[%s235 + $0xc0] sm:$0xf]
        %v285 = vld [vmem:[%s235 + $0xc4] sm:$0xf]
        %v286 = vld [vmem:[%s235 + $0xc8] sm:$0x1]
        %v287 = vld [vmem:[%s235 + $0xcc] sm:$0xf]
        %v288 = vld [vmem:[%s235 + $0xd0] sm:$0xf]
        %v289 = vld [vmem:[%s235 + $0xd4] sm:$0x1]
        %v322 = vunpack.c.l.b16 %v236
        %v323 = vunpack.c.l.b16 %v237
        %v324 = vunpack.c.l.b16 %v239
        %v325 = vunpack.c.l.b16 %v240
        %v326 = vunpack.c.l.b16 %v242
        %v327 = vunpack.c.l.b16 %v243
        %v328 = vunpack.c.l.b16 %v245
        %v329 = vunpack.c.l.b16 %v246
        %v330 = vunpack.c.l.b16 %v248
        %v331 = vunpack.c.l.b16 %v249
        %v332 = vunpack.c.l.b16 %v251
        %v333 = vunpack.c.l.b16 %v252
        %v334 = vunpack.c.l.b16 %v254
        %v335 = vunpack.c.l.b16 %v255
        %v336 = vunpack.c.l.b16 %v257
        %v337 = vunpack.c.l.b16 %v258
        %v338 = vunpack.c.l.b16 %v260
        %v339 = vunpack.c.l.b16 %v261
        %v340 = vunpack.c.l.b16 %v263
        %v341 = vunpack.c.l.b16 %v264
        %v342 = vunpack.c.l.b16 %v266
        %v343 = vunpack.c.l.b16 %v267
        %v344 = vunpack.c.l.b16 %v269
        %v345 = vunpack.c.l.b16 %v270
        %v346 = vunpack.c.l.b16 %v272
        %v347 = vunpack.c.l.b16 %v273
        %v348 = vunpack.c.l.b16 %v275
        %v349 = vunpack.c.l.b16 %v276
        %v350 = vunpack.c.l.b16 %v278
        %v351 = vunpack.c.l.b16 %v279
        %v352 = vunpack.c.l.b16 %v281
        %v353 = vunpack.c.l.b16 %v282
        %v354 = vpack.c.b16 %v323, %v322
        %v355 = vpack.c.b16 %v325, %v324
        %v356 = vpack.c.b16 %v327, %v326
        %v357 = vpack.c.b16 %v329, %v328
        %v358 = vpack.c.b16 %v331, %v330
        %v359 = vpack.c.b16 %v333, %v332
        %v360 = vpack.c.b16 %v335, %v334
        %v361 = vpack.c.b16 %v337, %v336
        %v362 = vpack.c.b16 %v339, %v338
        %v363 = vpack.c.b16 %v341, %v340
        %v364 = vpack.c.b16 %v343, %v342
        %v365 = vpack.c.b16 %v345, %v344
        %v366 = vpack.c.b16 %v347, %v346
        %v367 = vpack.c.b16 %v349, %v348
        %v368 = vpack.c.b16 %v351, %v350
        %v369 = vpack.c.b16 %v353, %v352
        %v402 = vunpack.c.l.b16 %v238
        %v403 = vunpack.c.l.b16 %v241
        %v404 = vunpack.c.l.b16 %v244
        %v405 = vunpack.c.l.b16 %v247
        %v406 = vunpack.c.l.b16 %v250
        %v407 = vunpack.c.l.b16 %v253
        %v408 = vunpack.c.l.b16 %v256
        %v409 = vunpack.c.l.b16 %v259
        %v410 = vunpack.c.l.b16 %v262
        %v411 = vunpack.c.l.b16 %v265
        %v412 = vunpack.c.l.b16 %v268
        %v413 = vunpack.c.l.b16 %v271
        %v414 = vunpack.c.l.b16 %v274
        %v415 = vunpack.c.l.b16 %v277
        %v416 = vunpack.c.l.b16 %v280
        %v417 = vunpack.c.l.b16 %v283
        %v418 = vpack.c.b16 %v402, %v402
        %v419 = vpack.c.b16 %v403, %v403
        %v420 = vpack.c.b16 %v404, %v404
        %v421 = vpack.c.b16 %v405, %v405
        %v422 = vpack.c.b16 %v406, %v406
        %v423 = vpack.c.b16 %v407, %v407
        %v424 = vpack.c.b16 %v408, %v408
        %v425 = vpack.c.b16 %v409, %v409
        %v426 = vpack.c.b16 %v410, %v410
        %v427 = vpack.c.b16 %v411, %v411
        %v428 = vpack.c.b16 %v412, %v412
        %v429 = vpack.c.b16 %v413, %v413
        %v430 = vpack.c.b16 %v414, %v414
        %v431 = vpack.c.b16 %v415, %v415
        %v432 = vpack.c.b16 %v416, %v416
        %v433 = vpack.c.b16 %v417, %v417
        %vm434 = vsmask.f32 7424
        %v436 = vshrl.u32 %v354, 16
        %v438 = vshll.u32 %v354, 16
        %v440 = vrot.slane %v438, 1
        %v441 = vor.u32 %v436, %v440
        %v443 = vshll.u32 %v418, 16
        %v445 = vrot.slane %v443, 1
        %v446 = vsel %vm434, %v441, %v445
        %v448 = vshrl.u32 %v355, 16
        %v450 = vshll.u32 %v355, 16
        %v452 = vrot.slane %v450, 1
        %v453 = vor.u32 %v448, %v452
        %v455 = vshll.u32 %v419, 16
        %v457 = vrot.slane %v455, 1
        %v458 = vsel %vm434, %v453, %v457
        %v460 = vshrl.u32 %v356, 16
        %v462 = vshll.u32 %v356, 16
        %v464 = vrot.slane %v462, 1
        %v465 = vor.u32 %v460, %v464
        %v467 = vshll.u32 %v420, 16
        %v469 = vrot.slane %v467, 1
        %v470 = vsel %vm434, %v465, %v469
        %v472 = vshrl.u32 %v357, 16
        %v474 = vshll.u32 %v357, 16
        %v476 = vrot.slane %v474, 1
        %v477 = vor.u32 %v472, %v476
        %v479 = vshll.u32 %v421, 16
        %v481 = vrot.slane %v479, 1
        %v482 = vsel %vm434, %v477, %v481
        %v484 = vshrl.u32 %v358, 16
        %v486 = vshll.u32 %v358, 16
        %v488 = vrot.slane %v486, 1
        %v489 = vor.u32 %v484, %v488
        %v491 = vshll.u32 %v422, 16
        %v493 = vrot.slane %v491, 1
        %v494 = vsel %vm434, %v489, %v493
        %v496 = vshrl.u32 %v359, 16
        %v498 = vshll.u32 %v359, 16
        %v500 = vrot.slane %v498, 1
        %v501 = vor.u32 %v496, %v500
        %v503 = vshll.u32 %v423, 16
        %v505 = vrot.slane %v503, 1
        %v506 = vsel %vm434, %v501, %v505
        %v508 = vshrl.u32 %v360, 16
        %v510 = vshll.u32 %v360, 16
        %v512 = vrot.slane %v510, 1
        %v513 = vor.u32 %v508, %v512
        %v515 = vshll.u32 %v424, 16
        %v517 = vrot.slane %v515, 1
        %v518 = vsel %vm434, %v513, %v517
        %v520 = vshrl.u32 %v361, 16
        %v522 = vshll.u32 %v361, 16
        %v524 = vrot.slane %v522, 1
        %v525 = vor.u32 %v520, %v524
        %v527 = vshll.u32 %v425, 16
        %v529 = vrot.slane %v527, 1
        %v530 = vsel %vm434, %v525, %v529
        %v532 = vshrl.u32 %v362, 16
        %v534 = vshll.u32 %v362, 16
        %v536 = vrot.slane %v534, 1
        %v537 = vor.u32 %v532, %v536
        %v539 = vshll.u32 %v426, 16
        %v541 = vrot.slane %v539, 1
        %v542 = vsel %vm434, %v537, %v541
        %v544 = vshrl.u32 %v363, 16
        %v546 = vshll.u32 %v363, 16
        %v548 = vrot.slane %v546, 1
        %v549 = vor.u32 %v544, %v548
        %v551 = vshll.u32 %v427, 16
        %v553 = vrot.slane %v551, 1
        %v554 = vsel %vm434, %v549, %v553
        %v556 = vshrl.u32 %v364, 16
        %v558 = vshll.u32 %v364, 16
        %v560 = vrot.slane %v558, 1
        %v561 = vor.u32 %v556, %v560
        %v563 = vshll.u32 %v428, 16
        %v565 = vrot.slane %v563, 1
        %v566 = vsel %vm434, %v561, %v565
        %v568 = vshrl.u32 %v365, 16
        %v570 = vshll.u32 %v365, 16
        %v572 = vrot.slane %v570, 1
        %v573 = vor.u32 %v568, %v572
        %v575 = vshll.u32 %v429, 16
        %v577 = vrot.slane %v575, 1
        %v578 = vsel %vm434, %v573, %v577
        %v580 = vshrl.u32 %v366, 16
        %v582 = vshll.u32 %v366, 16
        %v584 = vrot.slane %v582, 1
        %v585 = vor.u32 %v580, %v584
        %v587 = vshll.u32 %v430, 16
        %v589 = vrot.slane %v587, 1
        %v590 = vsel %vm434, %v585, %v589
        %v592 = vshrl.u32 %v367, 16
        %v594 = vshll.u32 %v367, 16
        %v596 = vrot.slane %v594, 1
        %v597 = vor.u32 %v592, %v596
        %v599 = vshll.u32 %v431, 16
        %v601 = vrot.slane %v599, 1
        %v602 = vsel %vm434, %v597, %v601
        %v604 = vshrl.u32 %v368, 16
        %v606 = vshll.u32 %v368, 16
        %v608 = vrot.slane %v606, 1
        %v609 = vor.u32 %v604, %v608
        %v611 = vshll.u32 %v432, 16
        %v613 = vrot.slane %v611, 1
        %v614 = vsel %vm434, %v609, %v613
        %v616 = vshrl.u32 %v369, 16
        %v618 = vshll.u32 %v369, 16
        %v620 = vrot.slane %v618, 1
        %v621 = vor.u32 %v616, %v620
        %v623 = vshll.u32 %v433, 16
        %v625 = vrot.slane %v623, 1
        %v626 = vsel %vm434, %v621, %v625
        %vm643 = vcmask 1046528
        %v644 = vrot.slane %v354, 1
        %v645 = vrot.slane %v418, 1
        %v646 = vsel %vm643, %v644, %v645
        %v647 = vrot.slane %v355, 1
        %v648 = vrot.slane %v419, 1
        %v649 = vsel %vm643, %v647, %v648
        %v650 = vrot.slane %v356, 1
        %v651 = vrot.slane %v420, 1
        %v652 = vsel %vm643, %v650, %v651
        %v653 = vrot.slane %v357, 1
        %v654 = vrot.slane %v421, 1
        %v655 = vsel %vm643, %v653, %v654
        %v656 = vrot.slane %v358, 1
        %v657 = vrot.slane %v422, 1
        %v658 = vsel %vm643, %v656, %v657
        %v659 = vrot.slane %v359, 1
        %v660 = vrot.slane %v423, 1
        %v661 = vsel %vm643, %v659, %v660
        %v662 = vrot.slane %v360, 1
        %v663 = vrot.slane %v424, 1
        %v664 = vsel %vm643, %v662, %v663
        %v665 = vrot.slane %v361, 1
        %v666 = vrot.slane %v425, 1
        %v667 = vsel %vm643, %v665, %v666
        %v668 = vrot.slane %v362, 1
        %v669 = vrot.slane %v426, 1
        %v670 = vsel %vm643, %v668, %v669
        %v671 = vrot.slane %v363, 1
        %v672 = vrot.slane %v427, 1
        %v673 = vsel %vm643, %v671, %v672
        %v674 = vrot.slane %v364, 1
        %v675 = vrot.slane %v428, 1
        %v676 = vsel %vm643, %v674, %v675
        %v677 = vrot.slane %v365, 1
        %v678 = vrot.slane %v429, 1
        %v679 = vsel %vm643, %v677, %v678
        %v680 = vrot.slane %v366, 1
        %v681 = vrot.slane %v430, 1
        %v682 = vsel %vm643, %v680, %v681
        %v683 = vrot.slane %v367, 1
        %v684 = vrot.slane %v431, 1
        %v685 = vsel %vm643, %v683, %v684
        %v686 = vrot.slane %v368, 1
        %v687 = vrot.slane %v432, 1
        %v688 = vsel %vm643, %v686, %v687
        %v689 = vrot.slane %v369, 1
        %v690 = vrot.slane %v433, 1
        %v691 = vsel %vm643, %v689, %v690
        %v710 = vunpack.c.l.b16 %v284
        %v711 = vunpack.c.l.b16 %v285
        %v712 = vpack.c.b16 %v711, %v710
        %v715 = vunpack.c.l.b16 %v286
        %v716 = vpack.c.b16 %v715, %v715
        %v718 = vshrl.u32 %v712, 16
        %v720 = vshll.u32 %v712, 16
        %v722 = vrot.slane %v720, 1
        %v723 = vor.u32 %v718, %v722
        %v725 = vshll.u32 %v716, 16
        %v727 = vrot.slane %v725, 1
        %v728 = vsel %vm434, %v723, %v727
        %v730 = vrot.slane %v712, 1
        %v731 = vrot.slane %v716, 1
        %v732 = vsel %vm643, %v730, %v731
        %v736 = vunpack.c.l.b16 %v287
        %v737 = vunpack.c.l.b16 %v288
        %v738 = vpack.c.b16 %v737, %v736
        %v741 = vunpack.c.l.b16 %v289
        %v742 = vpack.c.b16 %v741, %v741
        %v744 = vshrl.u32 %v738, 16
        %v746 = vshll.u32 %v738, 16
        %v748 = vrot.slane %v746, 1
        %v749 = vor.u32 %v744, %v748
        %v751 = vshll.u32 %v742, 16
        %v753 = vrot.slane %v751, 1
        %v754 = vsel %vm434, %v749, %v753
        %v756 = vrot.slane %v738, 1
        %v757 = vrot.slane %v742, 1
        %v758 = vsel %vm643, %v756, %v757
        %v760 = vld [vmem:[#allocation5] sm:$0xf]
        %v761 = vld [vmem:[#allocation5 + $0x4] sm:$0xf]
        %v762 = vld [vmem:[#allocation5 + $0x8] sm:$0xf]
        %v763 = vld [vmem:[#allocation5 + $0xc] sm:$0xf]
        %v764 = vld [vmem:[#allocation5 + $0x10] sm:$0xf]
        %v765 = vld [vmem:[#allocation5 + $0x14] sm:$0xf]
        %v766 = vld [vmem:[#allocation5 + $0x18] sm:$0xf]
        %v767 = vld [vmem:[#allocation5 + $0x1c] sm:$0xf]
        %v768 = vld [vmem:[#allocation5 + $0x20] sm:$0xf]
        %v769 = vld [vmem:[#allocation5 + $0x24] sm:$0xf]
        %v770 = vld [vmem:[#allocation5 + $0x28] sm:$0xf]
        %v771 = vld [vmem:[#allocation5 + $0x2c] sm:$0xf]
        %v772 = vld [vmem:[#allocation5 + $0x30] sm:$0xf]
        %v773 = vld [vmem:[#allocation5 + $0x34] sm:$0xf]
        %v774 = vld [vmem:[#allocation5 + $0x38] sm:$0xf]
        %v775 = vld [vmem:[#allocation5 + $0x3c] sm:$0xf]
        %v776 = vld [vmem:[#allocation5 + $0x40] sm:$0xf]
        %v777 = vld [vmem:[#allocation5 + $0x44] sm:$0xf]
        %v778 = vld [vmem:[#allocation5 + $0x48] sm:$0xf]
        %v779 = vld [vmem:[#allocation5 + $0x4c] sm:$0xf]
        %v780 = vld [vmem:[#allocation5 + $0x50] sm:$0xf]
        %v781 = vld [vmem:[#allocation5 + $0x54] sm:$0xf]
        %v782 = vld [vmem:[#allocation5 + $0x58] sm:$0xf]
        %v783 = vld [vmem:[#allocation5 + $0x5c] sm:$0xf]
        %v784 = vld [vmem:[#allocation5 + $0x60] sm:$0xf]
        %v785 = vld [vmem:[#allocation5 + $0x64] sm:$0xf]
        %v786 = vld [vmem:[#allocation5 + $0x68] sm:$0xf]
        %v787 = vld [vmem:[#allocation5 + $0x6c] sm:$0xf]
        %v788 = vld [vmem:[#allocation5 + $0x70] sm:$0xf]
        %v789 = vld [vmem:[#allocation5 + $0x74] sm:$0xf]
        %v790 = vld [vmem:[#allocation5 + $0x78] sm:$0xf]
        %v791 = vld [vmem:[#allocation5 + $0x7c] sm:$0xf]
        %v792 = vld [vmem:[#allocation5 + $0x80] sm:$0xf]
        %v793 = vld [vmem:[#allocation5 + $0x84] sm:$0xf]
        %v794 = vld [vmem:[#allocation5 + $0x88] sm:$0xf]
        %v795 = vld [vmem:[#allocation5 + $0x8c] sm:$0xf]
        %v796 = vld [vmem:[#allocation5 + $0x90] sm:$0xf]
        %v797 = vld [vmem:[#allocation5 + $0x94] sm:$0xf]
        %v798 = vld [vmem:[#allocation5 + $0x98] sm:$0xf]
        %v799 = vld [vmem:[#allocation5 + $0x9c] sm:$0xf]
        %v800 = vld [vmem:[#allocation5 + $0xa0] sm:$0xf]
        %v801 = vld [vmem:[#allocation5 + $0xa4] sm:$0xf]
        %v802 = vld [vmem:[#allocation5 + $0xa8] sm:$0xf]
        %v803 = vld [vmem:[#allocation5 + $0xac] sm:$0xf]
        %v804 = vld [vmem:[#allocation5 + $0xb0] sm:$0xf]
        %v805 = vld [vmem:[#allocation5 + $0xb4] sm:$0xf]
        %v806 = vld [vmem:[#allocation5 + $0xb8] sm:$0xf]
        %v807 = vld [vmem:[#allocation5 + $0xbc] sm:$0xf]
        %v808 = vld [vmem:[#allocation5 + $0xc0] sm:$0xf]
        %v809 = vld [vmem:[#allocation5 + $0xc4] sm:$0xf]
        %v810 = vld [vmem:[#allocation5 + $0xc8] sm:$0xf]
        %v811 = vld [vmem:[#allocation5 + $0xcc] sm:$0xf]
        %v812 = vld [vmem:[#allocation5 + $0xd0] sm:$0xf]
        %v813 = vld [vmem:[#allocation5 + $0xd4] sm:$0xf]
        %v814 = vld [vmem:[#allocation5 + $0xd8] sm:$0xf]
        %v815 = vld [vmem:[#allocation5 + $0xdc] sm:$0xf]
        %v816 = vld [vmem:[#allocation5 + $0xe0] sm:$0xf]
        %v817 = vld [vmem:[#allocation5 + $0xe4] sm:$0xf]
        %v818 = vld [vmem:[#allocation5 + $0xe8] sm:$0xf]
        %v819 = vld [vmem:[#allocation5 + $0xec] sm:$0xf]
        %v820 = vld [vmem:[#allocation5 + $0xf0] sm:$0xf]
        %v821 = vld [vmem:[#allocation5 + $0xf4] sm:$0xf]
        %v822 = vld [vmem:[#allocation5 + $0xf8] sm:$0xf]
        %v823 = vld [vmem:[#allocation5 + $0xfc] sm:$0xf]
        %v824 = vld [vmem:[#allocation5 + $0x100] sm:$0xf]
        %v825 = vld [vmem:[#allocation5 + $0x104] sm:$0xf]
        %v826 = vld [vmem:[#allocation5 + $0x108] sm:$0xf]
        %v827 = vld [vmem:[#allocation5 + $0x10c] sm:$0xf]
        %v828 = vld [vmem:[#allocation5 + $0x110] sm:$0xf]
        %v829 = vld [vmem:[#allocation5 + $0x114] sm:$0xf]
        %v830 = vld [vmem:[#allocation5 + $0x118] sm:$0xf]
        %v831 = vld [vmem:[#allocation5 + $0x11c] sm:$0xf]
        %v832 = vld [vmem:[#allocation5 + $0x120] sm:$0xf]
        %v833 = vld [vmem:[#allocation5 + $0x124] sm:$0xf]
        %v834 = vld [vmem:[#allocation5 + $0x128] sm:$0xf]
        %v835 = vld [vmem:[#allocation5 + $0x12c] sm:$0xf]
        %v836 = vld [vmem:[#allocation5 + $0x130] sm:$0xf]
        %v837 = vld [vmem:[#allocation5 + $0x134] sm:$0xf]
        %v838 = vld [vmem:[#allocation5 + $0x138] sm:$0xf]
        %v839 = vld [vmem:[#allocation5 + $0x13c] sm:$0xf]
        %v840 = vld [vmem:[#allocation5 + $0x140] sm:$0xf]
        %v841 = vld [vmem:[#allocation5 + $0x144] sm:$0xf]
        %v842 = vld [vmem:[#allocation5 + $0x148] sm:$0xf]
        %v843 = vld [vmem:[#allocation5 + $0x14c] sm:$0xf]
        %v844 = vld [vmem:[#allocation5 + $0x150] sm:$0xf]
        %v845 = vld [vmem:[#allocation5 + $0x154] sm:$0xf]
        %v846 = vld [vmem:[#allocation5 + $0x158] sm:$0xf]
        %v847 = vld [vmem:[#allocation5 + $0x15c] sm:$0xf]
        %v848 = vld [vmem:[#allocation5 + $0x160] sm:$0xf]
        %v849 = vld [vmem:[#allocation5 + $0x164] sm:$0xf]
        %v850 = vld [vmem:[#allocation5 + $0x168] sm:$0xf]
        %v851 = vld [vmem:[#allocation5 + $0x16c] sm:$0xf]
        %v852 = vld [vmem:[#allocation5 + $0x170] sm:$0xf]
        %v853 = vld [vmem:[#allocation5 + $0x174] sm:$0xf]
        %v854 = vld [vmem:[#allocation5 + $0x178] sm:$0xf]
        %v855 = vld [vmem:[#allocation5 + $0x17c] sm:$0xf]
        %v856 = vld [vmem:[#allocation5 + $0x180] sm:$0xf]
        %v857 = vld [vmem:[#allocation5 + $0x184] sm:$0xf]
        %v858 = vld [vmem:[#allocation5 + $0x188] sm:$0xf]
        %v859 = vld [vmem:[#allocation5 + $0x18c] sm:$0xf]
        %v860 = vld [vmem:[#allocation5 + $0x190] sm:$0xf]
        %v861 = vld [vmem:[#allocation5 + $0x194] sm:$0xf]
        %v862 = vld [vmem:[#allocation5 + $0x198] sm:$0xf]
        %v863 = vld [vmem:[#allocation5 + $0x19c] sm:$0xf]
        %v864 = vld [vmem:[#allocation5 + $0x1a0] sm:$0xf]
        %v865 = vld [vmem:[#allocation5 + $0x1a4] sm:$0xf]
        %v866 = vld [vmem:[#allocation5 + $0x1a8] sm:$0xf]
        %v867 = vld [vmem:[#allocation5 + $0x1ac] sm:$0xf]
        %v868 = vld [vmem:[#allocation5 + $0x1b0] sm:$0xf]
        %v869 = vld [vmem:[#allocation5 + $0x1b4] sm:$0xf]
        %v870 = vld [vmem:[#allocation5 + $0x1b8] sm:$0xf]
        %v871 = vld [vmem:[#allocation5 + $0x1bc] sm:$0xf]
        %v872 = vld [vmem:[#allocation5 + $0x1c0] sm:$0xf]
        %v873 = vld [vmem:[#allocation5 + $0x1c4] sm:$0xf]
        %v874 = vld [vmem:[#allocation5 + $0x1c8] sm:$0xf]
        %v875 = vld [vmem:[#allocation5 + $0x1cc] sm:$0xf]
        %v876 = vld [vmem:[#allocation5 + $0x1d0] sm:$0xf]
        %v877 = vld [vmem:[#allocation5 + $0x1d4] sm:$0xf]
        %v878 = vld [vmem:[#allocation5 + $0x1d8] sm:$0xf]
        %v879 = vld [vmem:[#allocation5 + $0x1dc] sm:$0xf]
        %v880 = vld [vmem:[#allocation5 + $0x1e0] sm:$0xf]
        %v881 = vld [vmem:[#allocation5 + $0x1e4] sm:$0xf]
        %v882 = vld [vmem:[#allocation5 + $0x1e8] sm:$0xf]
        %v883 = vld [vmem:[#allocation5 + $0x1ec] sm:$0xf]
        %v884 = vld [vmem:[#allocation5 + $0x1f0] sm:$0xf]
        %v885 = vld [vmem:[#allocation5 + $0x1f4] sm:$0xf]
        %v886 = vld [vmem:[#allocation5 + $0x1f8] sm:$0xf]
        %v887 = vld [vmem:[#allocation5 + $0x1fc] sm:$0xf]
        %v888 = vld [vmem:[#allocation5 + $0x200] sm:$0xf]
        %v889 = vld [vmem:[#allocation5 + $0x204] sm:$0xf]
        %v890 = vld [vmem:[#allocation5 + $0x208] sm:$0xf]
        %v891 = vld [vmem:[#allocation5 + $0x20c] sm:$0xf]
        %v892 = vld [vmem:[#allocation5 + $0x210] sm:$0xf]
        %v893 = vld [vmem:[#allocation5 + $0x214] sm:$0xf]
        %v894 = vld [vmem:[#allocation5 + $0x218] sm:$0xf]
        %v895 = vld [vmem:[#allocation5 + $0x21c] sm:$0xf]
        %v896 = vld [vmem:[#allocation5 + $0x220] sm:$0xf]
        %v897 = vld [vmem:[#allocation5 + $0x224] sm:$0xf]
        %v898 = vld [vmem:[#allocation5 + $0x228] sm:$0xf]
        %v899 = vld [vmem:[#allocation5 + $0x22c] sm:$0xf]
        %v900 = vld [vmem:[#allocation5 + $0x230] sm:$0xf]
        %v901 = vld [vmem:[#allocation5 + $0x234] sm:$0xf]
        %v902 = vld [vmem:[#allocation5 + $0x238] sm:$0xf]
        %v903 = vld [vmem:[#allocation5 + $0x23c] sm:$0xf]
        %v904 = vld [vmem:[#allocation7] sm:$0x1]
        %v906 = vlaneseq
        %v907 = vshrl.u32 %v906, 7
        %v908 = vsub.s32 0, %v907
        %v909 = vrot.slane %v904, %v908
        %v1055 = vunpack.c.l.b16 %v760
        %v1056 = vunpack.c.l.b16 %v761
        %v1057 = vunpack.c.l.b16 %v762
        %v1058 = vunpack.c.l.b16 %v763
        %v1059 = vunpack.c.l.b16 %v764
        %v1060 = vunpack.c.l.b16 %v765
        %v1061 = vunpack.c.l.b16 %v766
        %v1062 = vunpack.c.l.b16 %v767
        %v1063 = vunpack.c.l.b16 %v768
        %v1064 = vunpack.c.l.b16 %v769
        %v1065 = vunpack.c.l.b16 %v770
        %v1066 = vunpack.c.l.b16 %v771
        %v1067 = vunpack.c.l.b16 %v772
        %v1068 = vunpack.c.l.b16 %v773
        %v1069 = vunpack.c.l.b16 %v774
        %v1070 = vunpack.c.l.b16 %v775
        %v1071 = vunpack.c.l.b16 %v776
        %v1072 = vunpack.c.l.b16 %v777
        %v1073 = vunpack.c.l.b16 %v778
        %v1074 = vunpack.c.l.b16 %v779
        %v1075 = vunpack.c.l.b16 %v780
        %v1076 = vunpack.c.l.b16 %v781
        %v1077 = vunpack.c.l.b16 %v782
        %v1078 = vunpack.c.l.b16 %v783
        %v1079 = vunpack.c.l.b16 %v784
        %v1080 = vunpack.c.l.b16 %v785
        %v1081 = vunpack.c.l.b16 %v786
        %v1082 = vunpack.c.l.b16 %v787
        %v1083 = vunpack.c.l.b16 %v788
        %v1084 = vunpack.c.l.b16 %v789
        %v1085 = vunpack.c.l.b16 %v790
        %v1086 = vunpack.c.l.b16 %v791
        %v1087 = vunpack.c.l.b16 %v792
        %v1088 = vunpack.c.l.b16 %v793
        %v1089 = vunpack.c.l.b16 %v794
        %v1090 = vunpack.c.l.b16 %v795
        %v1091 = vunpack.c.l.b16 %v796
        %v1092 = vunpack.c.l.b16 %v797
        %v1093 = vunpack.c.l.b16 %v798
        %v1094 = vunpack.c.l.b16 %v799
        %v1095 = vunpack.c.l.b16 %v800
        %v1096 = vunpack.c.l.b16 %v801
        %v1097 = vunpack.c.l.b16 %v802
        %v1098 = vunpack.c.l.b16 %v803
        %v1099 = vunpack.c.l.b16 %v804
        %v1100 = vunpack.c.l.b16 %v805
        %v1101 = vunpack.c.l.b16 %v806
        %v1102 = vunpack.c.l.b16 %v807
        %v1103 = vunpack.c.l.b16 %v808
        %v1104 = vunpack.c.l.b16 %v809
        %v1105 = vunpack.c.l.b16 %v810
        %v1106 = vunpack.c.l.b16 %v811
        %v1107 = vunpack.c.l.b16 %v812
        %v1108 = vunpack.c.l.b16 %v813
        %v1109 = vunpack.c.l.b16 %v814
        %v1110 = vunpack.c.l.b16 %v815
        %v1111 = vunpack.c.l.b16 %v816
        %v1112 = vunpack.c.l.b16 %v817
        %v1113 = vunpack.c.l.b16 %v818
        %v1114 = vunpack.c.l.b16 %v819
        %v1115 = vunpack.c.l.b16 %v820
        %v1116 = vunpack.c.l.b16 %v821
        %v1117 = vunpack.c.l.b16 %v822
        %v1118 = vunpack.c.l.b16 %v823
        %v1119 = vunpack.c.l.b16 %v824
        %v1120 = vunpack.c.l.b16 %v825
        %v1121 = vunpack.c.l.b16 %v826
        %v1122 = vunpack.c.l.b16 %v827
        %v1123 = vunpack.c.l.b16 %v828
        %v1124 = vunpack.c.l.b16 %v829
        %v1125 = vunpack.c.l.b16 %v830
        %v1126 = vunpack.c.l.b16 %v831
        %v1127 = vunpack.c.l.b16 %v832
        %v1128 = vunpack.c.l.b16 %v833
        %v1129 = vunpack.c.l.b16 %v834
        %v1130 = vunpack.c.l.b16 %v835
        %v1131 = vunpack.c.l.b16 %v836
        %v1132 = vunpack.c.l.b16 %v837
        %v1133 = vunpack.c.l.b16 %v838
        %v1134 = vunpack.c.l.b16 %v839
        %v1135 = vunpack.c.l.b16 %v840
        %v1136 = vunpack.c.l.b16 %v841
        %v1137 = vunpack.c.l.b16 %v842
        %v1138 = vunpack.c.l.b16 %v843
        %v1139 = vunpack.c.l.b16 %v844
        %v1140 = vunpack.c.l.b16 %v845
        %v1141 = vunpack.c.l.b16 %v846
        %v1142 = vunpack.c.l.b16 %v847
        %v1143 = vunpack.c.l.b16 %v848
        %v1144 = vunpack.c.l.b16 %v849
        %v1145 = vunpack.c.l.b16 %v850
        %v1146 = vunpack.c.l.b16 %v851
        %v1147 = vunpack.c.l.b16 %v852
        %v1148 = vunpack.c.l.b16 %v853
        %v1149 = vunpack.c.l.b16 %v854
        %v1150 = vunpack.c.l.b16 %v855
        %v1151 = vunpack.c.l.b16 %v856
        %v1152 = vunpack.c.l.b16 %v857
        %v1153 = vunpack.c.l.b16 %v858
        %v1154 = vunpack.c.l.b16 %v859
        %v1155 = vunpack.c.l.b16 %v860
        %v1156 = vunpack.c.l.b16 %v861
        %v1157 = vunpack.c.l.b16 %v862
        %v1158 = vunpack.c.l.b16 %v863
        %v1159 = vunpack.c.l.b16 %v864
        %v1160 = vunpack.c.l.b16 %v865
        %v1161 = vunpack.c.l.b16 %v866
        %v1162 = vunpack.c.l.b16 %v867
        %v1163 = vunpack.c.l.b16 %v868
        %v1164 = vunpack.c.l.b16 %v869
        %v1165 = vunpack.c.l.b16 %v870
        %v1166 = vunpack.c.l.b16 %v871
        %v1167 = vunpack.c.l.b16 %v872
        %v1168 = vunpack.c.l.b16 %v873
        %v1169 = vunpack.c.l.b16 %v874
        %v1170 = vunpack.c.l.b16 %v875
        %v1171 = vunpack.c.l.b16 %v876
        %v1172 = vunpack.c.l.b16 %v877
        %v1173 = vunpack.c.l.b16 %v878
        %v1174 = vunpack.c.l.b16 %v879
        %v1175 = vunpack.c.l.b16 %v880
        %v1176 = vunpack.c.l.b16 %v881
        %v1177 = vunpack.c.l.b16 %v882
        %v1178 = vunpack.c.l.b16 %v883
        %v1179 = vunpack.c.l.b16 %v884
        %v1180 = vunpack.c.l.b16 %v885
        %v1181 = vunpack.c.l.b16 %v886
        %v1182 = vunpack.c.l.b16 %v887
        %v1183 = vunpack.c.l.b16 %v888
        %v1184 = vunpack.c.l.b16 %v889
        %v1185 = vunpack.c.l.b16 %v890
        %v1186 = vunpack.c.l.b16 %v891
        %v1187 = vunpack.c.l.b16 %v892
        %v1188 = vunpack.c.l.b16 %v893
        %v1189 = vunpack.c.l.b16 %v894
        %v1190 = vunpack.c.l.b16 %v895
        %v1191 = vunpack.c.l.b16 %v896
        %v1192 = vunpack.c.l.b16 %v897
        %v1193 = vunpack.c.l.b16 %v898
        %v1194 = vunpack.c.l.b16 %v899
        %v1195 = vunpack.c.l.b16 %v900
        %v1196 = vunpack.c.l.b16 %v901
        %v1197 = vunpack.c.l.b16 %v902
        %v1198 = vunpack.c.l.b16 %v903
        %v1199 = vpack.c.b16 %v1056, %v1055
        %v1200 = vpack.c.b16 %v1058, %v1057
        %v1201 = vpack.c.b16 %v1060, %v1059
        %v1202 = vpack.c.b16 %v1062, %v1061
        %v1203 = vpack.c.b16 %v1064, %v1063
        %v1204 = vpack.c.b16 %v1066, %v1065
        %v1205 = vpack.c.b16 %v1068, %v1067
        %v1206 = vpack.c.b16 %v1070, %v1069
        %v1207 = vpack.c.b16 %v1072, %v1071
        %v1208 = vpack.c.b16 %v1074, %v1073
        %v1209 = vpack.c.b16 %v1076, %v1075
        %v1210 = vpack.c.b16 %v1078, %v1077
        %v1211 = vpack.c.b16 %v1080, %v1079
        %v1212 = vpack.c.b16 %v1082, %v1081
        %v1213 = vpack.c.b16 %v1084, %v1083
        %v1214 = vpack.c.b16 %v1086, %v1085
        %v1215 = vpack.c.b16 %v1088, %v1087
        %v1216 = vpack.c.b16 %v1090, %v1089
        %v1217 = vpack.c.b16 %v1092, %v1091
        %v1218 = vpack.c.b16 %v1094, %v1093
        %v1219 = vpack.c.b16 %v1096, %v1095
        %v1220 = vpack.c.b16 %v1098, %v1097
        %v1221 = vpack.c.b16 %v1100, %v1099
        %v1222 = vpack.c.b16 %v1102, %v1101
        %v1223 = vpack.c.b16 %v1104, %v1103
        %v1224 = vpack.c.b16 %v1106, %v1105
        %v1225 = vpack.c.b16 %v1108, %v1107
        %v1226 = vpack.c.b16 %v1110, %v1109
        %v1227 = vpack.c.b16 %v1112, %v1111
        %v1228 = vpack.c.b16 %v1114, %v1113
        %v1229 = vpack.c.b16 %v1116, %v1115
        %v1230 = vpack.c.b16 %v1118, %v1117
        %v1231 = vpack.c.b16 %v1120, %v1119
        %v1232 = vpack.c.b16 %v1122, %v1121
        %v1233 = vpack.c.b16 %v1124, %v1123
        %v1234 = vpack.c.b16 %v1126, %v1125
        %v1235 = vpack.c.b16 %v1128, %v1127
        %v1236 = vpack.c.b16 %v1130, %v1129
        %v1237 = vpack.c.b16 %v1132, %v1131
        %v1238 = vpack.c.b16 %v1134, %v1133
        %v1239 = vpack.c.b16 %v1136, %v1135
        %v1240 = vpack.c.b16 %v1138, %v1137
        %v1241 = vpack.c.b16 %v1140, %v1139
        %v1242 = vpack.c.b16 %v1142, %v1141
        %v1243 = vpack.c.b16 %v1144, %v1143
        %v1244 = vpack.c.b16 %v1146, %v1145
        %v1245 = vpack.c.b16 %v1148, %v1147
        %v1246 = vpack.c.b16 %v1150, %v1149
        %v1247 = vpack.c.b16 %v1152, %v1151
        %v1248 = vpack.c.b16 %v1154, %v1153
        %v1249 = vpack.c.b16 %v1156, %v1155
        %v1250 = vpack.c.b16 %v1158, %v1157
        %v1251 = vpack.c.b16 %v1160, %v1159
        %v1252 = vpack.c.b16 %v1162, %v1161
        %v1253 = vpack.c.b16 %v1164, %v1163
        %v1254 = vpack.c.b16 %v1166, %v1165
        %v1255 = vpack.c.b16 %v1168, %v1167
        %v1256 = vpack.c.b16 %v1170, %v1169
        %v1257 = vpack.c.b16 %v1172, %v1171
        %v1258 = vpack.c.b16 %v1174, %v1173
        %v1259 = vpack.c.b16 %v1176, %v1175
        %v1260 = vpack.c.b16 %v1178, %v1177
        %v1261 = vpack.c.b16 %v1180, %v1179
        %v1262 = vpack.c.b16 %v1182, %v1181
        %v1263 = vpack.c.b16 %v1184, %v1183
        %v1264 = vpack.c.b16 %v1186, %v1185
        %v1265 = vpack.c.b16 %v1188, %v1187
        %v1266 = vpack.c.b16 %v1190, %v1189
        %v1267 = vpack.c.b16 %v1192, %v1191
        %v1268 = vpack.c.b16 %v1194, %v1193
        %v1269 = vpack.c.b16 %v1196, %v1195
        %v1270 = vpack.c.b16 %v1198, %v1197
        %1343 = vmatprep.subr.bf16.mxu0 0
        %1344 = vmatpush1.bf16.msra.mxu0 %v1199
        %1345 = vmatprep.subr.bf16.mxu0 0
        %1346 = vmatpush1.bf16.msra.mxu0 %v1200
        %1347 = vmatprep.subr.bf16.mxu0 0
        %1348 = vmatpush1.bf16.msra.mxu0 %v1201
        %1349 = vmatprep.subr.bf16.mxu0 0
        %1350 = vmatpush1.bf16.msra.mxu0 %v1202
        %1351 = vmatprep.subr.bf16.mxu0 0
        %1352 = vmatpush1.bf16.msra.mxu0 %v1203
        %1353 = vmatprep.subr.bf16.mxu0 0
        %1354 = vmatpush1.bf16.msra.mxu0 %v1204
        %1355 = vmatprep.subr.bf16.mxu0 0
        %1356 = vmatpush1.bf16.msra.mxu0 %v1205
        %1357 = vmatprep.subr.bf16.mxu0 0
        %1358 = vmatpush1.bf16.msra.mxu0 %v1206
        %1359 = vmatprep.subr.bf16.mxu0 0
        %1360 = vmatpush1.bf16.msra.mxu0 %v1207
        %1361 = vmatprep.subr.bf16.mxu0 0
        %1362 = vmatpush1.bf16.msra.mxu0 %v1208
        %1363 = vmatprep.subr.bf16.mxu0 0
        %1364 = vmatpush1.bf16.msra.mxu0 %v1209
        %1365 = vmatprep.subr.bf16.mxu0 0
        %1366 = vmatpush1.bf16.msra.mxu0 %v1210
        %1367 = vmatprep.subr.bf16.mxu0 0
        %1368 = vmatpush1.bf16.msra.mxu0 %v1211
        %1369 = vmatprep.subr.bf16.mxu0 0
        %1370 = vmatpush1.bf16.msra.mxu0 %v1212
        %1371 = vmatprep.subr.bf16.mxu0 0
        %1372 = vmatpush1.bf16.msra.mxu0 %v1213
        %1373 = vmatprep.subr.bf16.mxu0 0
        %1374 = vmatpush1.bf16.msra.mxu0 %v1214
        %1375 = vmatprep.mubr.bf16.mxu0 %v446
        %1376 = vmatmul.mubr.bf16.gmra.mrb[0].mxu0 %v354
        %v1377 = vpop.f32.mrb[0].mxu0
        %v1378 = vadd.f32 %v909, %v1377
        %v1379 = vpop.f32.mrb[0].mxu0
        %v1380 = vpop.f32.mrb[0].mxu0
        %v1381 = vadd.f32 %v909, %v1380
        %v1382 = vpop.f32.mrb[0].mxu0
        %1383 = vmatprep.mubr.bf16.mxu0 %v458
        %1384 = vmatmul.mubr.bf16.gmra.mrb[0].mxu0 %v355
        %v1385 = vpop.f32.mrb[0].mxu0
        %v1386 = vadd.f32 %v909, %v1385
        %v1387 = vpop.f32.mrb[0].mxu0
        %v1388 = vpop.f32.mrb[0].mxu0
        %v1389 = vadd.f32 %v909, %v1388
        %v1390 = vpop.f32.mrb[0].mxu0
        %1391 = vmatprep.mubr.bf16.mxu0 %v470
        %1392 = vmatmul.mubr.bf16.gmra.mrb[0].mxu0 %v356
        %v1393 = vpop.f32.mrb[0].mxu0
        %v1394 = vadd.f32 %v909, %v1393
        %v1395 = vpop.f32.mrb[0].mxu0
        %v1396 = vpop.f32.mrb[0].mxu0
        %v1397 = vadd.f32 %v909, %v1396
        %v1398 = vpop.f32.mrb[0].mxu0
        %1399 = vmatprep.mubr.bf16.mxu0 %v482
        %1400 = vmatmul.mubr.bf16.gmra.mrb[0].mxu0 %v357
        %v1401 = vpop.f32.mrb[0].mxu0
        %v1402 = vadd.f32 %v909, %v1401
        %v1403 = vpop.f32.mrb[0].mxu0
        %v1404 = vpop.f32.mrb[0].mxu0
        %v1405 = vadd.f32 %v909, %v1404
        %v1406 = vpop.f32.mrb[0].mxu0
        %1407 = vmatprep.mubr.bf16.mxu0 %v494
        %1408 = vmatmul.mubr.bf16.gmra.mrb[0].mxu0 %v358
        %v1409 = vpop.f32.mrb[0].mxu0
        %v1410 = vadd.f32 %v909, %v1409
        %v1411 = vpop.f32.mrb[0].mxu0
        %v1412 = vpop.f32.mrb[0].mxu0
        %v1413 = vadd.f32 %v909, %v1412
        %v1414 = vpop.f32.mrb[0].mxu0
        %1415 = vmatprep.mubr.bf16.mxu0 %v506
        %1416 = vmatmul.mubr.bf16.gmra.mrb[0].mxu0 %v359
        %v1417 = vpop.f32.mrb[0].mxu0
        %v1418 = vadd.f32 %v909, %v1417
        %v1419 = vpop.f32.mrb[0].mxu0
        %v1420 = vpop.f32.mrb[0].mxu0
        %v1421 = vadd.f32 %v909, %v1420
        %v1422 = vpop.f32.mrb[0].mxu0
        %1423 = vmatprep.mubr.bf16.mxu0 %v518
        %1424 = vmatmul.mubr.bf16.gmra.mrb[0].mxu0 %v360
        %v1425 = vpop.f32.mrb[0].mxu0
        %v1426 = vadd.f32 %v909, %v1425
        %v1427 = vpop.f32.mrb[0].mxu0
        %v1428 = vpop.f32.mrb[0].mxu0
        %v1429 = vadd.f32 %v909, %v1428
        %v1430 = vpop.f32.mrb[0].mxu0
        %1431 = vmatprep.mubr.bf16.mxu0 %v530
        %1432 = vmatmul.mubr.bf16.gmra.mrb[0].mxu0 %v361
        %v1433 = vpop.f32.mrb[0].mxu0
        %v1434 = vadd.f32 %v909, %v1433
        %v1435 = vpop.f32.mrb[0].mxu0
        %v1436 = vpop.f32.mrb[0].mxu0
        %v1437 = vadd.f32 %v909, %v1436
        %v1438 = vpop.f32.mrb[0].mxu0
        %1439 = vmatprep.mubr.bf16.mxu0 %v542
        %1440 = vmatmul.mubr.bf16.gmra.mrb[0].mxu0 %v362
        %v1441 = vpop.f32.mrb[0].mxu0
        %v1442 = vadd.f32 %v909, %v1441
        %v1443 = vpop.f32.mrb[0].mxu0
        %v1444 = vpop.f32.mrb[0].mxu0
        %v1445 = vadd.f32 %v909, %v1444
        %v1446 = vpop.f32.mrb[0].mxu0
        %1447 = vmatprep.mubr.bf16.mxu0 %v554
        %1448 = vmatmul.mubr.bf16.gmra.mrb[0].mxu0 %v363
        %v1449 = vpop.f32.mrb[0].mxu0
        %v1450 = vadd.f32 %v909, %v1449
        %v1451 = vpop.f32.mrb[0].mxu0
        %v1452 = vpop.f32.mrb[0].mxu0
        %v1453 = vadd.f32 %v909, %v1452
        %v1454 = vpop.f32.mrb[0].mxu0
        %1455 = vmatprep.mubr.bf16.mxu0 %v566
        %1456 = vmatmul.mubr.bf16.gmra.mrb[0].mxu0 %v364
        %v1457 = vpop.f32.mrb[0].mxu0
        %v1458 = vadd.f32 %v909, %v1457
        %v1459 = vpop.f32.mrb[0].mxu0
        %v1460 = vpop.f32.mrb[0].mxu0
        %v1461 = vadd.f32 %v909, %v1460
        %v1462 = vpop.f32.mrb[0].mxu0
        %1463 = vmatprep.mubr.bf16.mxu0 %v578
        %1464 = vmatmul.mubr.bf16.gmra.mrb[0].mxu0 %v365
        %v1465 = vpop.f32.mrb[0].mxu0
        %v1466 = vadd.f32 %v909, %v1465
        %v1467 = vpop.f32.mrb[0].mxu0
        %v1468 = vpop.f32.mrb[0].mxu0
        %v1469 = vadd.f32 %v909, %v1468
        %v1470 = vpop.f32.mrb[0].mxu0
        %1471 = vmatprep.mubr.bf16.mxu0 %v590
        %1472 = vmatmul.mubr.bf16.gmra.mrb[0].mxu0 %v366
        %v1473 = vpop.f32.mrb[0].mxu0
        %v1474 = vadd.f32 %v909, %v1473
        %v1475 = vpop.f32.mrb[0].mxu0
        %v1476 = vpop.f32.mrb[0].mxu0
        %v1477 = vadd.f32 %v909, %v1476
        %v1478 = vpop.f32.mrb[0].mxu0
        %1479 = vmatprep.mubr.bf16.mxu0 %v602
        %1480 = vmatmul.mubr.bf16.gmra.mrb[0].mxu0 %v367
        %v1481 = vpop.f32.mrb[0].mxu0
        %v1482 = vadd.f32 %v909, %v1481
        %v1483 = vpop.f32.mrb[0].mxu0
        %v1484 = vpop.f32.mrb[0].mxu0
        %v1485 = vadd.f32 %v909, %v1484
        %v1486 = vpop.f32.mrb[0].mxu0
        %1487 = vmatprep.mubr.bf16.mxu0 %v614
        %1488 = vmatmul.mubr.bf16.gmra.mrb[0].mxu0 %v368
        %v1489 = vpop.f32.mrb[0].mxu0
        %v1490 = vadd.f32 %v909, %v1489
        %v1491 = vpop.f32.mrb[0].mxu0
        %v1492 = vpop.f32.mrb[0].mxu0
        %v1493 = vadd.f32 %v909, %v1492
        %v1494 = vpop.f32.mrb[0].mxu0
        %1495 = vmatprep.mubr.bf16.mxu0 %v626
        %1496 = vmatmul.mubr.bf16.gmra.mrb[0].mxu0 %v369
        %v1497 = vpop.f32.mrb[0].mxu0
        %v1498 = vadd.f32 %v909, %v1497
        %v1499 = vpop.f32.mrb[0].mxu0
        %v1500 = vpop.f32.mrb[0].mxu0
        %v1501 = vadd.f32 %v909, %v1500
        %v1502 = vpop.f32.mrb[0].mxu0
        %1503 = vdwg.mxu0
        %1504 = vmatprep.subr.bf16.mxu0 0
        %1505 = vmatpush1.bf16.msra.mxu0 %v1215
        %1506 = vmatprep.subr.bf16.mxu0 0
        %1507 = vmatpush1.bf16.msra.mxu0 %v1216
        %1508 = vmatprep.subr.bf16.mxu0 0
        %1509 = vmatpush1.bf16.msra.mxu0 %v1217
        %1510 = vmatprep.subr.bf16.mxu0 0
        %1511 = vmatpush1.bf16.msra.mxu0 %v1218
        %1512 = vmatprep.subr.bf16.mxu0 0
        %1513 = vmatpush1.bf16.msra.mxu0 %v1219
        %1514 = vmatprep.subr.bf16.mxu0 0
        %1515 = vmatpush1.bf16.msra.mxu0 %v1220
        %1516 = vmatprep.subr.bf16.mxu0 0
        %1517 = vmatpush1.bf16.msra.mxu0 %v1221
        %1518 = vmatprep.subr.bf16.mxu0 0
        %1519 = vmatpush1.bf16.msra.mxu0 %v1222
        %1520 = vmatprep.subr.bf16.mxu0 0
        %1521 = vmatpush1.bf16.msra.mxu0 %v1223
        %1522 = vmatprep.subr.bf16.mxu0 0
        %1523 = vmatpush1.bf16.msra.mxu0 %v1224
        %1524 = vmatprep.subr.bf16.mxu0 0
        %1525 = vmatpush1.bf16.msra.mxu0 %v1225
        %1526 = vmatprep.subr.bf16.mxu0 0
        %1527 = vmatpush1.bf16.msra.mxu0 %v1226
        %1528 = vmatprep.subr.bf16.mxu0 0
        %1529 = vmatpush1.bf16.msra.mxu0 %v1227
        %1530 = vmatprep.subr.bf16.mxu0 0
        %1531 = vmatpush1.bf16.msra.mxu0 %v1228
        %1532 = vmatprep.subr.bf16.mxu0 0
        %1533 = vmatpush1.bf16.msra.mxu0 %v1229
        %1534 = vmatprep.subr.bf16.mxu0 0
        %1535 = vmatpush1.bf16.msra.mxu0 %v1230
        %1536 = vmatprep.mubr.bf16.mxu0 %v355
        %1537 = vmatmul.mubr.bf16.gmra.mrb[0].mxu0 %v646
        %v1538 = vpop.f32.mrb[0].mxu0
        %v1539 = vadd.f32 %v1378, %v1538
        %v1540 = vpop.f32.mrb[0].mxu0
        %v1541 = vpop.f32.mrb[0].mxu0
        %v1542 = vadd.f32 %v1381, %v1541
        %v1543 = vpop.f32.mrb[0].mxu0
        %1544 = vmatprep.mubr.bf16.mxu0 %v356
        %1545 = vmatmul.mubr.bf16.gmra.mrb[0].mxu0 %v649
        %v1546 = vpop.f32.mrb[0].mxu0
        %v1547 = vadd.f32 %v1386, %v1546
        %v1548 = vpop.f32.mrb[0].mxu0
        %v1549 = vpop.f32.mrb[0].mxu0
        %v1550 = vadd.f32 %v1389, %v1549
        %v1551 = vpop.f32.mrb[0].mxu0
        %1552 = vmatprep.mubr.bf16.mxu0 %v357
        %1553 = vmatmul.mubr.bf16.gmra.mrb[0].mxu0 %v652
        %v1554 = vpop.f32.mrb[0].mxu0
        %v1555 = vadd.f32 %v1394, %v1554
        %v1556 = vpop.f32.mrb[0].mxu0
        %v1557 = vpop.f32.mrb[0].mxu0
        %v1558 = vadd.f32 %v1397, %v1557
        %v1559 = vpop.f32.mrb[0].mxu0
        %1560 = vmatprep.mubr.bf16.mxu0 %v358
        %1561 = vmatmul.mubr.bf16.gmra.mrb[0].mxu0 %v655
        %v1562 = vpop.f32.mrb[0].mxu0
        %v1563 = vadd.f32 %v1402, %v1562
        %v1564 = vpop.f32.mrb[0].mxu0
        %v1565 = vpop.f32.mrb[0].mxu0
        %v1566 = vadd.f32 %v1405, %v1565
        %v1567 = vpop.f32.mrb[0].mxu0
        %1568 = vmatprep.mubr.bf16.mxu0 %v359
        %1569 = vmatmul.mubr.bf16.gmra.mrb[0].mxu0 %v658
        %v1570 = vpop.f32.mrb[0].mxu0
        %v1571 = vadd.f32 %v1410, %v1570
        %v1572 = vpop.f32.mrb[0].mxu0
        %v1573 = vpop.f32.mrb[0].mxu0
        %v1574 = vadd.f32 %v1413, %v1573
        %v1575 = vpop.f32.mrb[0].mxu0
        %1576 = vmatprep.mubr.bf16.mxu0 %v360
        %1577 = vmatmul.mubr.bf16.gmra.mrb[0].mxu0 %v661
        %v1578 = vpop.f32.mrb[0].mxu0
        %v1579 = vadd.f32 %v1418, %v1578
        %v1580 = vpop.f32.mrb[0].mxu0
        %v1581 = vpop.f32.mrb[0].mxu0
        %v1582 = vadd.f32 %v1421, %v1581
        %v1583 = vpop.f32.mrb[0].mxu0
        %1584 = vmatprep.mubr.bf16.mxu0 %v361
        %1585 = vmatmul.mubr.bf16.gmra.mrb[0].mxu0 %v664
        %v1586 = vpop.f32.mrb[0].mxu0
        %v1587 = vadd.f32 %v1426, %v1586
        %v1588 = vpop.f32.mrb[0].mxu0
        %v1589 = vpop.f32.mrb[0].mxu0
        %v1590 = vadd.f32 %v1429, %v1589
        %v1591 = vpop.f32.mrb[0].mxu0
        %1592 = vmatprep.mubr.bf16.mxu0 %v362
        %1593 = vmatmul.mubr.bf16.gmra.mrb[0].mxu0 %v667
        %v1594 = vpop.f32.mrb[0].mxu0
        %v1595 = vadd.f32 %v1434, %v1594
        %v1596 = vpop.f32.mrb[0].mxu0
        %v1597 = vpop.f32.mrb[0].mxu0
        %v1598 = vadd.f32 %v1437, %v1597
        %v1599 = vpop.f32.mrb[0].mxu0
        %1600 = vmatprep.mubr.bf16.mxu0 %v363
        %1601 = vmatmul.mubr.bf16.gmra.mrb[0].mxu0 %v670
        %v1602 = vpop.f32.mrb[0].mxu0
        %v1603 = vadd.f32 %v1442, %v1602
        %v1604 = vpop.f32.mrb[0].mxu0
        %v1605 = vpop.f32.mrb[0].mxu0
        %v1606 = vadd.f32 %v1445, %v1605
        %v1607 = vpop.f32.mrb[0].mxu0
        %1608 = vmatprep.mubr.bf16.mxu0 %v364
        %1609 = vmatmul.mubr.bf16.gmra.mrb[0].mxu0 %v673
        %v1610 = vpop.f32.mrb[0].mxu0
        %v1611 = vadd.f32 %v1450, %v1610
        %v1612 = vpop.f32.mrb[0].mxu0
        %v1613 = vpop.f32.mrb[0].mxu0
        %v1614 = vadd.f32 %v1453, %v1613
        %v1615 = vpop.f32.mrb[0].mxu0
        %1616 = vmatprep.mubr.bf16.mxu0 %v365
        %1617 = vmatmul.mubr.bf16.gmra.mrb[0].mxu0 %v676
        %v1618 = vpop.f32.mrb[0].mxu0
        %v1619 = vadd.f32 %v1458, %v1618
        %v1620 = vpop.f32.mrb[0].mxu0
        %v1621 = vpop.f32.mrb[0].mxu0
        %v1622 = vadd.f32 %v1461, %v1621
        %v1623 = vpop.f32.mrb[0].mxu0
        %1624 = vmatprep.mubr.bf16.mxu0 %v366
        %1625 = vmatmul.mubr.bf16.gmra.mrb[0].mxu0 %v679
        %v1626 = vpop.f32.mrb[0].mxu0
        %v1627 = vadd.f32 %v1466, %v1626
        %v1628 = vpop.f32.mrb[0].mxu0
        %v1629 = vpop.f32.mrb[0].mxu0
        %v1630 = vadd.f32 %v1469, %v1629
        %v1631 = vpop.f32.mrb[0].mxu0
        %1632 = vmatprep.mubr.bf16.mxu0 %v367
        %1633 = vmatmul.mubr.bf16.gmra.mrb[0].mxu0 %v682
        %v1634 = vpop.f32.mrb[0].mxu0
        %v1635 = vadd.f32 %v1474, %v1634
        %v1636 = vpop.f32.mrb[0].mxu0
        %v1637 = vpop.f32.mrb[0].mxu0
        %v1638 = vadd.f32 %v1477, %v1637
        %v1639 = vpop.f32.mrb[0].mxu0
        %1640 = vmatprep.mubr.bf16.mxu0 %v368
        %1641 = vmatmul.mubr.bf16.gmra.mrb[0].mxu0 %v685
        %v1642 = vpop.f32.mrb[0].mxu0
        %v1643 = vadd.f32 %v1482, %v1642
        %v1644 = vpop.f32.mrb[0].mxu0
        %v1645 = vpop.f32.mrb[0].mxu0
        %v1646 = vadd.f32 %v1485, %v1645
        %v1647 = vpop.f32.mrb[0].mxu0
        %1648 = vmatprep.mubr.bf16.mxu0 %v369
        %1649 = vmatmul.mubr.bf16.gmra.mrb[0].mxu0 %v688
        %v1650 = vpop.f32.mrb[0].mxu0
        %v1651 = vadd.f32 %v1490, %v1650
        %v1652 = vpop.f32.mrb[0].mxu0
        %v1653 = vpop.f32.mrb[0].mxu0
        %v1654 = vadd.f32 %v1493, %v1653
        %v1655 = vpop.f32.mrb[0].mxu0
        %1656 = vmatprep.mubr.bf16.mxu0 %v712
        %1657 = vmatmul.mubr.bf16.gmra.mrb[0].mxu0 %v691
        %v1658 = vpop.f32.mrb[0].mxu0
        %v1659 = vadd.f32 %v1498, %v1658
        %v1660 = vpop.f32.mrb[0].mxu0
        %v1661 = vpop.f32.mrb[0].mxu0
        %v1662 = vadd.f32 %v1501, %v1661
        %v1663 = vpop.f32.mrb[0].mxu0
        %1664 = vdwg.mxu0
        %1665 = vmatprep.subr.bf16.mxu0 0
        %1666 = vmatpush1.bf16.msra.mxu0 %v1231
        %1667 = vmatprep.subr.bf16.mxu0 0
        %1668 = vmatpush1.bf16.msra.mxu0 %v1232
        %1669 = vmatprep.subr.bf16.mxu0 0
        %1670 = vmatpush1.bf16.msra.mxu0 %v1233
        %1671 = vmatprep.subr.bf16.mxu0 0
        %1672 = vmatpush1.bf16.msra.mxu0 %v1234
        %1673 = vmatprep.subr.bf16.mxu0 0
        %1674 = vmatpush1.bf16.msra.mxu0 %v1235
        %1675 = vmatprep.subr.bf16.mxu0 0
        %1676 = vmatpush1.bf16.msra.mxu0 %v1236
        %1677 = vmatprep.subr.bf16.mxu0 0
        %1678 = vmatpush1.bf16.msra.mxu0 %v1237
        %1679 = vmatprep.subr.bf16.mxu0 0
        %1680 = vmatpush1.bf16.msra.mxu0 %v1238
        %1681 = vmatprep.subr.bf16.mxu0 0
        %1682 = vmatpush1.bf16.msra.mxu0 %v1239
        %1683 = vmatprep.subr.bf16.mxu0 0
        %1684 = vmatpush1.bf16.msra.mxu0 %v1240
        %1685 = vmatprep.subr.bf16.mxu0 0
        %1686 = vmatpush1.bf16.msra.mxu0 %v1241
        %1687 = vmatprep.subr.bf16.mxu0 0
        %1688 = vmatpush1.bf16.msra.mxu0 %v1242
        %1689 = vmatprep.subr.bf16.mxu0 0
        %1690 = vmatpush1.bf16.msra.mxu0 %v1243
        %1691 = vmatprep.subr.bf16.mxu0 0
        %1692 = vmatpush1.bf16.msra.mxu0 %v1244
        %1693 = vmatprep.subr.bf16.mxu0 0
        %1694 = vmatpush1.bf16.msra.mxu0 %v1245
        %1695 = vmatprep.subr.bf16.mxu0 0
        %1696 = vmatpush1.bf16.msra.mxu0 %v1246
        %1697 = vmatprep.mubr.bf16.mxu0 %v649
        %1698 = vmatmul.mubr.bf16.gmra.mrb[0].mxu0 %v458
        %v1699 = vpop.f32.mrb[0].mxu0
        %v1700 = vadd.f32 %v1539, %v1699
        %v1701 = vpop.f32.mrb[0].mxu0
        %v1702 = vpop.f32.mrb[0].mxu0
        %v1703 = vadd.f32 %v1542, %v1702
        %v1704 = vpop.f32.mrb[0].mxu0
        %1705 = vmatprep.mubr.bf16.mxu0 %v652
        %1706 = vmatmul.mubr.bf16.gmra.mrb[0].mxu0 %v470
        %v1707 = vpop.f32.mrb[0].mxu0
        %v1708 = vadd.f32 %v1547, %v1707
        %v1709 = vpop.f32.mrb[0].mxu0
        %v1710 = vpop.f32.mrb[0].mxu0
        %v1711 = vadd.f32 %v1550, %v1710
        %v1712 = vpop.f32.mrb[0].mxu0
        %1713 = vmatprep.mubr.bf16.mxu0 %v655
        %1714 = vmatmul.mubr.bf16.gmra.mrb[0].mxu0 %v482
        %v1715 = vpop.f32.mrb[0].mxu0
        %v1716 = vadd.f32 %v1555, %v1715
        %v1717 = vpop.f32.mrb[0].mxu0
        %v1718 = vpop.f32.mrb[0].mxu0
        %v1719 = vadd.f32 %v1558, %v1718
        %v1720 = vpop.f32.mrb[0].mxu0
        %1721 = vmatprep.mubr.bf16.mxu0 %v658
        %1722 = vmatmul.mubr.bf16.gmra.mrb[0].mxu0 %v494
        %v1723 = vpop.f32.mrb[0].mxu0
        %v1724 = vadd.f32 %v1563, %v1723
        %v1725 = vpop.f32.mrb[0].mxu0
        %v1726 = vpop.f32.mrb[0].mxu0
        %v1727 = vadd.f32 %v1566, %v1726
        %v1728 = vpop.f32.mrb[0].mxu0
        %1729 = vmatprep.mubr.bf16.mxu0 %v661
        %1730 = vmatmul.mubr.bf16.gmra.mrb[0].mxu0 %v506
        %v1731 = vpop.f32.mrb[0].mxu0
        %v1732 = vadd.f32 %v1571, %v1731
        %v1733 = vpop.f32.mrb[0].mxu0
        %v1734 = vpop.f32.mrb[0].mxu0
        %v1735 = vadd.f32 %v1574, %v1734
        %v1736 = vpop.f32.mrb[0].mxu0
        %1737 = vmatprep.mubr.bf16.mxu0 %v664
        %1738 = vmatmul.mubr.bf16.gmra.mrb[0].mxu0 %v518
        %v1739 = vpop.f32.mrb[0].mxu0
        %v1740 = vadd.f32 %v1579, %v1739
        %v1741 = vpop.f32.mrb[0].mxu0
        %v1742 = vpop.f32.mrb[0].mxu0
        %v1743 = vadd.f32 %v1582, %v1742
        %v1744 = vpop.f32.mrb[0].mxu0
        %1745 = vmatprep.mubr.bf16.mxu0 %v667
        %1746 = vmatmul.mubr.bf16.gmra.mrb[0].mxu0 %v530
        %v1747 = vpop.f32.mrb[0].mxu0
        %v1748 = vadd.f32 %v1587, %v1747
        %v1749 = vpop.f32.mrb[0].mxu0
        %v1750 = vpop.f32.mrb[0].mxu0
        %v1751 = vadd.f32 %v1590, %v1750
        %v1752 = vpop.f32.mrb[0].mxu0
        %1753 = vmatprep.mubr.bf16.mxu0 %v670
        %1754 = vmatmul.mubr.bf16.gmra.mrb[0].mxu0 %v542
        %v1755 = vpop.f32.mrb[0].mxu0
        %v1756 = vadd.f32 %v1595, %v1755
        %v1757 = vpop.f32.mrb[0].mxu0
        %v1758 = vpop.f32.mrb[0].mxu0
        %v1759 = vadd.f32 %v1598, %v1758
        %v1760 = vpop.f32.mrb[0].mxu0
        %1761 = vmatprep.mubr.bf16.mxu0 %v673
        %1762 = vmatmul.mubr.bf16.gmra.mrb[0].mxu0 %v554
        %v1763 = vpop.f32.mrb[0].mxu0
        %v1764 = vadd.f32 %v1603, %v1763
        %v1765 = vpop.f32.mrb[0].mxu0
        %v1766 = vpop.f32.mrb[0].mxu0
        %v1767 = vadd.f32 %v1606, %v1766
        %v1768 = vpop.f32.mrb[0].mxu0
        %1769 = vmatprep.mubr.bf16.mxu0 %v676
        %1770 = vmatmul.mubr.bf16.gmra.mrb[0].mxu0 %v566
        %v1771 = vpop.f32.mrb[0].mxu0
        %v1772 = vadd.f32 %v1611, %v1771
        %v1773 = vpop.f32.mrb[0].mxu0
        %v1774 = vpop.f32.mrb[0].mxu0
        %v1775 = vadd.f32 %v1614, %v1774
        %v1776 = vpop.f32.mrb[0].mxu0
        %1777 = vmatprep.mubr.bf16.mxu0 %v679
        %1778 = vmatmul.mubr.bf16.gmra.mrb[0].mxu0 %v578
        %v1779 = vpop.f32.mrb[0].mxu0
        %v1780 = vadd.f32 %v1619, %v1779
        %v1781 = vpop.f32.mrb[0].mxu0
        %v1782 = vpop.f32.mrb[0].mxu0
        %v1783 = vadd.f32 %v1622, %v1782
        %v1784 = vpop.f32.mrb[0].mxu0
        %1785 = vmatprep.mubr.bf16.mxu0 %v682
        %1786 = vmatmul.mubr.bf16.gmra.mrb[0].mxu0 %v590
        %v1787 = vpop.f32.mrb[0].mxu0
        %v1788 = vadd.f32 %v1627, %v1787
        %v1789 = vpop.f32.mrb[0].mxu0
        %v1790 = vpop.f32.mrb[0].mxu0
        %v1791 = vadd.f32 %v1630, %v1790
        %v1792 = vpop.f32.mrb[0].mxu0
        %1793 = vmatprep.mubr.bf16.mxu0 %v685
        %1794 = vmatmul.mubr.bf16.gmra.mrb[0].mxu0 %v602
        %v1795 = vpop.f32.mrb[0].mxu0
        %v1796 = vadd.f32 %v1635, %v1795
        %v1797 = vpop.f32.mrb[0].mxu0
        %v1798 = vpop.f32.mrb[0].mxu0
        %v1799 = vadd.f32 %v1638, %v1798
        %v1800 = vpop.f32.mrb[0].mxu0
        %1801 = vmatprep.mubr.bf16.mxu0 %v688
        %1802 = vmatmul.mubr.bf16.gmra.mrb[0].mxu0 %v614
        %v1803 = vpop.f32.mrb[0].mxu0
        %v1804 = vadd.f32 %v1643, %v1803
        %v1805 = vpop.f32.mrb[0].mxu0
        %v1806 = vpop.f32.mrb[0].mxu0
        %v1807 = vadd.f32 %v1646, %v1806
        %v1808 = vpop.f32.mrb[0].mxu0
        %1809 = vmatprep.mubr.bf16.mxu0 %v691
        %1810 = vmatmul.mubr.bf16.gmra.mrb[0].mxu0 %v626
        %v1811 = vpop.f32.mrb[0].mxu0
        %v1812 = vadd.f32 %v1651, %v1811
        %v1813 = vpop.f32.mrb[0].mxu0
        %v1814 = vpop.f32.mrb[0].mxu0
        %v1815 = vadd.f32 %v1654, %v1814
        %v1816 = vpop.f32.mrb[0].mxu0
        %1817 = vmatprep.mubr.bf16.mxu0 %v732
        %1818 = vmatmul.mubr.bf16.gmra.mrb[0].mxu0 %v728
        %v1819 = vpop.f32.mrb[0].mxu0
        %v1820 = vadd.f32 %v1659, %v1819
        %v1821 = vpop.f32.mrb[0].mxu0
        %v1822 = vpop.f32.mrb[0].mxu0
        %v1823 = vadd.f32 %v1662, %v1822
        %v1824 = vpop.f32.mrb[0].mxu0
        %1825 = vdwg.mxu0
        %1826 = vmatprep.subr.bf16.mxu0 0
        %1827 = vmatpush1.bf16.msra.mxu0 %v1247
        %1828 = vmatprep.subr.bf16.mxu0 0
        %1829 = vmatpush1.bf16.msra.mxu0 %v1248
        %1830 = vmatprep.subr.bf16.mxu0 0
        %1831 = vmatpush1.bf16.msra.mxu0 %v1249
        %1832 = vmatprep.subr.bf16.mxu0 0
        %1833 = vmatpush1.bf16.msra.mxu0 %v1250
        %1834 = vmatprep.subr.bf16.mxu0 0
        %1835 = vmatpush1.bf16.msra.mxu0 %v1251
        %1836 = vmatprep.subr.bf16.mxu0 0
        %1837 = vmatpush1.bf16.msra.mxu0 %v1252
        %1838 = vmatprep.subr.bf16.mxu0 0
        %1839 = vmatpush1.bf16.msra.mxu0 %v1253
        %1840 = vmatprep.subr.bf16.mxu0 0
        %1841 = vmatpush1.bf16.msra.mxu0 %v1254
        %1842 = vmatprep.subr.bf16.mxu0 0
        %1843 = vmatpush1.bf16.msra.mxu0 %v1255
        %1844 = vmatprep.subr.bf16.mxu0 0
        %1845 = vmatpush1.bf16.msra.mxu0 %v1256
        %1846 = vmatprep.subr.bf16.mxu0 0
        %1847 = vmatpush1.bf16.msra.mxu0 %v1257
        %1848 = vmatprep.subr.bf16.mxu0 0
        %1849 = vmatpush1.bf16.msra.mxu0 %v1258
        %1850 = vmatprep.subr.bf16.mxu0 0
        %1851 = vmatpush1.bf16.msra.mxu0 %v1259
        %1852 = vmatprep.subr.bf16.mxu0 0
        %1853 = vmatpush1.bf16.msra.mxu0 %v1260
        %1854 = vmatprep.subr.bf16.mxu0 0
        %1855 = vmatpush1.bf16.msra.mxu0 %v1261
        %1856 = vmatprep.subr.bf16.mxu0 0
        %1857 = vmatpush1.bf16.msra.mxu0 %v1262
        %1858 = vmatprep.mubr.bf16.mxu0 %v470
        %1859 = vmatmul.mubr.bf16.gmra.mrb[0].mxu0 %v356
        %v1860 = vpop.f32.mrb[0].mxu0
        %v1861 = vadd.f32 %v1700, %v1860
        %v1862 = vpop.f32.mrb[0].mxu0
        %v1863 = vpop.f32.mrb[0].mxu0
        %v1864 = vadd.f32 %v1703, %v1863
        %v1865 = vpop.f32.mrb[0].mxu0
        %1866 = vmatprep.mubr.bf16.mxu0 %v482
        %1867 = vmatmul.mubr.bf16.gmra.mrb[0].mxu0 %v357
        %v1868 = vpop.f32.mrb[0].mxu0
        %v1869 = vadd.f32 %v1708, %v1868
        %v1870 = vpop.f32.mrb[0].mxu0
        %v1871 = vpop.f32.mrb[0].mxu0
        %v1872 = vadd.f32 %v1711, %v1871
        %v1873 = vpop.f32.mrb[0].mxu0
        %1874 = vmatprep.mubr.bf16.mxu0 %v494
        %1875 = vmatmul.mubr.bf16.gmra.mrb[0].mxu0 %v358
        %v1876 = vpop.f32.mrb[0].mxu0
        %v1877 = vadd.f32 %v1716, %v1876
        %v1878 = vpop.f32.mrb[0].mxu0
        %v1879 = vpop.f32.mrb[0].mxu0
        %v1880 = vadd.f32 %v1719, %v1879
        %v1881 = vpop.f32.mrb[0].mxu0
        %1882 = vmatprep.mubr.bf16.mxu0 %v506
        %1883 = vmatmul.mubr.bf16.gmra.mrb[0].mxu0 %v359
        %v1884 = vpop.f32.mrb[0].mxu0
        %v1885 = vadd.f32 %v1724, %v1884
        %v1886 = vpop.f32.mrb[0].mxu0
        %v1887 = vpop.f32.mrb[0].mxu0
        %v1888 = vadd.f32 %v1727, %v1887
        %v1889 = vpop.f32.mrb[0].mxu0
        %1890 = vmatprep.mubr.bf16.mxu0 %v518
        %1891 = vmatmul.mubr.bf16.gmra.mrb[0].mxu0 %v360
        %v1892 = vpop.f32.mrb[0].mxu0
        %v1893 = vadd.f32 %v1732, %v1892
        %v1894 = vpop.f32.mrb[0].mxu0
        %v1895 = vpop.f32.mrb[0].mxu0
        %v1896 = vadd.f32 %v1735, %v1895
        %v1897 = vpop.f32.mrb[0].mxu0
        %1898 = vmatprep.mubr.bf16.mxu0 %v530
        %1899 = vmatmul.mubr.bf16.gmra.mrb[0].mxu0 %v361
        %v1900 = vpop.f32.mrb[0].mxu0
        %v1901 = vadd.f32 %v1740, %v1900
        %v1902 = vpop.f32.mrb[0].mxu0
        %v1903 = vpop.f32.mrb[0].mxu0
        %v1904 = vadd.f32 %v1743, %v1903
        %v1905 = vpop.f32.mrb[0].mxu0
        %1906 = vmatprep.mubr.bf16.mxu0 %v542
        %1907 = vmatmul.mubr.bf16.gmra.mrb[0].mxu0 %v362
        %v1908 = vpop.f32.mrb[0].mxu0
        %v1909 = vadd.f32 %v1748, %v1908
        %v1910 = vpop.f32.mrb[0].mxu0
        %v1911 = vpop.f32.mrb[0].mxu0
        %v1912 = vadd.f32 %v1751, %v1911
        %v1913 = vpop.f32.mrb[0].mxu0
        %1914 = vmatprep.mubr.bf16.mxu0 %v554
        %1915 = vmatmul.mubr.bf16.gmra.mrb[0].mxu0 %v363
        %v1916 = vpop.f32.mrb[0].mxu0
        %v1917 = vadd.f32 %v1756, %v1916
        %v1918 = vpop.f32.mrb[0].mxu0
        %v1919 = vpop.f32.mrb[0].mxu0
        %v1920 = vadd.f32 %v1759, %v1919
        %v1921 = vpop.f32.mrb[0].mxu0
        %1922 = vmatprep.mubr.bf16.mxu0 %v566
        %1923 = vmatmul.mubr.bf16.gmra.mrb[0].mxu0 %v364
        %v1924 = vpop.f32.mrb[0].mxu0
        %v1925 = vadd.f32 %v1764, %v1924
        %v1926 = vpop.f32.mrb[0].mxu0
        %v1927 = vpop.f32.mrb[0].mxu0
        %v1928 = vadd.f32 %v1767, %v1927
        %v1929 = vpop.f32.mrb[0].mxu0
        %1930 = vmatprep.mubr.bf16.mxu0 %v578
        %1931 = vmatmul.mubr.bf16.gmra.mrb[0].mxu0 %v365
        %v1932 = vpop.f32.mrb[0].mxu0
        %v1933 = vadd.f32 %v1772, %v1932
        %v1934 = vpop.f32.mrb[0].mxu0
        %v1935 = vpop.f32.mrb[0].mxu0
        %v1936 = vadd.f32 %v1775, %v1935
        %v1937 = vpop.f32.mrb[0].mxu0
        %1938 = vmatprep.mubr.bf16.mxu0 %v590
        %1939 = vmatmul.mubr.bf16.gmra.mrb[0].mxu0 %v366
        %v1940 = vpop.f32.mrb[0].mxu0
        %v1941 = vadd.f32 %v1780, %v1940
        %v1942 = vpop.f32.mrb[0].mxu0
        %v1943 = vpop.f32.mrb[0].mxu0
        %v1944 = vadd.f32 %v1783, %v1943
        %v1945 = vpop.f32.mrb[0].mxu0
        %1946 = vmatprep.mubr.bf16.mxu0 %v602
        %1947 = vmatmul.mubr.bf16.gmra.mrb[0].mxu0 %v367
        %v1948 = vpop.f32.mrb[0].mxu0
        %v1949 = vadd.f32 %v1788, %v1948
        %v1950 = vpop.f32.mrb[0].mxu0
        %v1951 = vpop.f32.mrb[0].mxu0
        %v1952 = vadd.f32 %v1791, %v1951
        %v1953 = vpop.f32.mrb[0].mxu0
        %1954 = vmatprep.mubr.bf16.mxu0 %v614
        %1955 = vmatmul.mubr.bf16.gmra.mrb[0].mxu0 %v368
        %v1956 = vpop.f32.mrb[0].mxu0
        %v1957 = vadd.f32 %v1796, %v1956
        %v1958 = vpop.f32.mrb[0].mxu0
        %v1959 = vpop.f32.mrb[0].mxu0
        %v1960 = vadd.f32 %v1799, %v1959
        %v1961 = vpop.f32.mrb[0].mxu0
        %1962 = vmatprep.mubr.bf16.mxu0 %v626
        %1963 = vmatmul.mubr.bf16.gmra.mrb[0].mxu0 %v369
        %v1964 = vpop.f32.mrb[0].mxu0
        %v1965 = vadd.f32 %v1804, %v1964
        %v1966 = vpop.f32.mrb[0].mxu0
        %v1967 = vpop.f32.mrb[0].mxu0
        %v1968 = vadd.f32 %v1807, %v1967
        %v1969 = vpop.f32.mrb[0].mxu0
        %1970 = vmatprep.mubr.bf16.mxu0 %v728
        %1971 = vmatmul.mubr.bf16.gmra.mrb[0].mxu0 %v712
        %v1972 = vpop.f32.mrb[0].mxu0
        %v1973 = vadd.f32 %v1812, %v1972
        %v1974 = vpop.f32.mrb[0].mxu0
        %v1975 = vpop.f32.mrb[0].mxu0
        %v1976 = vadd.f32 %v1815, %v1975
        %v1977 = vpop.f32.mrb[0].mxu0
        %1978 = vmatprep.mubr.bf16.mxu0 %v754
        %1979 = vmatmul.mubr.bf16.gmra.mrb[0].mxu0 %v738
        %v1980 = vpop.f32.mrb[0].mxu0
        %v1981 = vadd.f32 %v1820, %v1980
        %v1982 = vpop.f32.mrb[0].mxu0
        %v1983 = vpop.f32.mrb[0].mxu0
        %v1984 = vadd.f32 %v1823, %v1983
        %v1985 = vpop.f32.mrb[0].mxu0
        %1986 = vdwg.mxu0
        %1987 = vmatprep.subr.bf16.mxu0 0
        %1988 = vmatpush1.bf16.msra.mxu0 %v1263
        %1989 = vmatprep.subr.bf16.mxu0 0
        %1990 = vmatpush1.bf16.msra.mxu0 %v1264
        %1991 = vmatprep.subr.bf16.mxu0 0
        %1992 = vmatpush1.bf16.msra.mxu0 %v1265
        %1993 = vmatprep.subr.bf16.mxu0 0
        %1994 = vmatpush1.bf16.msra.mxu0 %v1266
        %1995 = vmatprep.subr.bf16.mxu0 0
        %1996 = vmatpush1.bf16.msra.mxu0 %v1267
        %1997 = vmatprep.subr.bf16.mxu0 0
        %1998 = vmatpush1.bf16.msra.mxu0 %v1268
        %1999 = vmatprep.subr.bf16.mxu0 0
        %2000 = vmatpush1.bf16.msra.mxu0 %v1269
        %2001 = vmatprep.subr.bf16.mxu0 0
        %2002 = vmatpush1.bf16.msra.mxu0 %v1270
        %2003 = vmatprep.subr.bf16.mxu0 0
        %2004 = vmatpush1.bf16.msra.mxu0 0
        %2005 = vmatprep.subr.bf16.mxu0 0
        %2006 = vmatpush1.bf16.msra.mxu0 0
        %2007 = vmatprep.subr.bf16.mxu0 0
        %2008 = vmatpush1.bf16.msra.mxu0 0
        %2009 = vmatprep.subr.bf16.mxu0 0
        %2010 = vmatpush1.bf16.msra.mxu0 0
        %2011 = vmatprep.subr.bf16.mxu0 0
        %2012 = vmatpush1.bf16.msra.mxu0 0
        %2013 = vmatprep.subr.bf16.mxu0 0
        %2014 = vmatpush1.bf16.msra.mxu0 0
        %2015 = vmatprep.subr.bf16.mxu0 0
        %2016 = vmatpush1.bf16.msra.mxu0 0
        %2017 = vmatprep.subr.bf16.mxu0 0
        %2018 = vmatpush1.bf16.msra.mxu0 0
        %2019 = vmatprep.mubr.bf16.mxu0 0
        %2020 = vmatmul.mubr.bf16.gmra.mrb[0].mxu0 %v652
        %v2021 = vpop.f32.mrb[0].mxu0
        %v2022 = vadd.f32 %v1861, %v2021
        %v2023 = vpop.f32.mrb[0].mxu0
        %v2024 = vpop.f32.mrb[0].mxu0
        %v2025 = vadd.f32 %v1864, %v2024
        %v2026 = vpop.f32.mrb[0].mxu0
        %2027 = vmatprep.mubr.bf16.mxu0 0
        %2028 = vmatmul.mubr.bf16.gmra.mrb[0].mxu0 %v655
        %v2029 = vpop.f32.mrb[0].mxu0
        %v2030 = vadd.f32 %v1869, %v2029
        %v2031 = vpop.f32.mrb[0].mxu0
        %v2032 = vpop.f32.mrb[0].mxu0
        %v2033 = vadd.f32 %v1872, %v2032
        %v2034 = vpop.f32.mrb[0].mxu0
        %2035 = vmatprep.mubr.bf16.mxu0 0
        %2036 = vmatmul.mubr.bf16.gmra.mrb[0].mxu0 %v658
        %v2037 = vpop.f32.mrb[0].mxu0
        %v2038 = vadd.f32 %v1877, %v2037
        %v2039 = vpop.f32.mrb[0].mxu0
        %v2040 = vpop.f32.mrb[0].mxu0
        %v2041 = vadd.f32 %v1880, %v2040
        %v2042 = vpop.f32.mrb[0].mxu0
        %2043 = vmatprep.mubr.bf16.mxu0 0
        %2044 = vmatmul.mubr.bf16.gmra.mrb[0].mxu0 %v661
        %v2045 = vpop.f32.mrb[0].mxu0
        %v2046 = vadd.f32 %v1885, %v2045
        %v2047 = vpop.f32.mrb[0].mxu0
        %v2048 = vpop.f32.mrb[0].mxu0
        %v2049 = vadd.f32 %v1888, %v2048
        %v2050 = vpop.f32.mrb[0].mxu0
        %2051 = vmatprep.mubr.bf16.mxu0 0
        %2052 = vmatmul.mubr.bf16.gmra.mrb[0].mxu0 %v664
        %v2053 = vpop.f32.mrb[0].mxu0
        %v2054 = vadd.f32 %v1893, %v2053
        %v2055 = vpop.f32.mrb[0].mxu0
        %v2056 = vpop.f32.mrb[0].mxu0
        %v2057 = vadd.f32 %v1896, %v2056
        %v2058 = vpop.f32.mrb[0].mxu0
        %2059 = vmatprep.mubr.bf16.mxu0 0
        %2060 = vmatmul.mubr.bf16.gmra.mrb[0].mxu0 %v667
        %v2061 = vpop.f32.mrb[0].mxu0
        %v2062 = vadd.f32 %v1901, %v2061
        %v2063 = vpop.f32.mrb[0].mxu0
        %v2064 = vpop.f32.mrb[0].mxu0
        %v2065 = vadd.f32 %v1904, %v2064
        %v2066 = vpop.f32.mrb[0].mxu0
        %2067 = vmatprep.mubr.bf16.mxu0 0
        %2068 = vmatmul.mubr.bf16.gmra.mrb[0].mxu0 %v670
        %v2069 = vpop.f32.mrb[0].mxu0
        %v2070 = vadd.f32 %v1909, %v2069
        %v2071 = vpop.f32.mrb[0].mxu0
        %v2072 = vpop.f32.mrb[0].mxu0
        %v2073 = vadd.f32 %v1912, %v2072
        %v2074 = vpop.f32.mrb[0].mxu0
        %2075 = vmatprep.mubr.bf16.mxu0 0
        %2076 = vmatmul.mubr.bf16.gmra.mrb[0].mxu0 %v673
        %v2077 = vpop.f32.mrb[0].mxu0
        %v2078 = vadd.f32 %v1917, %v2077
        %v2079 = vpop.f32.mrb[0].mxu0
        %v2080 = vpop.f32.mrb[0].mxu0
        %v2081 = vadd.f32 %v1920, %v2080
        %v2082 = vpop.f32.mrb[0].mxu0
        %2083 = vmatprep.mubr.bf16.mxu0 0
        %2084 = vmatmul.mubr.bf16.gmra.mrb[0].mxu0 %v676
        %v2085 = vpop.f32.mrb[0].mxu0
        %v2086 = vadd.f32 %v1925, %v2085
        %v2087 = vpop.f32.mrb[0].mxu0
        %v2088 = vpop.f32.mrb[0].mxu0
        %v2089 = vadd.f32 %v1928, %v2088
        %v2090 = vpop.f32.mrb[0].mxu0
        %2091 = vmatprep.mubr.bf16.mxu0 0
        %2092 = vmatmul.mubr.bf16.gmra.mrb[0].mxu0 %v679
        %v2093 = vpop.f32.mrb[0].mxu0
        %v2094 = vadd.f32 %v1933, %v2093
        %v2095 = vpop.f32.mrb[0].mxu0
        %v2096 = vpop.f32.mrb[0].mxu0
        %v2097 = vadd.f32 %v1936, %v2096
        %v2098 = vpop.f32.mrb[0].mxu0
        %2099 = vmatprep.mubr.bf16.mxu0 0
        %2100 = vmatmul.mubr.bf16.gmra.mrb[0].mxu0 %v682
        %v2101 = vpop.f32.mrb[0].mxu0
        %v2102 = vadd.f32 %v1941, %v2101
        %v2103 = vpop.f32.mrb[0].mxu0
        %v2104 = vpop.f32.mrb[0].mxu0
        %v2105 = vadd.f32 %v1944, %v2104
        %v2106 = vpop.f32.mrb[0].mxu0
        %2107 = vmatprep.mubr.bf16.mxu0 0
        %2108 = vmatmul.mubr.bf16.gmra.mrb[0].mxu0 %v685
        %v2109 = vpop.f32.mrb[0].mxu0
        %v2110 = vadd.f32 %v1949, %v2109
        %v2111 = vpop.f32.mrb[0].mxu0
        %v2112 = vpop.f32.mrb[0].mxu0
        %v2113 = vadd.f32 %v1952, %v2112
        %v2114 = vpop.f32.mrb[0].mxu0
        %2115 = vmatprep.mubr.bf16.mxu0 0
        %2116 = vmatmul.mubr.bf16.gmra.mrb[0].mxu0 %v688
        %v2117 = vpop.f32.mrb[0].mxu0
        %v2118 = vadd.f32 %v1957, %v2117
        %v2119 = vpop.f32.mrb[0].mxu0
        %v2120 = vpop.f32.mrb[0].mxu0
        %v2121 = vadd.f32 %v1960, %v2120
        %v2122 = vpop.f32.mrb[0].mxu0
        %2123 = vmatprep.mubr.bf16.mxu0 0
        %2124 = vmatmul.mubr.bf16.gmra.mrb[0].mxu0 %v691
        %v2125 = vpop.f32.mrb[0].mxu0
        %v2126 = vadd.f32 %v1965, %v2125
        %v2127 = vpop.f32.mrb[0].mxu0
        %v2128 = vpop.f32.mrb[0].mxu0
        %v2129 = vadd.f32 %v1968, %v2128
        %v2130 = vpop.f32.mrb[0].mxu0
        %2131 = vmatprep.mubr.bf16.mxu0 0
        %2132 = vmatmul.mubr.bf16.gmra.mrb[0].mxu0 %v732
        %v2133 = vpop.f32.mrb[0].mxu0
        %v2134 = vadd.f32 %v1973, %v2133
        %v2135 = vpop.f32.mrb[0].mxu0
        %v2136 = vpop.f32.mrb[0].mxu0
        %v2137 = vadd.f32 %v1976, %v2136
        %v2138 = vpop.f32.mrb[0].mxu0
        %2139 = vmatprep.mubr.bf16.mxu0 0
        %2140 = vmatmul.mubr.bf16.gmra.mrb[0].mxu0 %v758
        %v2141 = vpop.f32.mrb[0].mxu0
        %v2142 = vadd.f32 %v1981, %v2141
        %v2143 = vpop.f32.mrb[0].mxu0
        %v2144 = vpop.f32.mrb[0].mxu0
        %v2145 = vadd.f32 %v1984, %v2144
        %v2146 = vpop.f32.mrb[0].mxu0
        %2147 = vdwg.mxu0
        %v2148 = vmax.f32 %v2022, 0.0
        %v2149 = vmax.f32 %v2025, 0.0
        %v2150 = vmax.f32 %v2030, 0.0
        %v2151 = vmax.f32 %v2033, 0.0
        %v2152 = vmax.f32 %v2038, 0.0
        %v2153 = vmax.f32 %v2041, 0.0
        %v2154 = vmax.f32 %v2046, 0.0
        %v2155 = vmax.f32 %v2049, 0.0
        %v2156 = vmax.f32 %v2054, 0.0
        %v2157 = vmax.f32 %v2057, 0.0
        %v2158 = vmax.f32 %v2062, 0.0
        %v2159 = vmax.f32 %v2065, 0.0
        %v2160 = vmax.f32 %v2070, 0.0
        %v2161 = vmax.f32 %v2073, 0.0
        %v2162 = vmax.f32 %v2078, 0.0
        %v2163 = vmax.f32 %v2081, 0.0
        %v2164 = vmax.f32 %v2086, 0.0
        %v2165 = vmax.f32 %v2089, 0.0
        %v2166 = vmax.f32 %v2094, 0.0
        %v2167 = vmax.f32 %v2097, 0.0
        %v2168 = vmax.f32 %v2102, 0.0
        %v2169 = vmax.f32 %v2105, 0.0
        %v2170 = vmax.f32 %v2110, 0.0
        %v2171 = vmax.f32 %v2113, 0.0
        %v2172 = vmax.f32 %v2118, 0.0
        %v2173 = vmax.f32 %v2121, 0.0
        %v2174 = vmax.f32 %v2126, 0.0
        %v2175 = vmax.f32 %v2129, 0.0
        %v2176 = vmax.f32 %v2134, 0.0
        %v2177 = vmax.f32 %v2137, 0.0
        %v2178 = vmax.f32 %v2142, 0.0
        %v2179 = vmax.f32 %v2145, 0.0
        %v2180 = vpack.c.bf16 %v2149, %v2148
        %v2181 = vpack.c.bf16 %v2151, %v2150
        %v2182 = vpack.c.bf16 %v2153, %v2152
        %v2183 = vpack.c.bf16 %v2155, %v2154
        %v2184 = vpack.c.bf16 %v2157, %v2156
        %v2185 = vpack.c.bf16 %v2159, %v2158
        %v2186 = vpack.c.bf16 %v2161, %v2160
        %v2187 = vpack.c.bf16 %v2163, %v2162
        %v2188 = vpack.c.bf16 %v2165, %v2164
        %v2189 = vpack.c.bf16 %v2167, %v2166
        %v2190 = vpack.c.bf16 %v2169, %v2168
        %v2191 = vpack.c.bf16 %v2171, %v2170
        %v2192 = vpack.c.bf16 %v2173, %v2172
        %v2193 = vpack.c.bf16 %v2175, %v2174
        %v2194 = vpack.c.bf16 %v2177, %v2176
        %v2195 = vpack.c.bf16 %v2179, %v2178
        %v2212 = vunpack.c.l.b16 %v2180
        %v2213 = vunpack.c.h.b16 %v2180
        %v2214 = vunpack.c.l.b16 %v2181
        %v2215 = vunpack.c.h.b16 %v2181
        %v2216 = vunpack.c.l.b16 %v2182
        %v2217 = vunpack.c.h.b16 %v2182
        %v2218 = vunpack.c.l.b16 %v2183
        %v2219 = vunpack.c.h.b16 %v2183
        %v2220 = vunpack.c.l.b16 %v2184
        %v2221 = vunpack.c.h.b16 %v2184
        %v2222 = vunpack.c.l.b16 %v2185
        %v2223 = vunpack.c.h.b16 %v2185
        %v2224 = vunpack.c.l.b16 %v2186
        %v2225 = vunpack.c.h.b16 %v2186
        %v2226 = vunpack.c.l.b16 %v2187
        %v2227 = vunpack.c.h.b16 %v2187
        %v2228 = vunpack.c.l.b16 %v2188
        %v2229 = vunpack.c.h.b16 %v2188
        %v2230 = vunpack.c.l.b16 %v2189
        %v2231 = vunpack.c.h.b16 %v2189
        %v2232 = vunpack.c.l.b16 %v2190
        %v2233 = vunpack.c.h.b16 %v2190
        %v2234 = vunpack.c.l.b16 %v2191
        %v2235 = vunpack.c.h.b16 %v2191
        %v2236 = vunpack.c.l.b16 %v2192
        %v2237 = vunpack.c.h.b16 %v2192
        %v2238 = vunpack.c.l.b16 %v2193
        %v2239 = vunpack.c.h.b16 %v2193
        %v2240 = vunpack.c.l.b16 %v2194
        %v2241 = vunpack.c.h.b16 %v2194
        %v2242 = vunpack.c.l.b16 %v2195
        %v2243 = vunpack.c.h.b16 %v2195
        %v2244 = vpack.c.b16 %v2212, %v2212
        %v2245 = vpack.c.b16 %v2213, %v2213
        %v2246 = vpack.c.b16 %v2214, %v2214
        %v2247 = vpack.c.b16 %v2215, %v2215
        %v2248 = vpack.c.b16 %v2216, %v2216
        %v2249 = vpack.c.b16 %v2217, %v2217
        %v2250 = vpack.c.b16 %v2218, %v2218
        %v2251 = vpack.c.b16 %v2219, %v2219
        %v2252 = vpack.c.b16 %v2220, %v2220
        %v2253 = vpack.c.b16 %v2221, %v2221
        %v2254 = vpack.c.b16 %v2222, %v2222
        %v2255 = vpack.c.b16 %v2223, %v2223
        %v2256 = vpack.c.b16 %v2224, %v2224
        %v2257 = vpack.c.b16 %v2225, %v2225
        %v2258 = vpack.c.b16 %v2226, %v2226
        %v2259 = vpack.c.b16 %v2227, %v2227
        %v2260 = vpack.c.b16 %v2228, %v2228
        %v2261 = vpack.c.b16 %v2229, %v2229
        %v2262 = vpack.c.b16 %v2230, %v2230
        %v2263 = vpack.c.b16 %v2231, %v2231
        %v2264 = vpack.c.b16 %v2232, %v2232
        %v2265 = vpack.c.b16 %v2233, %v2233
        %v2266 = vpack.c.b16 %v2234, %v2234
        %v2267 = vpack.c.b16 %v2235, %v2235
        %v2268 = vpack.c.b16 %v2236, %v2236
        %v2269 = vpack.c.b16 %v2237, %v2237
        %v2270 = vpack.c.b16 %v2238, %v2238
        %v2271 = vpack.c.b16 %v2239, %v2239
        %v2272 = vpack.c.b16 %v2240, %v2240
        %v2273 = vpack.c.b16 %v2241, %v2241
        %v2274 = vpack.c.b16 %v2242, %v2242
        %v2275 = vpack.c.b16 %v2243, %v2243
        %2308 = vst [vmem:[%s229] sm:$0xf] %v2244
        %2309 = vst [vmem:[%s229 + $0x4] sm:$0xf] %v2245
        %2310 = vst [vmem:[%s229 + $0x8] sm:$0xf] %v2246
        %2311 = vst [vmem:[%s229 + $0xc] sm:$0xf] %v2247
        %2312 = vst [vmem:[%s229 + $0x10] sm:$0xf] %v2248
        %2313 = vst [vmem:[%s229 + $0x14] sm:$0xf] %v2249
        %2314 = vst [vmem:[%s229 + $0x18] sm:$0xf] %v2250
        %2315 = vst [vmem:[%s229 + $0x1c] sm:$0xf] %v2251
        %2316 = vst [vmem:[%s229 + $0x20] sm:$0xf] %v2252
        %2317 = vst [vmem:[%s229 + $0x24] sm:$0xf] %v2253
        %2318 = vst [vmem:[%s229 + $0x28] sm:$0xf] %v2254
        %2319 = vst [vmem:[%s229 + $0x2c] sm:$0xf] %v2255
        %2320 = vst [vmem:[%s229 + $0x30] sm:$0xf] %v2256
        %2321 = vst [vmem:[%s229 + $0x34] sm:$0xf] %v2257
        %2322 = vst [vmem:[%s229 + $0x38] sm:$0xf] %v2258
        %2323 = vst [vmem:[%s229 + $0x3c] sm:$0xf] %v2259
        %2324 = vst [vmem:[%s229 + $0x40] sm:$0xf] %v2260
        %2325 = vst [vmem:[%s229 + $0x44] sm:$0xf] %v2261
        %2326 = vst [vmem:[%s229 + $0x48] sm:$0xf] %v2262
        %2327 = vst [vmem:[%s229 + $0x4c] sm:$0xf] %v2263
        %2328 = vst [vmem:[%s229 + $0x50] sm:$0xf] %v2264
        %2329 = vst [vmem:[%s229 + $0x54] sm:$0xf] %v2265
        %2330 = vst [vmem:[%s229 + $0x58] sm:$0xf] %v2266
        %2331 = vst [vmem:[%s229 + $0x5c] sm:$0xf] %v2267
        %2332 = vst [vmem:[%s229 + $0x60] sm:$0xf] %v2268
        %2333 = vst [vmem:[%s229 + $0x64] sm:$0xf] %v2269
        %2334 = vst [vmem:[%s229 + $0x68] sm:$0xf] %v2270
        %2335 = vst [vmem:[%s229 + $0x6c] sm:$0xf] %v2271
        %2336 = vst [vmem:[%s229 + $0x70] sm:$0xf] %v2272
        %2337 = vst [vmem:[%s229 + $0x74] sm:$0xf] %v2273
        %2338 = vst [vmem:[%s229 + $0x78] sm:$0xf] %v2274
        %2339 = vst [vmem:[%s229 + $0x7c] sm:$0xf] %v2275
        %s2340 = sand.u32 %s111, 1
        %s2341 = scalar_lea.sflag [#allocation4], %s2340
        %s2342 = sand.u32 %s111, 1
        %s2343 = smul.addr %s2342, 128
        %s2344 = scalar_lea.vmem [#allocation8], %s2343
        // Predicated region
        $region45: #{inceptionB_forward.15} parent=31 // pred_check
          %p2345 = pneg %p121
        $region46: #{inceptionB_forward.15} parent=31 // pred_check_branch
          %2347 = sbr.rel (%p2345) target = $region48
        $region47: #{inceptionB_forward.15} parent=31 // pred_region
          %s2348 = smul.u32 16, %s26
          %s2350 = ssub.s32 2048, 2048
          %2351 = vsyncadd %s2341, %s2350
          %s2352 = smul.addr %s2348, 2
          %s2353 = smul.addr %s25, 32
          %s2354 = sadd.s32 %s2352, %s2353
          %s2355 = smul.addr %s2354, 64
          %s2356 = scalar_lea.hbm %s3, %s2355
          %s2357 = sshll.u32 %s2344, 4
          %s2358 = int_to_ptr.vmem [resolvable:$true] %s2357
          %2363 = dma.vmem_to_hbm [thread:$0]  %s2358, 2048, %s2356, %s2341, 64, 64, 4
        $region48: #{inceptionB_forward.15} parent=31 // pred_fallthru
          _
      $region32: #{inceptionB_forward.15} parent=5 // pred_fallthru
        _
      %p2364 = scmp.le.s32.totalorder 2, %s16
      // Predicated region
      $region49: #{inceptionB_forward.15} parent=5 // pred_check
        %p2365 = pneg %p2364
      $region50: #{inceptionB_forward.15} parent=5 // pred_check_branch
        %2367 = sbr.rel (%p2365) target = $region52
      $region51: #{inceptionB_forward.15} parent=5 // pred_region
        %s2368 = ssub.s32 %s16, 2
        // Predicated region
        $region53: #{inceptionB_forward.15} parent=51 // pred_check
          %p2369 = pneg %p127
        $region54: #{inceptionB_forward.15} parent=51 // pred_check_branch
          %2371 = sbr.rel (%p2369) target = $region56
        $region55: #{inceptionB_forward.15} parent=51 // pred_region
          %s2372 = sand.u32 %s112, 1
          %s2373 = scalar_lea.sflag [#allocation4], %s2372
          %s2374 = sand.u32 %s112, 1
          %s2375 = smul.addr %s2374, 128
          %s2376 = scalar_lea.vmem [#allocation8], %s2375
          %2377 = dma.done %s2373, 2048
        $region56: #{inceptionB_forward.15} parent=51 // pred_fallthru
          _
      $region52: #{inceptionB_forward.15} parent=5 // pred_fallthru
        _
    $region6: #{inceptionB_forward.15} parent=1 // loop_footer
      %s20 = sadd.s32 1, %s16
    $region7: #{inceptionB_forward.15} parent=1 // loop_footer_branch
      %15 = sbr.rel target = $region3
    $region8: #{inceptionB_forward.15} parent=1 // loop_exit
      _
    %2378 = vsyncpa [#allocation3], 1
    %s2379 = scalar_lea.sflag [#allocation3], 1
    %2380 = vsyncpa %s2379, 1
    %2381 = vsyncpa [#allocation6], 1
    %2382 = vsyncpa [#allocation4], 1
    %s2383 = scalar_lea.sflag [#allocation4], 1
    %2384 = vsyncpa %s2383, 1

// kernel: inceptionB_forward.9
$region0: #{inceptionB_forward.9}
  #allocation0 [shape = 'u32[]', space=smem, size = 0x4, offset = 0x4, fixed_abs, tag = 'smem constant byte address 0x4 - core index']
  #allocation1 [shape = 'u32[144,128]{1,0:T(1,128)}', space=vmem, size = 0x12000, scoped, tag = 'internal scratch']
  %s0 = inlined_call_operand.hbm [shape: bf16[2,16,22,128], index: 0, kind: input, shape index: {}]
  %s1 = inlined_call_operand.hbm [shape: bf16[896,128], index: 1, kind: input, shape index: {}]
  %s2 = inlined_call_operand.hbm [shape: f32[1,128], index: 2, kind: input, shape index: {}]
  %s3 = inlined_call_operand.hbm [shape: bf16[2,16,16,128], index: 3, kind: output, shape index: {}]
  %s4 = sld [smem:[#allocation0]]
  $region57: #{inceptionB_forward.9} parent=0
    _
  %s6 = ssub.s32 1, %s4
  %s7 = scalar_select 0, %s6, %s4
  $region1: #{inceptionB_forward.9} parent=0
    #allocation2 [shape = 'u8[196608]{0}', space=vmem, size = 0x30000, scoped, tag = 'input window, operand 0']
    #allocation3 [shape = 's32[2]{0}', space=sflag, size = 0x8, scoped, tag = 'scoped memory for inceptionB_forward.9']
    #allocation4 [shape = 's32[2]{0}', space=sflag, size = 0x8, scoped, tag = 'scoped memory for inceptionB_forward.9']
    #allocation5 [shape = 'u8[229376]{0}', space=vmem, size = 0x38000, scoped, tag = 'input window, operand 1, single buffered']
    #allocation6 [shape = 's32[1]{0}', space=sflag, size = 0x4, scoped, tag = 'scoped memory for inceptionB_forward.9']
    #allocation7 [shape = 'u8[512]{0}', space=vmem, size = 0x400, scoped, tag = 'input window, operand 2, single buffered']
    #allocation8 [shape = 'u8[131072]{0}', space=vmem, size = 0x20000, scoped, tag = 'output window, operand 0']
    %8 = vsyncpa [#allocation3], 0
    %s9 = scalar_lea.sflag [#allocation3], 1
    %10 = vsyncpa %s9, 0
    %11 = vsyncpa [#allocation6], 0
    %12 = vsyncpa [#allocation4], 0
    %s13 = scalar_lea.sflag [#allocation4], 1
    %14 = vsyncpa %s13, 0
    loop: start=0, step=1, limit=4
    $region2: #{inceptionB_forward.9} parent=1 // loop_pre_header
      _
    $region3: #{inceptionB_forward.9} parent=1 // loop_header
      %s16 = sphi 0, %s20
      %p17 = scmp.ge.s32.totalorder %s16, 4
      %s23 = sphi 0, %s35
      %s24 = sphi 0, %s31
      %s25 = sphi 0, %s23
      %s26 = sphi 0, %s24
      %s27 = sphi 0, %s25
      %s28 = sphi 0, %s26
      %s38 = sphi 0, %s40
      %s41 = sphi 0, %s38
      %s42 = sphi 0, %s41
      %s58 = sphi 0, %s42
      %s62 = sphi 0, %s62
      %s64 = sphi 0, %s62
      %s65 = sphi 0, %s64
      %s79 = sphi 0, %s65
      %s83 = sphi 0, %s83
      %s85 = sphi 0, %s83
      %s86 = sphi 0, %s85
      %s100 = sphi 0, %s86
      %s108 = sphi 0, %s110
      %s111 = sphi 0, %s108
      %s112 = sphi 0, %s111
      %s128 = sphi 0, %s112
    $region4: #{inceptionB_forward.9} parent=1 // loop_header_branch
      %19 = sbr.rel (%p17) target = $region8
    $region5: #{inceptionB_forward.9} parent=1 // loop_body
      %s21 = ssub.s32 %s16, 1
      %s22 = ssub.s32 %s16, 2
      %s29 = sadd.s32 1, %s24
      %p30 = scmp.ge.s32.totalorder %s29, 1
      %s31 = scalar_select %p30, 0, %s29
      %s32 = sadd.s32 1, %s23
      %s33 = scalar_select %p30, %s32, %s23
      %p34 = scmp.ge.s32.totalorder %s33, 2
      %s35 = scalar_select %p34, 0, %s33
      %s36 = ssub.s32 %s23, %s35
      %p37 = scmp.eq.s32.totalorder %s36, 0
      %s39 = sadd.s32 %s38, 1
      %s40 = scalar_select %p37, %s38, %s39
      %p43 = pneg %p37
      %p44 = scmp.eq.s32.totalorder %s16, 1
      %p45 = por %p43, %p44
      %p46 = scmp.ne.s32.totalorder %s38, %s41
      %p47 = scmp.eq.s32.totalorder %s16, 0
      %p48 = por %p46, %p47
      %p49 = scmp.ne.s32.totalorder %s38, %s41
      %p50 = scmp.eq.s32.totalorder %s21, 1
      %p51 = por %p49, %p50
      %p52 = scmp.ne.s32.totalorder %s41, %s42
      %p53 = scmp.eq.s32.totalorder %s21, 0
      %p54 = por %p52, %p53
      %p55 = scmp.ne.s32.totalorder %s41, %s42
      %p56 = scmp.eq.s32.totalorder %s22, 1
      %p57 = por %p55, %p56
      %p59 = scmp.ne.s32.totalorder %s42, %s58
      %p60 = scmp.eq.s32.totalorder %s22, 0
      %p61 = por %p59, %p60
      %s63 = sadd.s32 %s62, 1
      %p66 = scmp.eq.s32.totalorder %s16, 1
      %p67 = scmp.ne.s32.totalorder %s62, %s64
      %p68 = scmp.eq.s32.totalorder %s16, 0
      %p69 = por %p67, %p68
      %p70 = scmp.ne.s32.totalorder %s62, %s64
      %p71 = scmp.eq.s32.totalorder %s21, 1
      %p72 = por %p70, %p71
      %p73 = scmp.ne.s32.totalorder %s64, %s65
      %p74 = scmp.eq.s32.totalorder %s21, 0
      %p75 = por %p73, %p74
      %p76 = scmp.ne.s32.totalorder %s64, %s65
      %p77 = scmp.eq.s32.totalorder %s22, 1
      %p78 = por %p76, %p77
      %p80 = scmp.ne.s32.totalorder %s65, %s79
      %p81 = scmp.eq.s32.totalorder %s22, 0
      %p82 = por %p80, %p81
      %s84 = sadd.s32 %s83, 1
      %p87 = scmp.eq.s32.totalorder %s16, 1
      %p88 = scmp.ne.s32.totalorder %s83, %s85
      %p89 = scmp.eq.s32.totalorder %s16, 0
      %p90 = por %p88, %p89
      %p91 = scmp.ne.s32.totalorder %s83, %s85
      %p92 = scmp.eq.s32.totalorder %s21, 1
      %p93 = por %p91, %p92
      %p94 = scmp.ne.s32.totalorder %s85, %s86
      %p95 = scmp.eq.s32.totalorder %s21, 0
      %p96 = por %p94, %p95
      %p97 = scmp.ne.s32.totalorder %s85, %s86
      %p98 = scmp.eq.s32.totalorder %s22, 1
      %p99 = por %p97, %p98
      %p101 = scmp.ne.s32.totalorder %s86, %s100
      %p102 = scmp.eq.s32.totalorder %s22, 0
      %p103 = por %p101, %p102
      %s104 = ssub.s32 %s23, %s35
      %s105 = ssub.s32 %s24, %s31
      %s106 = sor.u32 %s104, %s105
      %p107 = scmp.eq.s32.totalorder %s106, 0
      %s109 = sadd.s32 %s108, 1
      %s110 = scalar_select %p107, %s108, %s109
      %p113 = pneg %p107
      %p114 = scmp.eq.s32.totalorder %s16, 1
      %p115 = por %p113, %p114
      %p116 = scmp.ne.s32.totalorder %s108, %s111
      %p117 = scmp.eq.s32.totalorder %s16, 0
      %p118 = por %p116, %p117
      %p119 = scmp.ne.s32.totalorder %s108, %s111
      %p120 = scmp.eq.s32.totalorder %s21, 1
      %p121 = por %p119, %p120
      %p122 = scmp.ne.s32.totalorder %s111, %s112
      %p123 = scmp.eq.s32.totalorder %s21, 0
      %p124 = por %p122, %p123
      %p125 = scmp.ne.s32.totalorder %s111, %s112
      %p126 = scmp.eq.s32.totalorder %s22, 1
      %p127 = por %p125, %p126
      %p129 = scmp.ne.s32.totalorder %s112, %s128
      %p130 = scmp.eq.s32.totalorder %s22, 0
      %p131 = por %p129, %p130
      %p132 = scmp.le.s32.totalorder 1, %s16
      %p133 = scmp.lt.s32.totalorder %s16, 3
      %p134 = pnand %p132, %p133
      %p135 = pneg %p134
      // Predicated region
      $region9: #{inceptionB_forward.9} parent=5 // pred_check
        _
      $region10: #{inceptionB_forward.9} parent=5 // pred_check_branch
        %137 = sbr.rel (%p134) target = $region12
      $region11: #{inceptionB_forward.9} parent=5 // pred_region
        %s138 = ssub.s32 %s16, 1
        // Predicated region
        $region13: #{inceptionB_forward.9} parent=11 // pred_check
          %p139 = pneg %p75
        $region14: #{inceptionB_forward.9} parent=11 // pred_check_branch
          %141 = sbr.rel (%p139) target = $region16
        $region15: #{inceptionB_forward.9} parent=11 // pred_region
          %s143 = ssub.s32 7168, 7168
          %144 = vsyncadd [#allocation6], %s143
          %s145 = sshll.u32 [#allocation5], 4
          %s146 = int_to_ptr.vmem [resolvable:$true] %s145
          %151 = dma.hbm_to_vmem [thread:$0]  %s1, 7168, %s146, [#allocation6], 64, 64, 4
        $region16: #{inceptionB_forward.9} parent=11 // pred_fallthru
          _
        // Predicated region
        $region17: #{inceptionB_forward.9} parent=11 // pred_check
          %p152 = pneg %p96
        $region18: #{inceptionB_forward.9} parent=11 // pred_check_branch
          %154 = sbr.rel (%p152) target = $region20
        $region19: #{inceptionB_forward.9} parent=11 // pred_region
          %s156 = ssub.s32 16, 16
          %157 = vsyncadd [#allocation6], %s156
          %s159 = sshll.u32 [#allocation7], 4
          %s160 = int_to_ptr.vmem [resolvable:$true] %s159
          %162 = dma.hbm_to_vmem [thread:$0]  %s2, 16, %s160, [#allocation6]
        $region20: #{inceptionB_forward.9} parent=11 // pred_fallthru
          _
      $region12: #{inceptionB_forward.9} parent=5 // pred_fallthru
        _
      %p163 = scmp.lt.s32.totalorder %s16, 2
      // Predicated region
      $region21: #{inceptionB_forward.9} parent=5 // pred_check
        %p164 = pneg %p163
      $region22: #{inceptionB_forward.9} parent=5 // pred_check_branch
        %166 = sbr.rel (%p164) target = $region24
      $region23: #{inceptionB_forward.9} parent=5 // pred_region
        // Predicated region
        $region25: #{inceptionB_forward.9} parent=23 // pred_check
          %p167 = pneg %p48
        $region26: #{inceptionB_forward.9} parent=23 // pred_check_branch
          %169 = sbr.rel (%p167) target = $region28
        $region27: #{inceptionB_forward.9} parent=23 // pred_region
          %s170 = sand.u32 %s38, 1
          %s171 = scalar_lea.sflag [#allocation3], %s170
          %s172 = sand.u32 %s38, 1
          %s173 = smul.addr %s172, 192
          %s174 = scalar_lea.vmem [#allocation2], %s173
          %s176 = ssub.s32 3072, 3072
          %177 = vsyncadd %s171, %s176
          %s178 = smul.addr %s23, 48
          %s179 = smul.addr %s178, 64
          %s180 = scalar_lea.hbm %s0, %s179
          %s181 = sshll.u32 %s174, 4
          %s182 = int_to_ptr.vmem [resolvable:$true] %s181
          %187 = dma.hbm_to_vmem [thread:$0]  %s180, 3072, %s182, %s171, 64, 64, 4
        $region28: #{inceptionB_forward.9} parent=23 // pred_fallthru
          _
      $region24: #{inceptionB_forward.9} parent=5 // pred_fallthru
        _
      %p188 = scmp.le.s32.totalorder 1, %s16
      %p189 = scmp.lt.s32.totalorder %s16, 3
      %p190 = pnand %p188, %p189
      %p191 = pneg %p190
      // Predicated region
      $region29: #{inceptionB_forward.9} parent=5 // pred_check
        _
      $region30: #{inceptionB_forward.9} parent=5 // pred_check_branch
        %193 = sbr.rel (%p190) target = $region32
      $region31: #{inceptionB_forward.9} parent=5 // pred_region
        %s194 = ssub.s32 %s16, 1
        %s195 = sand.u32 %s41, 1
        %s196 = scalar_lea.sflag [#allocation3], %s195
        %s197 = sand.u32 %s41, 1
        %s198 = smul.addr %s197, 192
        %s199 = scalar_lea.vmem [#allocation2], %s198
        // Predicated region
        $region33: #{inceptionB_forward.9} parent=31 // pred_check
          %p200 = pneg %p54
        $region34: #{inceptionB_forward.9} parent=31 // pred_check_branch
          %202 = sbr.rel (%p200) target = $region36
        $region35: #{inceptionB_forward.9} parent=31 // pred_region
          %203 = dma.done %s196, 3072
        $region36: #{inceptionB_forward.9} parent=31 // pred_fallthru
          _
        // Predicated region
        $region37: #{inceptionB_forward.9} parent=31 // pred_check
          %p204 = pneg %p75
        $region38: #{inceptionB_forward.9} parent=31 // pred_check_branch
          %206 = sbr.rel (%p204) target = $region40
        $region39: #{inceptionB_forward.9} parent=31 // pred_region
          %207 = dma.done [#allocation6], 7168
        $region40: #{inceptionB_forward.9} parent=31 // pred_fallthru
          _
        // Predicated region
        $region41: #{inceptionB_forward.9} parent=31 // pred_check
          %p208 = pneg %p96
        $region42: #{inceptionB_forward.9} parent=31 // pred_check_branch
          %210 = sbr.rel (%p208) target = $region44
        $region43: #{inceptionB_forward.9} parent=31 // pred_region
          %211 = dma.done [#allocation6], 16
        $region44: #{inceptionB_forward.9} parent=31 // pred_fallthru
          _
        %s212 = sand.u32 %s41, 1
        %s213 = scalar_lea.sflag [#allocation3], %s212
        %s214 = sand.u32 %s41, 1
        %s215 = smul.addr %s214, 192
        %s216 = scalar_lea.vmem [#allocation2], %s215
        %p217 = pneg %p54
        %p218 = pneg %p51
        %p219 = pneg %p75
        %p220 = pneg %p72
        %p221 = pneg %p96
        %p222 = pneg %p93
        %p223 = pneg %p124
        %p224 = pneg %p121
        %s225 = sand.u32 %s111, 1
        %s226 = scalar_lea.sflag [#allocation4], %s225
        %s227 = sand.u32 %s111, 1
        %s228 = smul.addr %s227, 128
        %s229 = scalar_lea.vmem [#allocation8], %s228
        %s230 = smul.u32 16, %s26
        %s232 = smul.u32 %s26, 16
        %s233 = smul.u32 %s232, 3
        %s234 = smul.addr %s233, 4
        %s235 = scalar_lea.vmem %s199, %s234 [#allocation2]
        %v236 = vld [vmem:[%s235] sm:$0xf]
        %v237 = vld [vmem:[%s235 + $0x4] sm:$0xf]
        %v238 = vld [vmem:[%s235 + $0x8] sm:$0x7]
        %v239 = vld [vmem:[%s235 + $0xc] sm:$0xf]
        %v240 = vld [vmem:[%s235 + $0x10] sm:$0xf]
        %v241 = vld [vmem:[%s235 + $0x14] sm:$0x7]
        %v242 = vld [vmem:[%s235 + $0x18] sm:$0xf]
        %v243 = vld [vmem:[%s235 + $0x1c] sm:$0xf]
        %v244 = vld [vmem:[%s235 + $0x20] sm:$0x7]
        %v245 = vld [vmem:[%s235 + $0x24] sm:$0xf]
        %v246 = vld [vmem:[%s235 + $0x28] sm:$0xf]
        %v247 = vld [vmem:[%s235 + $0x2c] sm:$0x7]
        %v248 = vld [vmem:[%s235 + $0x30] sm:$0xf]
        %v249 = vld [vmem:[%s235 + $0x34] sm:$0xf]
        %v250 = vld [vmem:[%s235 + $0x38] sm:$0x7]
        %v251 = vld [vmem:[%s235 + $0x3c] sm:$0xf]
        %v252 = vld [vmem:[%s235 + $0x40] sm:$0xf]
        %v253 = vld [vmem:[%s235 + $0x44] sm:$0x7]
        %v254 = vld [vmem:[%s235 + $0x48] sm:$0xf]
        %v255 = vld [vmem:[%s235 + $0x4c] sm:$0xf]
        %v256 = vld [vmem:[%s235 + $0x50] sm:$0x7]
        %v257 = vld [vmem:[%s235 + $0x54] sm:$0xf]
        %v258 = vld [vmem:[%s235 + $0x58] sm:$0xf]
        %v259 = vld [vmem:[%s235 + $0x5c] sm:$0x7]
        %v260 = vld [vmem:[%s235 + $0x60] sm:$0xf]
        %v261 = vld [vmem:[%s235 + $0x64] sm:$0xf]
        %v262 = vld [vmem:[%s235 + $0x68] sm:$0x7]
        %v263 = vld [vmem:[%s235 + $0x6c] sm:$0xf]
        %v264 = vld [vmem:[%s235 + $0x70] sm:$0xf]
        %v265 = vld [vmem:[%s235 + $0x74] sm:$0x7]
        %v266 = vld [vmem:[%s235 + $0x78] sm:$0xf]
        %v267 = vld [vmem:[%s235 + $0x7c] sm:$0xf]
        %v268 = vld [vmem:[%s235 + $0x80] sm:$0x7]
        %v269 = vld [vmem:[%s235 + $0x84] sm:$0xf]
        %v270 = vld [vmem:[%s235 + $0x88] sm:$0xf]
        %v271 = vld [vmem:[%s235 + $0x8c] sm:$0x7]
        %v272 = vld [vmem:[%s235 + $0x90] sm:$0xf]
        %v273 = vld [vmem:[%s235 + $0x94] sm:$0xf]
        %v274 = vld [vmem:[%s235 + $0x98] sm:$0x7]
        %v275 = vld [vmem:[%s235 + $0x9c] sm:$0xf]
        %v276 = vld [vmem:[%s235 + $0xa0] sm:$0xf]
        %v277 = vld [vmem:[%s235 + $0xa4] sm:$0x7]
        %v278 = vld [vmem:[%s235 + $0xa8] sm:$0xf]
        %v279 = vld [vmem:[%s235 + $0xac] sm:$0xf]
        %v280 = vld [vmem:[%s235 + $0xb0] sm:$0x7]
        %v281 = vld [vmem:[%s235 + $0xb4] sm:$0xf]
        %v282 = vld [vmem:[%s235 + $0xb8] sm:$0xf]
        %v283 = vld [vmem:[%s235 + $0xbc] sm:$0x7]
        %v316 = vunpack.c.l.b16 %v236
        %v317 = vunpack.c.l.b16 %v237
        %v318 = vunpack.c.l.b16 %v239
        %v319 = vunpack.c.l.b16 %v240
        %v320 = vunpack.c.l.b16 %v242
        %v321 = vunpack.c.l.b16 %v243
        %v322 = vunpack.c.l.b16 %v245
        %v323 = vunpack.c.l.b16 %v246
        %v324 = vunpack.c.l.b16 %v248
        %v325 = vunpack.c.l.b16 %v249
        %v326 = vunpack.c.l.b16 %v251
        %v327 = vunpack.c.l.b16 %v252
        %v328 = vunpack.c.l.b16 %v254
        %v329 = vunpack.c.l.b16 %v255
        %v330 = vunpack.c.l.b16 %v257
        %v331 = vunpack.c.l.b16 %v258
        %v332 = vunpack.c.l.b16 %v260
        %v333 = vunpack.c.l.b16 %v261
        %v334 = vunpack.c.l.b16 %v263
        %v335 = vunpack.c.l.b16 %v264
        %v336 = vunpack.c.l.b16 %v266
        %v337 = vunpack.c.l.b16 %v267
        %v338 = vunpack.c.l.b16 %v269
        %v339 = vunpack.c.l.b16 %v270
        %v340 = vunpack.c.l.b16 %v272
        %v341 = vunpack.c.l.b16 %v273
        %v342 = vunpack.c.l.b16 %v275
        %v343 = vunpack.c.l.b16 %v276
        %v344 = vunpack.c.l.b16 %v278
        %v345 = vunpack.c.l.b16 %v279
        %v346 = vunpack.c.l.b16 %v281
        %v347 = vunpack.c.l.b16 %v282
        %v348 = vpack.c.b16 %v317, %v316
        %v349 = vpack.c.b16 %v319, %v318
        %v350 = vpack.c.b16 %v321, %v320
        %v351 = vpack.c.b16 %v323, %v322
        %v352 = vpack.c.b16 %v325, %v324
        %v353 = vpack.c.b16 %v327, %v326
        %v354 = vpack.c.b16 %v329, %v328
        %v355 = vpack.c.b16 %v331, %v330
        %v356 = vpack.c.b16 %v333, %v332
        %v357 = vpack.c.b16 %v335, %v334
        %v358 = vpack.c.b16 %v337, %v336
        %v359 = vpack.c.b16 %v339, %v338
        %v360 = vpack.c.b16 %v341, %v340
        %v361 = vpack.c.b16 %v343, %v342
        %v362 = vpack.c.b16 %v345, %v344
        %v363 = vpack.c.b16 %v347, %v346
        %v396 = vunpack.c.l.b16 %v238
        %v397 = vunpack.c.l.b16 %v241
        %v398 = vunpack.c.l.b16 %v244
        %v399 = vunpack.c.l.b16 %v247
        %v400 = vunpack.c.l.b16 %v250
        %v401 = vunpack.c.l.b16 %v253
        %v402 = vunpack.c.l.b16 %v256
        %v403 = vunpack.c.l.b16 %v259
        %v404 = vunpack.c.l.b16 %v262
        %v405 = vunpack.c.l.b16 %v265
        %v406 = vunpack.c.l.b16 %v268
        %v407 = vunpack.c.l.b16 %v271
        %v408 = vunpack.c.l.b16 %v274
        %v409 = vunpack.c.l.b16 %v277
        %v410 = vunpack.c.l.b16 %v280
        %v411 = vunpack.c.l.b16 %v283
        %v412 = vpack.c.b16 %v396, %v396
        %v413 = vpack.c.b16 %v397, %v397
        %v414 = vpack.c.b16 %v398, %v398
        %v415 = vpack.c.b16 %v399, %v399
        %v416 = vpack.c.b16 %v400, %v400
        %v417 = vpack.c.b16 %v401, %v401
        %v418 = vpack.c.b16 %v402, %v402
        %v419 = vpack.c.b16 %v403, %v403
        %v420 = vpack.c.b16 %v404, %v404
        %v421 = vpack.c.b16 %v405, %v405
        %v422 = vpack.c.b16 %v406, %v406
        %v423 = vpack.c.b16 %v407, %v407
        %v424 = vpack.c.b16 %v408, %v408
        %v425 = vpack.c.b16 %v409, %v409
        %v426 = vpack.c.b16 %v410, %v410
        %v427 = vpack.c.b16 %v411, %v411
        %vm428 = vsmask.f32 7424
        %v430 = vshrl.u32 %v348, 16
        %v432 = vshll.u32 %v348, 16
        %v434 = vrot.slane %v432, 1
        %v435 = vor.u32 %v430, %v434
        %v437 = vshll.u32 %v412, 16
        %v439 = vrot.slane %v437, 1
        %v440 = vsel %vm428, %v435, %v439
        %v442 = vshrl.u32 %v349, 16
        %v444 = vshll.u32 %v349, 16
        %v446 = vrot.slane %v444, 1
        %v447 = vor.u32 %v442, %v446
        %v449 = vshll.u32 %v413, 16
        %v451 = vrot.slane %v449, 1
        %v452 = vsel %vm428, %v447, %v451
        %v454 = vshrl.u32 %v350, 16
        %v456 = vshll.u32 %v350, 16
        %v458 = vrot.slane %v456, 1
        %v459 = vor.u32 %v454, %v458
        %v461 = vshll.u32 %v414, 16
        %v463 = vrot.slane %v461, 1
        %v464 = vsel %vm428, %v459, %v463
        %v466 = vshrl.u32 %v351, 16
        %v468 = vshll.u32 %v351, 16
        %v470 = vrot.slane %v468, 1
        %v471 = vor.u32 %v466, %v470
        %v473 = vshll.u32 %v415, 16
        %v475 = vrot.slane %v473, 1
        %v476 = vsel %vm428, %v471, %v475
        %v478 = vshrl.u32 %v352, 16
        %v480 = vshll.u32 %v352, 16
        %v482 = vrot.slane %v480, 1
        %v483 = vor.u32 %v478, %v482
        %v485 = vshll.u32 %v416, 16
        %v487 = vrot.slane %v485, 1
        %v488 = vsel %vm428, %v483, %v487
        %v490 = vshrl.u32 %v353, 16
        %v492 = vshll.u32 %v353, 16
        %v494 = vrot.slane %v492, 1
        %v495 = vor.u32 %v490, %v494
        %v497 = vshll.u32 %v417, 16
        %v499 = vrot.slane %v497, 1
        %v500 = vsel %vm428, %v495, %v499
        %v502 = vshrl.u32 %v354, 16
        %v504 = vshll.u32 %v354, 16
        %v506 = vrot.slane %v504, 1
        %v507 = vor.u32 %v502, %v506
        %v509 = vshll.u32 %v418, 16
        %v511 = vrot.slane %v509, 1
        %v512 = vsel %vm428, %v507, %v511
        %v514 = vshrl.u32 %v355, 16
        %v516 = vshll.u32 %v355, 16
        %v518 = vrot.slane %v516, 1
        %v519 = vor.u32 %v514, %v518
        %v521 = vshll.u32 %v419, 16
        %v523 = vrot.slane %v521, 1
        %v524 = vsel %vm428, %v519, %v523
        %v526 = vshrl.u32 %v356, 16
        %v528 = vshll.u32 %v356, 16
        %v530 = vrot.slane %v528, 1
        %v531 = vor.u32 %v526, %v530
        %v533 = vshll.u32 %v420, 16
        %v535 = vrot.slane %v533, 1
        %v536 = vsel %vm428, %v531, %v535
        %v538 = vshrl.u32 %v357, 16
        %v540 = vshll.u32 %v357, 16
        %v542 = vrot.slane %v540, 1
        %v543 = vor.u32 %v538, %v542
        %v545 = vshll.u32 %v421, 16
        %v547 = vrot.slane %v545, 1
        %v548 = vsel %vm428, %v543, %v547
        %v550 = vshrl.u32 %v358, 16
        %v552 = vshll.u32 %v358, 16
        %v554 = vrot.slane %v552, 1
        %v555 = vor.u32 %v550, %v554
        %v557 = vshll.u32 %v422, 16
        %v559 = vrot.slane %v557, 1
        %v560 = vsel %vm428, %v555, %v559
        %v562 = vshrl.u32 %v359, 16
        %v564 = vshll.u32 %v359, 16
        %v566 = vrot.slane %v564, 1
        %v567 = vor.u32 %v562, %v566
        %v569 = vshll.u32 %v423, 16
        %v571 = vrot.slane %v569, 1
        %v572 = vsel %vm428, %v567, %v571
        %v574 = vshrl.u32 %v360, 16
        %v576 = vshll.u32 %v360, 16
        %v578 = vrot.slane %v576, 1
        %v579 = vor.u32 %v574, %v578
        %v581 = vshll.u32 %v424, 16
        %v583 = vrot.slane %v581, 1
        %v584 = vsel %vm428, %v579, %v583
        %v586 = vshrl.u32 %v361, 16
        %v588 = vshll.u32 %v361, 16
        %v590 = vrot.slane %v588, 1
        %v591 = vor.u32 %v586, %v590
        %v593 = vshll.u32 %v425, 16
        %v595 = vrot.slane %v593, 1
        %v596 = vsel %vm428, %v591, %v595
        %v598 = vshrl.u32 %v362, 16
        %v600 = vshll.u32 %v362, 16
        %v602 = vrot.slane %v600, 1
        %v603 = vor.u32 %v598, %v602
        %v605 = vshll.u32 %v426, 16
        %v607 = vrot.slane %v605, 1
        %v608 = vsel %vm428, %v603, %v607
        %v610 = vshrl.u32 %v363, 16
        %v612 = vshll.u32 %v363, 16
        %v614 = vrot.slane %v612, 1
        %v615 = vor.u32 %v610, %v614
        %v617 = vshll.u32 %v427, 16
        %v619 = vrot.slane %v617, 1
        %v620 = vsel %vm428, %v615, %v619
        %vm637 = vcmask 1046528
        %v638 = vrot.slane %v348, 1
        %v639 = vrot.slane %v412, 1
        %v640 = vsel %vm637, %v638, %v639
        %v641 = vrot.slane %v349, 1
        %v642 = vrot.slane %v413, 1
        %v643 = vsel %vm637, %v641, %v642
        %v644 = vrot.slane %v350, 1
        %v645 = vrot.slane %v414, 1
        %v646 = vsel %vm637, %v644, %v645
        %v647 = vrot.slane %v351, 1
        %v648 = vrot.slane %v415, 1
        %v649 = vsel %vm637, %v647, %v648
        %v650 = vrot.slane %v352, 1
        %v651 = vrot.slane %v416, 1
        %v652 = vsel %vm637, %v650, %v651
        %v653 = vrot.slane %v353, 1
        %v654 = vrot.slane %v417, 1
        %v655 = vsel %vm637, %v653, %v654
        %v656 = vrot.slane %v354, 1
        %v657 = vrot.slane %v418, 1
        %v658 = vsel %vm637, %v656, %v657
        %v659 = vrot.slane %v355, 1
        %v660 = vrot.slane %v419, 1
        %v661 = vsel %vm637, %v659, %v660
        %v662 = vrot.slane %v356, 1
        %v663 = vrot.slane %v420, 1
        %v664 = vsel %vm637, %v662, %v663
        %v665 = vrot.slane %v357, 1
        %v666 = vrot.slane %v421, 1
        %v667 = vsel %vm637, %v665, %v666
        %v668 = vrot.slane %v358, 1
        %v669 = vrot.slane %v422, 1
        %v670 = vsel %vm637, %v668, %v669
        %v671 = vrot.slane %v359, 1
        %v672 = vrot.slane %v423, 1
        %v673 = vsel %vm637, %v671, %v672
        %v674 = vrot.slane %v360, 1
        %v675 = vrot.slane %v424, 1
        %v676 = vsel %vm637, %v674, %v675
        %v677 = vrot.slane %v361, 1
        %v678 = vrot.slane %v425, 1
        %v679 = vsel %vm637, %v677, %v678
        %v680 = vrot.slane %v362, 1
        %v681 = vrot.slane %v426, 1
        %v682 = vsel %vm637, %v680, %v681
        %v683 = vrot.slane %v363, 1
        %v684 = vrot.slane %v427, 1
        %v685 = vsel %vm637, %v683, %v684
        %vm702 = vsmask.f32 6400
        %v703 = vrot.slane %v430, 1
        %v704 = vrot.slane %v432, 2
        %v705 = vor.u32 %v703, %v704
        %v706 = vshrl.u32 %v412, 16
        %v708 = vrot.slane %v706, 1
        %v709 = vrot.slane %v437, 2
        %v710 = vor.u32 %v708, %v709
        %v711 = vsel %vm702, %v705, %v710
        %v712 = vrot.slane %v442, 1
        %v713 = vrot.slane %v444, 2
        %v714 = vor.u32 %v712, %v713
        %v715 = vshrl.u32 %v413, 16
        %v717 = vrot.slane %v715, 1
        %v718 = vrot.slane %v449, 2
        %v719 = vor.u32 %v717, %v718
        %v720 = vsel %vm702, %v714, %v719
        %v721 = vrot.slane %v454, 1
        %v722 = vrot.slane %v456, 2
        %v723 = vor.u32 %v721, %v722
        %v724 = vshrl.u32 %v414, 16
        %v726 = vrot.slane %v724, 1
        %v727 = vrot.slane %v461, 2
        %v728 = vor.u32 %v726, %v727
        %v729 = vsel %vm702, %v723, %v728
        %v730 = vrot.slane %v466, 1
        %v731 = vrot.slane %v468, 2
        %v732 = vor.u32 %v730, %v731
        %v733 = vshrl.u32 %v415, 16
        %v735 = vrot.slane %v733, 1
        %v736 = vrot.slane %v473, 2
        %v737 = vor.u32 %v735, %v736
        %v738 = vsel %vm702, %v732, %v737
        %v739 = vrot.slane %v478, 1
        %v740 = vrot.slane %v480, 2
        %v741 = vor.u32 %v739, %v740
        %v742 = vshrl.u32 %v416, 16
        %v744 = vrot.slane %v742, 1
        %v745 = vrot.slane %v485, 2
        %v746 = vor.u32 %v744, %v745
        %v747 = vsel %vm702, %v741, %v746
        %v748 = vrot.slane %v490, 1
        %v749 = vrot.slane %v492, 2
        %v750 = vor.u32 %v748, %v749
        %v751 = vshrl.u32 %v417, 16
        %v753 = vrot.slane %v751, 1
        %v754 = vrot.slane %v497, 2
        %v755 = vor.u32 %v753, %v754
        %v756 = vsel %vm702, %v750, %v755
        %v757 = vrot.slane %v502, 1
        %v758 = vrot.slane %v504, 2
        %v759 = vor.u32 %v757, %v758
        %v760 = vshrl.u32 %v418, 16
        %v762 = vrot.slane %v760, 1
        %v763 = vrot.slane %v509, 2
        %v764 = vor.u32 %v762, %v763
        %v765 = vsel %vm702, %v759, %v764
        %v766 = vrot.slane %v514, 1
        %v767 = vrot.slane %v516, 2
        %v768 = vor.u32 %v766, %v767
        %v769 = vshrl.u32 %v419, 16
        %v771 = vrot.slane %v769, 1
        %v772 = vrot.slane %v521, 2
        %v773 = vor.u32 %v771, %v772
        %v774 = vsel %vm702, %v768, %v773
        %v775 = vrot.slane %v526, 1
        %v776 = vrot.slane %v528, 2
        %v777 = vor.u32 %v775, %v776
        %v778 = vshrl.u32 %v420, 16
        %v780 = vrot.slane %v778, 1
        %v781 = vrot.slane %v533, 2
        %v782 = vor.u32 %v780, %v781
        %v783 = vsel %vm702, %v777, %v782
        %v784 = vrot.slane %v538, 1
        %v785 = vrot.slane %v540, 2
        %v786 = vor.u32 %v784, %v785
        %v787 = vshrl.u32 %v421, 16
        %v789 = vrot.slane %v787, 1
        %v790 = vrot.slane %v545, 2
        %v791 = vor.u32 %v789, %v790
        %v792 = vsel %vm702, %v786, %v791
        %v793 = vrot.slane %v550, 1
        %v794 = vrot.slane %v552, 2
        %v795 = vor.u32 %v793, %v794
        %v796 = vshrl.u32 %v422, 16
        %v798 = vrot.slane %v796, 1
        %v799 = vrot.slane %v557, 2
        %v800 = vor.u32 %v798, %v799
        %v801 = vsel %vm702, %v795, %v800
        %v802 = vrot.slane %v562, 1
        %v803 = vrot.slane %v564, 2
        %v804 = vor.u32 %v802, %v803
        %v805 = vshrl.u32 %v423, 16
        %v807 = vrot.slane %v805, 1
        %v808 = vrot.slane %v569, 2
        %v809 = vor.u32 %v807, %v808
        %v810 = vsel %vm702, %v804, %v809
        %v811 = vrot.slane %v574, 1
        %v812 = vrot.slane %v576, 2
        %v813 = vor.u32 %v811, %v812
        %v814 = vshrl.u32 %v424, 16
        %v816 = vrot.slane %v814, 1
        %v817 = vrot.slane %v581, 2
        %v818 = vor.u32 %v816, %v817
        %v819 = vsel %vm702, %v813, %v818
        %v820 = vrot.slane %v586, 1
        %v821 = vrot.slane %v588, 2
        %v822 = vor.u32 %v820, %v821
        %v823 = vshrl.u32 %v425, 16
        %v825 = vrot.slane %v823, 1
        %v826 = vrot.slane %v593, 2
        %v827 = vor.u32 %v825, %v826
        %v828 = vsel %vm702, %v822, %v827
        %v829 = vrot.slane %v598, 1
        %v830 = vrot.slane %v600, 2
        %v831 = vor.u32 %v829, %v830
        %v832 = vshrl.u32 %v426, 16
        %v834 = vrot.slane %v832, 1
        %v835 = vrot.slane %v605, 2
        %v836 = vor.u32 %v834, %v835
        %v837 = vsel %vm702, %v831, %v836
        %v838 = vrot.slane %v610, 1
        %v839 = vrot.slane %v612, 2
        %v840 = vor.u32 %v838, %v839
        %v841 = vshrl.u32 %v427, 16
        %v843 = vrot.slane %v841, 1
        %v844 = vrot.slane %v617, 2
        %v845 = vor.u32 %v843, %v844
        %v846 = vsel %vm702, %v840, %v845
        %vm863 = vcmask 1045504
        %v864 = vrot.slane %v348, 2
        %v865 = vrot.slane %v412, 2
        %v866 = vsel %vm863, %v864, %v865
        %v867 = vrot.slane %v349, 2
        %v868 = vrot.slane %v413, 2
        %v869 = vsel %vm863, %v867, %v868
        %v870 = vrot.slane %v350, 2
        %v871 = vrot.slane %v414, 2
        %v872 = vsel %vm863, %v870, %v871
        %v873 = vrot.slane %v351, 2
        %v874 = vrot.slane %v415, 2
        %v875 = vsel %vm863, %v873, %v874
        %v876 = vrot.slane %v352, 2
        %v877 = vrot.slane %v416, 2
        %v878 = vsel %vm863, %v876, %v877
        %v879 = vrot.slane %v353, 2
        %v880 = vrot.slane %v417, 2
        %v881 = vsel %vm863, %v879, %v880
        %v882 = vrot.slane %v354, 2
        %v883 = vrot.slane %v418, 2
        %v884 = vsel %vm863, %v882, %v883
        %v885 = vrot.slane %v355, 2
        %v886 = vrot.slane %v419, 2
        %v887 = vsel %vm863, %v885, %v886
        %v888 = vrot.slane %v356, 2
        %v889 = vrot.slane %v420, 2
        %v890 = vsel %vm863, %v888, %v889
        %v891 = vrot.slane %v357, 2
        %v892 = vrot.slane %v421, 2
        %v893 = vsel %vm863, %v891, %v892
        %v894 = vrot.slane %v358, 2
        %v895 = vrot.slane %v422, 2
        %v896 = vsel %vm863, %v894, %v895
        %v897 = vrot.slane %v359, 2
        %v898 = vrot.slane %v423, 2
        %v899 = vsel %vm863, %v897, %v898
        %v900 = vrot.slane %v360, 2
        %v901 = vrot.slane %v424, 2
        %v902 = vsel %vm863, %v900, %v901
        %v903 = vrot.slane %v361, 2
        %v904 = vrot.slane %v425, 2
        %v905 = vsel %vm863, %v903, %v904
        %v906 = vrot.slane %v362, 2
        %v907 = vrot.slane %v426, 2
        %v908 = vsel %vm863, %v906, %v907
        %v909 = vrot.slane %v363, 2
        %v910 = vrot.slane %v427, 2
        %v911 = vsel %vm863, %v909, %v910
        %vm928 = vsmask.f32 5376
        %v929 = vrot.slane %v430, 2
        %v930 = vrot.slane %v432, 3
        %v931 = vor.u32 %v929, %v930
        %v932 = vrot.slane %v706, 2
        %v933 = vrot.slane %v437, 3
        %v934 = vor.u32 %v932, %v933
        %v935 = vsel %vm928, %v931, %v934
        %v936 = vrot.slane %v442, 2
        %v937 = vrot.slane %v444, 3
        %v938 = vor.u32 %v936, %v937
        %v939 = vrot.slane %v715, 2
        %v940 = vrot.slane %v449, 3
        %v941 = vor.u32 %v939, %v940
        %v942 = vsel %vm928, %v938, %v941
        %v943 = vrot.slane %v454, 2
        %v944 = vrot.slane %v456, 3
        %v945 = vor.u32 %v943, %v944
        %v946 = vrot.slane %v724, 2
        %v947 = vrot.slane %v461, 3
        %v948 = vor.u32 %v946, %v947
        %v949 = vsel %vm928, %v945, %v948
        %v950 = vrot.slane %v466, 2
        %v951 = vrot.slane %v468, 3
        %v952 = vor.u32 %v950, %v951
        %v953 = vrot.slane %v733, 2
        %v954 = vrot.slane %v473, 3
        %v955 = vor.u32 %v953, %v954
        %v956 = vsel %vm928, %v952, %v955
        %v957 = vrot.slane %v478, 2
        %v958 = vrot.slane %v480, 3
        %v959 = vor.u32 %v957, %v958
        %v960 = vrot.slane %v742, 2
        %v961 = vrot.slane %v485, 3
        %v962 = vor.u32 %v960, %v961
        %v963 = vsel %vm928, %v959, %v962
        %v964 = vrot.slane %v490, 2
        %v965 = vrot.slane %v492, 3
        %v966 = vor.u32 %v964, %v965
        %v967 = vrot.slane %v751, 2
        %v968 = vrot.slane %v497, 3
        %v969 = vor.u32 %v967, %v968
        %v970 = vsel %vm928, %v966, %v969
        %v971 = vrot.slane %v502, 2
        %v972 = vrot.slane %v504, 3
        %v973 = vor.u32 %v971, %v972
        %v974 = vrot.slane %v760, 2
        %v975 = vrot.slane %v509, 3
        %v976 = vor.u32 %v974, %v975
        %v977 = vsel %vm928, %v973, %v976
        %v978 = vrot.slane %v514, 2
        %v979 = vrot.slane %v516, 3
        %v980 = vor.u32 %v978, %v979
        %v981 = vrot.slane %v769, 2
        %v982 = vrot.slane %v521, 3
        %v983 = vor.u32 %v981, %v982
        %v984 = vsel %vm928, %v980, %v983
        %v985 = vrot.slane %v526, 2
        %v986 = vrot.slane %v528, 3
        %v987 = vor.u32 %v985, %v986
        %v988 = vrot.slane %v778, 2
        %v989 = vrot.slane %v533, 3
        %v990 = vor.u32 %v988, %v989
        %v991 = vsel %vm928, %v987, %v990
        %v992 = vrot.slane %v538, 2
        %v993 = vrot.slane %v540, 3
        %v994 = vor.u32 %v992, %v993
        %v995 = vrot.slane %v787, 2
        %v996 = vrot.slane %v545, 3
        %v997 = vor.u32 %v995, %v996
        %v998 = vsel %vm928, %v994, %v997
        %v999 = vrot.slane %v550, 2
        %v1000 = vrot.slane %v552, 3
        %v1001 = vor.u32 %v999, %v1000
        %v1002 = vrot.slane %v796, 2
        %v1003 = vrot.slane %v557, 3
        %v1004 = vor.u32 %v1002, %v1003
        %v1005 = vsel %vm928, %v1001, %v1004
        %v1006 = vrot.slane %v562, 2
        %v1007 = vrot.slane %v564, 3
        %v1008 = vor.u32 %v1006, %v1007
        %v1009 = vrot.slane %v805, 2
        %v1010 = vrot.slane %v569, 3
        %v1011 = vor.u32 %v1009, %v1010
        %v1012 = vsel %vm928, %v1008, %v1011
        %v1013 = vrot.slane %v574, 2
        %v1014 = vrot.slane %v576, 3
        %v1015 = vor.u32 %v1013, %v1014
        %v1016 = vrot.slane %v814, 2
        %v1017 = vrot.slane %v581, 3
        %v1018 = vor.u32 %v1016, %v1017
        %v1019 = vsel %vm928, %v1015, %v1018
        %v1020 = vrot.slane %v586, 2
        %v1021 = vrot.slane %v588, 3
        %v1022 = vor.u32 %v1020, %v1021
        %v1023 = vrot.slane %v823, 2
        %v1024 = vrot.slane %v593, 3
        %v1025 = vor.u32 %v1023, %v1024
        %v1026 = vsel %vm928, %v1022, %v1025
        %v1027 = vrot.slane %v598, 2
        %v1028 = vrot.slane %v600, 3
        %v1029 = vor.u32 %v1027, %v1028
        %v1030 = vrot.slane %v832, 2
        %v1031 = vrot.slane %v605, 3
        %v1032 = vor.u32 %v1030, %v1031
        %v1033 = vsel %vm928, %v1029, %v1032
        %v1034 = vrot.slane %v610, 2
        %v1035 = vrot.slane %v612, 3
        %v1036 = vor.u32 %v1034, %v1035
        %v1037 = vrot.slane %v841, 2
        %v1038 = vrot.slane %v617, 3
        %v1039 = vor.u32 %v1037, %v1038
        %v1040 = vsel %vm928, %v1036, %v1039
        %vm1057 = vcmask 1044480
        %v1058 = vrot.slane %v348, 3
        %v1059 = vrot.slane %v412, 3
        %v1060 = vsel %vm1057, %v1058, %v1059
        %v1061 = vrot.slane %v349, 3
        %v1062 = vrot.slane %v413, 3
        %v1063 = vsel %vm1057, %v1061, %v1062
        %v1064 = vrot.slane %v350, 3
        %v1065 = vrot.slane %v414, 3
        %v1066 = vsel %vm1057, %v1064, %v1065
        %v1067 = vrot.slane %v351, 3
        %v1068 = vrot.slane %v415, 3
        %v1069 = vsel %vm1057, %v1067, %v1068
        %v1070 = vrot.slane %v352, 3
        %v1071 = vrot.slane %v416, 3
        %v1072 = vsel %vm1057, %v1070, %v1071
        %v1073 = vrot.slane %v353, 3
        %v1074 = vrot.slane %v417, 3
        %v1075 = vsel %vm1057, %v1073, %v1074
        %v1076 = vrot.slane %v354, 3
        %v1077 = vrot.slane %v418, 3
        %v1078 = vsel %vm1057, %v1076, %v1077
        %v1079 = vrot.slane %v355, 3
        %v1080 = vrot.slane %v419, 3
        %v1081 = vsel %vm1057, %v1079, %v1080
        %v1082 = vrot.slane %v356, 3
        %v1083 = vrot.slane %v420, 3
        %v1084 = vsel %vm1057, %v1082, %v1083
        %v1085 = vrot.slane %v357, 3
        %v1086 = vrot.slane %v421, 3
        %v1087 = vsel %vm1057, %v1085, %v1086
        %v1088 = vrot.slane %v358, 3
        %v1089 = vrot.slane %v422, 3
        %v1090 = vsel %vm1057, %v1088, %v1089
        %v1091 = vrot.slane %v359, 3
        %v1092 = vrot.slane %v423, 3
        %v1093 = vsel %vm1057, %v1091, %v1092
        %v1094 = vrot.slane %v360, 3
        %v1095 = vrot.slane %v424, 3
        %v1096 = vsel %vm1057, %v1094, %v1095
        %v1097 = vrot.slane %v361, 3
        %v1098 = vrot.slane %v425, 3
        %v1099 = vsel %vm1057, %v1097, %v1098
        %v1100 = vrot.slane %v362, 3
        %v1101 = vrot.slane %v426, 3
        %v1102 = vsel %vm1057, %v1100, %v1101
        %v1103 = vrot.slane %v363, 3
        %v1104 = vrot.slane %v427, 3
        %v1105 = vsel %vm1057, %v1103, %v1104
        %v1122 = vld [vmem:[#allocation5] sm:$0xf]
        %v1123 = vld [vmem:[#allocation5 + $0x4] sm:$0xf]
        %v1124 = vld [vmem:[#allocation5 + $0x8] sm:$0xf]
        %v1125 = vld [vmem:[#allocation5 + $0xc] sm:$0xf]
        %v1126 = vld [vmem:[#allocation5 + $0x10] sm:$0xf]
        %v1127 = vld [vmem:[#allocation5 + $0x14] sm:$0xf]
        %v1128 = vld [vmem:[#allocation5 + $0x18] sm:$0xf]
        %v1129 = vld [vmem:[#allocation5 + $0x1c] sm:$0xf]
        %v1130 = vld [vmem:[#allocation5 + $0x20] sm:$0xf]
        %v1131 = vld [vmem:[#allocation5 + $0x24] sm:$0xf]
        %v1132 = vld [vmem:[#allocation5 + $0x28] sm:$0xf]
        %v1133 = vld [vmem:[#allocation5 + $0x2c] sm:$0xf]
        %v1134 = vld [vmem:[#allocation5 + $0x30] sm:$0xf]
        %v1135 = vld [vmem:[#allocation5 + $0x34] sm:$0xf]
        %v1136 = vld [vmem:[#allocation5 + $0x38] sm:$0xf]
        %v1137 = vld [vmem:[#allocation5 + $0x3c] sm:$0xf]
        %v1138 = vld [vmem:[#allocation5 + $0x40] sm:$0xf]
        %v1139 = vld [vmem:[#allocation5 + $0x44] sm:$0xf]
        %v1140 = vld [vmem:[#allocation5 + $0x48] sm:$0xf]
        %v1141 = vld [vmem:[#allocation5 + $0x4c] sm:$0xf]
        %v1142 = vld [vmem:[#allocation5 + $0x50] sm:$0xf]
        %v1143 = vld [vmem:[#allocation5 + $0x54] sm:$0xf]
        %v1144 = vld [vmem:[#allocation5 + $0x58] sm:$0xf]
        %v1145 = vld [vmem:[#allocation5 + $0x5c] sm:$0xf]
        %v1146 = vld [vmem:[#allocation5 + $0x60] sm:$0xf]
        %v1147 = vld [vmem:[#allocation5 + $0x64] sm:$0xf]
        %v1148 = vld [vmem:[#allocation5 + $0x68] sm:$0xf]
        %v1149 = vld [vmem:[#allocation5 + $0x6c] sm:$0xf]
        %v1150 = vld [vmem:[#allocation5 + $0x70] sm:$0xf]
        %v1151 = vld [vmem:[#allocation5 + $0x74] sm:$0xf]
        %v1152 = vld [vmem:[#allocation5 + $0x78] sm:$0xf]
        %v1153 = vld [vmem:[#allocation5 + $0x7c] sm:$0xf]
        %v1154 = vld [vmem:[#allocation5 + $0x80] sm:$0xf]
        %v1155 = vld [vmem:[#allocation5 + $0x84] sm:$0xf]
        %v1156 = vld [vmem:[#allocation5 + $0x88] sm:$0xf]
        %v1157 = vld [vmem:[#allocation5 + $0x8c] sm:$0xf]
        %v1158 = vld [vmem:[#allocation5 + $0x90] sm:$0xf]
        %v1159 = vld [vmem:[#allocation5 + $0x94] sm:$0xf]
        %v1160 = vld [vmem:[#allocation5 + $0x98] sm:$0xf]
        %v1161 = vld [vmem:[#allocation5 + $0x9c] sm:$0xf]
        %v1162 = vld [vmem:[#allocation5 + $0xa0] sm:$0xf]
        %v1163 = vld [vmem:[#allocation5 + $0xa4] sm:$0xf]
        %v1164 = vld [vmem:[#allocation5 + $0xa8] sm:$0xf]
        %v1165 = vld [vmem:[#allocation5 + $0xac] sm:$0xf]
        %v1166 = vld [vmem:[#allocation5 + $0xb0] sm:$0xf]
        %v1167 = vld [vmem:[#allocation5 + $0xb4] sm:$0xf]
        %v1168 = vld [vmem:[#allocation5 + $0xb8] sm:$0xf]
        %v1169 = vld [vmem:[#allocation5 + $0xbc] sm:$0xf]
        %v1170 = vld [vmem:[#allocation5 + $0xc0] sm:$0xf]
        %v1171 = vld [vmem:[#allocation5 + $0xc4] sm:$0xf]
        %v1172 = vld [vmem:[#allocation5 + $0xc8] sm:$0xf]
        %v1173 = vld [vmem:[#allocation5 + $0xcc] sm:$0xf]
        %v1174 = vld [vmem:[#allocation5 + $0xd0] sm:$0xf]
        %v1175 = vld [vmem:[#allocation5 + $0xd4] sm:$0xf]
        %v1176 = vld [vmem:[#allocation5 + $0xd8] sm:$0xf]
        %v1177 = vld [vmem:[#allocation5 + $0xdc] sm:$0xf]
        %v1178 = vld [vmem:[#allocation5 + $0xe0] sm:$0xf]
        %v1179 = vld [vmem:[#allocation5 + $0xe4] sm:$0xf]
        %v1180 = vld [vmem:[#allocation5 + $0xe8] sm:$0xf]
        %v1181 = vld [vmem:[#allocation5 + $0xec] sm:$0xf]
        %v1182 = vld [vmem:[#allocation5 + $0xf0] sm:$0xf]
        %v1183 = vld [vmem:[#allocation5 + $0xf4] sm:$0xf]
        %v1184 = vld [vmem:[#allocation5 + $0xf8] sm:$0xf]
        %v1185 = vld [vmem:[#allocation5 + $0xfc] sm:$0xf]
        %v1186 = vld [vmem:[#allocation5 + $0x100] sm:$0xf]
        %v1187 = vld [vmem:[#allocation5 + $0x104] sm:$0xf]
        %v1188 = vld [vmem:[#allocation5 + $0x108] sm:$0xf]
        %v1189 = vld [vmem:[#allocation5 + $0x10c] sm:$0xf]
        %v1190 = vld [vmem:[#allocation5 + $0x110] sm:$0xf]
        %v1191 = vld [vmem:[#allocation5 + $0x114] sm:$0xf]
        %v1192 = vld [vmem:[#allocation5 + $0x118] sm:$0xf]
        %v1193 = vld [vmem:[#allocation5 + $0x11c] sm:$0xf]
        %v1194 = vld [vmem:[#allocation5 + $0x120] sm:$0xf]
        %v1195 = vld [vmem:[#allocation5 + $0x124] sm:$0xf]
        %v1196 = vld [vmem:[#allocation5 + $0x128] sm:$0xf]
        %v1197 = vld [vmem:[#allocation5 + $0x12c] sm:$0xf]
        %v1198 = vld [vmem:[#allocation5 + $0x130] sm:$0xf]
        %v1199 = vld [vmem:[#allocation5 + $0x134] sm:$0xf]
        %v1200 = vld [vmem:[#allocation5 + $0x138] sm:$0xf]
        %v1201 = vld [vmem:[#allocation5 + $0x13c] sm:$0xf]
        %v1202 = vld [vmem:[#allocation5 + $0x140] sm:$0xf]
        %v1203 = vld [vmem:[#allocation5 + $0x144] sm:$0xf]
        %v1204 = vld [vmem:[#allocation5 + $0x148] sm:$0xf]
        %v1205 = vld [vmem:[#allocation5 + $0x14c] sm:$0xf]
        %v1206 = vld [vmem:[#allocation5 + $0x150] sm:$0xf]
        %v1207 = vld [vmem:[#allocation5 + $0x154] sm:$0xf]
        %v1208 = vld [vmem:[#allocation5 + $0x158] sm:$0xf]
        %v1209 = vld [vmem:[#allocation5 + $0x15c] sm:$0xf]
        %v1210 = vld [vmem:[#allocation5 + $0x160] sm:$0xf]
        %v1211 = vld [vmem:[#allocation5 + $0x164] sm:$0xf]
        %v1212 = vld [vmem:[#allocation5 + $0x168] sm:$0xf]
        %v1213 = vld [vmem:[#allocation5 + $0x16c] sm:$0xf]
        %v1214 = vld [vmem:[#allocation5 + $0x170] sm:$0xf]
        %v1215 = vld [vmem:[#allocation5 + $0x174] sm:$0xf]
        %v1216 = vld [vmem:[#allocation5 + $0x178] sm:$0xf]
        %v1217 = vld [vmem:[#allocation5 + $0x17c] sm:$0xf]
        %v1218 = vld [vmem:[#allocation5 + $0x180] sm:$0xf]
        %v1219 = vld [vmem:[#allocation5 + $0x184] sm:$0xf]
        %v1220 = vld [vmem:[#allocation5 + $0x188] sm:$0xf]
        %v1221 = vld [vmem:[#allocation5 + $0x18c] sm:$0xf]
        %v1222 = vld [vmem:[#allocation5 + $0x190] sm:$0xf]
        %v1223 = vld [vmem:[#allocation5 + $0x194] sm:$0xf]
        %v1224 = vld [vmem:[#allocation5 + $0x198] sm:$0xf]
        %v1225 = vld [vmem:[#allocation5 + $0x19c] sm:$0xf]
        %v1226 = vld [vmem:[#allocation5 + $0x1a0] sm:$0xf]
        %v1227 = vld [vmem:[#allocation5 + $0x1a4] sm:$0xf]
        %v1228 = vld [vmem:[#allocation5 + $0x1a8] sm:$0xf]
        %v1229 = vld [vmem:[#allocation5 + $0x1ac] sm:$0xf]
        %v1230 = vld [vmem:[#allocation5 + $0x1b0] sm:$0xf]
        %v1231 = vld [vmem:[#allocation5 + $0x1b4] sm:$0xf]
        %v1232 = vld [vmem:[#allocation5 + $0x1b8] sm:$0xf]
        %v1233 = vld [vmem:[#allocation5 + $0x1bc] sm:$0xf]
        %v1234 = vld [vmem:[#allocation7] sm:$0x1]
        %v1236 = vlaneseq
        %v1237 = vshrl.u32 %v1236, 7
        %v1238 = vsub.s32 0, %v1237
        %v1239 = vrot.slane %v1234, %v1238
        %v1353 = vunpack.c.l.b16 %v1122
        %v1354 = vunpack.c.l.b16 %v1123
        %v1355 = vunpack.c.l.b16 %v1124
        %v1356 = vunpack.c.l.b16 %v1125
        %v1357 = vunpack.c.l.b16 %v1126
        %v1358 = vunpack.c.l.b16 %v1127
        %v1359 = vunpack.c.l.b16 %v1128
        %v1360 = vunpack.c.l.b16 %v1129
        %v1361 = vunpack.c.l.b16 %v1130
        %v1362 = vunpack.c.l.b16 %v1131
        %v1363 = vunpack.c.l.b16 %v1132
        %v1364 = vunpack.c.l.b16 %v1133
        %v1365 = vunpack.c.l.b16 %v1134
        %v1366 = vunpack.c.l.b16 %v1135
        %v1367 = vunpack.c.l.b16 %v1136
        %v1368 = vunpack.c.l.b16 %v1137
        %v1369 = vunpack.c.l.b16 %v1138
        %v1370 = vunpack.c.l.b16 %v1139
        %v1371 = vunpack.c.l.b16 %v1140
        %v1372 = vunpack.c.l.b16 %v1141
        %v1373 = vunpack.c.l.b16 %v1142
        %v1374 = vunpack.c.l.b16 %v1143
        %v1375 = vunpack.c.l.b16 %v1144
        %v1376 = vunpack.c.l.b16 %v1145
        %v1377 = vunpack.c.l.b16 %v1146
        %v1378 = vunpack.c.l.b16 %v1147
        %v1379 = vunpack.c.l.b16 %v1148
        %v1380 = vunpack.c.l.b16 %v1149
        %v1381 = vunpack.c.l.b16 %v1150
        %v1382 = vunpack.c.l.b16 %v1151
        %v1383 = vunpack.c.l.b16 %v1152
        %v1384 = vunpack.c.l.b16 %v1153
        %v1385 = vunpack.c.l.b16 %v1154
        %v1386 = vunpack.c.l.b16 %v1155
        %v1387 = vunpack.c.l.b16 %v1156
        %v1388 = vunpack.c.l.b16 %v1157
        %v1389 = vunpack.c.l.b16 %v1158
        %v1390 = vunpack.c.l.b16 %v1159
        %v1391 = vunpack.c.l.b16 %v1160
        %v1392 = vunpack.c.l.b16 %v1161
        %v1393 = vunpack.c.l.b16 %v1162
        %v1394 = vunpack.c.l.b16 %v1163
        %v1395 = vunpack.c.l.b16 %v1164
        %v1396 = vunpack.c.l.b16 %v1165
        %v1397 = vunpack.c.l.b16 %v1166
        %v1398 = vunpack.c.l.b16 %v1167
        %v1399 = vunpack.c.l.b16 %v1168
        %v1400 = vunpack.c.l.b16 %v1169
        %v1401 = vunpack.c.l.b16 %v1170
        %v1402 = vunpack.c.l.b16 %v1171
        %v1403 = vunpack.c.l.b16 %v1172
        %v1404 = vunpack.c.l.b16 %v1173
        %v1405 = vunpack.c.l.b16 %v1174
        %v1406 = vunpack.c.l.b16 %v1175
        %v1407 = vunpack.c.l.b16 %v1176
        %v1408 = vunpack.c.l.b16 %v1177
        %v1409 = vunpack.c.l.b16 %v1178
        %v1410 = vunpack.c.l.b16 %v1179
        %v1411 = vunpack.c.l.b16 %v1180
        %v1412 = vunpack.c.l.b16 %v1181
        %v1413 = vunpack.c.l.b16 %v1182
        %v1414 = vunpack.c.l.b16 %v1183
        %v1415 = vunpack.c.l.b16 %v1184
        %v1416 = vunpack.c.l.b16 %v1185
        %v1417 = vunpack.c.l.b16 %v1186
        %v1418 = vunpack.c.l.b16 %v1187
        %v1419 = vunpack.c.l.b16 %v1188
        %v1420 = vunpack.c.l.b16 %v1189
        %v1421 = vunpack.c.l.b16 %v1190
        %v1422 = vunpack.c.l.b16 %v1191
        %v1423 = vunpack.c.l.b16 %v1192
        %v1424 = vunpack.c.l.b16 %v1193
        %v1425 = vunpack.c.l.b16 %v1194
        %v1426 = vunpack.c.l.b16 %v1195
        %v1427 = vunpack.c.l.b16 %v1196
        %v1428 = vunpack.c.l.b16 %v1197
        %v1429 = vunpack.c.l.b16 %v1198
        %v1430 = vunpack.c.l.b16 %v1199
        %v1431 = vunpack.c.l.b16 %v1200
        %v1432 = vunpack.c.l.b16 %v1201
        %v1433 = vunpack.c.l.b16 %v1202
        %v1434 = vunpack.c.l.b16 %v1203
        %v1435 = vunpack.c.l.b16 %v1204
        %v1436 = vunpack.c.l.b16 %v1205
        %v1437 = vunpack.c.l.b16 %v1206
        %v1438 = vunpack.c.l.b16 %v1207
        %v1439 = vunpack.c.l.b16 %v1208
        %v1440 = vunpack.c.l.b16 %v1209
        %v1441 = vunpack.c.l.b16 %v1210
        %v1442 = vunpack.c.l.b16 %v1211
        %v1443 = vunpack.c.l.b16 %v1212
        %v1444 = vunpack.c.l.b16 %v1213
        %v1445 = vunpack.c.l.b16 %v1214
        %v1446 = vunpack.c.l.b16 %v1215
        %v1447 = vunpack.c.l.b16 %v1216
        %v1448 = vunpack.c.l.b16 %v1217
        %v1449 = vunpack.c.l.b16 %v1218
        %v1450 = vunpack.c.l.b16 %v1219
        %v1451 = vunpack.c.l.b16 %v1220
        %v1452 = vunpack.c.l.b16 %v1221
        %v1453 = vunpack.c.l.b16 %v1222
        %v1454 = vunpack.c.l.b16 %v1223
        %v1455 = vunpack.c.l.b16 %v1224
        %v1456 = vunpack.c.l.b16 %v1225
        %v1457 = vunpack.c.l.b16 %v1226
        %v1458 = vunpack.c.l.b16 %v1227
        %v1459 = vunpack.c.l.b16 %v1228
        %v1460 = vunpack.c.l.b16 %v1229
        %v1461 = vunpack.c.l.b16 %v1230
        %v1462 = vunpack.c.l.b16 %v1231
        %v1463 = vunpack.c.l.b16 %v1232
        %v1464 = vunpack.c.l.b16 %v1233
        %v1465 = vpack.c.b16 %v1354, %v1353
        %v1466 = vpack.c.b16 %v1356, %v1355
        %v1467 = vpack.c.b16 %v1358, %v1357
        %v1468 = vpack.c.b16 %v1360, %v1359
        %v1469 = vpack.c.b16 %v1362, %v1361
        %v1470 = vpack.c.b16 %v1364, %v1363
        %v1471 = vpack.c.b16 %v1366, %v1365
        %v1472 = vpack.c.b16 %v1368, %v1367
        %v1473 = vpack.c.b16 %v1370, %v1369
        %v1474 = vpack.c.b16 %v1372, %v1371
        %v1475 = vpack.c.b16 %v1374, %v1373
        %v1476 = vpack.c.b16 %v1376, %v1375
        %v1477 = vpack.c.b16 %v1378, %v1377
        %v1478 = vpack.c.b16 %v1380, %v1379
        %v1479 = vpack.c.b16 %v1382, %v1381
        %v1480 = vpack.c.b16 %v1384, %v1383
        %v1481 = vpack.c.b16 %v1386, %v1385
        %v1482 = vpack.c.b16 %v1388, %v1387
        %v1483 = vpack.c.b16 %v1390, %v1389
        %v1484 = vpack.c.b16 %v1392, %v1391
        %v1485 = vpack.c.b16 %v1394, %v1393
        %v1486 = vpack.c.b16 %v1396, %v1395
        %v1487 = vpack.c.b16 %v1398, %v1397
        %v1488 = vpack.c.b16 %v1400, %v1399
        %v1489 = vpack.c.b16 %v1402, %v1401
        %v1490 = vpack.c.b16 %v1404, %v1403
        %v1491 = vpack.c.b16 %v1406, %v1405
        %v1492 = vpack.c.b16 %v1408, %v1407
        %v1493 = vpack.c.b16 %v1410, %v1409
        %v1494 = vpack.c.b16 %v1412, %v1411
        %v1495 = vpack.c.b16 %v1414, %v1413
        %v1496 = vpack.c.b16 %v1416, %v1415
        %v1497 = vpack.c.b16 %v1418, %v1417
        %v1498 = vpack.c.b16 %v1420, %v1419
        %v1499 = vpack.c.b16 %v1422, %v1421
        %v1500 = vpack.c.b16 %v1424, %v1423
        %v1501 = vpack.c.b16 %v1426, %v1425
        %v1502 = vpack.c.b16 %v1428, %v1427
        %v1503 = vpack.c.b16 %v1430, %v1429
        %v1504 = vpack.c.b16 %v1432, %v1431
        %v1505 = vpack.c.b16 %v1434, %v1433
        %v1506 = vpack.c.b16 %v1436, %v1435
        %v1507 = vpack.c.b16 %v1438, %v1437
        %v1508 = vpack.c.b16 %v1440, %v1439
        %v1509 = vpack.c.b16 %v1442, %v1441
        %v1510 = vpack.c.b16 %v1444, %v1443
        %v1511 = vpack.c.b16 %v1446, %v1445
        %v1512 = vpack.c.b16 %v1448, %v1447
        %v1513 = vpack.c.b16 %v1450, %v1449
        %v1514 = vpack.c.b16 %v1452, %v1451
        %v1515 = vpack.c.b16 %v1454, %v1453
        %v1516 = vpack.c.b16 %v1456, %v1455
        %v1517 = vpack.c.b16 %v1458, %v1457
        %v1518 = vpack.c.b16 %v1460, %v1459
        %v1519 = vpack.c.b16 %v1462, %v1461
        %v1520 = vpack.c.b16 %v1464, %v1463
        %1577 = vmatprep.subr.bf16.mxu0 0
        %1578 = vmatpush1.bf16.msra.mxu0 %v1465
        %1579 = vmatprep.subr.bf16.mxu0 0
        %1580 = vmatpush1.bf16.msra.mxu0 %v1466
        %1581 = vmatprep.subr.bf16.mxu0 0
        %1582 = vmatpush1.bf16.msra.mxu0 %v1467
        %1583 = vmatprep.subr.bf16.mxu0 0
        %1584 = vmatpush1.bf16.msra.mxu0 %v1468
        %1585 = vmatprep.subr.bf16.mxu0 0
        %1586 = vmatpush1.bf16.msra.mxu0 %v1469
        %1587 = vmatprep.subr.bf16.mxu0 0
        %1588 = vmatpush1.bf16.msra.mxu0 %v1470
        %1589 = vmatprep.subr.bf16.mxu0 0
        %1590 = vmatpush1.bf16.msra.mxu0 %v1471
        %1591 = vmatprep.subr.bf16.mxu0 0
        %1592 = vmatpush1.bf16.msra.mxu0 %v1472
        %1593 = vmatprep.subr.bf16.mxu0 0
        %1594 = vmatpush1.bf16.msra.mxu0 %v1473
        %1595 = vmatprep.subr.bf16.mxu0 0
        %1596 = vmatpush1.bf16.msra.mxu0 %v1474
        %1597 = vmatprep.subr.bf16.mxu0 0
        %1598 = vmatpush1.bf16.msra.mxu0 %v1475
        %1599 = vmatprep.subr.bf16.mxu0 0
        %1600 = vmatpush1.bf16.msra.mxu0 %v1476
        %1601 = vmatprep.subr.bf16.mxu0 0
        %1602 = vmatpush1.bf16.msra.mxu0 %v1477
        %1603 = vmatprep.subr.bf16.mxu0 0
        %1604 = vmatpush1.bf16.msra.mxu0 %v1478
        %1605 = vmatprep.subr.bf16.mxu0 0
        %1606 = vmatpush1.bf16.msra.mxu0 %v1479
        %1607 = vmatprep.subr.bf16.mxu0 0
        %1608 = vmatpush1.bf16.msra.mxu0 %v1480
        %1609 = vmatprep.mubr.bf16.mxu0 %v440
        %1610 = vmatmul.mubr.bf16.gmra.mrb[0].mxu0 %v348
        %v1611 = vpop.f32.mrb[0].mxu0
        %v1612 = vadd.f32 %v1239, %v1611
        %v1613 = vpop.f32.mrb[0].mxu0
        %v1614 = vpop.f32.mrb[0].mxu0
        %v1615 = vadd.f32 %v1239, %v1614
        %v1616 = vpop.f32.mrb[0].mxu0
        %1617 = vmatprep.mubr.bf16.mxu0 %v452
        %1618 = vmatmul.mubr.bf16.gmra.mrb[0].mxu0 %v349
        %v1619 = vpop.f32.mrb[0].mxu0
        %v1620 = vadd.f32 %v1239, %v1619
        %v1621 = vpop.f32.mrb[0].mxu0
        %v1622 = vpop.f32.mrb[0].mxu0
        %v1623 = vadd.f32 %v1239, %v1622
        %v1624 = vpop.f32.mrb[0].mxu0
        %1625 = vmatprep.mubr.bf16.mxu0 %v464
        %1626 = vmatmul.mubr.bf16.gmra.mrb[0].mxu0 %v350
        %v1627 = vpop.f32.mrb[0].mxu0
        %v1628 = vadd.f32 %v1239, %v1627
        %v1629 = vpop.f32.mrb[0].mxu0
        %v1630 = vpop.f32.mrb[0].mxu0
        %v1631 = vadd.f32 %v1239, %v1630
        %v1632 = vpop.f32.mrb[0].mxu0
        %1633 = vmatprep.mubr.bf16.mxu0 %v476
        %1634 = vmatmul.mubr.bf16.gmra.mrb[0].mxu0 %v351
        %v1635 = vpop.f32.mrb[0].mxu0
        %v1636 = vadd.f32 %v1239, %v1635
        %v1637 = vpop.f32.mrb[0].mxu0
        %v1638 = vpop.f32.mrb[0].mxu0
        %v1639 = vadd.f32 %v1239, %v1638
        %v1640 = vpop.f32.mrb[0].mxu0
        %1641 = vmatprep.mubr.bf16.mxu0 %v488
        %1642 = vmatmul.mubr.bf16.gmra.mrb[0].mxu0 %v352
        %v1643 = vpop.f32.mrb[0].mxu0
        %v1644 = vadd.f32 %v1239, %v1643
        %v1645 = vpop.f32.mrb[0].mxu0
        %v1646 = vpop.f32.mrb[0].mxu0
        %v1647 = vadd.f32 %v1239, %v1646
        %v1648 = vpop.f32.mrb[0].mxu0
        %1649 = vmatprep.mubr.bf16.mxu0 %v500
        %1650 = vmatmul.mubr.bf16.gmra.mrb[0].mxu0 %v353
        %v1651 = vpop.f32.mrb[0].mxu0
        %v1652 = vadd.f32 %v1239, %v1651
        %v1653 = vpop.f32.mrb[0].mxu0
        %v1654 = vpop.f32.mrb[0].mxu0
        %v1655 = vadd.f32 %v1239, %v1654
        %v1656 = vpop.f32.mrb[0].mxu0
        %1657 = vmatprep.mubr.bf16.mxu0 %v512
        %1658 = vmatmul.mubr.bf16.gmra.mrb[0].mxu0 %v354
        %v1659 = vpop.f32.mrb[0].mxu0
        %v1660 = vadd.f32 %v1239, %v1659
        %v1661 = vpop.f32.mrb[0].mxu0
        %v1662 = vpop.f32.mrb[0].mxu0
        %v1663 = vadd.f32 %v1239, %v1662
        %v1664 = vpop.f32.mrb[0].mxu0
        %1665 = vmatprep.mubr.bf16.mxu0 %v524
        %1666 = vmatmul.mubr.bf16.gmra.mrb[0].mxu0 %v355
        %v1667 = vpop.f32.mrb[0].mxu0
        %v1668 = vadd.f32 %v1239, %v1667
        %v1669 = vpop.f32.mrb[0].mxu0
        %v1670 = vpop.f32.mrb[0].mxu0
        %v1671 = vadd.f32 %v1239, %v1670
        %v1672 = vpop.f32.mrb[0].mxu0
        %1673 = vmatprep.mubr.bf16.mxu0 %v536
        %1674 = vmatmul.mubr.bf16.gmra.mrb[0].mxu0 %v356
        %v1675 = vpop.f32.mrb[0].mxu0
        %v1676 = vadd.f32 %v1239, %v1675
        %v1677 = vpop.f32.mrb[0].mxu0
        %v1678 = vpop.f32.mrb[0].mxu0
        %v1679 = vadd.f32 %v1239, %v1678
        %v1680 = vpop.f32.mrb[0].mxu0
        %1681 = vmatprep.mubr.bf16.mxu0 %v548
        %1682 = vmatmul.mubr.bf16.gmra.mrb[0].mxu0 %v357
        %v1683 = vpop.f32.mrb[0].mxu0
        %v1684 = vadd.f32 %v1239, %v1683
        %v1685 = vpop.f32.mrb[0].mxu0
        %v1686 = vpop.f32.mrb[0].mxu0
        %v1687 = vadd.f32 %v1239, %v1686
        %v1688 = vpop.f32.mrb[0].mxu0
        %1689 = vmatprep.mubr.bf16.mxu0 %v560
        %1690 = vmatmul.mubr.bf16.gmra.mrb[0].mxu0 %v358
        %v1691 = vpop.f32.mrb[0].mxu0
        %v1692 = vadd.f32 %v1239, %v1691
        %v1693 = vpop.f32.mrb[0].mxu0
        %v1694 = vpop.f32.mrb[0].mxu0
        %v1695 = vadd.f32 %v1239, %v1694
        %v1696 = vpop.f32.mrb[0].mxu0
        %1697 = vmatprep.mubr.bf16.mxu0 %v572
        %1698 = vmatmul.mubr.bf16.gmra.mrb[0].mxu0 %v359
        %v1699 = vpop.f32.mrb[0].mxu0
        %v1700 = vadd.f32 %v1239, %v1699
        %v1701 = vpop.f32.mrb[0].mxu0
        %v1702 = vpop.f32.mrb[0].mxu0
        %v1703 = vadd.f32 %v1239, %v1702
        %v1704 = vpop.f32.mrb[0].mxu0
        %1705 = vmatprep.mubr.bf16.mxu0 %v584
        %1706 = vmatmul.mubr.bf16.gmra.mrb[0].mxu0 %v360
        %v1707 = vpop.f32.mrb[0].mxu0
        %v1708 = vadd.f32 %v1239, %v1707
        %v1709 = vpop.f32.mrb[0].mxu0
        %v1710 = vpop.f32.mrb[0].mxu0
        %v1711 = vadd.f32 %v1239, %v1710
        %v1712 = vpop.f32.mrb[0].mxu0
        %1713 = vmatprep.mubr.bf16.mxu0 %v596
        %1714 = vmatmul.mubr.bf16.gmra.mrb[0].mxu0 %v361
        %v1715 = vpop.f32.mrb[0].mxu0
        %v1716 = vadd.f32 %v1239, %v1715
        %v1717 = vpop.f32.mrb[0].mxu0
        %v1718 = vpop.f32.mrb[0].mxu0
        %v1719 = vadd.f32 %v1239, %v1718
        %v1720 = vpop.f32.mrb[0].mxu0
        %1721 = vmatprep.mubr.bf16.mxu0 %v608
        %1722 = vmatmul.mubr.bf16.gmra.mrb[0].mxu0 %v362
        %v1723 = vpop.f32.mrb[0].mxu0
        %v1724 = vadd.f32 %v1239, %v1723
        %v1725 = vpop.f32.mrb[0].mxu0
        %v1726 = vpop.f32.mrb[0].mxu0
        %v1727 = vadd.f32 %v1239, %v1726
        %v1728 = vpop.f32.mrb[0].mxu0
        %1729 = vmatprep.mubr.bf16.mxu0 %v620
        %1730 = vmatmul.mubr.bf16.gmra.mrb[0].mxu0 %v363
        %v1731 = vpop.f32.mrb[0].mxu0
        %v1732 = vadd.f32 %v1239, %v1731
        %v1733 = vpop.f32.mrb[0].mxu0
        %v1734 = vpop.f32.mrb[0].mxu0
        %v1735 = vadd.f32 %v1239, %v1734
        %v1736 = vpop.f32.mrb[0].mxu0
        %1737 = vdwg.mxu0
        %1738 = vmatprep.subr.bf16.mxu0 0
        %1739 = vmatpush1.bf16.msra.mxu0 %v1481
        %1740 = vmatprep.subr.bf16.mxu0 0
        %1741 = vmatpush1.bf16.msra.mxu0 %v1482
        %1742 = vmatprep.subr.bf16.mxu0 0
        %1743 = vmatpush1.bf16.msra.mxu0 %v1483
        %1744 = vmatprep.subr.bf16.mxu0 0
        %1745 = vmatpush1.bf16.msra.mxu0 %v1484
        %1746 = vmatprep.subr.bf16.mxu0 0
        %1747 = vmatpush1.bf16.msra.mxu0 %v1485
        %1748 = vmatprep.subr.bf16.mxu0 0
        %1749 = vmatpush1.bf16.msra.mxu0 %v1486
        %1750 = vmatprep.subr.bf16.mxu0 0
        %1751 = vmatpush1.bf16.msra.mxu0 %v1487
        %1752 = vmatprep.subr.bf16.mxu0 0
        %1753 = vmatpush1.bf16.msra.mxu0 %v1488
        %1754 = vmatprep.subr.bf16.mxu0 0
        %1755 = vmatpush1.bf16.msra.mxu0 %v1489
        %1756 = vmatprep.subr.bf16.mxu0 0
        %1757 = vmatpush1.bf16.msra.mxu0 %v1490
        %1758 = vmatprep.subr.bf16.mxu0 0
        %1759 = vmatpush1.bf16.msra.mxu0 %v1491
        %1760 = vmatprep.subr.bf16.mxu0 0
        %1761 = vmatpush1.bf16.msra.mxu0 %v1492
        %1762 = vmatprep.subr.bf16.mxu0 0
        %1763 = vmatpush1.bf16.msra.mxu0 %v1493
        %1764 = vmatprep.subr.bf16.mxu0 0
        %1765 = vmatpush1.bf16.msra.mxu0 %v1494
        %1766 = vmatprep.subr.bf16.mxu0 0
        %1767 = vmatpush1.bf16.msra.mxu0 %v1495
        %1768 = vmatprep.subr.bf16.mxu0 0
        %1769 = vmatpush1.bf16.msra.mxu0 %v1496
        %1770 = vmatprep.mubr.bf16.mxu0 %v711
        %1771 = vmatmul.mubr.bf16.gmra.mrb[0].mxu0 %v640
        %v1772 = vpop.f32.mrb[0].mxu0
        %v1773 = vadd.f32 %v1612, %v1772
        %v1774 = vpop.f32.mrb[0].mxu0
        %v1775 = vpop.f32.mrb[0].mxu0
        %v1776 = vadd.f32 %v1615, %v1775
        %v1777 = vpop.f32.mrb[0].mxu0
        %1778 = vmatprep.mubr.bf16.mxu0 %v720
        %1779 = vmatmul.mubr.bf16.gmra.mrb[0].mxu0 %v643
        %v1780 = vpop.f32.mrb[0].mxu0
        %v1781 = vadd.f32 %v1620, %v1780
        %v1782 = vpop.f32.mrb[0].mxu0
        %v1783 = vpop.f32.mrb[0].mxu0
        %v1784 = vadd.f32 %v1623, %v1783
        %v1785 = vpop.f32.mrb[0].mxu0
        %1786 = vmatprep.mubr.bf16.mxu0 %v729
        %1787 = vmatmul.mubr.bf16.gmra.mrb[0].mxu0 %v646
        %v1788 = vpop.f32.mrb[0].mxu0
        %v1789 = vadd.f32 %v1628, %v1788
        %v1790 = vpop.f32.mrb[0].mxu0
        %v1791 = vpop.f32.mrb[0].mxu0
        %v1792 = vadd.f32 %v1631, %v1791
        %v1793 = vpop.f32.mrb[0].mxu0
        %1794 = vmatprep.mubr.bf16.mxu0 %v738
        %1795 = vmatmul.mubr.bf16.gmra.mrb[0].mxu0 %v649
        %v1796 = vpop.f32.mrb[0].mxu0
        %v1797 = vadd.f32 %v1636, %v1796
        %v1798 = vpop.f32.mrb[0].mxu0
        %v1799 = vpop.f32.mrb[0].mxu0
        %v1800 = vadd.f32 %v1639, %v1799
        %v1801 = vpop.f32.mrb[0].mxu0
        %1802 = vmatprep.mubr.bf16.mxu0 %v747
        %1803 = vmatmul.mubr.bf16.gmra.mrb[0].mxu0 %v652
        %v1804 = vpop.f32.mrb[0].mxu0
        %v1805 = vadd.f32 %v1644, %v1804
        %v1806 = vpop.f32.mrb[0].mxu0
        %v1807 = vpop.f32.mrb[0].mxu0
        %v1808 = vadd.f32 %v1647, %v1807
        %v1809 = vpop.f32.mrb[0].mxu0
        %1810 = vmatprep.mubr.bf16.mxu0 %v756
        %1811 = vmatmul.mubr.bf16.gmra.mrb[0].mxu0 %v655
        %v1812 = vpop.f32.mrb[0].mxu0
        %v1813 = vadd.f32 %v1652, %v1812
        %v1814 = vpop.f32.mrb[0].mxu0
        %v1815 = vpop.f32.mrb[0].mxu0
        %v1816 = vadd.f32 %v1655, %v1815
        %v1817 = vpop.f32.mrb[0].mxu0
        %1818 = vmatprep.mubr.bf16.mxu0 %v765
        %1819 = vmatmul.mubr.bf16.gmra.mrb[0].mxu0 %v658
        %v1820 = vpop.f32.mrb[0].mxu0
        %v1821 = vadd.f32 %v1660, %v1820
        %v1822 = vpop.f32.mrb[0].mxu0
        %v1823 = vpop.f32.mrb[0].mxu0
        %v1824 = vadd.f32 %v1663, %v1823
        %v1825 = vpop.f32.mrb[0].mxu0
        %1826 = vmatprep.mubr.bf16.mxu0 %v774
        %1827 = vmatmul.mubr.bf16.gmra.mrb[0].mxu0 %v661
        %v1828 = vpop.f32.mrb[0].mxu0
        %v1829 = vadd.f32 %v1668, %v1828
        %v1830 = vpop.f32.mrb[0].mxu0
        %v1831 = vpop.f32.mrb[0].mxu0
        %v1832 = vadd.f32 %v1671, %v1831
        %v1833 = vpop.f32.mrb[0].mxu0
        %1834 = vmatprep.mubr.bf16.mxu0 %v783
        %1835 = vmatmul.mubr.bf16.gmra.mrb[0].mxu0 %v664
        %v1836 = vpop.f32.mrb[0].mxu0
        %v1837 = vadd.f32 %v1676, %v1836
        %v1838 = vpop.f32.mrb[0].mxu0
        %v1839 = vpop.f32.mrb[0].mxu0
        %v1840 = vadd.f32 %v1679, %v1839
        %v1841 = vpop.f32.mrb[0].mxu0
        %1842 = vmatprep.mubr.bf16.mxu0 %v792
        %1843 = vmatmul.mubr.bf16.gmra.mrb[0].mxu0 %v667
        %v1844 = vpop.f32.mrb[0].mxu0
        %v1845 = vadd.f32 %v1684, %v1844
        %v1846 = vpop.f32.mrb[0].mxu0
        %v1847 = vpop.f32.mrb[0].mxu0
        %v1848 = vadd.f32 %v1687, %v1847
        %v1849 = vpop.f32.mrb[0].mxu0
        %1850 = vmatprep.mubr.bf16.mxu0 %v801
        %1851 = vmatmul.mubr.bf16.gmra.mrb[0].mxu0 %v670
        %v1852 = vpop.f32.mrb[0].mxu0
        %v1853 = vadd.f32 %v1692, %v1852
        %v1854 = vpop.f32.mrb[0].mxu0
        %v1855 = vpop.f32.mrb[0].mxu0
        %v1856 = vadd.f32 %v1695, %v1855
        %v1857 = vpop.f32.mrb[0].mxu0
        %1858 = vmatprep.mubr.bf16.mxu0 %v810
        %1859 = vmatmul.mubr.bf16.gmra.mrb[0].mxu0 %v673
        %v1860 = vpop.f32.mrb[0].mxu0
        %v1861 = vadd.f32 %v1700, %v1860
        %v1862 = vpop.f32.mrb[0].mxu0
        %v1863 = vpop.f32.mrb[0].mxu0
        %v1864 = vadd.f32 %v1703, %v1863
        %v1865 = vpop.f32.mrb[0].mxu0
        %1866 = vmatprep.mubr.bf16.mxu0 %v819
        %1867 = vmatmul.mubr.bf16.gmra.mrb[0].mxu0 %v676
        %v1868 = vpop.f32.mrb[0].mxu0
        %v1869 = vadd.f32 %v1708, %v1868
        %v1870 = vpop.f32.mrb[0].mxu0
        %v1871 = vpop.f32.mrb[0].mxu0
        %v1872 = vadd.f32 %v1711, %v1871
        %v1873 = vpop.f32.mrb[0].mxu0
        %1874 = vmatprep.mubr.bf16.mxu0 %v828
        %1875 = vmatmul.mubr.bf16.gmra.mrb[0].mxu0 %v679
        %v1876 = vpop.f32.mrb[0].mxu0
        %v1877 = vadd.f32 %v1716, %v1876
        %v1878 = vpop.f32.mrb[0].mxu0
        %v1879 = vpop.f32.mrb[0].mxu0
        %v1880 = vadd.f32 %v1719, %v1879
        %v1881 = vpop.f32.mrb[0].mxu0
        %1882 = vmatprep.mubr.bf16.mxu0 %v837
        %1883 = vmatmul.mubr.bf16.gmra.mrb[0].mxu0 %v682
        %v1884 = vpop.f32.mrb[0].mxu0
        %v1885 = vadd.f32 %v1724, %v1884
        %v1886 = vpop.f32.mrb[0].mxu0
        %v1887 = vpop.f32.mrb[0].mxu0
        %v1888 = vadd.f32 %v1727, %v1887
        %v1889 = vpop.f32.mrb[0].mxu0
        %1890 = vmatprep.mubr.bf16.mxu0 %v846
        %1891 = vmatmul.mubr.bf16.gmra.mrb[0].mxu0 %v685
        %v1892 = vpop.f32.mrb[0].mxu0
        %v1893 = vadd.f32 %v1732, %v1892
        %v1894 = vpop.f32.mrb[0].mxu0
        %v1895 = vpop.f32.mrb[0].mxu0
        %v1896 = vadd.f32 %v1735, %v1895
        %v1897 = vpop.f32.mrb[0].mxu0
        %1898 = vdwg.mxu0
        %1899 = vmatprep.subr.bf16.mxu0 0
        %1900 = vmatpush1.bf16.msra.mxu0 %v1497
        %1901 = vmatprep.subr.bf16.mxu0 0
        %1902 = vmatpush1.bf16.msra.mxu0 %v1498
        %1903 = vmatprep.subr.bf16.mxu0 0
        %1904 = vmatpush1.bf16.msra.mxu0 %v1499
        %1905 = vmatprep.subr.bf16.mxu0 0
        %1906 = vmatpush1.bf16.msra.mxu0 %v1500
        %1907 = vmatprep.subr.bf16.mxu0 0
        %1908 = vmatpush1.bf16.msra.mxu0 %v1501
        %1909 = vmatprep.subr.bf16.mxu0 0
        %1910 = vmatpush1.bf16.msra.mxu0 %v1502
        %1911 = vmatprep.subr.bf16.mxu0 0
        %1912 = vmatpush1.bf16.msra.mxu0 %v1503
        %1913 = vmatprep.subr.bf16.mxu0 0
        %1914 = vmatpush1.bf16.msra.mxu0 %v1504
        %1915 = vmatprep.subr.bf16.mxu0 0
        %1916 = vmatpush1.bf16.msra.mxu0 %v1505
        %1917 = vmatprep.subr.bf16.mxu0 0
        %1918 = vmatpush1.bf16.msra.mxu0 %v1506
        %1919 = vmatprep.subr.bf16.mxu0 0
        %1920 = vmatpush1.bf16.msra.mxu0 %v1507
        %1921 = vmatprep.subr.bf16.mxu0 0
        %1922 = vmatpush1.bf16.msra.mxu0 %v1508
        %1923 = vmatprep.subr.bf16.mxu0 0
        %1924 = vmatpush1.bf16.msra.mxu0 %v1509
        %1925 = vmatprep.subr.bf16.mxu0 0
        %1926 = vmatpush1.bf16.msra.mxu0 %v1510
        %1927 = vmatprep.subr.bf16.mxu0 0
        %1928 = vmatpush1.bf16.msra.mxu0 %v1511
        %1929 = vmatprep.subr.bf16.mxu0 0
        %1930 = vmatpush1.bf16.msra.mxu0 %v1512
        %1931 = vmatprep.mubr.bf16.mxu0 %v935
        %1932 = vmatmul.mubr.bf16.gmra.mrb[0].mxu0 %v866
        %v1933 = vpop.f32.mrb[0].mxu0
        %v1934 = vadd.f32 %v1773, %v1933
        %v1935 = vpop.f32.mrb[0].mxu0
        %v1936 = vpop.f32.mrb[0].mxu0
        %v1937 = vadd.f32 %v1776, %v1936
        %v1938 = vpop.f32.mrb[0].mxu0
        %1939 = vmatprep.mubr.bf16.mxu0 %v942
        %1940 = vmatmul.mubr.bf16.gmra.mrb[0].mxu0 %v869
        %v1941 = vpop.f32.mrb[0].mxu0
        %v1942 = vadd.f32 %v1781, %v1941
        %v1943 = vpop.f32.mrb[0].mxu0
        %v1944 = vpop.f32.mrb[0].mxu0
        %v1945 = vadd.f32 %v1784, %v1944
        %v1946 = vpop.f32.mrb[0].mxu0
        %1947 = vmatprep.mubr.bf16.mxu0 %v949
        %1948 = vmatmul.mubr.bf16.gmra.mrb[0].mxu0 %v872
        %v1949 = vpop.f32.mrb[0].mxu0
        %v1950 = vadd.f32 %v1789, %v1949
        %v1951 = vpop.f32.mrb[0].mxu0
        %v1952 = vpop.f32.mrb[0].mxu0
        %v1953 = vadd.f32 %v1792, %v1952
        %v1954 = vpop.f32.mrb[0].mxu0
        %1955 = vmatprep.mubr.bf16.mxu0 %v956
        %1956 = vmatmul.mubr.bf16.gmra.mrb[0].mxu0 %v875
        %v1957 = vpop.f32.mrb[0].mxu0
        %v1958 = vadd.f32 %v1797, %v1957
        %v1959 = vpop.f32.mrb[0].mxu0
        %v1960 = vpop.f32.mrb[0].mxu0
        %v1961 = vadd.f32 %v1800, %v1960
        %v1962 = vpop.f32.mrb[0].mxu0
        %1963 = vmatprep.mubr.bf16.mxu0 %v963
        %1964 = vmatmul.mubr.bf16.gmra.mrb[0].mxu0 %v878
        %v1965 = vpop.f32.mrb[0].mxu0
        %v1966 = vadd.f32 %v1805, %v1965
        %v1967 = vpop.f32.mrb[0].mxu0
        %v1968 = vpop.f32.mrb[0].mxu0
        %v1969 = vadd.f32 %v1808, %v1968
        %v1970 = vpop.f32.mrb[0].mxu0
        %1971 = vmatprep.mubr.bf16.mxu0 %v970
        %1972 = vmatmul.mubr.bf16.gmra.mrb[0].mxu0 %v881
        %v1973 = vpop.f32.mrb[0].mxu0
        %v1974 = vadd.f32 %v1813, %v1973
        %v1975 = vpop.f32.mrb[0].mxu0
        %v1976 = vpop.f32.mrb[0].mxu0
        %v1977 = vadd.f32 %v1816, %v1976
        %v1978 = vpop.f32.mrb[0].mxu0
        %1979 = vmatprep.mubr.bf16.mxu0 %v977
        %1980 = vmatmul.mubr.bf16.gmra.mrb[0].mxu0 %v884
        %v1981 = vpop.f32.mrb[0].mxu0
        %v1982 = vadd.f32 %v1821, %v1981
        %v1983 = vpop.f32.mrb[0].mxu0
        %v1984 = vpop.f32.mrb[0].mxu0
        %v1985 = vadd.f32 %v1824, %v1984
        %v1986 = vpop.f32.mrb[0].mxu0
        %1987 = vmatprep.mubr.bf16.mxu0 %v984
        %1988 = vmatmul.mubr.bf16.gmra.mrb[0].mxu0 %v887
        %v1989 = vpop.f32.mrb[0].mxu0
        %v1990 = vadd.f32 %v1829, %v1989
        %v1991 = vpop.f32.mrb[0].mxu0
        %v1992 = vpop.f32.mrb[0].mxu0
        %v1993 = vadd.f32 %v1832, %v1992
        %v1994 = vpop.f32.mrb[0].mxu0
        %1995 = vmatprep.mubr.bf16.mxu0 %v991
        %1996 = vmatmul.mubr.bf16.gmra.mrb[0].mxu0 %v890
        %v1997 = vpop.f32.mrb[0].mxu0
        %v1998 = vadd.f32 %v1837, %v1997
        %v1999 = vpop.f32.mrb[0].mxu0
        %v2000 = vpop.f32.mrb[0].mxu0
        %v2001 = vadd.f32 %v1840, %v2000
        %v2002 = vpop.f32.mrb[0].mxu0
        %2003 = vmatprep.mubr.bf16.mxu0 %v998
        %2004 = vmatmul.mubr.bf16.gmra.mrb[0].mxu0 %v893
        %v2005 = vpop.f32.mrb[0].mxu0
        %v2006 = vadd.f32 %v1845, %v2005
        %v2007 = vpop.f32.mrb[0].mxu0
        %v2008 = vpop.f32.mrb[0].mxu0
        %v2009 = vadd.f32 %v1848, %v2008
        %v2010 = vpop.f32.mrb[0].mxu0
        %2011 = vmatprep.mubr.bf16.mxu0 %v1005
        %2012 = vmatmul.mubr.bf16.gmra.mrb[0].mxu0 %v896
        %v2013 = vpop.f32.mrb[0].mxu0
        %v2014 = vadd.f32 %v1853, %v2013
        %v2015 = vpop.f32.mrb[0].mxu0
        %v2016 = vpop.f32.mrb[0].mxu0
        %v2017 = vadd.f32 %v1856, %v2016
        %v2018 = vpop.f32.mrb[0].mxu0
        %2019 = vmatprep.mubr.bf16.mxu0 %v1012
        %2020 = vmatmul.mubr.bf16.gmra.mrb[0].mxu0 %v899
        %v2021 = vpop.f32.mrb[0].mxu0
        %v2022 = vadd.f32 %v1861, %v2021
        %v2023 = vpop.f32.mrb[0].mxu0
        %v2024 = vpop.f32.mrb[0].mxu0
        %v2025 = vadd.f32 %v1864, %v2024
        %v2026 = vpop.f32.mrb[0].mxu0
        %2027 = vmatprep.mubr.bf16.mxu0 %v1019
        %2028 = vmatmul.mubr.bf16.gmra.mrb[0].mxu0 %v902
        %v2029 = vpop.f32.mrb[0].mxu0
        %v2030 = vadd.f32 %v1869, %v2029
        %v2031 = vpop.f32.mrb[0].mxu0
        %v2032 = vpop.f32.mrb[0].mxu0
        %v2033 = vadd.f32 %v1872, %v2032
        %v2034 = vpop.f32.mrb[0].mxu0
        %2035 = vmatprep.mubr.bf16.mxu0 %v1026
        %2036 = vmatmul.mubr.bf16.gmra.mrb[0].mxu0 %v905
        %v2037 = vpop.f32.mrb[0].mxu0
        %v2038 = vadd.f32 %v1877, %v2037
        %v2039 = vpop.f32.mrb[0].mxu0
        %v2040 = vpop.f32.mrb[0].mxu0
        %v2041 = vadd.f32 %v1880, %v2040
        %v2042 = vpop.f32.mrb[0].mxu0
        %2043 = vmatprep.mubr.bf16.mxu0 %v1033
        %2044 = vmatmul.mubr.bf16.gmra.mrb[0].mxu0 %v908
        %v2045 = vpop.f32.mrb[0].mxu0
        %v2046 = vadd.f32 %v1885, %v2045
        %v2047 = vpop.f32.mrb[0].mxu0
        %v2048 = vpop.f32.mrb[0].mxu0
        %v2049 = vadd.f32 %v1888, %v2048
        %v2050 = vpop.f32.mrb[0].mxu0
        %2051 = vmatprep.mubr.bf16.mxu0 %v1040
        %2052 = vmatmul.mubr.bf16.gmra.mrb[0].mxu0 %v911
        %v2053 = vpop.f32.mrb[0].mxu0
        %v2054 = vadd.f32 %v1893, %v2053
        %v2055 = vpop.f32.mrb[0].mxu0
        %v2056 = vpop.f32.mrb[0].mxu0
        %v2057 = vadd.f32 %v1896, %v2056
        %v2058 = vpop.f32.mrb[0].mxu0
        %2059 = vdwg.mxu0
        %2060 = vmatprep.subr.bf16.mxu0 0
        %2061 = vmatpush1.bf16.msra.mxu0 %v1513
        %2062 = vmatprep.subr.bf16.mxu0 0
        %2063 = vmatpush1.bf16.msra.mxu0 %v1514
        %2064 = vmatprep.subr.bf16.mxu0 0
        %2065 = vmatpush1.bf16.msra.mxu0 %v1515
        %2066 = vmatprep.subr.bf16.mxu0 0
        %2067 = vmatpush1.bf16.msra.mxu0 %v1516
        %2068 = vmatprep.subr.bf16.mxu0 0
        %2069 = vmatpush1.bf16.msra.mxu0 %v1517
        %2070 = vmatprep.subr.bf16.mxu0 0
        %2071 = vmatpush1.bf16.msra.mxu0 %v1518
        %2072 = vmatprep.subr.bf16.mxu0 0
        %2073 = vmatpush1.bf16.msra.mxu0 %v1519
        %2074 = vmatprep.subr.bf16.mxu0 0
        %2075 = vmatpush1.bf16.msra.mxu0 %v1520
        %2076 = vmatprep.subr.bf16.mxu0 0
        %2077 = vmatpush1.bf16.msra.mxu0 0
        %2078 = vmatprep.subr.bf16.mxu0 0
        %2079 = vmatpush1.bf16.msra.mxu0 0
        %2080 = vmatprep.subr.bf16.mxu0 0
        %2081 = vmatpush1.bf16.msra.mxu0 0
        %2082 = vmatprep.subr.bf16.mxu0 0
        %2083 = vmatpush1.bf16.msra.mxu0 0
        %2084 = vmatprep.subr.bf16.mxu0 0
        %2085 = vmatpush1.bf16.msra.mxu0 0
        %2086 = vmatprep.subr.bf16.mxu0 0
        %2087 = vmatpush1.bf16.msra.mxu0 0
        %2088 = vmatprep.subr.bf16.mxu0 0
        %2089 = vmatpush1.bf16.msra.mxu0 0
        %2090 = vmatprep.subr.bf16.mxu0 0
        %2091 = vmatpush1.bf16.msra.mxu0 0
        %2092 = vmatprep.mubr.bf16.mxu0 0
        %2093 = vmatmul.mubr.bf16.gmra.mrb[0].mxu0 %v1060
        %v2094 = vpop.f32.mrb[0].mxu0
        %v2095 = vadd.f32 %v1934, %v2094
        %v2096 = vpop.f32.mrb[0].mxu0
        %v2097 = vpop.f32.mrb[0].mxu0
        %v2098 = vadd.f32 %v1937, %v2097
        %v2099 = vpop.f32.mrb[0].mxu0
        %2100 = vmatprep.mubr.bf16.mxu0 0
        %2101 = vmatmul.mubr.bf16.gmra.mrb[0].mxu0 %v1063
        %v2102 = vpop.f32.mrb[0].mxu0
        %v2103 = vadd.f32 %v1942, %v2102
        %v2104 = vpop.f32.mrb[0].mxu0
        %v2105 = vpop.f32.mrb[0].mxu0
        %v2106 = vadd.f32 %v1945, %v2105
        %v2107 = vpop.f32.mrb[0].mxu0
        %2108 = vmatprep.mubr.bf16.mxu0 0
        %2109 = vmatmul.mubr.bf16.gmra.mrb[0].mxu0 %v1066
        %v2110 = vpop.f32.mrb[0].mxu0
        %v2111 = vadd.f32 %v1950, %v2110
        %v2112 = vpop.f32.mrb[0].mxu0
        %v2113 = vpop.f32.mrb[0].mxu0
        %v2114 = vadd.f32 %v1953, %v2113
        %v2115 = vpop.f32.mrb[0].mxu0
        %2116 = vmatprep.mubr.bf16.mxu0 0
        %2117 = vmatmul.mubr.bf16.gmra.mrb[0].mxu0 %v1069
        %v2118 = vpop.f32.mrb[0].mxu0
        %v2119 = vadd.f32 %v1958, %v2118
        %v2120 = vpop.f32.mrb[0].mxu0
        %v2121 = vpop.f32.mrb[0].mxu0
        %v2122 = vadd.f32 %v1961, %v2121
        %v2123 = vpop.f32.mrb[0].mxu0
        %2124 = vmatprep.mubr.bf16.mxu0 0
        %2125 = vmatmul.mubr.bf16.gmra.mrb[0].mxu0 %v1072
        %v2126 = vpop.f32.mrb[0].mxu0
        %v2127 = vadd.f32 %v1966, %v2126
        %v2128 = vpop.f32.mrb[0].mxu0
        %v2129 = vpop.f32.mrb[0].mxu0
        %v2130 = vadd.f32 %v1969, %v2129
        %v2131 = vpop.f32.mrb[0].mxu0
        %2132 = vmatprep.mubr.bf16.mxu0 0
        %2133 = vmatmul.mubr.bf16.gmra.mrb[0].mxu0 %v1075
        %v2134 = vpop.f32.mrb[0].mxu0
        %v2135 = vadd.f32 %v1974, %v2134
        %v2136 = vpop.f32.mrb[0].mxu0
        %v2137 = vpop.f32.mrb[0].mxu0
        %v2138 = vadd.f32 %v1977, %v2137
        %v2139 = vpop.f32.mrb[0].mxu0
        %2140 = vmatprep.mubr.bf16.mxu0 0
        %2141 = vmatmul.mubr.bf16.gmra.mrb[0].mxu0 %v1078
        %v2142 = vpop.f32.mrb[0].mxu0
        %v2143 = vadd.f32 %v1982, %v2142
        %v2144 = vpop.f32.mrb[0].mxu0
        %v2145 = vpop.f32.mrb[0].mxu0
        %v2146 = vadd.f32 %v1985, %v2145
        %v2147 = vpop.f32.mrb[0].mxu0
        %2148 = vmatprep.mubr.bf16.mxu0 0
        %2149 = vmatmul.mubr.bf16.gmra.mrb[0].mxu0 %v1081
        %v2150 = vpop.f32.mrb[0].mxu0
        %v2151 = vadd.f32 %v1990, %v2150
        %v2152 = vpop.f32.mrb[0].mxu0
        %v2153 = vpop.f32.mrb[0].mxu0
        %v2154 = vadd.f32 %v1993, %v2153
        %v2155 = vpop.f32.mrb[0].mxu0
        %2156 = vmatprep.mubr.bf16.mxu0 0
        %2157 = vmatmul.mubr.bf16.gmra.mrb[0].mxu0 %v1084
        %v2158 = vpop.f32.mrb[0].mxu0
        %v2159 = vadd.f32 %v1998, %v2158
        %v2160 = vpop.f32.mrb[0].mxu0
        %v2161 = vpop.f32.mrb[0].mxu0
        %v2162 = vadd.f32 %v2001, %v2161
        %v2163 = vpop.f32.mrb[0].mxu0
        %2164 = vmatprep.mubr.bf16.mxu0 0
        %2165 = vmatmul.mubr.bf16.gmra.mrb[0].mxu0 %v1087
        %v2166 = vpop.f32.mrb[0].mxu0
        %v2167 = vadd.f32 %v2006, %v2166
        %v2168 = vpop.f32.mrb[0].mxu0
        %v2169 = vpop.f32.mrb[0].mxu0
        %v2170 = vadd.f32 %v2009, %v2169
        %v2171 = vpop.f32.mrb[0].mxu0
        %2172 = vmatprep.mubr.bf16.mxu0 0
        %2173 = vmatmul.mubr.bf16.gmra.mrb[0].mxu0 %v1090
        %v2174 = vpop.f32.mrb[0].mxu0
        %v2175 = vadd.f32 %v2014, %v2174
        %v2176 = vpop.f32.mrb[0].mxu0
        %v2177 = vpop.f32.mrb[0].mxu0
        %v2178 = vadd.f32 %v2017, %v2177
        %v2179 = vpop.f32.mrb[0].mxu0
        %2180 = vmatprep.mubr.bf16.mxu0 0
        %2181 = vmatmul.mubr.bf16.gmra.mrb[0].mxu0 %v1093
        %v2182 = vpop.f32.mrb[0].mxu0
        %v2183 = vadd.f32 %v2022, %v2182
        %v2184 = vpop.f32.mrb[0].mxu0
        %v2185 = vpop.f32.mrb[0].mxu0
        %v2186 = vadd.f32 %v2025, %v2185
        %v2187 = vpop.f32.mrb[0].mxu0
        %2188 = vmatprep.mubr.bf16.mxu0 0
        %2189 = vmatmul.mubr.bf16.gmra.mrb[0].mxu0 %v1096
        %v2190 = vpop.f32.mrb[0].mxu0
        %v2191 = vadd.f32 %v2030, %v2190
        %v2192 = vpop.f32.mrb[0].mxu0
        %v2193 = vpop.f32.mrb[0].mxu0
        %v2194 = vadd.f32 %v2033, %v2193
        %v2195 = vpop.f32.mrb[0].mxu0
        %2196 = vmatprep.mubr.bf16.mxu0 0
        %2197 = vmatmul.mubr.bf16.gmra.mrb[0].mxu0 %v1099
        %v2198 = vpop.f32.mrb[0].mxu0
        %v2199 = vadd.f32 %v2038, %v2198
        %v2200 = vpop.f32.mrb[0].mxu0
        %v2201 = vpop.f32.mrb[0].mxu0
        %v2202 = vadd.f32 %v2041, %v2201
        %v2203 = vpop.f32.mrb[0].mxu0
        %2204 = vmatprep.mubr.bf16.mxu0 0
        %2205 = vmatmul.mubr.bf16.gmra.mrb[0].mxu0 %v1102
        %v2206 = vpop.f32.mrb[0].mxu0
        %v2207 = vadd.f32 %v2046, %v2206
        %v2208 = vpop.f32.mrb[0].mxu0
        %v2209 = vpop.f32.mrb[0].mxu0
        %v2210 = vadd.f32 %v2049, %v2209
        %v2211 = vpop.f32.mrb[0].mxu0
        %2212 = vmatprep.mubr.bf16.mxu0 0
        %2213 = vmatmul.mubr.bf16.gmra.mrb[0].mxu0 %v1105
        %v2214 = vpop.f32.mrb[0].mxu0
        %v2215 = vadd.f32 %v2054, %v2214
        %v2216 = vpop.f32.mrb[0].mxu0
        %v2217 = vpop.f32.mrb[0].mxu0
        %v2218 = vadd.f32 %v2057, %v2217
        %v2219 = vpop.f32.mrb[0].mxu0
        %2220 = vdwg.mxu0
        %v2221 = vmax.f32 %v2095, 0.0
        %v2222 = vmax.f32 %v2098, 0.0
        %v2223 = vmax.f32 %v2103, 0.0
        %v2224 = vmax.f32 %v2106, 0.0
        %v2225 = vmax.f32 %v2111, 0.0
        %v2226 = vmax.f32 %v2114, 0.0
        %v2227 = vmax.f32 %v2119, 0.0
        %v2228 = vmax.f32 %v2122, 0.0
        %v2229 = vmax.f32 %v2127, 0.0
        %v2230 = vmax.f32 %v2130, 0.0
        %v2231 = vmax.f32 %v2135, 0.0
        %v2232 = vmax.f32 %v2138, 0.0
        %v2233 = vmax.f32 %v2143, 0.0
        %v2234 = vmax.f32 %v2146, 0.0
        %v2235 = vmax.f32 %v2151, 0.0
        %v2236 = vmax.f32 %v2154, 0.0
        %v2237 = vmax.f32 %v2159, 0.0
        %v2238 = vmax.f32 %v2162, 0.0
        %v2239 = vmax.f32 %v2167, 0.0
        %v2240 = vmax.f32 %v2170, 0.0
        %v2241 = vmax.f32 %v2175, 0.0
        %v2242 = vmax.f32 %v2178, 0.0
        %v2243 = vmax.f32 %v2183, 0.0
        %v2244 = vmax.f32 %v2186, 0.0
        %v2245 = vmax.f32 %v2191, 0.0
        %v2246 = vmax.f32 %v2194, 0.0
        %v2247 = vmax.f32 %v2199, 0.0
        %v2248 = vmax.f32 %v2202, 0.0
        %v2249 = vmax.f32 %v2207, 0.0
        %v2250 = vmax.f32 %v2210, 0.0
        %v2251 = vmax.f32 %v2215, 0.0
        %v2252 = vmax.f32 %v2218, 0.0
        %v2253 = vpack.c.bf16 %v2222, %v2221
        %v2254 = vpack.c.bf16 %v2224, %v2223
        %v2255 = vpack.c.bf16 %v2226, %v2225
        %v2256 = vpack.c.bf16 %v2228, %v2227
        %v2257 = vpack.c.bf16 %v2230, %v2229
        %v2258 = vpack.c.bf16 %v2232, %v2231
        %v2259 = vpack.c.bf16 %v2234, %v2233
        %v2260 = vpack.c.bf16 %v2236, %v2235
        %v2261 = vpack.c.bf16 %v2238, %v2237
        %v2262 = vpack.c.bf16 %v2240, %v2239
        %v2263 = vpack.c.bf16 %v2242, %v2241
        %v2264 = vpack.c.bf16 %v2244, %v2243
        %v2265 = vpack.c.bf16 %v2246, %v2245
        %v2266 = vpack.c.bf16 %v2248, %v2247
        %v2267 = vpack.c.bf16 %v2250, %v2249
        %v2268 = vpack.c.bf16 %v2252, %v2251
        %v2285 = vunpack.c.l.b16 %v2253
        %v2286 = vunpack.c.h.b16 %v2253
        %v2287 = vunpack.c.l.b16 %v2254
        %v2288 = vunpack.c.h.b16 %v2254
        %v2289 = vunpack.c.l.b16 %v2255
        %v2290 = vunpack.c.h.b16 %v2255
        %v2291 = vunpack.c.l.b16 %v2256
        %v2292 = vunpack.c.h.b16 %v2256
        %v2293 = vunpack.c.l.b16 %v2257
        %v2294 = vunpack.c.h.b16 %v2257
        %v2295 = vunpack.c.l.b16 %v2258
        %v2296 = vunpack.c.h.b16 %v2258
        %v2297 = vunpack.c.l.b16 %v2259
        %v2298 = vunpack.c.h.b16 %v2259
        %v2299 = vunpack.c.l.b16 %v2260
        %v2300 = vunpack.c.h.b16 %v2260
        %v2301 = vunpack.c.l.b16 %v2261
        %v2302 = vunpack.c.h.b16 %v2261
        %v2303 = vunpack.c.l.b16 %v2262
        %v2304 = vunpack.c.h.b16 %v2262
        %v2305 = vunpack.c.l.b16 %v2263
        %v2306 = vunpack.c.h.b16 %v2263
        %v2307 = vunpack.c.l.b16 %v2264
        %v2308 = vunpack.c.h.b16 %v2264
        %v2309 = vunpack.c.l.b16 %v2265
        %v2310 = vunpack.c.h.b16 %v2265
        %v2311 = vunpack.c.l.b16 %v2266
        %v2312 = vunpack.c.h.b16 %v2266
        %v2313 = vunpack.c.l.b16 %v2267
        %v2314 = vunpack.c.h.b16 %v2267
        %v2315 = vunpack.c.l.b16 %v2268
        %v2316 = vunpack.c.h.b16 %v2268
        %v2317 = vpack.c.b16 %v2285, %v2285
        %v2318 = vpack.c.b16 %v2286, %v2286
        %v2319 = vpack.c.b16 %v2287, %v2287
        %v2320 = vpack.c.b16 %v2288, %v2288
        %v2321 = vpack.c.b16 %v2289, %v2289
        %v2322 = vpack.c.b16 %v2290, %v2290
        %v2323 = vpack.c.b16 %v2291, %v2291
        %v2324 = vpack.c.b16 %v2292, %v2292
        %v2325 = vpack.c.b16 %v2293, %v2293
        %v2326 = vpack.c.b16 %v2294, %v2294
        %v2327 = vpack.c.b16 %v2295, %v2295
        %v2328 = vpack.c.b16 %v2296, %v2296
        %v2329 = vpack.c.b16 %v2297, %v2297
        %v2330 = vpack.c.b16 %v2298, %v2298
        %v2331 = vpack.c.b16 %v2299, %v2299
        %v2332 = vpack.c.b16 %v2300, %v2300
        %v2333 = vpack.c.b16 %v2301, %v2301
        %v2334 = vpack.c.b16 %v2302, %v2302
        %v2335 = vpack.c.b16 %v2303, %v2303
        %v2336 = vpack.c.b16 %v2304, %v2304
        %v2337 = vpack.c.b16 %v2305, %v2305
        %v2338 = vpack.c.b16 %v2306, %v2306
        %v2339 = vpack.c.b16 %v2307, %v2307
        %v2340 = vpack.c.b16 %v2308, %v2308
        %v2341 = vpack.c.b16 %v2309, %v2309
        %v2342 = vpack.c.b16 %v2310, %v2310
        %v2343 = vpack.c.b16 %v2311, %v2311
        %v2344 = vpack.c.b16 %v2312, %v2312
        %v2345 = vpack.c.b16 %v2313, %v2313
        %v2346 = vpack.c.b16 %v2314, %v2314
        %v2347 = vpack.c.b16 %v2315, %v2315
        %v2348 = vpack.c.b16 %v2316, %v2316
        %2381 = vst [vmem:[%s229] sm:$0xf] %v2317
        %2382 = vst [vmem:[%s229 + $0x4] sm:$0xf] %v2318
        %2383 = vst [vmem:[%s229 + $0x8] sm:$0xf] %v2319
        %2384 = vst [vmem:[%s229 + $0xc] sm:$0xf] %v2320
        %2385 = vst [vmem:[%s229 + $0x10] sm:$0xf] %v2321
        %2386 = vst [vmem:[%s229 + $0x14] sm:$0xf] %v2322
        %2387 = vst [vmem:[%s229 + $0x18] sm:$0xf] %v2323
        %2388 = vst [vmem:[%s229 + $0x1c] sm:$0xf] %v2324
        %2389 = vst [vmem:[%s229 + $0x20] sm:$0xf] %v2325
        %2390 = vst [vmem:[%s229 + $0x24] sm:$0xf] %v2326
        %2391 = vst [vmem:[%s229 + $0x28] sm:$0xf] %v2327
        %2392 = vst [vmem:[%s229 + $0x2c] sm:$0xf] %v2328
        %2393 = vst [vmem:[%s229 + $0x30] sm:$0xf] %v2329
        %2394 = vst [vmem:[%s229 + $0x34] sm:$0xf] %v2330
        %2395 = vst [vmem:[%s229 + $0x38] sm:$0xf] %v2331
        %2396 = vst [vmem:[%s229 + $0x3c] sm:$0xf] %v2332
        %2397 = vst [vmem:[%s229 + $0x40] sm:$0xf] %v2333
        %2398 = vst [vmem:[%s229 + $0x44] sm:$0xf] %v2334
        %2399 = vst [vmem:[%s229 + $0x48] sm:$0xf] %v2335
        %2400 = vst [vmem:[%s229 + $0x4c] sm:$0xf] %v2336
        %2401 = vst [vmem:[%s229 + $0x50] sm:$0xf] %v2337
        %2402 = vst [vmem:[%s229 + $0x54] sm:$0xf] %v2338
        %2403 = vst [vmem:[%s229 + $0x58] sm:$0xf] %v2339
        %2404 = vst [vmem:[%s229 + $0x5c] sm:$0xf] %v2340
        %2405 = vst [vmem:[%s229 + $0x60] sm:$0xf] %v2341
        %2406 = vst [vmem:[%s229 + $0x64] sm:$0xf] %v2342
        %2407 = vst [vmem:[%s229 + $0x68] sm:$0xf] %v2343
        %2408 = vst [vmem:[%s229 + $0x6c] sm:$0xf] %v2344
        %2409 = vst [vmem:[%s229 + $0x70] sm:$0xf] %v2345
        %2410 = vst [vmem:[%s229 + $0x74] sm:$0xf] %v2346
        %2411 = vst [vmem:[%s229 + $0x78] sm:$0xf] %v2347
        %2412 = vst [vmem:[%s229 + $0x7c] sm:$0xf] %v2348
        %s2413 = sand.u32 %s111, 1
        %s2414 = scalar_lea.sflag [#allocation4], %s2413
        %s2415 = sand.u32 %s111, 1
        %s2416 = smul.addr %s2415, 128
        %s2417 = scalar_lea.vmem [#allocation8], %s2416
        // Predicated region
        $region45: #{inceptionB_forward.9} parent=31 // pred_check
          %p2418 = pneg %p121
        $region46: #{inceptionB_forward.9} parent=31 // pred_check_branch
          %2420 = sbr.rel (%p2418) target = $region48
        $region47: #{inceptionB_forward.9} parent=31 // pred_region
          %s2421 = smul.u32 16, %s26
          %s2423 = ssub.s32 2048, 2048
          %2424 = vsyncadd %s2414, %s2423
          %s2425 = smul.addr %s2421, 2
          %s2426 = smul.addr %s25, 32
          %s2427 = sadd.s32 %s2425, %s2426
          %s2428 = smul.addr %s2427, 64
          %s2429 = scalar_lea.hbm %s3, %s2428
          %s2430 = sshll.u32 %s2417, 4
          %s2431 = int_to_ptr.vmem [resolvable:$true] %s2430
          %2436 = dma.vmem_to_hbm [thread:$0]  %s2431, 2048, %s2429, %s2414, 64, 64, 4
        $region48: #{inceptionB_forward.9} parent=31 // pred_fallthru
          _
      $region32: #{inceptionB_forward.9} parent=5 // pred_fallthru
        _
      %p2437 = scmp.le.s32.totalorder 2, %s16
      // Predicated region
      $region49: #{inceptionB_forward.9} parent=5 // pred_check
        %p2438 = pneg %p2437
      $region50: #{inceptionB_forward.9} parent=5 // pred_check_branch
        %2440 = sbr.rel (%p2438) target = $region52
      $region51: #{inceptionB_forward.9} parent=5 // pred_region
        %s2441 = ssub.s32 %s16, 2
        // Predicated region
        $region53: #{inceptionB_forward.9} parent=51 // pred_check
          %p2442 = pneg %p127
        $region54: #{inceptionB_forward.9} parent=51 // pred_check_branch
          %2444 = sbr.rel (%p2442) target = $region56
        $region55: #{inceptionB_forward.9} parent=51 // pred_region
          %s2445 = sand.u32 %s112, 1
          %s2446 = scalar_lea.sflag [#allocation4], %s2445
          %s2447 = sand.u32 %s112, 1
          %s2448 = smul.addr %s2447, 128
          %s2449 = scalar_lea.vmem [#allocation8], %s2448
          %2450 = dma.done %s2446, 2048
        $region56: #{inceptionB_forward.9} parent=51 // pred_fallthru
          _
      $region52: #{inceptionB_forward.9} parent=5 // pred_fallthru
        _
    $region6: #{inceptionB_forward.9} parent=1 // loop_footer
      %s20 = sadd.s32 1, %s16
    $region7: #{inceptionB_forward.9} parent=1 // loop_footer_branch
      %15 = sbr.rel target = $region3
    $region8: #{inceptionB_forward.9} parent=1 // loop_exit
      _
    %2451 = vsyncpa [#allocation3], 1
    %s2452 = scalar_lea.sflag [#allocation3], 1
    %2453 = vsyncpa %s2452, 1
    %2454 = vsyncpa [#allocation6], 1
    %2455 = vsyncpa [#allocation4], 1
    %s2456 = scalar_lea.sflag [#allocation4], 1
    %2457 = vsyncpa %s2456, 1

</llo_original>
